<compile_context>
chip_gen: v7x
topology: tpu7x:2x2x1
jax: 0.10.0
libtpu: 0.0.40
codegen_flags: <defaults>
</compile_context>

<pallas_src>
import functools

import jax
import jax.numpy as jnp
from jax.experimental import pallas as pl
from jax.experimental.pallas import tpu as pltpu

F32 = jnp.float32
VMEM = pl.BlockSpec(memory_space=pltpu.MemorySpace.VMEM)


# ----------------------------------------------------------------------------
# Single fused kernel: edge-NN + atom_expand + depth loop (NNConv msg/aggr,
# root+bias+ReLU, GRU cell) + Set2Set readout (LSTM cell + segment softmax).
# Everything stays VMEM/vreg resident.
# ----------------------------------------------------------------------------
def _ggnet_kernel(x_ref, ea_ref, gat_ref, scat_ref, ohb_ref, ohbt_ref,
                  p_ref, r_ref,
                  ew1_ref, eb1_ref, ew2_ref, eb2_ref,
                  aw_ref, ab_ref, rw_ref, cb_ref,
                  gwih_ref, gwhh_ref, gbih_ref, gbhh_ref,
                  swih_ref, swhh_ref, sbih_ref, sbhh_ref,
                  q_ref, *, depth, steps, d):
    f32 = jnp.float32

    # ---- NNConv edge network (Linear -> ReLU -> Linear), depth-invariant ----
    eh = jnp.dot(ea_ref[...], ew1_ref[...], preferred_element_type=f32)
    eh = jnp.maximum(eh + eb1_ref[...], 0.0)
    ew = jnp.dot(eh, ew2_ref[...], preferred_element_type=f32) + eb2_ref[...]  # [E, d*d]

    gather_oh = gat_ref[...]        # [E, N]  one-hot(src)
    scat_norm = scat_ref[...]       # [N, E]  one-hot(dst).T * 1/deg  (mean aggr)
    P = p_ref[...]                  # [d, d*d] replicate each input channel d times
    R = r_ref[...]                  # [d*d, d] group-sum back to output channels
    root_w = rw_ref[...]
    conv_b = cb_ref[...]
    gwih = gwih_ref[...]
    gwhh = gwhh_ref[...]
    gbih = gbih_ref[...]
    gbhh = gbhh_ref[...]

    # ---- atom_expand_nn: Linear + ReLU ----
    out = jnp.dot(x_ref[...], aw_ref[...], preferred_element_type=f32)
    out = jnp.maximum(out + ab_ref[...], 0.0)    # [N, D]
    h = out                                      # GRU hidden state

    # ---- depth loop (short static loop, fully unrolled in the trace) ----
    for _ in range(depth):
        # one-hot gather of source-node features (keeps `out` resident).
        x_src = jnp.dot(gather_oh, out, preferred_element_type=f32)      # [E, D]
        # NNConv message, msg[e,f] = sum_u x_src[e,u] * ew[e, u*d + f],
        # as two MXU matmuls + one lane-dense elementwise multiply.
        x_rep = jnp.dot(x_src, P, preferred_element_type=f32)            # [E, D*D]
        msg = jnp.dot(x_rep * ew, R, preferred_element_type=f32)         # [E, D]
        # mean aggregation by destination node (deg_inv folded into scat_norm).
        agg = jnp.dot(scat_norm, msg, preferred_element_type=f32)        # [N, D]
        # NNConv root weight + bias, then the GGNet-level F.relu.
        m = agg + jnp.dot(out, root_w, preferred_element_type=f32) + conv_b
        m = jnp.maximum(m, 0.0)
        # GRU cell (PyTorch gate order r, z, n).  3*d = 96 lanes fit in one
        # 128-lane tile -> gate slices are cheap sub-tile selects.
        gi = jnp.dot(m, gwih, preferred_element_type=f32) + gbih
        gh = jnp.dot(h, gwhh, preferred_element_type=f32) + gbhh
        r_g = jax.nn.sigmoid(gi[:, 0 * d:1 * d] + gh[:, 0 * d:1 * d])
        z_g = jax.nn.sigmoid(gi[:, 1 * d:2 * d] + gh[:, 1 * d:2 * d])
        n_g = jnp.tanh(gi[:, 2 * d:3 * d] + r_g * gh[:, 2 * d:3 * d])
        h = (1.0 - z_g) * n_g + z_g * h
        out = h

    # TODO(synk): ligand_only_readout branch (data-dependent boolean node
    # filtering) not implemented; this path is ligand_only_readout=False.

    # ---- Set2Set readout (LSTM gate order i, f, g, o) ----
    ohb = ohb_ref[...]              # [N, B]
    ohbt = ohbt_ref[...]            # [B, N]
    swih = swih_ref[...]
    swhh = swhh_ref[...]
    sbih = sbih_ref[...]
    sbhh = sbhh_ref[...]
    b = ohbt.shape[0]
    xr = out                        # [N, D]

    q_star = jnp.zeros((b, 2 * d), f32)
    hs = jnp.zeros((b, d), f32)
    cs = jnp.zeros((b, d), f32)

    for _ in range(steps):
        # LSTM cell
        g = (jnp.dot(q_star, swih, preferred_element_type=f32) + sbih
             + jnp.dot(hs, swhh, preferred_element_type=f32) + sbhh)
        i_g = jax.nn.sigmoid(g[:, 0 * d:1 * d])
        f_g = jax.nn.sigmoid(g[:, 1 * d:2 * d])
        g_g = jnp.tanh(g[:, 2 * d:3 * d])
        o_g = jax.nn.sigmoid(g[:, 3 * d:4 * d])
        cs = f_g * cs + i_g * g_g
        hs = o_g * jnp.tanh(cs)
        q = hs                                                        # [B, D]

        # segment softmax attention + weighted scatter-sum (f32 throughout).
        q_node = jnp.dot(ohb, q, preferred_element_type=f32)          # [N, D]
        e = jnp.sum(xr * q_node, axis=1, keepdims=True)               # [N, 1]
        e_mask = jnp.where(ohb > 0.5, e, jnp.float32(-1e30))          # [N, B]
        seg_max = jnp.max(e_mask, axis=0, keepdims=True)              # [1, B]
        max_node = jnp.sum(ohb * seg_max, axis=1, keepdims=True)      # [N, 1]
        exp_e = jnp.exp(e - max_node)                                 # [N, 1]
        seg_sum = jnp.sum(ohb * exp_e, axis=0, keepdims=True)         # [1, B]
        denom_node = jnp.sum(ohb * seg_sum, axis=1, keepdims=True)    # [N, 1]
        a = exp_e / denom_node                                        # [N, 1]
        rr = jnp.dot(ohbt, a * xr, preferred_element_type=f32)        # [B, D]
        q_star = jnp.concatenate([q, rr], axis=1)                     # [B, 2D]

    q_ref[...] = q_star


# ----------------------------------------------------------------------------
# GGNet forward: one pallas_call + cheap one-time XLA glue.
# ----------------------------------------------------------------------------
def ggnet_forward(x, edge_index, edge_attr, batch, params, *, depth, n_graphs,
                  processing_steps=3):
    n_nodes = x.shape[0]
    d = params["root_w"].shape[0]
    src, dst = edge_index[0], edge_index[1]

    # One-time glue: gather / scatter matrices (deg_inv folded), batch one-hots,
    # and the constant replicate / group-sum matrices for the NNConv message.
    gather_oh = jax.nn.one_hot(src, n_nodes, dtype=F32)                  # [E, N]
    scat_t = jax.nn.one_hot(dst, n_nodes, dtype=F32).T                   # [N, E]
    deg_inv = 1.0 / jnp.maximum(scat_t.sum(axis=1, keepdims=True), 1.0)  # [N, 1]
    scat_norm = scat_t * deg_inv                                         # mean aggr
    oh_batch = jax.nn.one_hot(batch, n_graphs, dtype=F32)                # [N, B]
    oh_batch_t = oh_batch.T                                              # [B, N]

    k_idx = jnp.arange(d * d)
    P = (k_idx[None, :] // d == jnp.arange(d)[:, None]).astype(F32)      # [d, d*d]
    R = (k_idx[:, None] % d == jnp.arange(d)[None, :]).astype(F32)       # [d*d, d]

    kern = functools.partial(_ggnet_kernel, depth=depth,
                             steps=processing_steps, d=d)
    return pl.pallas_call(
        kern,
        out_shape=jax.ShapeDtypeStruct((n_graphs, 2 * d), F32),
        in_specs=[VMEM] * 24,
        out_specs=VMEM,
    )(x, edge_attr, gather_oh, scat_norm, oh_batch, oh_batch_t, P, R,
      params["enn_w1"], params["enn_b1"], params["enn_w2"], params["enn_b2"],
      params["atom_w"], params["atom_b"], params["root_w"], params["conv_b"],
      params["gru_wih"], params["gru_whh"], params["gru_bih"], params["gru_bhh"],
      params["s2s_wih"], params["s2s_whh"], params["s2s_bih"], params["s2s_bhh"])


# ----------------------------------------------------------------------------
# Deterministic parameter / data construction
# ----------------------------------------------------------------------------
def make_params(key, node_dim, bond_dim, d, internal):
    ks = jax.random.split(key, 16)

    def init(k, shape, fan_in):
        return jax.random.normal(k, shape, F32) / jnp.sqrt(jnp.float32(fan_in))

    return {
        # atom expand
        "atom_w": init(ks[0], (node_dim, d), node_dim),
        "atom_b": init(ks[1], (1, d), node_dim),
        # edge network
        "enn_w1": init(ks[2], (bond_dim, internal), bond_dim),
        "enn_b1": init(ks[3], (1, internal), bond_dim),
        "enn_w2": init(ks[4], (internal, d * d), internal),
        "enn_b2": init(ks[5], (1, d * d), internal),
        # NNConv root + bias
        "root_w": init(ks[6], (d, d), d),
        "conv_b": init(ks[7], (1, d), d),
        # GRU (gate order r, z, n), weights stored as [in, 3*hidden]
        "gru_wih": init(ks[8], (d, 3 * d), d),
        "gru_whh": init(ks[9], (d, 3 * d), d),
        "gru_bih": init(ks[10], (1, 3 * d), d),
        "gru_bhh": init(ks[11], (1, 3 * d), d),
        # Set2Set LSTM (gate order i, f, g, o), input 2D -> hidden D
        "s2s_wih": init(ks[12], (2 * d, 4 * d), 2 * d),
        "s2s_whh": init(ks[13], (d, 4 * d), d),
        "s2s_bih": init(ks[14], (1, 4 * d), d),
        "s2s_bhh": init(ks[15], (1, 4 * d), d),
    }


if __name__ == "__main__":
    node_dim, bond_dim = 16, 8
    nn_conv_in_dim, nn_conv_internal_dim = 32, 64
    depth = 3
    n_per_graph, n_graphs = 12, 2
    n_nodes = n_per_graph * n_graphs

    key = jax.random.PRNGKey(0)
    k_param, k_x, k_e = jax.random.split(key, 3)

    params = make_params(k_param, node_dim, bond_dim,
                         nn_conv_in_dim, nn_conv_internal_dim)

    # Graph data: two 12-node rings (bidirectional edges), batch = graph id.
    idx = jnp.arange(n_per_graph)
    src0 = jnp.concatenate([idx, (idx + 1) % n_per_graph])
    dst0 = jnp.concatenate([(idx + 1) % n_per_graph, idx])
    src = jnp.concatenate([src0, src0 + n_per_graph])
    dst = jnp.concatenate([dst0, dst0 + n_per_graph])
    edge_index = jnp.stack([src, dst]).astype(jnp.int32)                 # [2, E]
    batch = jnp.concatenate([jnp.zeros(n_per_graph, jnp.int32),
                             jnp.ones(n_per_graph, jnp.int32)])          # [N]

    x = jax.random.normal(k_x, (n_nodes, node_dim), F32)                 # [N, node_dim]
    edge_attr = jax.random.normal(k_e, (edge_index.shape[1], bond_dim), F32)

    fwd = jax.jit(functools.partial(ggnet_forward, depth=depth, n_graphs=n_graphs))
    out = fwd(x, edge_index, edge_attr, batch, params)
    out = jax.block_until_ready(out)

    assert out.shape == (n_graphs, 2 * nn_conv_in_dim)
    assert bool(jnp.all(jnp.isfinite(out)))
    print("KERNEL_OK")
</pallas_src>

<mosaic_0001>
module attributes {stable_mosaic.version = 11 : i64} {
  func.func @_ggnet_kernel(%arg0: memref<24x16xf32, #tpu.memory_space<vmem>>, %arg1: memref<48x8xf32, #tpu.memory_space<vmem>>, %arg2: memref<48x24xf32, #tpu.memory_space<vmem>>, %arg3: memref<24x48xf32, #tpu.memory_space<vmem>>, %arg4: memref<24x2xf32, #tpu.memory_space<vmem>>, %arg5: memref<2x24xf32, #tpu.memory_space<vmem>>, %arg6: memref<32x1024xf32, #tpu.memory_space<vmem>>, %arg7: memref<1024x32xf32, #tpu.memory_space<vmem>>, %arg8: memref<8x64xf32, #tpu.memory_space<vmem>>, %arg9: memref<1x64xf32, #tpu.memory_space<vmem>>, %arg10: memref<64x1024xf32, #tpu.memory_space<vmem>>, %arg11: memref<1x1024xf32, #tpu.memory_space<vmem>>, %arg12: memref<16x32xf32, #tpu.memory_space<vmem>>, %arg13: memref<1x32xf32, #tpu.memory_space<vmem>>, %arg14: memref<32x32xf32, #tpu.memory_space<vmem>>, %arg15: memref<1x32xf32, #tpu.memory_space<vmem>>, %arg16: memref<32x96xf32, #tpu.memory_space<vmem>>, %arg17: memref<32x96xf32, #tpu.memory_space<vmem>>, %arg18: memref<1x96xf32, #tpu.memory_space<vmem>>, %arg19: memref<1x96xf32, #tpu.memory_space<vmem>>, %arg20: memref<64x128xf32, #tpu.memory_space<vmem>>, %arg21: memref<32x128xf32, #tpu.memory_space<vmem>>, %arg22: memref<1x128xf32, #tpu.memory_space<vmem>>, %arg23: memref<1x128xf32, #tpu.memory_space<vmem>>, %arg24: memref<2x64xf32, #tpu.memory_space<vmem>>) attributes {dimension_semantics = [], scalar_prefetch = 0 : i64, scratch_operands = 0 : i64, tpu.core_type = #tpu.core_type<tc>} {
    %c0 = arith.constant 0 : index
    %c0_0 = arith.constant 0 : index
    %0 = vector.load %arg1[%c0, %c0_0] : memref<48x8xf32, #tpu.memory_space<vmem>>, vector<48x8xf32>
    %c0_1 = arith.constant 0 : index
    %c0_2 = arith.constant 0 : index
    %1 = vector.load %arg8[%c0_1, %c0_2] : memref<8x64xf32, #tpu.memory_space<vmem>>, vector<8x64xf32>
    %cst = arith.constant dense<0.000000e+00> : vector<48x64xf32>
    %2 = tpu.matmul %0, %1, %cst {dimension_numbers = #tpu.dot_dimension_numbers<[1], [0], [0], [1], [0, 0, 1, 1], [], []>} : vector<48x8xf32>, vector<8x64xf32>, vector<48x64xf32> -> vector<48x64xf32>
    %c0_3 = arith.constant 0 : index
    %c0_4 = arith.constant 0 : index
    %3 = vector.load %arg9[%c0_3, %c0_4] : memref<1x64xf32, #tpu.memory_space<vmem>>, vector<1x64xf32>
    %4 = vector.broadcast %3 : vector<1x64xf32> to vector<48x64xf32>
    %5 = arith.addf %2, %4 : vector<48x64xf32>
    %cst_5 = arith.constant 0.000000e+00 : f32
    %6 = vector.broadcast %cst_5 : f32 to vector<48x64xf32>
    %7 = arith.maximumf %5, %6 : vector<48x64xf32>
    %c0_6 = arith.constant 0 : index
    %c0_7 = arith.constant 0 : index
    %8 = vector.load %arg10[%c0_6, %c0_7] : memref<64x1024xf32, #tpu.memory_space<vmem>>, vector<64x1024xf32>
    %cst_8 = arith.constant dense<0.000000e+00> : vector<48x1024xf32>
    %9 = tpu.matmul %7, %8, %cst_8 {dimension_numbers = #tpu.dot_dimension_numbers<[1], [0], [0], [1], [0, 0, 1, 1], [], []>} : vector<48x64xf32>, vector<64x1024xf32>, vector<48x1024xf32> -> vector<48x1024xf32>
    %c0_9 = arith.constant 0 : index
    %c0_10 = arith.constant 0 : index
    %10 = vector.load %arg11[%c0_9, %c0_10] : memref<1x1024xf32, #tpu.memory_space<vmem>>, vector<1x1024xf32>
    %11 = vector.broadcast %10 : vector<1x1024xf32> to vector<48x1024xf32>
    %12 = arith.addf %9, %11 : vector<48x1024xf32>
    %c0_11 = arith.constant 0 : index
    %c0_12 = arith.constant 0 : index
    %13 = vector.load %arg2[%c0_11, %c0_12] : memref<48x24xf32, #tpu.memory_space<vmem>>, vector<48x24xf32>
    %c0_13 = arith.constant 0 : index
    %c0_14 = arith.constant 0 : index
    %14 = vector.load %arg3[%c0_13, %c0_14] : memref<24x48xf32, #tpu.memory_space<vmem>>, vector<24x48xf32>
    %c0_15 = arith.constant 0 : index
    %c0_16 = arith.constant 0 : index
    %15 = vector.load %arg6[%c0_15, %c0_16] : memref<32x1024xf32, #tpu.memory_space<vmem>>, vector<32x1024xf32>
    %c0_17 = arith.constant 0 : index
    %c0_18 = arith.constant 0 : index
    %16 = vector.load %arg7[%c0_17, %c0_18] : memref<1024x32xf32, #tpu.memory_space<vmem>>, vector<1024x32xf32>
    %c0_19 = arith.constant 0 : index
    %c0_20 = arith.constant 0 : index
    %17 = vector.load %arg14[%c0_19, %c0_20] : memref<32x32xf32, #tpu.memory_space<vmem>>, vector<32x32xf32>
    %c0_21 = arith.constant 0 : index
    %c0_22 = arith.constant 0 : index
    %18 = vector.load %arg15[%c0_21, %c0_22] : memref<1x32xf32, #tpu.memory_space<vmem>>, vector<1x32xf32>
    %c0_23 = arith.constant 0 : index
    %c0_24 = arith.constant 0 : index
    %19 = vector.load %arg16[%c0_23, %c0_24] : memref<32x96xf32, #tpu.memory_space<vmem>>, vector<32x96xf32>
    %c0_25 = arith.constant 0 : index
    %c0_26 = arith.constant 0 : index
    %20 = vector.load %arg17[%c0_25, %c0_26] : memref<32x96xf32, #tpu.memory_space<vmem>>, vector<32x96xf32>
    %c0_27 = arith.constant 0 : index
    %c0_28 = arith.constant 0 : index
    %21 = vector.load %arg18[%c0_27, %c0_28] : memref<1x96xf32, #tpu.memory_space<vmem>>, vector<1x96xf32>
    %c0_29 = arith.constant 0 : index
    %c0_30 = arith.constant 0 : index
    %22 = vector.load %arg19[%c0_29, %c0_30] : memref<1x96xf32, #tpu.memory_space<vmem>>, vector<1x96xf32>
    %c0_31 = arith.constant 0 : index
    %c0_32 = arith.constant 0 : index
    %23 = vector.load %arg0[%c0_31, %c0_32] : memref<24x16xf32, #tpu.memory_space<vmem>>, vector<24x16xf32>
    %c0_33 = arith.constant 0 : index
    %c0_34 = arith.constant 0 : index
    %24 = vector.load %arg12[%c0_33, %c0_34] : memref<16x32xf32, #tpu.memory_space<vmem>>, vector<16x32xf32>
    %cst_35 = arith.constant dense<0.000000e+00> : vector<24x32xf32>
    %25 = tpu.matmul %23, %24, %cst_35 {dimension_numbers = #tpu.dot_dimension_numbers<[1], [0], [0], [1], [0, 0, 1, 1], [], []>} : vector<24x16xf32>, vector<16x32xf32>, vector<24x32xf32> -> vector<24x32xf32>
    %c0_36 = arith.constant 0 : index
    %c0_37 = arith.constant 0 : index
    %26 = vector.load %arg13[%c0_36, %c0_37] : memref<1x32xf32, #tpu.memory_space<vmem>>, vector<1x32xf32>
    %27 = vector.broadcast %26 : vector<1x32xf32> to vector<24x32xf32>
    %28 = arith.addf %25, %27 : vector<24x32xf32>
    %cst_38 = arith.constant 0.000000e+00 : f32
    %29 = vector.broadcast %cst_38 : f32 to vector<24x32xf32>
    %30 = arith.maximumf %28, %29 : vector<24x32xf32>
    %cst_39 = arith.constant dense<0.000000e+00> : vector<48x32xf32>
    %31 = tpu.matmul %13, %30, %cst_39 {dimension_numbers = #tpu.dot_dimension_numbers<[1], [0], [0], [1], [0, 0, 1, 1], [], []>} : vector<48x24xf32>, vector<24x32xf32>, vector<48x32xf32> -> vector<48x32xf32>
    %cst_40 = arith.constant dense<0.000000e+00> : vector<48x1024xf32>
    %32 = tpu.matmul %31, %15, %cst_40 {dimension_numbers = #tpu.dot_dimension_numbers<[1], [0], [0], [1], [0, 0, 1, 1], [], []>} : vector<48x32xf32>, vector<32x1024xf32>, vector<48x1024xf32> -> vector<48x1024xf32>
    %33 = arith.mulf %32, %12 : vector<48x1024xf32>
    %cst_41 = arith.constant dense<0.000000e+00> : vector<48x32xf32>
    %34 = tpu.matmul %33, %16, %cst_41 {dimension_numbers = #tpu.dot_dimension_numbers<[1], [0], [0], [1], [0, 0, 1, 1], [], []>} : vector<48x1024xf32>, vector<1024x32xf32>, vector<48x32xf32> -> vector<48x32xf32>
    %cst_42 = arith.constant dense<0.000000e+00> : vector<24x32xf32>
    %35 = tpu.matmul %14, %34, %cst_42 {dimension_numbers = #tpu.dot_dimension_numbers<[1], [0], [0], [1], [0, 0, 1, 1], [], []>} : vector<24x48xf32>, vector<48x32xf32>, vector<24x32xf32> -> vector<24x32xf32>
    %cst_43 = arith.constant dense<0.000000e+00> : vector<24x32xf32>
    %36 = tpu.matmul %30, %17, %cst_43 {dimension_numbers = #tpu.dot_dimension_numbers<[1], [0], [0], [1], [0, 0, 1, 1], [], []>} : vector<24x32xf32>, vector<32x32xf32>, vector<24x32xf32> -> vector<24x32xf32>
    %37 = arith.addf %35, %36 : vector<24x32xf32>
    %38 = vector.broadcast %18 : vector<1x32xf32> to vector<24x32xf32>
    %39 = arith.addf %37, %38 : vector<24x32xf32>
    %cst_44 = arith.constant 0.000000e+00 : f32
    %40 = vector.broadcast %cst_44 : f32 to vector<24x32xf32>
    %41 = arith.maximumf %39, %40 : vector<24x32xf32>
    %cst_45 = arith.constant dense<0.000000e+00> : vector<24x96xf32>
    %42 = tpu.matmul %41, %19, %cst_45 {dimension_numbers = #tpu.dot_dimension_numbers<[1], [0], [0], [1], [0, 0, 1, 1], [], []>} : vector<24x32xf32>, vector<32x96xf32>, vector<24x96xf32> -> vector<24x96xf32>
    %43 = vector.broadcast %21 : vector<1x96xf32> to vector<24x96xf32>
    %44 = arith.addf %42, %43 : vector<24x96xf32>
    %cst_46 = arith.constant dense<0.000000e+00> : vector<24x96xf32>
    %45 = tpu.matmul %30, %20, %cst_46 {dimension_numbers = #tpu.dot_dimension_numbers<[1], [0], [0], [1], [0, 0, 1, 1], [], []>} : vector<24x32xf32>, vector<32x96xf32>, vector<24x96xf32> -> vector<24x96xf32>
    %46 = vector.broadcast %22 : vector<1x96xf32> to vector<24x96xf32>
    %47 = arith.addf %45, %46 : vector<24x96xf32>
    %48 = vector.extract_strided_slice %44 {offsets = [0, 0], sizes = [24, 32], strides = [1, 1]} : vector<24x96xf32> to vector<24x32xf32>
    %49 = vector.extract_strided_slice %47 {offsets = [0, 0], sizes = [24, 32], strides = [1, 1]} : vector<24x96xf32> to vector<24x32xf32>
    %50 = arith.addf %48, %49 : vector<24x32xf32>
    %51 = arith.negf %50 : vector<24x32xf32>
    %52 = math.exp %51 : vector<24x32xf32>
    %cst_47 = arith.constant 1.000000e+00 : f32
    %53 = vector.broadcast %cst_47 : f32 to vector<24x32xf32>
    %54 = arith.addf %53, %52 : vector<24x32xf32>
    %55 = arith.divf %53, %54 : vector<24x32xf32>
    %56 = vector.extract_strided_slice %44 {offsets = [0, 32], sizes = [24, 32], strides = [1, 1]} : vector<24x96xf32> to vector<24x32xf32>
    %57 = vector.extract_strided_slice %47 {offsets = [0, 32], sizes = [24, 32], strides = [1, 1]} : vector<24x96xf32> to vector<24x32xf32>
    %58 = arith.addf %56, %57 : vector<24x32xf32>
    %59 = arith.negf %58 : vector<24x32xf32>
    %60 = math.exp %59 : vector<24x32xf32>
    %cst_48 = arith.constant 1.000000e+00 : f32
    %61 = vector.broadcast %cst_48 : f32 to vector<24x32xf32>
    %62 = arith.addf %61, %60 : vector<24x32xf32>
    %63 = arith.divf %61, %62 : vector<24x32xf32>
    %64 = vector.extract_strided_slice %44 {offsets = [0, 64], sizes = [24, 32], strides = [1, 1]} : vector<24x96xf32> to vector<24x32xf32>
    %65 = vector.extract_strided_slice %47 {offsets = [0, 64], sizes = [24, 32], strides = [1, 1]} : vector<24x96xf32> to vector<24x32xf32>
    %66 = arith.mulf %55, %65 : vector<24x32xf32>
    %67 = arith.addf %64, %66 : vector<24x32xf32>
    %68 = math.tanh %67 : vector<24x32xf32>
    %cst_49 = arith.constant 1.000000e+00 : f32
    %69 = vector.broadcast %cst_49 : f32 to vector<24x32xf32>
    %70 = arith.subf %69, %63 : vector<24x32xf32>
    %71 = arith.mulf %70, %68 : vector<24x32xf32>
    %72 = arith.mulf %63, %30 : vector<24x32xf32>
    %73 = arith.addf %71, %72 : vector<24x32xf32>
    %cst_50 = arith.constant dense<0.000000e+00> : vector<48x32xf32>
    %74 = tpu.matmul %13, %73, %cst_50 {dimension_numbers = #tpu.dot_dimension_numbers<[1], [0], [0], [1], [0, 0, 1, 1], [], []>} : vector<48x24xf32>, vector<24x32xf32>, vector<48x32xf32> -> vector<48x32xf32>
    %cst_51 = arith.constant dense<0.000000e+00> : vector<48x1024xf32>
    %75 = tpu.matmul %74, %15, %cst_51 {dimension_numbers = #tpu.dot_dimension_numbers<[1], [0], [0], [1], [0, 0, 1, 1], [], []>} : vector<48x32xf32>, vector<32x1024xf32>, vector<48x1024xf32> -> vector<48x1024xf32>
    %76 = arith.mulf %75, %12 : vector<48x1024xf32>
    %cst_52 = arith.constant dense<0.000000e+00> : vector<48x32xf32>
    %77 = tpu.matmul %76, %16, %cst_52 {dimension_numbers = #tpu.dot_dimension_numbers<[1], [0], [0], [1], [0, 0, 1, 1], [], []>} : vector<48x1024xf32>, vector<1024x32xf32>, vector<48x32xf32> -> vector<48x32xf32>
    %cst_53 = arith.constant dense<0.000000e+00> : vector<24x32xf32>
    %78 = tpu.matmul %14, %77, %cst_53 {dimension_numbers = #tpu.dot_dimension_numbers<[1], [0], [0], [1], [0, 0, 1, 1], [], []>} : vector<24x48xf32>, vector<48x32xf32>, vector<24x32xf32> -> vector<24x32xf32>
    %cst_54 = arith.constant dense<0.000000e+00> : vector<24x32xf32>
    %79 = tpu.matmul %73, %17, %cst_54 {dimension_numbers = #tpu.dot_dimension_numbers<[1], [0], [0], [1], [0, 0, 1, 1], [], []>} : vector<24x32xf32>, vector<32x32xf32>, vector<24x32xf32> -> vector<24x32xf32>
    %80 = arith.addf %78, %79 : vector<24x32xf32>
    %81 = vector.broadcast %18 : vector<1x32xf32> to vector<24x32xf32>
    %82 = arith.addf %80, %81 : vector<24x32xf32>
    %cst_55 = arith.constant 0.000000e+00 : f32
    %83 = vector.broadcast %cst_55 : f32 to vector<24x32xf32>
    %84 = arith.maximumf %82, %83 : vector<24x32xf32>
    %cst_56 = arith.constant dense<0.000000e+00> : vector<24x96xf32>
    %85 = tpu.matmul %84, %19, %cst_56 {dimension_numbers = #tpu.dot_dimension_numbers<[1], [0], [0], [1], [0, 0, 1, 1], [], []>} : vector<24x32xf32>, vector<32x96xf32>, vector<24x96xf32> -> vector<24x96xf32>
    %86 = vector.broadcast %21 : vector<1x96xf32> to vector<24x96xf32>
    %87 = arith.addf %85, %86 : vector<24x96xf32>
    %cst_57 = arith.constant dense<0.000000e+00> : vector<24x96xf32>
    %88 = tpu.matmul %73, %20, %cst_57 {dimension_numbers = #tpu.dot_dimension_numbers<[1], [0], [0], [1], [0, 0, 1, 1], [], []>} : vector<24x32xf32>, vector<32x96xf32>, vector<24x96xf32> -> vector<24x96xf32>
    %89 = vector.broadcast %22 : vector<1x96xf32> to vector<24x96xf32>
    %90 = arith.addf %88, %89 : vector<24x96xf32>
    %91 = vector.extract_strided_slice %87 {offsets = [0, 0], sizes = [24, 32], strides = [1, 1]} : vector<24x96xf32> to vector<24x32xf32>
    %92 = vector.extract_strided_slice %90 {offsets = [0, 0], sizes = [24, 32], strides = [1, 1]} : vector<24x96xf32> to vector<24x32xf32>
    %93 = arith.addf %91, %92 : vector<24x32xf32>
    %94 = arith.negf %93 : vector<24x32xf32>
    %95 = math.exp %94 : vector<24x32xf32>
    %cst_58 = arith.constant 1.000000e+00 : f32
    %96 = vector.broadcast %cst_58 : f32 to vector<24x32xf32>
    %97 = arith.addf %96, %95 : vector<24x32xf32>
    %98 = arith.divf %96, %97 : vector<24x32xf32>
    %99 = vector.extract_strided_slice %87 {offsets = [0, 32], sizes = [24, 32], strides = [1, 1]} : vector<24x96xf32> to vector<24x32xf32>
    %100 = vector.extract_strided_slice %90 {offsets = [0, 32], sizes = [24, 32], strides = [1, 1]} : vector<24x96xf32> to vector<24x32xf32>
    %101 = arith.addf %99, %100 : vector<24x32xf32>
    %102 = arith.negf %101 : vector<24x32xf32>
    %103 = math.exp %102 : vector<24x32xf32>
    %cst_59 = arith.constant 1.000000e+00 : f32
    %104 = vector.broadcast %cst_59 : f32 to vector<24x32xf32>
    %105 = arith.addf %104, %103 : vector<24x32xf32>
    %106 = arith.divf %104, %105 : vector<24x32xf32>
    %107 = vector.extract_strided_slice %87 {offsets = [0, 64], sizes = [24, 32], strides = [1, 1]} : vector<24x96xf32> to vector<24x32xf32>
    %108 = vector.extract_strided_slice %90 {offsets = [0, 64], sizes = [24, 32], strides = [1, 1]} : vector<24x96xf32> to vector<24x32xf32>
    %109 = arith.mulf %98, %108 : vector<24x32xf32>
    %110 = arith.addf %107, %109 : vector<24x32xf32>
    %111 = math.tanh %110 : vector<24x32xf32>
    %cst_60 = arith.constant 1.000000e+00 : f32
    %112 = vector.broadcast %cst_60 : f32 to vector<24x32xf32>
    %113 = arith.subf %112, %106 : vector<24x32xf32>
    %114 = arith.mulf %113, %111 : vector<24x32xf32>
    %115 = arith.mulf %106, %73 : vector<24x32xf32>
    %116 = arith.addf %114, %115 : vector<24x32xf32>
    %cst_61 = arith.constant dense<0.000000e+00> : vector<48x32xf32>
    %117 = tpu.matmul %13, %116, %cst_61 {dimension_numbers = #tpu.dot_dimension_numbers<[1], [0], [0], [1], [0, 0, 1, 1], [], []>} : vector<48x24xf32>, vector<24x32xf32>, vector<48x32xf32> -> vector<48x32xf32>
    %cst_62 = arith.constant dense<0.000000e+00> : vector<48x1024xf32>
    %118 = tpu.matmul %117, %15, %cst_62 {dimension_numbers = #tpu.dot_dimension_numbers<[1], [0], [0], [1], [0, 0, 1, 1], [], []>} : vector<48x32xf32>, vector<32x1024xf32>, vector<48x1024xf32> -> vector<48x1024xf32>
    %119 = arith.mulf %118, %12 : vector<48x1024xf32>
    %cst_63 = arith.constant dense<0.000000e+00> : vector<48x32xf32>
    %120 = tpu.matmul %119, %16, %cst_63 {dimension_numbers = #tpu.dot_dimension_numbers<[1], [0], [0], [1], [0, 0, 1, 1], [], []>} : vector<48x1024xf32>, vector<1024x32xf32>, vector<48x32xf32> -> vector<48x32xf32>
    %cst_64 = arith.constant dense<0.000000e+00> : vector<24x32xf32>
    %121 = tpu.matmul %14, %120, %cst_64 {dimension_numbers = #tpu.dot_dimension_numbers<[1], [0], [0], [1], [0, 0, 1, 1], [], []>} : vector<24x48xf32>, vector<48x32xf32>, vector<24x32xf32> -> vector<24x32xf32>
    %cst_65 = arith.constant dense<0.000000e+00> : vector<24x32xf32>
    %122 = tpu.matmul %116, %17, %cst_65 {dimension_numbers = #tpu.dot_dimension_numbers<[1], [0], [0], [1], [0, 0, 1, 1], [], []>} : vector<24x32xf32>, vector<32x32xf32>, vector<24x32xf32> -> vector<24x32xf32>
    %123 = arith.addf %121, %122 : vector<24x32xf32>
    %124 = vector.broadcast %18 : vector<1x32xf32> to vector<24x32xf32>
    %125 = arith.addf %123, %124 : vector<24x32xf32>
    %cst_66 = arith.constant 0.000000e+00 : f32
    %126 = vector.broadcast %cst_66 : f32 to vector<24x32xf32>
    %127 = arith.maximumf %125, %126 : vector<24x32xf32>
    %cst_67 = arith.constant dense<0.000000e+00> : vector<24x96xf32>
    %128 = tpu.matmul %127, %19, %cst_67 {dimension_numbers = #tpu.dot_dimension_numbers<[1], [0], [0], [1], [0, 0, 1, 1], [], []>} : vector<24x32xf32>, vector<32x96xf32>, vector<24x96xf32> -> vector<24x96xf32>
    %129 = vector.broadcast %21 : vector<1x96xf32> to vector<24x96xf32>
    %130 = arith.addf %128, %129 : vector<24x96xf32>
    %cst_68 = arith.constant dense<0.000000e+00> : vector<24x96xf32>
    %131 = tpu.matmul %116, %20, %cst_68 {dimension_numbers = #tpu.dot_dimension_numbers<[1], [0], [0], [1], [0, 0, 1, 1], [], []>} : vector<24x32xf32>, vector<32x96xf32>, vector<24x96xf32> -> vector<24x96xf32>
    %132 = vector.broadcast %22 : vector<1x96xf32> to vector<24x96xf32>
    %133 = arith.addf %131, %132 : vector<24x96xf32>
    %134 = vector.extract_strided_slice %130 {offsets = [0, 0], sizes = [24, 32], strides = [1, 1]} : vector<24x96xf32> to vector<24x32xf32>
    %135 = vector.extract_strided_slice %133 {offsets = [0, 0], sizes = [24, 32], strides = [1, 1]} : vector<24x96xf32> to vector<24x32xf32>
    %136 = arith.addf %134, %135 : vector<24x32xf32>
    %137 = arith.negf %136 : vector<24x32xf32>
    %138 = math.exp %137 : vector<24x32xf32>
    %cst_69 = arith.constant 1.000000e+00 : f32
    %139 = vector.broadcast %cst_69 : f32 to vector<24x32xf32>
    %140 = arith.addf %139, %138 : vector<24x32xf32>
    %141 = arith.divf %139, %140 : vector<24x32xf32>
    %142 = vector.extract_strided_slice %130 {offsets = [0, 32], sizes = [24, 32], strides = [1, 1]} : vector<24x96xf32> to vector<24x32xf32>
    %143 = vector.extract_strided_slice %133 {offsets = [0, 32], sizes = [24, 32], strides = [1, 1]} : vector<24x96xf32> to vector<24x32xf32>
    %144 = arith.addf %142, %143 : vector<24x32xf32>
    %145 = arith.negf %144 : vector<24x32xf32>
    %146 = math.exp %145 : vector<24x32xf32>
    %cst_70 = arith.constant 1.000000e+00 : f32
    %147 = vector.broadcast %cst_70 : f32 to vector<24x32xf32>
    %148 = arith.addf %147, %146 : vector<24x32xf32>
    %149 = arith.divf %147, %148 : vector<24x32xf32>
    %150 = vector.extract_strided_slice %130 {offsets = [0, 64], sizes = [24, 32], strides = [1, 1]} : vector<24x96xf32> to vector<24x32xf32>
    %151 = vector.extract_strided_slice %133 {offsets = [0, 64], sizes = [24, 32], strides = [1, 1]} : vector<24x96xf32> to vector<24x32xf32>
    %152 = arith.mulf %141, %151 : vector<24x32xf32>
    %153 = arith.addf %150, %152 : vector<24x32xf32>
    %154 = math.tanh %153 : vector<24x32xf32>
    %cst_71 = arith.constant 1.000000e+00 : f32
    %155 = vector.broadcast %cst_71 : f32 to vector<24x32xf32>
    %156 = arith.subf %155, %149 : vector<24x32xf32>
    %157 = arith.mulf %156, %154 : vector<24x32xf32>
    %158 = arith.mulf %149, %116 : vector<24x32xf32>
    %159 = arith.addf %157, %158 : vector<24x32xf32>
    %c0_72 = arith.constant 0 : index
    %c0_73 = arith.constant 0 : index
    %160 = vector.load %arg4[%c0_72, %c0_73] : memref<24x2xf32, #tpu.memory_space<vmem>>, vector<24x2xf32>
    %c0_74 = arith.constant 0 : index
    %c0_75 = arith.constant 0 : index
    %161 = vector.load %arg5[%c0_74, %c0_75] : memref<2x24xf32, #tpu.memory_space<vmem>>, vector<2x24xf32>
    %c0_76 = arith.constant 0 : index
    %c0_77 = arith.constant 0 : index
    %162 = vector.load %arg20[%c0_76, %c0_77] : memref<64x128xf32, #tpu.memory_space<vmem>>, vector<64x128xf32>
    %c0_78 = arith.constant 0 : index
    %c0_79 = arith.constant 0 : index
    %163 = vector.load %arg21[%c0_78, %c0_79] : memref<32x128xf32, #tpu.memory_space<vmem>>, vector<32x128xf32>
    %c0_80 = arith.constant 0 : index
    %c0_81 = arith.constant 0 : index
    %164 = vector.load %arg22[%c0_80, %c0_81] : memref<1x128xf32, #tpu.memory_space<vmem>>, vector<1x128xf32>
    %c0_82 = arith.constant 0 : index
    %c0_83 = arith.constant 0 : index
    %165 = vector.load %arg23[%c0_82, %c0_83] : memref<1x128xf32, #tpu.memory_space<vmem>>, vector<1x128xf32>
    %cst_84 = arith.constant 0.000000e+00 : f32
    %166 = vector.broadcast %cst_84 : f32 to vector<2x64xf32>
    %cst_85 = arith.constant 0.000000e+00 : f32
    %167 = vector.broadcast %cst_85 : f32 to vector<2x32xf32>
    %cst_86 = arith.constant 0.000000e+00 : f32
    %168 = vector.broadcast %cst_86 : f32 to vector<2x32xf32>
    %cst_87 = arith.constant dense<0.000000e+00> : vector<2x128xf32>
    %169 = tpu.matmul %166, %162, %cst_87 {dimension_numbers = #tpu.dot_dimension_numbers<[1], [0], [0], [1], [0, 0, 1, 1], [], []>} : vector<2x64xf32>, vector<64x128xf32>, vector<2x128xf32> -> vector<2x128xf32>
    %170 = vector.broadcast %164 : vector<1x128xf32> to vector<2x128xf32>
    %171 = arith.addf %169, %170 : vector<2x128xf32>
    %cst_88 = arith.constant dense<0.000000e+00> : vector<2x128xf32>
    %172 = tpu.matmul %167, %163, %cst_88 {dimension_numbers = #tpu.dot_dimension_numbers<[1], [0], [0], [1], [0, 0, 1, 1], [], []>} : vector<2x32xf32>, vector<32x128xf32>, vector<2x128xf32> -> vector<2x128xf32>
    %173 = arith.addf %171, %172 : vector<2x128xf32>
    %174 = vector.broadcast %165 : vector<1x128xf32> to vector<2x128xf32>
    %175 = arith.addf %173, %174 : vector<2x128xf32>
    %176 = vector.extract_strided_slice %175 {offsets = [0, 0], sizes = [2, 32], strides = [1, 1]} : vector<2x128xf32> to vector<2x32xf32>
    %177 = arith.negf %176 : vector<2x32xf32>
    %178 = math.exp %177 : vector<2x32xf32>
    %cst_89 = arith.constant 1.000000e+00 : f32
    %179 = vector.broadcast %cst_89 : f32 to vector<2x32xf32>
    %180 = arith.addf %179, %178 : vector<2x32xf32>
    %181 = arith.divf %179, %180 : vector<2x32xf32>
    %182 = vector.extract_strided_slice %175 {offsets = [0, 32], sizes = [2, 32], strides = [1, 1]} : vector<2x128xf32> to vector<2x32xf32>
    %183 = arith.negf %182 : vector<2x32xf32>
    %184 = math.exp %183 : vector<2x32xf32>
    %cst_90 = arith.constant 1.000000e+00 : f32
    %185 = vector.broadcast %cst_90 : f32 to vector<2x32xf32>
    %186 = arith.addf %185, %184 : vector<2x32xf32>
    %187 = arith.divf %185, %186 : vector<2x32xf32>
    %188 = vector.extract_strided_slice %175 {offsets = [0, 64], sizes = [2, 32], strides = [1, 1]} : vector<2x128xf32> to vector<2x32xf32>
    %189 = math.tanh %188 : vector<2x32xf32>
    %190 = vector.extract_strided_slice %175 {offsets = [0, 96], sizes = [2, 32], strides = [1, 1]} : vector<2x128xf32> to vector<2x32xf32>
    %191 = arith.negf %190 : vector<2x32xf32>
    %192 = math.exp %191 : vector<2x32xf32>
    %cst_91 = arith.constant 1.000000e+00 : f32
    %193 = vector.broadcast %cst_91 : f32 to vector<2x32xf32>
    %194 = arith.addf %193, %192 : vector<2x32xf32>
    %195 = arith.divf %193, %194 : vector<2x32xf32>
    %196 = arith.mulf %187, %168 : vector<2x32xf32>
    %197 = arith.mulf %181, %189 : vector<2x32xf32>
    %198 = arith.addf %196, %197 : vector<2x32xf32>
    %199 = math.tanh %198 : vector<2x32xf32>
    %200 = arith.mulf %195, %199 : vector<2x32xf32>
    %cst_92 = arith.constant dense<0.000000e+00> : vector<24x32xf32>
    %201 = tpu.matmul %160, %200, %cst_92 {dimension_numbers = #tpu.dot_dimension_numbers<[1], [0], [0], [1], [0, 0, 1, 1], [], []>} : vector<24x2xf32>, vector<2x32xf32>, vector<24x32xf32> -> vector<24x32xf32>
    %202 = arith.mulf %159, %201 : vector<24x32xf32>
    %cst_93 = arith.constant dense<0.000000e+00> : vector<24xf32>
    %203 = vector.multi_reduction <add>, %202, %cst_93 [1] : vector<24x32xf32> to vector<24xf32>
    %204 = vector.shape_cast %203 : vector<24xf32> to vector<24x1xf32>
    %cst_94 = arith.constant 5.000000e-01 : f32
    %205 = vector.broadcast %cst_94 : f32 to vector<24x2xf32>
    %206 = arith.cmpf ogt, %160, %205 : vector<24x2xf32>
    %cst_95 = arith.constant -1.000000e+30 : f32
    %207 = vector.shape_cast %204 : vector<24x1xf32> to vector<24x1xf32>
    %208 = vector.broadcast %207 : vector<24x1xf32> to vector<24x2xf32>
    %209 = vector.broadcast %cst_95 : f32 to vector<24x2xf32>
    %210 = arith.select %206, %208, %209 : vector<24x2xi1>, vector<24x2xf32>
    %cst_96 = arith.constant dense<0xFF800000> : vector<2xf32>
    %211 = vector.multi_reduction <maximumf>, %210, %cst_96 [0] : vector<24x2xf32> to vector<2xf32>
    %212 = vector.shape_cast %211 : vector<2xf32> to vector<1x2xf32>
    %213 = vector.broadcast %212 : vector<1x2xf32> to vector<24x2xf32>
    %214 = arith.mulf %160, %213 : vector<24x2xf32>
    %cst_97 = arith.constant dense<0.000000e+00> : vector<24xf32>
    %215 = vector.multi_reduction <add>, %214, %cst_97 [1] : vector<24x2xf32> to vector<24xf32>
    %216 = vector.shape_cast %215 : vector<24xf32> to vector<24x1xf32>
    %217 = arith.subf %204, %216 : vector<24x1xf32>
    %218 = math.exp %217 : vector<24x1xf32>
    %219 = vector.broadcast %218 : vector<24x1xf32> to vector<24x2xf32>
    %220 = arith.mulf %160, %219 : vector<24x2xf32>
    %cst_98 = arith.constant dense<0.000000e+00> : vector<2xf32>
    %221 = vector.multi_reduction <add>, %220, %cst_98 [0] : vector<24x2xf32> to vector<2xf32>
    %222 = vector.shape_cast %221 : vector<2xf32> to vector<1x2xf32>
    %223 = vector.broadcast %222 : vector<1x2xf32> to vector<24x2xf32>
    %224 = arith.mulf %160, %223 : vector<24x2xf32>
    %cst_99 = arith.constant dense<0.000000e+00> : vector<24xf32>
    %225 = vector.multi_reduction <add>, %224, %cst_99 [1] : vector<24x2xf32> to vector<24xf32>
    %226 = vector.shape_cast %225 : vector<24xf32> to vector<24x1xf32>
    %227 = arith.divf %218, %226 : vector<24x1xf32>
    %228 = vector.broadcast %227 : vector<24x1xf32> to vector<24x32xf32>
    %229 = arith.mulf %228, %159 : vector<24x32xf32>
    %cst_100 = arith.constant dense<0.000000e+00> : vector<2x32xf32>
    %230 = tpu.matmul %161, %229, %cst_100 {dimension_numbers = #tpu.dot_dimension_numbers<[1], [0], [0], [1], [0, 0, 1, 1], [], []>} : vector<2x24xf32>, vector<24x32xf32>, vector<2x32xf32> -> vector<2x32xf32>
    %231 = tpu.concatenate %200, %230 in 1 : vector<2x32xf32>, vector<2x32xf32> -> vector<2x64xf32>
    %cst_101 = arith.constant dense<0.000000e+00> : vector<2x128xf32>
    %232 = tpu.matmul %231, %162, %cst_101 {dimension_numbers = #tpu.dot_dimension_numbers<[1], [0], [0], [1], [0, 0, 1, 1], [], []>} : vector<2x64xf32>, vector<64x128xf32>, vector<2x128xf32> -> vector<2x128xf32>
    %233 = vector.broadcast %164 : vector<1x128xf32> to vector<2x128xf32>
    %234 = arith.addf %232, %233 : vector<2x128xf32>
    %cst_102 = arith.constant dense<0.000000e+00> : vector<2x128xf32>
    %235 = tpu.matmul %200, %163, %cst_102 {dimension_numbers = #tpu.dot_dimension_numbers<[1], [0], [0], [1], [0, 0, 1, 1], [], []>} : vector<2x32xf32>, vector<32x128xf32>, vector<2x128xf32> -> vector<2x128xf32>
    %236 = arith.addf %234, %235 : vector<2x128xf32>
    %237 = vector.broadcast %165 : vector<1x128xf32> to vector<2x128xf32>
    %238 = arith.addf %236, %237 : vector<2x128xf32>
    %239 = vector.extract_strided_slice %238 {offsets = [0, 0], sizes = [2, 32], strides = [1, 1]} : vector<2x128xf32> to vector<2x32xf32>
    %240 = arith.negf %239 : vector<2x32xf32>
    %241 = math.exp %240 : vector<2x32xf32>
    %cst_103 = arith.constant 1.000000e+00 : f32
    %242 = vector.broadcast %cst_103 : f32 to vector<2x32xf32>
    %243 = arith.addf %242, %241 : vector<2x32xf32>
    %244 = arith.divf %242, %243 : vector<2x32xf32>
    %245 = vector.extract_strided_slice %238 {offsets = [0, 32], sizes = [2, 32], strides = [1, 1]} : vector<2x128xf32> to vector<2x32xf32>
    %246 = arith.negf %245 : vector<2x32xf32>
    %247 = math.exp %246 : vector<2x32xf32>
    %cst_104 = arith.constant 1.000000e+00 : f32
    %248 = vector.broadcast %cst_104 : f32 to vector<2x32xf32>
    %249 = arith.addf %248, %247 : vector<2x32xf32>
    %250 = arith.divf %248, %249 : vector<2x32xf32>
    %251 = vector.extract_strided_slice %238 {offsets = [0, 64], sizes = [2, 32], strides = [1, 1]} : vector<2x128xf32> to vector<2x32xf32>
    %252 = math.tanh %251 : vector<2x32xf32>
    %253 = vector.extract_strided_slice %238 {offsets = [0, 96], sizes = [2, 32], strides = [1, 1]} : vector<2x128xf32> to vector<2x32xf32>
    %254 = arith.negf %253 : vector<2x32xf32>
    %255 = math.exp %254 : vector<2x32xf32>
    %cst_105 = arith.constant 1.000000e+00 : f32
    %256 = vector.broadcast %cst_105 : f32 to vector<2x32xf32>
    %257 = arith.addf %256, %255 : vector<2x32xf32>
    %258 = arith.divf %256, %257 : vector<2x32xf32>
    %259 = arith.mulf %250, %198 : vector<2x32xf32>
    %260 = arith.mulf %244, %252 : vector<2x32xf32>
    %261 = arith.addf %259, %260 : vector<2x32xf32>
    %262 = math.tanh %261 : vector<2x32xf32>
    %263 = arith.mulf %258, %262 : vector<2x32xf32>
    %cst_106 = arith.constant dense<0.000000e+00> : vector<24x32xf32>
    %264 = tpu.matmul %160, %263, %cst_106 {dimension_numbers = #tpu.dot_dimension_numbers<[1], [0], [0], [1], [0, 0, 1, 1], [], []>} : vector<24x2xf32>, vector<2x32xf32>, vector<24x32xf32> -> vector<24x32xf32>
    %265 = arith.mulf %159, %264 : vector<24x32xf32>
    %cst_107 = arith.constant dense<0.000000e+00> : vector<24xf32>
    %266 = vector.multi_reduction <add>, %265, %cst_107 [1] : vector<24x32xf32> to vector<24xf32>
    %267 = vector.shape_cast %266 : vector<24xf32> to vector<24x1xf32>
    %cst_108 = arith.constant 5.000000e-01 : f32
    %268 = vector.broadcast %cst_108 : f32 to vector<24x2xf32>
    %269 = arith.cmpf ogt, %160, %268 : vector<24x2xf32>
    %cst_109 = arith.constant -1.000000e+30 : f32
    %270 = vector.shape_cast %267 : vector<24x1xf32> to vector<24x1xf32>
    %271 = vector.broadcast %270 : vector<24x1xf32> to vector<24x2xf32>
    %272 = vector.broadcast %cst_109 : f32 to vector<24x2xf32>
    %273 = arith.select %269, %271, %272 : vector<24x2xi1>, vector<24x2xf32>
    %cst_110 = arith.constant dense<0xFF800000> : vector<2xf32>
    %274 = vector.multi_reduction <maximumf>, %273, %cst_110 [0] : vector<24x2xf32> to vector<2xf32>
    %275 = vector.shape_cast %274 : vector<2xf32> to vector<1x2xf32>
    %276 = vector.broadcast %275 : vector<1x2xf32> to vector<24x2xf32>
    %277 = arith.mulf %160, %276 : vector<24x2xf32>
    %cst_111 = arith.constant dense<0.000000e+00> : vector<24xf32>
    %278 = vector.multi_reduction <add>, %277, %cst_111 [1] : vector<24x2xf32> to vector<24xf32>
    %279 = vector.shape_cast %278 : vector<24xf32> to vector<24x1xf32>
    %280 = arith.subf %267, %279 : vector<24x1xf32>
    %281 = math.exp %280 : vector<24x1xf32>
    %282 = vector.broadcast %281 : vector<24x1xf32> to vector<24x2xf32>
    %283 = arith.mulf %160, %282 : vector<24x2xf32>
    %cst_112 = arith.constant dense<0.000000e+00> : vector<2xf32>
    %284 = vector.multi_reduction <add>, %283, %cst_112 [0] : vector<24x2xf32> to vector<2xf32>
    %285 = vector.shape_cast %284 : vector<2xf32> to vector<1x2xf32>
    %286 = vector.broadcast %285 : vector<1x2xf32> to vector<24x2xf32>
    %287 = arith.mulf %160, %286 : vector<24x2xf32>
    %cst_113 = arith.constant dense<0.000000e+00> : vector<24xf32>
    %288 = vector.multi_reduction <add>, %287, %cst_113 [1] : vector<24x2xf32> to vector<24xf32>
    %289 = vector.shape_cast %288 : vector<24xf32> to vector<24x1xf32>
    %290 = arith.divf %281, %289 : vector<24x1xf32>
    %291 = vector.broadcast %290 : vector<24x1xf32> to vector<24x32xf32>
    %292 = arith.mulf %291, %159 : vector<24x32xf32>
    %cst_114 = arith.constant dense<0.000000e+00> : vector<2x32xf32>
    %293 = tpu.matmul %161, %292, %cst_114 {dimension_numbers = #tpu.dot_dimension_numbers<[1], [0], [0], [1], [0, 0, 1, 1], [], []>} : vector<2x24xf32>, vector<24x32xf32>, vector<2x32xf32> -> vector<2x32xf32>
    %294 = tpu.concatenate %263, %293 in 1 : vector<2x32xf32>, vector<2x32xf32> -> vector<2x64xf32>
    %cst_115 = arith.constant dense<0.000000e+00> : vector<2x128xf32>
    %295 = tpu.matmul %294, %162, %cst_115 {dimension_numbers = #tpu.dot_dimension_numbers<[1], [0], [0], [1], [0, 0, 1, 1], [], []>} : vector<2x64xf32>, vector<64x128xf32>, vector<2x128xf32> -> vector<2x128xf32>
    %296 = vector.broadcast %164 : vector<1x128xf32> to vector<2x128xf32>
    %297 = arith.addf %295, %296 : vector<2x128xf32>
    %cst_116 = arith.constant dense<0.000000e+00> : vector<2x128xf32>
    %298 = tpu.matmul %263, %163, %cst_116 {dimension_numbers = #tpu.dot_dimension_numbers<[1], [0], [0], [1], [0, 0, 1, 1], [], []>} : vector<2x32xf32>, vector<32x128xf32>, vector<2x128xf32> -> vector<2x128xf32>
    %299 = arith.addf %297, %298 : vector<2x128xf32>
    %300 = vector.broadcast %165 : vector<1x128xf32> to vector<2x128xf32>
    %301 = arith.addf %299, %300 : vector<2x128xf32>
    %302 = vector.extract_strided_slice %301 {offsets = [0, 0], sizes = [2, 32], strides = [1, 1]} : vector<2x128xf32> to vector<2x32xf32>
    %303 = arith.negf %302 : vector<2x32xf32>
    %304 = math.exp %303 : vector<2x32xf32>
    %cst_117 = arith.constant 1.000000e+00 : f32
    %305 = vector.broadcast %cst_117 : f32 to vector<2x32xf32>
    %306 = arith.addf %305, %304 : vector<2x32xf32>
    %307 = arith.divf %305, %306 : vector<2x32xf32>
    %308 = vector.extract_strided_slice %301 {offsets = [0, 32], sizes = [2, 32], strides = [1, 1]} : vector<2x128xf32> to vector<2x32xf32>
    %309 = arith.negf %308 : vector<2x32xf32>
    %310 = math.exp %309 : vector<2x32xf32>
    %cst_118 = arith.constant 1.000000e+00 : f32
    %311 = vector.broadcast %cst_118 : f32 to vector<2x32xf32>
    %312 = arith.addf %311, %310 : vector<2x32xf32>
    %313 = arith.divf %311, %312 : vector<2x32xf32>
    %314 = vector.extract_strided_slice %301 {offsets = [0, 64], sizes = [2, 32], strides = [1, 1]} : vector<2x128xf32> to vector<2x32xf32>
    %315 = math.tanh %314 : vector<2x32xf32>
    %316 = vector.extract_strided_slice %301 {offsets = [0, 96], sizes = [2, 32], strides = [1, 1]} : vector<2x128xf32> to vector<2x32xf32>
    %317 = arith.negf %316 : vector<2x32xf32>
    %318 = math.exp %317 : vector<2x32xf32>
    %cst_119 = arith.constant 1.000000e+00 : f32
    %319 = vector.broadcast %cst_119 : f32 to vector<2x32xf32>
    %320 = arith.addf %319, %318 : vector<2x32xf32>
    %321 = arith.divf %319, %320 : vector<2x32xf32>
    %322 = arith.mulf %313, %261 : vector<2x32xf32>
    %323 = arith.mulf %307, %315 : vector<2x32xf32>
    %324 = arith.addf %322, %323 : vector<2x32xf32>
    %325 = math.tanh %324 : vector<2x32xf32>
    %326 = arith.mulf %321, %325 : vector<2x32xf32>
    %cst_120 = arith.constant dense<0.000000e+00> : vector<24x32xf32>
    %327 = tpu.matmul %160, %326, %cst_120 {dimension_numbers = #tpu.dot_dimension_numbers<[1], [0], [0], [1], [0, 0, 1, 1], [], []>} : vector<24x2xf32>, vector<2x32xf32>, vector<24x32xf32> -> vector<24x32xf32>
    %328 = arith.mulf %159, %327 : vector<24x32xf32>
    %cst_121 = arith.constant dense<0.000000e+00> : vector<24xf32>
    %329 = vector.multi_reduction <add>, %328, %cst_121 [1] : vector<24x32xf32> to vector<24xf32>
    %330 = vector.shape_cast %329 : vector<24xf32> to vector<24x1xf32>
    %cst_122 = arith.constant 5.000000e-01 : f32
    %331 = vector.broadcast %cst_122 : f32 to vector<24x2xf32>
    %332 = arith.cmpf ogt, %160, %331 : vector<24x2xf32>
    %cst_123 = arith.constant -1.000000e+30 : f32
    %333 = vector.shape_cast %330 : vector<24x1xf32> to vector<24x1xf32>
    %334 = vector.broadcast %333 : vector<24x1xf32> to vector<24x2xf32>
    %335 = vector.broadcast %cst_123 : f32 to vector<24x2xf32>
    %336 = arith.select %332, %334, %335 : vector<24x2xi1>, vector<24x2xf32>
    %cst_124 = arith.constant dense<0xFF800000> : vector<2xf32>
    %337 = vector.multi_reduction <maximumf>, %336, %cst_124 [0] : vector<24x2xf32> to vector<2xf32>
    %338 = vector.shape_cast %337 : vector<2xf32> to vector<1x2xf32>
    %339 = vector.broadcast %338 : vector<1x2xf32> to vector<24x2xf32>
    %340 = arith.mulf %160, %339 : vector<24x2xf32>
    %cst_125 = arith.constant dense<0.000000e+00> : vector<24xf32>
    %341 = vector.multi_reduction <add>, %340, %cst_125 [1] : vector<24x2xf32> to vector<24xf32>
    %342 = vector.shape_cast %341 : vector<24xf32> to vector<24x1xf32>
    %343 = arith.subf %330, %342 : vector<24x1xf32>
    %344 = math.exp %343 : vector<24x1xf32>
    %345 = vector.broadcast %344 : vector<24x1xf32> to vector<24x2xf32>
    %346 = arith.mulf %160, %345 : vector<24x2xf32>
    %cst_126 = arith.constant dense<0.000000e+00> : vector<2xf32>
    %347 = vector.multi_reduction <add>, %346, %cst_126 [0] : vector<24x2xf32> to vector<2xf32>
    %348 = vector.shape_cast %347 : vector<2xf32> to vector<1x2xf32>
    %349 = vector.broadcast %348 : vector<1x2xf32> to vector<24x2xf32>
    %350 = arith.mulf %160, %349 : vector<24x2xf32>
    %cst_127 = arith.constant dense<0.000000e+00> : vector<24xf32>
    %351 = vector.multi_reduction <add>, %350, %cst_127 [1] : vector<24x2xf32> to vector<24xf32>
    %352 = vector.shape_cast %351 : vector<24xf32> to vector<24x1xf32>
    %353 = arith.divf %344, %352 : vector<24x1xf32>
    %354 = vector.broadcast %353 : vector<24x1xf32> to vector<24x32xf32>
    %355 = arith.mulf %354, %159 : vector<24x32xf32>
    %cst_128 = arith.constant dense<0.000000e+00> : vector<2x32xf32>
    %356 = tpu.matmul %161, %355, %cst_128 {dimension_numbers = #tpu.dot_dimension_numbers<[1], [0], [0], [1], [0, 0, 1, 1], [], []>} : vector<2x24xf32>, vector<24x32xf32>, vector<2x32xf32> -> vector<2x32xf32>
    %357 = tpu.concatenate %326, %356 in 1 : vector<2x32xf32>, vector<2x32xf32> -> vector<2x64xf32>
    %c0_129 = arith.constant 0 : index
    %c0_130 = arith.constant 0 : index
    %358 = vector.load %arg24[%c0_129, %c0_130] : memref<2x64xf32, #tpu.memory_space<vmem>>, vector<2x64xf32>
    tpu.vector_store %arg24[%c0_129, %c0_130], %357 {strides = array<i32>} : memref<2x64xf32, #tpu.memory_space<vmem>>, vector<2x64xf32>,
    return
  }
}

</mosaic_0001>

<llo_original>
// kernel: ggnet_forward.1
$region0: #{ggnet_forward.1}
  #allocation0 [shape = 'u32[]', space=smem, size = 0x4, offset = 0x4, fixed_abs, tag = 'smem constant byte address 0x4 - core index']
  #allocation1 [shape = 'u32[144,128]{1,0:T(1,128)}', space=vmem, size = 0x12000, scoped, tag = 'internal scratch']
  %s0 = inlined_call_operand.vmem [shape: f32[24,16], index: 0, kind: input, shape index: {}]
  %s1 = inlined_call_operand.vmem [shape: f32[48,8], index: 1, kind: input, shape index: {}]
  %s2 = inlined_call_operand.vmem [shape: f32[48,24], index: 2, kind: input, shape index: {}]
  %s3 = inlined_call_operand.vmem [shape: f32[24,48], index: 3, kind: input, shape index: {}]
  %s4 = inlined_call_operand.vmem [shape: f32[24,2], index: 4, kind: input, shape index: {}]
  %s5 = inlined_call_operand.vmem [shape: f32[2,24], index: 5, kind: input, shape index: {}]
  %s6 = inlined_call_operand.vmem [shape: f32[32,1024], index: 6, kind: input, shape index: {}]
  %s7 = inlined_call_operand.vmem [shape: f32[1024,32], index: 7, kind: input, shape index: {}]
  %s8 = inlined_call_operand.vmem [shape: f32[8,64], index: 8, kind: input, shape index: {}]
  %s9 = inlined_call_operand.vmem [shape: f32[1,64], index: 9, kind: input, shape index: {}]
  %s10 = inlined_call_operand.vmem [shape: f32[64,1024], index: 10, kind: input, shape index: {}]
  %s11 = inlined_call_operand.vmem [shape: f32[1,1024], index: 11, kind: input, shape index: {}]
  %s12 = inlined_call_operand.vmem [shape: f32[16,32], index: 12, kind: input, shape index: {}]
  %s13 = inlined_call_operand.vmem [shape: f32[1,32], index: 13, kind: input, shape index: {}]
  %s14 = inlined_call_operand.vmem [shape: f32[32,32], index: 14, kind: input, shape index: {}]
  %s15 = inlined_call_operand.vmem [shape: f32[1,32], index: 15, kind: input, shape index: {}]
  %s16 = inlined_call_operand.vmem [shape: f32[32,96], index: 16, kind: input, shape index: {}]
  %s17 = inlined_call_operand.vmem [shape: f32[32,96], index: 17, kind: input, shape index: {}]
  %s18 = inlined_call_operand.vmem [shape: f32[1,96], index: 18, kind: input, shape index: {}]
  %s19 = inlined_call_operand.vmem [shape: f32[1,96], index: 19, kind: input, shape index: {}]
  %s20 = inlined_call_operand.vmem [shape: f32[64,128], index: 20, kind: input, shape index: {}]
  %s21 = inlined_call_operand.vmem [shape: f32[32,128], index: 21, kind: input, shape index: {}]
  %s22 = inlined_call_operand.vmem [shape: f32[1,128], index: 22, kind: input, shape index: {}]
  %s23 = inlined_call_operand.vmem [shape: f32[1,128], index: 23, kind: input, shape index: {}]
  %s24 = inlined_call_operand.hbm [shape: f32[2,64], index: 24, kind: output, shape index: {}]
  %s25 = sld [smem:[#allocation0]]
  $region106: #{ggnet_forward.1} parent=0
    _
  %s27 = ssub.s32 1, %s25
  %s28 = scalar_select 0, %s27, %s25
  $region1: #{ggnet_forward.1} parent=0
    #allocation2 [shape = 'u8[1024]{0}', space=vmem, size = 0x400, scoped, tag = 'output window, operand 0, single buffered']
    #allocation3 [shape = 's32[1]{0}', space=sflag, size = 0x4, scoped, tag = 'scoped memory for ggnet_forward.1']
    %29 = vsyncpa [#allocation3], 0
    // Predicated region
    $region2: #{ggnet_forward.1} parent=1 // pred_check
      _
    $region3: #{ggnet_forward.1} parent=1 // pred_check_branch
      %31 = sbr.rel (0) target = $region5
    $region4: #{ggnet_forward.1} parent=1 // pred_region
      _
    $region5: #{ggnet_forward.1} parent=1 // pred_fallthru
      _
    // Predicated region
    $region6: #{ggnet_forward.1} parent=1 // pred_check
      _
    $region7: #{ggnet_forward.1} parent=1 // pred_check_branch
      %33 = sbr.rel (0) target = $region9
    $region8: #{ggnet_forward.1} parent=1 // pred_region
      _
    $region9: #{ggnet_forward.1} parent=1 // pred_fallthru
      _
    // Predicated region
    $region10: #{ggnet_forward.1} parent=1 // pred_check
      _
    $region11: #{ggnet_forward.1} parent=1 // pred_check_branch
      %35 = sbr.rel (0) target = $region13
    $region12: #{ggnet_forward.1} parent=1 // pred_region
      _
    $region13: #{ggnet_forward.1} parent=1 // pred_fallthru
      _
    // Predicated region
    $region14: #{ggnet_forward.1} parent=1 // pred_check
      _
    $region15: #{ggnet_forward.1} parent=1 // pred_check_branch
      %37 = sbr.rel (0) target = $region17
    $region16: #{ggnet_forward.1} parent=1 // pred_region
      _
    $region17: #{ggnet_forward.1} parent=1 // pred_fallthru
      _
    // Predicated region
    $region18: #{ggnet_forward.1} parent=1 // pred_check
      _
    $region19: #{ggnet_forward.1} parent=1 // pred_check_branch
      %39 = sbr.rel (0) target = $region21
    $region20: #{ggnet_forward.1} parent=1 // pred_region
      _
    $region21: #{ggnet_forward.1} parent=1 // pred_fallthru
      _
    // Predicated region
    $region22: #{ggnet_forward.1} parent=1 // pred_check
      _
    $region23: #{ggnet_forward.1} parent=1 // pred_check_branch
      %41 = sbr.rel (0) target = $region25
    $region24: #{ggnet_forward.1} parent=1 // pred_region
      _
    $region25: #{ggnet_forward.1} parent=1 // pred_fallthru
      _
    // Predicated region
    $region26: #{ggnet_forward.1} parent=1 // pred_check
      _
    $region27: #{ggnet_forward.1} parent=1 // pred_check_branch
      %43 = sbr.rel (0) target = $region29
    $region28: #{ggnet_forward.1} parent=1 // pred_region
      _
    $region29: #{ggnet_forward.1} parent=1 // pred_fallthru
      _
    // Predicated region
    $region30: #{ggnet_forward.1} parent=1 // pred_check
      _
    $region31: #{ggnet_forward.1} parent=1 // pred_check_branch
      %45 = sbr.rel (0) target = $region33
    $region32: #{ggnet_forward.1} parent=1 // pred_region
      _
    $region33: #{ggnet_forward.1} parent=1 // pred_fallthru
      _
    // Predicated region
    $region34: #{ggnet_forward.1} parent=1 // pred_check
      _
    $region35: #{ggnet_forward.1} parent=1 // pred_check_branch
      %47 = sbr.rel (0) target = $region37
    $region36: #{ggnet_forward.1} parent=1 // pred_region
      _
    $region37: #{ggnet_forward.1} parent=1 // pred_fallthru
      _
    // Predicated region
    $region38: #{ggnet_forward.1} parent=1 // pred_check
      _
    $region39: #{ggnet_forward.1} parent=1 // pred_check_branch
      %49 = sbr.rel (0) target = $region41
    $region40: #{ggnet_forward.1} parent=1 // pred_region
      _
    $region41: #{ggnet_forward.1} parent=1 // pred_fallthru
      _
    // Predicated region
    $region42: #{ggnet_forward.1} parent=1 // pred_check
      _
    $region43: #{ggnet_forward.1} parent=1 // pred_check_branch
      %51 = sbr.rel (0) target = $region45
    $region44: #{ggnet_forward.1} parent=1 // pred_region
      _
    $region45: #{ggnet_forward.1} parent=1 // pred_fallthru
      _
    // Predicated region
    $region46: #{ggnet_forward.1} parent=1 // pred_check
      _
    $region47: #{ggnet_forward.1} parent=1 // pred_check_branch
      %53 = sbr.rel (0) target = $region49
    $region48: #{ggnet_forward.1} parent=1 // pred_region
      _
    $region49: #{ggnet_forward.1} parent=1 // pred_fallthru
      _
    // Predicated region
    $region50: #{ggnet_forward.1} parent=1 // pred_check
      _
    $region51: #{ggnet_forward.1} parent=1 // pred_check_branch
      %55 = sbr.rel (0) target = $region53
    $region52: #{ggnet_forward.1} parent=1 // pred_region
      _
    $region53: #{ggnet_forward.1} parent=1 // pred_fallthru
      _
    // Predicated region
    $region54: #{ggnet_forward.1} parent=1 // pred_check
      _
    $region55: #{ggnet_forward.1} parent=1 // pred_check_branch
      %57 = sbr.rel (0) target = $region57
    $region56: #{ggnet_forward.1} parent=1 // pred_region
      _
    $region57: #{ggnet_forward.1} parent=1 // pred_fallthru
      _
    // Predicated region
    $region58: #{ggnet_forward.1} parent=1 // pred_check
      _
    $region59: #{ggnet_forward.1} parent=1 // pred_check_branch
      %59 = sbr.rel (0) target = $region61
    $region60: #{ggnet_forward.1} parent=1 // pred_region
      _
    $region61: #{ggnet_forward.1} parent=1 // pred_fallthru
      _
    // Predicated region
    $region62: #{ggnet_forward.1} parent=1 // pred_check
      _
    $region63: #{ggnet_forward.1} parent=1 // pred_check_branch
      %61 = sbr.rel (0) target = $region65
    $region64: #{ggnet_forward.1} parent=1 // pred_region
      _
    $region65: #{ggnet_forward.1} parent=1 // pred_fallthru
      _
    // Predicated region
    $region66: #{ggnet_forward.1} parent=1 // pred_check
      _
    $region67: #{ggnet_forward.1} parent=1 // pred_check_branch
      %63 = sbr.rel (0) target = $region69
    $region68: #{ggnet_forward.1} parent=1 // pred_region
      _
    $region69: #{ggnet_forward.1} parent=1 // pred_fallthru
      _
    // Predicated region
    $region70: #{ggnet_forward.1} parent=1 // pred_check
      _
    $region71: #{ggnet_forward.1} parent=1 // pred_check_branch
      %65 = sbr.rel (0) target = $region73
    $region72: #{ggnet_forward.1} parent=1 // pred_region
      _
    $region73: #{ggnet_forward.1} parent=1 // pred_fallthru
      _
    // Predicated region
    $region74: #{ggnet_forward.1} parent=1 // pred_check
      _
    $region75: #{ggnet_forward.1} parent=1 // pred_check_branch
      %67 = sbr.rel (0) target = $region77
    $region76: #{ggnet_forward.1} parent=1 // pred_region
      _
    $region77: #{ggnet_forward.1} parent=1 // pred_fallthru
      _
    // Predicated region
    $region78: #{ggnet_forward.1} parent=1 // pred_check
      _
    $region79: #{ggnet_forward.1} parent=1 // pred_check_branch
      %69 = sbr.rel (0) target = $region81
    $region80: #{ggnet_forward.1} parent=1 // pred_region
      _
    $region81: #{ggnet_forward.1} parent=1 // pred_fallthru
      _
    // Predicated region
    $region82: #{ggnet_forward.1} parent=1 // pred_check
      _
    $region83: #{ggnet_forward.1} parent=1 // pred_check_branch
      %71 = sbr.rel (0) target = $region85
    $region84: #{ggnet_forward.1} parent=1 // pred_region
      _
    $region85: #{ggnet_forward.1} parent=1 // pred_fallthru
      _
    // Predicated region
    $region86: #{ggnet_forward.1} parent=1 // pred_check
      _
    $region87: #{ggnet_forward.1} parent=1 // pred_check_branch
      %73 = sbr.rel (0) target = $region89
    $region88: #{ggnet_forward.1} parent=1 // pred_region
      _
    $region89: #{ggnet_forward.1} parent=1 // pred_fallthru
      _
    // Predicated region
    $region90: #{ggnet_forward.1} parent=1 // pred_check
      _
    $region91: #{ggnet_forward.1} parent=1 // pred_check_branch
      %75 = sbr.rel (0) target = $region93
    $region92: #{ggnet_forward.1} parent=1 // pred_region
      _
    $region93: #{ggnet_forward.1} parent=1 // pred_fallthru
      _
    // Predicated region
    $region94: #{ggnet_forward.1} parent=1 // pred_check
      _
    $region95: #{ggnet_forward.1} parent=1 // pred_check_branch
      %77 = sbr.rel (0) target = $region97
    $region96: #{ggnet_forward.1} parent=1 // pred_region
      _
    $region97: #{ggnet_forward.1} parent=1 // pred_fallthru
      _
    %v78 = vld [vmem:[%s1] sm:$0xff]
    %v79 = vld [vmem:[%s1 + $0x8] sm:$0xff]
    %v80 = vld [vmem:[%s1 + $0x10] sm:$0xff]
    %v81 = vld [vmem:[%s1 + $0x18] sm:$0xff]
    %v82 = vld [vmem:[%s1 + $0x20] sm:$0xff]
    %v83 = vld [vmem:[%s1 + $0x28] sm:$0xff]
    %v84 = vld [vmem:[%s8] sm:$0xff]
    %v85 = vld [vmem:[%s9] sm:$0x1]
    %v87 = vlaneseq
    %v88 = vshrl.u32 %v87, 7
    %v89 = vsub.s32 0, %v88
    %v90 = vrot.slane %v85, %v89
    %vm92 = vcmask 64512
    %v94 = vsel %vm92, %v78, 0
    %v97 = vsel %vm92, %v79, 0
    %v100 = vsel %vm92, %v80, 0
    %v103 = vsel %vm92, %v81, 0
    %v106 = vsel %vm92, %v82, 0
    %v109 = vsel %vm92, %v83, 0
    %111 = vmatprep.subr.mxu0 0.0
    %112 = vmatpush1.msra.mxu0 %v84
    %113 = vmatprep.subr.mxu0 0.0
    %114 = vmatpush1.msra.mxu0 0.0
    %115 = vmatprep.subr.mxu0 0.0
    %116 = vmatpush1.msra.mxu0 0.0
    %117 = vmatprep.subr.mxu0 0.0
    %118 = vmatpush1.msra.mxu0 0.0
    %119 = vmatprep.subr.mxu0 0.0
    %120 = vmatpush1.msra.mxu0 0.0
    %121 = vmatprep.subr.mxu0 0.0
    %122 = vmatpush1.msra.mxu0 0.0
    %123 = vmatprep.subr.mxu0 0.0
    %124 = vmatpush1.msra.mxu0 0.0
    %125 = vmatprep.subr.mxu0 0.0
    %126 = vmatpush1.msra.mxu0 0.0
    %127 = vmatprep.subr.mxu0 0.0
    %128 = vmatpush1.msra.mxu0 0.0
    %129 = vmatprep.subr.mxu0 0.0
    %130 = vmatpush1.msra.mxu0 0.0
    %131 = vmatprep.subr.mxu0 0.0
    %132 = vmatpush1.msra.mxu0 0.0
    %133 = vmatprep.subr.mxu0 0.0
    %134 = vmatpush1.msra.mxu0 0.0
    %135 = vmatprep.subr.mxu0 0.0
    %136 = vmatpush1.msra.mxu0 0.0
    %137 = vmatprep.subr.mxu0 0.0
    %138 = vmatpush1.msra.mxu0 0.0
    %139 = vmatprep.subr.mxu0 0.0
    %140 = vmatpush1.msra.mxu0 0.0
    %141 = vmatprep.subr.mxu0 0.0
    %142 = vmatpush1.msra.mxu0 0.0
    %143 = vmatprep.subr.mxu0 0.0
    %144 = vmatpush1.msra.mxu0 0.0
    %145 = vmatprep.subr.mxu0 0.0
    %146 = vmatpush1.msra.mxu0 0.0
    %147 = vmatprep.subr.mxu0 0.0
    %148 = vmatpush1.msra.mxu0 0.0
    %149 = vmatprep.subr.mxu0 0.0
    %150 = vmatpush1.msra.mxu0 0.0
    %151 = vmatprep.subr.mxu0 0.0
    %152 = vmatpush1.msra.mxu0 0.0
    %153 = vmatprep.subr.mxu0 0.0
    %154 = vmatpush1.msra.mxu0 0.0
    %155 = vmatprep.subr.mxu0 0.0
    %156 = vmatpush1.msra.mxu0 0.0
    %157 = vmatprep.subr.mxu0 0.0
    %158 = vmatpush1.msra.mxu0 0.0
    %159 = vmatprep.subr.mxu0 0.0
    %160 = vmatpush1.msra.mxu0 0.0
    %161 = vmatprep.subr.mxu0 0.0
    %162 = vmatpush1.msra.mxu0 0.0
    %163 = vmatprep.subr.mxu0 0.0
    %164 = vmatpush1.msra.mxu0 0.0
    %165 = vmatprep.subr.mxu0 0.0
    %166 = vmatpush1.msra.mxu0 0.0
    %167 = vmatprep.subr.mxu0 0.0
    %168 = vmatpush1.msra.mxu0 0.0
    %169 = vmatprep.subr.mxu0 0.0
    %170 = vmatpush1.msra.mxu0 0.0
    %171 = vmatprep.subr.mxu0 0.0
    %172 = vmatpush1.msra.mxu0 0.0
    %173 = vmatprep.subr.mxu0 0.0
    %174 = vmatpush1.msra.mxu0 0.0
    %175 = vmatprep.mubr.f32.mxu0 0.0
    %176 = vmatmul.mubr.f32.gmra.mrb[0].mxu0 %v94
    %v177 = vpop.f32.mrb[0].mxu0
    %v178 = vadd.f32 %v90, %v177
    %v179 = vpop.f32.mrb[0].mxu0
    %180 = vmatprep.mubr.f32.mxu0 0.0
    %181 = vmatmul.mubr.f32.gmra.mrb[0].mxu0 %v97
    %v182 = vpop.f32.mrb[0].mxu0
    %v183 = vadd.f32 %v90, %v182
    %v184 = vpop.f32.mrb[0].mxu0
    %185 = vmatprep.mubr.f32.mxu0 0.0
    %186 = vmatmul.mubr.f32.gmra.mrb[0].mxu0 %v100
    %v187 = vpop.f32.mrb[0].mxu0
    %v188 = vadd.f32 %v90, %v187
    %v189 = vpop.f32.mrb[0].mxu0
    %190 = vmatprep.mubr.f32.mxu0 0.0
    %191 = vmatmul.mubr.f32.gmra.mrb[0].mxu0 %v103
    %v192 = vpop.f32.mrb[0].mxu0
    %v193 = vadd.f32 %v90, %v192
    %v194 = vpop.f32.mrb[0].mxu0
    %195 = vmatprep.mubr.f32.mxu0 0.0
    %196 = vmatmul.mubr.f32.gmra.mrb[0].mxu0 %v106
    %v197 = vpop.f32.mrb[0].mxu0
    %v198 = vadd.f32 %v90, %v197
    %v199 = vpop.f32.mrb[0].mxu0
    %200 = vmatprep.mubr.f32.mxu0 0.0
    %201 = vmatmul.mubr.f32.gmra.mrb[0].mxu0 %v109
    %v202 = vpop.f32.mrb[0].mxu0
    %v203 = vadd.f32 %v90, %v202
    %v204 = vpop.f32.mrb[0].mxu0
    %205 = vdwg.mxu0
    %v206 = vmax.f32 %v178, 0.0
    %v207 = vmax.f32 %v183, 0.0
    %v208 = vmax.f32 %v188, 0.0
    %v209 = vmax.f32 %v193, 0.0
    %v210 = vmax.f32 %v198, 0.0
    %v211 = vmax.f32 %v203, 0.0
    %v212 = vld [vmem:[%s10] sm:$0xff]
    %v213 = vld [vmem:[%s10 + $0x8] sm:$0xff]
    %v214 = vld [vmem:[%s10 + $0x10] sm:$0xff]
    %v215 = vld [vmem:[%s10 + $0x18] sm:$0xff]
    %v216 = vld [vmem:[%s10 + $0x20] sm:$0xff]
    %v217 = vld [vmem:[%s10 + $0x28] sm:$0xff]
    %v218 = vld [vmem:[%s10 + $0x30] sm:$0xff]
    %v219 = vld [vmem:[%s10 + $0x38] sm:$0xff]
    %v220 = vld [vmem:[%s10 + $0x40] sm:$0xff]
    %v221 = vld [vmem:[%s10 + $0x48] sm:$0xff]
    %v222 = vld [vmem:[%s10 + $0x50] sm:$0xff]
    %v223 = vld [vmem:[%s10 + $0x58] sm:$0xff]
    %v224 = vld [vmem:[%s10 + $0x60] sm:$0xff]
    %v225 = vld [vmem:[%s10 + $0x68] sm:$0xff]
    %v226 = vld [vmem:[%s10 + $0x70] sm:$0xff]
    %v227 = vld [vmem:[%s10 + $0x78] sm:$0xff]
    %v228 = vld [vmem:[%s10 + $0x80] sm:$0xff]
    %v229 = vld [vmem:[%s10 + $0x88] sm:$0xff]
    %v230 = vld [vmem:[%s10 + $0x90] sm:$0xff]
    %v231 = vld [vmem:[%s10 + $0x98] sm:$0xff]
    %v232 = vld [vmem:[%s10 + $0xa0] sm:$0xff]
    %v233 = vld [vmem:[%s10 + $0xa8] sm:$0xff]
    %v234 = vld [vmem:[%s10 + $0xb0] sm:$0xff]
    %v235 = vld [vmem:[%s10 + $0xb8] sm:$0xff]
    %v236 = vld [vmem:[%s10 + $0xc0] sm:$0xff]
    %v237 = vld [vmem:[%s10 + $0xc8] sm:$0xff]
    %v238 = vld [vmem:[%s10 + $0xd0] sm:$0xff]
    %v239 = vld [vmem:[%s10 + $0xd8] sm:$0xff]
    %v240 = vld [vmem:[%s10 + $0xe0] sm:$0xff]
    %v241 = vld [vmem:[%s10 + $0xe8] sm:$0xff]
    %v242 = vld [vmem:[%s10 + $0xf0] sm:$0xff]
    %v243 = vld [vmem:[%s10 + $0xf8] sm:$0xff]
    %v244 = vld [vmem:[%s10 + $0x100] sm:$0xff]
    %v245 = vld [vmem:[%s10 + $0x108] sm:$0xff]
    %v246 = vld [vmem:[%s10 + $0x110] sm:$0xff]
    %v247 = vld [vmem:[%s10 + $0x118] sm:$0xff]
    %v248 = vld [vmem:[%s10 + $0x120] sm:$0xff]
    %v249 = vld [vmem:[%s10 + $0x128] sm:$0xff]
    %v250 = vld [vmem:[%s10 + $0x130] sm:$0xff]
    %v251 = vld [vmem:[%s10 + $0x138] sm:$0xff]
    %v252 = vld [vmem:[%s10 + $0x140] sm:$0xff]
    %v253 = vld [vmem:[%s10 + $0x148] sm:$0xff]
    %v254 = vld [vmem:[%s10 + $0x150] sm:$0xff]
    %v255 = vld [vmem:[%s10 + $0x158] sm:$0xff]
    %v256 = vld [vmem:[%s10 + $0x160] sm:$0xff]
    %v257 = vld [vmem:[%s10 + $0x168] sm:$0xff]
    %v258 = vld [vmem:[%s10 + $0x170] sm:$0xff]
    %v259 = vld [vmem:[%s10 + $0x178] sm:$0xff]
    %v260 = vld [vmem:[%s10 + $0x180] sm:$0xff]
    %v261 = vld [vmem:[%s10 + $0x188] sm:$0xff]
    %v262 = vld [vmem:[%s10 + $0x190] sm:$0xff]
    %v263 = vld [vmem:[%s10 + $0x198] sm:$0xff]
    %v264 = vld [vmem:[%s10 + $0x1a0] sm:$0xff]
    %v265 = vld [vmem:[%s10 + $0x1a8] sm:$0xff]
    %v266 = vld [vmem:[%s10 + $0x1b0] sm:$0xff]
    %v267 = vld [vmem:[%s10 + $0x1b8] sm:$0xff]
    %v268 = vld [vmem:[%s10 + $0x1c0] sm:$0xff]
    %v269 = vld [vmem:[%s10 + $0x1c8] sm:$0xff]
    %v270 = vld [vmem:[%s10 + $0x1d0] sm:$0xff]
    %v271 = vld [vmem:[%s10 + $0x1d8] sm:$0xff]
    %v272 = vld [vmem:[%s10 + $0x1e0] sm:$0xff]
    %v273 = vld [vmem:[%s10 + $0x1e8] sm:$0xff]
    %v274 = vld [vmem:[%s10 + $0x1f0] sm:$0xff]
    %v275 = vld [vmem:[%s10 + $0x1f8] sm:$0xff]
    %v276 = vld [vmem:[%s11] sm:$0xff]
    %v278 = vlaneseq
    %v279 = vshrl.u32 %v278, 7
    %v280 = vsub.s32 0, %v279
    %v281 = vrot.slane %v276, %v280
    %v282 = vlaneseq
    %v283 = vshrl.u32 %v282, 7
    %v284 = vsub.s32 1, %v283
    %v285 = vrot.slane %v276, %v284
    %v286 = vlaneseq
    %v287 = vshrl.u32 %v286, 7
    %v288 = vsub.s32 2, %v287
    %v289 = vrot.slane %v276, %v288
    %v290 = vlaneseq
    %v291 = vshrl.u32 %v290, 7
    %v292 = vsub.s32 3, %v291
    %v293 = vrot.slane %v276, %v292
    %v294 = vlaneseq
    %v295 = vshrl.u32 %v294, 7
    %v296 = vsub.s32 4, %v295
    %v297 = vrot.slane %v276, %v296
    %v298 = vlaneseq
    %v299 = vshrl.u32 %v298, 7
    %v300 = vsub.s32 5, %v299
    %v301 = vrot.slane %v276, %v300
    %v302 = vlaneseq
    %v303 = vshrl.u32 %v302, 7
    %v304 = vsub.s32 6, %v303
    %v305 = vrot.slane %v276, %v304
    %v306 = vlaneseq
    %v307 = vshrl.u32 %v306, 7
    %v308 = vsub.s32 7, %v307
    %v309 = vrot.slane %v276, %v308
    %vm318 = vcmask 523264
    %v320 = vsel %vm318, %v206, 0
    %v323 = vsel %vm318, %v207, 0
    %v326 = vsel %vm318, %v208, 0
    %v329 = vsel %vm318, %v209, 0
    %v332 = vsel %vm318, %v210, 0
    %v335 = vsel %vm318, %v211, 0
    %337 = vmatprep.subr.mxu0 %v213
    %338 = vmatpush1.msra.mxu0 %v212
    %339 = vmatprep.subr.mxu0 %v221
    %340 = vmatpush1.msra.mxu0 %v220
    %341 = vmatprep.subr.mxu0 %v229
    %342 = vmatpush1.msra.mxu0 %v228
    %343 = vmatprep.subr.mxu0 %v237
    %344 = vmatpush1.msra.mxu0 %v236
    %345 = vmatprep.subr.mxu0 %v245
    %346 = vmatpush1.msra.mxu0 %v244
    %347 = vmatprep.subr.mxu0 %v253
    %348 = vmatpush1.msra.mxu0 %v252
    %349 = vmatprep.subr.mxu0 %v261
    %350 = vmatpush1.msra.mxu0 %v260
    %351 = vmatprep.subr.mxu0 %v269
    %352 = vmatpush1.msra.mxu0 %v268
    %353 = vmatprep.subr.mxu0 0.0
    %354 = vmatpush1.msra.mxu0 0.0
    %355 = vmatprep.subr.mxu0 0.0
    %356 = vmatpush1.msra.mxu0 0.0
    %357 = vmatprep.subr.mxu0 0.0
    %358 = vmatpush1.msra.mxu0 0.0
    %359 = vmatprep.subr.mxu0 0.0
    %360 = vmatpush1.msra.mxu0 0.0
    %361 = vmatprep.subr.mxu0 0.0
    %362 = vmatpush1.msra.mxu0 0.0
    %363 = vmatprep.subr.mxu0 0.0
    %364 = vmatpush1.msra.mxu0 0.0
    %365 = vmatprep.subr.mxu0 0.0
    %366 = vmatpush1.msra.mxu0 0.0
    %367 = vmatprep.subr.mxu0 0.0
    %368 = vmatpush1.msra.mxu0 0.0
    %369 = vmatprep.subr.mxu0 0.0
    %370 = vmatpush1.msra.mxu0 0.0
    %371 = vmatprep.subr.mxu0 0.0
    %372 = vmatpush1.msra.mxu0 0.0
    %373 = vmatprep.subr.mxu0 0.0
    %374 = vmatpush1.msra.mxu0 0.0
    %375 = vmatprep.subr.mxu0 0.0
    %376 = vmatpush1.msra.mxu0 0.0
    %377 = vmatprep.subr.mxu0 0.0
    %378 = vmatpush1.msra.mxu0 0.0
    %379 = vmatprep.subr.mxu0 0.0
    %380 = vmatpush1.msra.mxu0 0.0
    %381 = vmatprep.subr.mxu0 0.0
    %382 = vmatpush1.msra.mxu0 0.0
    %383 = vmatprep.subr.mxu0 0.0
    %384 = vmatpush1.msra.mxu0 0.0
    %385 = vmatprep.subr.mxu0 0.0
    %386 = vmatpush1.msra.mxu0 0.0
    %387 = vmatprep.subr.mxu0 0.0
    %388 = vmatpush1.msra.mxu0 0.0
    %389 = vmatprep.subr.mxu0 0.0
    %390 = vmatpush1.msra.mxu0 0.0
    %391 = vmatprep.subr.mxu0 0.0
    %392 = vmatpush1.msra.mxu0 0.0
    %393 = vmatprep.subr.mxu0 0.0
    %394 = vmatpush1.msra.mxu0 0.0
    %395 = vmatprep.subr.mxu0 0.0
    %396 = vmatpush1.msra.mxu0 0.0
    %397 = vmatprep.subr.mxu0 0.0
    %398 = vmatpush1.msra.mxu0 0.0
    %399 = vmatprep.subr.mxu0 0.0
    %400 = vmatpush1.msra.mxu0 0.0
    %401 = vmatprep.mubr.f32.mxu0 0.0
    %402 = vmatmul.mubr.f32.gmra.mrb[0].mxu0 %v320
    %v403 = vpop.f32.mrb[0].mxu0
    %v404 = vadd.f32 %v281, %v403
    %v405 = vpop.f32.mrb[0].mxu0
    %v406 = vadd.f32 %v285, %v405
    %407 = vmatprep.mubr.f32.mxu0 0.0
    %408 = vmatmul.mubr.f32.gmra.mrb[0].mxu0 %v323
    %v409 = vpop.f32.mrb[0].mxu0
    %v410 = vadd.f32 %v281, %v409
    %v411 = vpop.f32.mrb[0].mxu0
    %v412 = vadd.f32 %v285, %v411
    %413 = vmatprep.mubr.f32.mxu0 0.0
    %414 = vmatmul.mubr.f32.gmra.mrb[0].mxu0 %v326
    %v415 = vpop.f32.mrb[0].mxu0
    %v416 = vadd.f32 %v281, %v415
    %v417 = vpop.f32.mrb[0].mxu0
    %v418 = vadd.f32 %v285, %v417
    %419 = vmatprep.mubr.f32.mxu0 0.0
    %420 = vmatmul.mubr.f32.gmra.mrb[0].mxu0 %v329
    %v421 = vpop.f32.mrb[0].mxu0
    %v422 = vadd.f32 %v281, %v421
    %v423 = vpop.f32.mrb[0].mxu0
    %v424 = vadd.f32 %v285, %v423
    %425 = vmatprep.mubr.f32.mxu0 0.0
    %426 = vmatmul.mubr.f32.gmra.mrb[0].mxu0 %v332
    %v427 = vpop.f32.mrb[0].mxu0
    %v428 = vadd.f32 %v281, %v427
    %v429 = vpop.f32.mrb[0].mxu0
    %v430 = vadd.f32 %v285, %v429
    %431 = vmatprep.mubr.f32.mxu0 0.0
    %432 = vmatmul.mubr.f32.gmra.mrb[0].mxu0 %v335
    %v433 = vpop.f32.mrb[0].mxu0
    %v434 = vadd.f32 %v281, %v433
    %v435 = vpop.f32.mrb[0].mxu0
    %v436 = vadd.f32 %v285, %v435
    %437 = vdwg.mxu0
    %438 = vmatprep.subr.mxu0 %v215
    %439 = vmatpush1.msra.mxu0 %v214
    %440 = vmatprep.subr.mxu0 %v223
    %441 = vmatpush1.msra.mxu0 %v222
    %442 = vmatprep.subr.mxu0 %v231
    %443 = vmatpush1.msra.mxu0 %v230
    %444 = vmatprep.subr.mxu0 %v239
    %445 = vmatpush1.msra.mxu0 %v238
    %446 = vmatprep.subr.mxu0 %v247
    %447 = vmatpush1.msra.mxu0 %v246
    %448 = vmatprep.subr.mxu0 %v255
    %449 = vmatpush1.msra.mxu0 %v254
    %450 = vmatprep.subr.mxu0 %v263
    %451 = vmatpush1.msra.mxu0 %v262
    %452 = vmatprep.subr.mxu0 %v271
    %453 = vmatpush1.msra.mxu0 %v270
    %454 = vmatprep.subr.mxu0 0.0
    %455 = vmatpush1.msra.mxu0 0.0
    %456 = vmatprep.subr.mxu0 0.0
    %457 = vmatpush1.msra.mxu0 0.0
    %458 = vmatprep.subr.mxu0 0.0
    %459 = vmatpush1.msra.mxu0 0.0
    %460 = vmatprep.subr.mxu0 0.0
    %461 = vmatpush1.msra.mxu0 0.0
    %462 = vmatprep.subr.mxu0 0.0
    %463 = vmatpush1.msra.mxu0 0.0
    %464 = vmatprep.subr.mxu0 0.0
    %465 = vmatpush1.msra.mxu0 0.0
    %466 = vmatprep.subr.mxu0 0.0
    %467 = vmatpush1.msra.mxu0 0.0
    %468 = vmatprep.subr.mxu0 0.0
    %469 = vmatpush1.msra.mxu0 0.0
    %470 = vmatprep.subr.mxu0 0.0
    %471 = vmatpush1.msra.mxu0 0.0
    %472 = vmatprep.subr.mxu0 0.0
    %473 = vmatpush1.msra.mxu0 0.0
    %474 = vmatprep.subr.mxu0 0.0
    %475 = vmatpush1.msra.mxu0 0.0
    %476 = vmatprep.subr.mxu0 0.0
    %477 = vmatpush1.msra.mxu0 0.0
    %478 = vmatprep.subr.mxu0 0.0
    %479 = vmatpush1.msra.mxu0 0.0
    %480 = vmatprep.subr.mxu0 0.0
    %481 = vmatpush1.msra.mxu0 0.0
    %482 = vmatprep.subr.mxu0 0.0
    %483 = vmatpush1.msra.mxu0 0.0
    %484 = vmatprep.subr.mxu0 0.0
    %485 = vmatpush1.msra.mxu0 0.0
    %486 = vmatprep.subr.mxu0 0.0
    %487 = vmatpush1.msra.mxu0 0.0
    %488 = vmatprep.subr.mxu0 0.0
    %489 = vmatpush1.msra.mxu0 0.0
    %490 = vmatprep.subr.mxu0 0.0
    %491 = vmatpush1.msra.mxu0 0.0
    %492 = vmatprep.subr.mxu0 0.0
    %493 = vmatpush1.msra.mxu0 0.0
    %494 = vmatprep.subr.mxu0 0.0
    %495 = vmatpush1.msra.mxu0 0.0
    %496 = vmatprep.subr.mxu0 0.0
    %497 = vmatpush1.msra.mxu0 0.0
    %498 = vmatprep.subr.mxu0 0.0
    %499 = vmatpush1.msra.mxu0 0.0
    %500 = vmatprep.subr.mxu0 0.0
    %501 = vmatpush1.msra.mxu0 0.0
    %502 = vmatprep.mubr.f32.mxu0 0.0
    %503 = vmatmul.mubr.f32.gmra.mrb[0].mxu0 %v320
    %v504 = vpop.f32.mrb[0].mxu0
    %v505 = vadd.f32 %v289, %v504
    %v506 = vpop.f32.mrb[0].mxu0
    %v507 = vadd.f32 %v293, %v506
    %508 = vmatprep.mubr.f32.mxu0 0.0
    %509 = vmatmul.mubr.f32.gmra.mrb[0].mxu0 %v323
    %v510 = vpop.f32.mrb[0].mxu0
    %v511 = vadd.f32 %v289, %v510
    %v512 = vpop.f32.mrb[0].mxu0
    %v513 = vadd.f32 %v293, %v512
    %514 = vmatprep.mubr.f32.mxu0 0.0
    %515 = vmatmul.mubr.f32.gmra.mrb[0].mxu0 %v326
    %v516 = vpop.f32.mrb[0].mxu0
    %v517 = vadd.f32 %v289, %v516
    %v518 = vpop.f32.mrb[0].mxu0
    %v519 = vadd.f32 %v293, %v518
    %520 = vmatprep.mubr.f32.mxu0 0.0
    %521 = vmatmul.mubr.f32.gmra.mrb[0].mxu0 %v329
    %v522 = vpop.f32.mrb[0].mxu0
    %v523 = vadd.f32 %v289, %v522
    %v524 = vpop.f32.mrb[0].mxu0
    %v525 = vadd.f32 %v293, %v524
    %526 = vmatprep.mubr.f32.mxu0 0.0
    %527 = vmatmul.mubr.f32.gmra.mrb[0].mxu0 %v332
    %v528 = vpop.f32.mrb[0].mxu0
    %v529 = vadd.f32 %v289, %v528
    %v530 = vpop.f32.mrb[0].mxu0
    %v531 = vadd.f32 %v293, %v530
    %532 = vmatprep.mubr.f32.mxu0 0.0
    %533 = vmatmul.mubr.f32.gmra.mrb[0].mxu0 %v335
    %v534 = vpop.f32.mrb[0].mxu0
    %v535 = vadd.f32 %v289, %v534
    %v536 = vpop.f32.mrb[0].mxu0
    %v537 = vadd.f32 %v293, %v536
    %538 = vdwg.mxu0
    %539 = vmatprep.subr.mxu0 %v217
    %540 = vmatpush1.msra.mxu0 %v216
    %541 = vmatprep.subr.mxu0 %v225
    %542 = vmatpush1.msra.mxu0 %v224
    %543 = vmatprep.subr.mxu0 %v233
    %544 = vmatpush1.msra.mxu0 %v232
    %545 = vmatprep.subr.mxu0 %v241
    %546 = vmatpush1.msra.mxu0 %v240
    %547 = vmatprep.subr.mxu0 %v249
    %548 = vmatpush1.msra.mxu0 %v248
    %549 = vmatprep.subr.mxu0 %v257
    %550 = vmatpush1.msra.mxu0 %v256
    %551 = vmatprep.subr.mxu0 %v265
    %552 = vmatpush1.msra.mxu0 %v264
    %553 = vmatprep.subr.mxu0 %v273
    %554 = vmatpush1.msra.mxu0 %v272
    %555 = vmatprep.subr.mxu0 0.0
    %556 = vmatpush1.msra.mxu0 0.0
    %557 = vmatprep.subr.mxu0 0.0
    %558 = vmatpush1.msra.mxu0 0.0
    %559 = vmatprep.subr.mxu0 0.0
    %560 = vmatpush1.msra.mxu0 0.0
    %561 = vmatprep.subr.mxu0 0.0
    %562 = vmatpush1.msra.mxu0 0.0
    %563 = vmatprep.subr.mxu0 0.0
    %564 = vmatpush1.msra.mxu0 0.0
    %565 = vmatprep.subr.mxu0 0.0
    %566 = vmatpush1.msra.mxu0 0.0
    %567 = vmatprep.subr.mxu0 0.0
    %568 = vmatpush1.msra.mxu0 0.0
    %569 = vmatprep.subr.mxu0 0.0
    %570 = vmatpush1.msra.mxu0 0.0
    %571 = vmatprep.subr.mxu0 0.0
    %572 = vmatpush1.msra.mxu0 0.0
    %573 = vmatprep.subr.mxu0 0.0
    %574 = vmatpush1.msra.mxu0 0.0
    %575 = vmatprep.subr.mxu0 0.0
    %576 = vmatpush1.msra.mxu0 0.0
    %577 = vmatprep.subr.mxu0 0.0
    %578 = vmatpush1.msra.mxu0 0.0
    %579 = vmatprep.subr.mxu0 0.0
    %580 = vmatpush1.msra.mxu0 0.0
    %581 = vmatprep.subr.mxu0 0.0
    %582 = vmatpush1.msra.mxu0 0.0
    %583 = vmatprep.subr.mxu0 0.0
    %584 = vmatpush1.msra.mxu0 0.0
    %585 = vmatprep.subr.mxu0 0.0
    %586 = vmatpush1.msra.mxu0 0.0
    %587 = vmatprep.subr.mxu0 0.0
    %588 = vmatpush1.msra.mxu0 0.0
    %589 = vmatprep.subr.mxu0 0.0
    %590 = vmatpush1.msra.mxu0 0.0
    %591 = vmatprep.subr.mxu0 0.0
    %592 = vmatpush1.msra.mxu0 0.0
    %593 = vmatprep.subr.mxu0 0.0
    %594 = vmatpush1.msra.mxu0 0.0
    %595 = vmatprep.subr.mxu0 0.0
    %596 = vmatpush1.msra.mxu0 0.0
    %597 = vmatprep.subr.mxu0 0.0
    %598 = vmatpush1.msra.mxu0 0.0
    %599 = vmatprep.subr.mxu0 0.0
    %600 = vmatpush1.msra.mxu0 0.0
    %601 = vmatprep.subr.mxu0 0.0
    %602 = vmatpush1.msra.mxu0 0.0
    %603 = vmatprep.mubr.f32.mxu0 0.0
    %604 = vmatmul.mubr.f32.gmra.mrb[0].mxu0 %v320
    %v605 = vpop.f32.mrb[0].mxu0
    %v606 = vadd.f32 %v297, %v605
    %v607 = vpop.f32.mrb[0].mxu0
    %v608 = vadd.f32 %v301, %v607
    %609 = vmatprep.mubr.f32.mxu0 0.0
    %610 = vmatmul.mubr.f32.gmra.mrb[0].mxu0 %v323
    %v611 = vpop.f32.mrb[0].mxu0
    %v612 = vadd.f32 %v297, %v611
    %v613 = vpop.f32.mrb[0].mxu0
    %v614 = vadd.f32 %v301, %v613
    %615 = vmatprep.mubr.f32.mxu0 0.0
    %616 = vmatmul.mubr.f32.gmra.mrb[0].mxu0 %v326
    %v617 = vpop.f32.mrb[0].mxu0
    %v618 = vadd.f32 %v297, %v617
    %v619 = vpop.f32.mrb[0].mxu0
    %v620 = vadd.f32 %v301, %v619
    %621 = vmatprep.mubr.f32.mxu0 0.0
    %622 = vmatmul.mubr.f32.gmra.mrb[0].mxu0 %v329
    %v623 = vpop.f32.mrb[0].mxu0
    %v624 = vadd.f32 %v297, %v623
    %v625 = vpop.f32.mrb[0].mxu0
    %v626 = vadd.f32 %v301, %v625
    %627 = vmatprep.mubr.f32.mxu0 0.0
    %628 = vmatmul.mubr.f32.gmra.mrb[0].mxu0 %v332
    %v629 = vpop.f32.mrb[0].mxu0
    %v630 = vadd.f32 %v297, %v629
    %v631 = vpop.f32.mrb[0].mxu0
    %v632 = vadd.f32 %v301, %v631
    %633 = vmatprep.mubr.f32.mxu0 0.0
    %634 = vmatmul.mubr.f32.gmra.mrb[0].mxu0 %v335
    %v635 = vpop.f32.mrb[0].mxu0
    %v636 = vadd.f32 %v297, %v635
    %v637 = vpop.f32.mrb[0].mxu0
    %v638 = vadd.f32 %v301, %v637
    %639 = vdwg.mxu0
    %640 = vmatprep.subr.mxu0 %v219
    %641 = vmatpush1.msra.mxu0 %v218
    %642 = vmatprep.subr.mxu0 %v227
    %643 = vmatpush1.msra.mxu0 %v226
    %644 = vmatprep.subr.mxu0 %v235
    %645 = vmatpush1.msra.mxu0 %v234
    %646 = vmatprep.subr.mxu0 %v243
    %647 = vmatpush1.msra.mxu0 %v242
    %648 = vmatprep.subr.mxu0 %v251
    %649 = vmatpush1.msra.mxu0 %v250
    %650 = vmatprep.subr.mxu0 %v259
    %651 = vmatpush1.msra.mxu0 %v258
    %652 = vmatprep.subr.mxu0 %v267
    %653 = vmatpush1.msra.mxu0 %v266
    %654 = vmatprep.subr.mxu0 %v275
    %655 = vmatpush1.msra.mxu0 %v274
    %656 = vmatprep.subr.mxu0 0.0
    %657 = vmatpush1.msra.mxu0 0.0
    %658 = vmatprep.subr.mxu0 0.0
    %659 = vmatpush1.msra.mxu0 0.0
    %660 = vmatprep.subr.mxu0 0.0
    %661 = vmatpush1.msra.mxu0 0.0
    %662 = vmatprep.subr.mxu0 0.0
    %663 = vmatpush1.msra.mxu0 0.0
    %664 = vmatprep.subr.mxu0 0.0
    %665 = vmatpush1.msra.mxu0 0.0
    %666 = vmatprep.subr.mxu0 0.0
    %667 = vmatpush1.msra.mxu0 0.0
    %668 = vmatprep.subr.mxu0 0.0
    %669 = vmatpush1.msra.mxu0 0.0
    %670 = vmatprep.subr.mxu0 0.0
    %671 = vmatpush1.msra.mxu0 0.0
    %672 = vmatprep.subr.mxu0 0.0
    %673 = vmatpush1.msra.mxu0 0.0
    %674 = vmatprep.subr.mxu0 0.0
    %675 = vmatpush1.msra.mxu0 0.0
    %676 = vmatprep.subr.mxu0 0.0
    %677 = vmatpush1.msra.mxu0 0.0
    %678 = vmatprep.subr.mxu0 0.0
    %679 = vmatpush1.msra.mxu0 0.0
    %680 = vmatprep.subr.mxu0 0.0
    %681 = vmatpush1.msra.mxu0 0.0
    %682 = vmatprep.subr.mxu0 0.0
    %683 = vmatpush1.msra.mxu0 0.0
    %684 = vmatprep.subr.mxu0 0.0
    %685 = vmatpush1.msra.mxu0 0.0
    %686 = vmatprep.subr.mxu0 0.0
    %687 = vmatpush1.msra.mxu0 0.0
    %688 = vmatprep.subr.mxu0 0.0
    %689 = vmatpush1.msra.mxu0 0.0
    %690 = vmatprep.subr.mxu0 0.0
    %691 = vmatpush1.msra.mxu0 0.0
    %692 = vmatprep.subr.mxu0 0.0
    %693 = vmatpush1.msra.mxu0 0.0
    %694 = vmatprep.subr.mxu0 0.0
    %695 = vmatpush1.msra.mxu0 0.0
    %696 = vmatprep.subr.mxu0 0.0
    %697 = vmatpush1.msra.mxu0 0.0
    %698 = vmatprep.subr.mxu0 0.0
    %699 = vmatpush1.msra.mxu0 0.0
    %700 = vmatprep.subr.mxu0 0.0
    %701 = vmatpush1.msra.mxu0 0.0
    %702 = vmatprep.subr.mxu0 0.0
    %703 = vmatpush1.msra.mxu0 0.0
    %704 = vmatprep.mubr.f32.mxu0 0.0
    %705 = vmatmul.mubr.f32.gmra.mrb[0].mxu0 %v320
    %v706 = vpop.f32.mrb[0].mxu0
    %v707 = vadd.f32 %v305, %v706
    %v708 = vpop.f32.mrb[0].mxu0
    %v709 = vadd.f32 %v309, %v708
    %710 = vmatprep.mubr.f32.mxu0 0.0
    %711 = vmatmul.mubr.f32.gmra.mrb[0].mxu0 %v323
    %v712 = vpop.f32.mrb[0].mxu0
    %v713 = vadd.f32 %v305, %v712
    %v714 = vpop.f32.mrb[0].mxu0
    %v715 = vadd.f32 %v309, %v714
    %716 = vmatprep.mubr.f32.mxu0 0.0
    %717 = vmatmul.mubr.f32.gmra.mrb[0].mxu0 %v326
    %v718 = vpop.f32.mrb[0].mxu0
    %v719 = vadd.f32 %v305, %v718
    %v720 = vpop.f32.mrb[0].mxu0
    %v721 = vadd.f32 %v309, %v720
    %722 = vmatprep.mubr.f32.mxu0 0.0
    %723 = vmatmul.mubr.f32.gmra.mrb[0].mxu0 %v329
    %v724 = vpop.f32.mrb[0].mxu0
    %v725 = vadd.f32 %v305, %v724
    %v726 = vpop.f32.mrb[0].mxu0
    %v727 = vadd.f32 %v309, %v726
    %728 = vmatprep.mubr.f32.mxu0 0.0
    %729 = vmatmul.mubr.f32.gmra.mrb[0].mxu0 %v332
    %v730 = vpop.f32.mrb[0].mxu0
    %v731 = vadd.f32 %v305, %v730
    %v732 = vpop.f32.mrb[0].mxu0
    %v733 = vadd.f32 %v309, %v732
    %734 = vmatprep.mubr.f32.mxu0 0.0
    %735 = vmatmul.mubr.f32.gmra.mrb[0].mxu0 %v335
    %v736 = vpop.f32.mrb[0].mxu0
    %v737 = vadd.f32 %v305, %v736
    %v738 = vpop.f32.mrb[0].mxu0
    %v739 = vadd.f32 %v309, %v738
    %740 = vdwg.mxu0
    %v741 = vld [vmem:[%s2] sm:$0xff]
    %v742 = vld [vmem:[%s2 + $0x8] sm:$0xff]
    %v743 = vld [vmem:[%s2 + $0x10] sm:$0xff]
    %v744 = vld [vmem:[%s2 + $0x18] sm:$0xff]
    %v745 = vld [vmem:[%s2 + $0x20] sm:$0xff]
    %v746 = vld [vmem:[%s2 + $0x28] sm:$0xff]
    %v747 = vld [vmem:[%s3] sm:$0xff]
    %v748 = vld [vmem:[%s3 + $0x8] sm:$0xff]
    %v749 = vld [vmem:[%s3 + $0x10] sm:$0xff]
    %v750 = vld [vmem:[%s6] sm:$0xff]
    %v751 = vld [vmem:[%s6 + $0x8] sm:$0xff]
    %v752 = vld [vmem:[%s6 + $0x10] sm:$0xff]
    %v753 = vld [vmem:[%s6 + $0x18] sm:$0xff]
    %v754 = vld [vmem:[%s6 + $0x20] sm:$0xff]
    %v755 = vld [vmem:[%s6 + $0x28] sm:$0xff]
    %v756 = vld [vmem:[%s6 + $0x30] sm:$0xff]
    %v757 = vld [vmem:[%s6 + $0x38] sm:$0xff]
    %v758 = vld [vmem:[%s6 + $0x40] sm:$0xff]
    %v759 = vld [vmem:[%s6 + $0x48] sm:$0xff]
    %v760 = vld [vmem:[%s6 + $0x50] sm:$0xff]
    %v761 = vld [vmem:[%s6 + $0x58] sm:$0xff]
    %v762 = vld [vmem:[%s6 + $0x60] sm:$0xff]
    %v763 = vld [vmem:[%s6 + $0x68] sm:$0xff]
    %v764 = vld [vmem:[%s6 + $0x70] sm:$0xff]
    %v765 = vld [vmem:[%s6 + $0x78] sm:$0xff]
    %v766 = vld [vmem:[%s6 + $0x80] sm:$0xff]
    %v767 = vld [vmem:[%s6 + $0x88] sm:$0xff]
    %v768 = vld [vmem:[%s6 + $0x90] sm:$0xff]
    %v769 = vld [vmem:[%s6 + $0x98] sm:$0xff]
    %v770 = vld [vmem:[%s6 + $0xa0] sm:$0xff]
    %v771 = vld [vmem:[%s6 + $0xa8] sm:$0xff]
    %v772 = vld [vmem:[%s6 + $0xb0] sm:$0xff]
    %v773 = vld [vmem:[%s6 + $0xb8] sm:$0xff]
    %v774 = vld [vmem:[%s6 + $0xc0] sm:$0xff]
    %v775 = vld [vmem:[%s6 + $0xc8] sm:$0xff]
    %v776 = vld [vmem:[%s6 + $0xd0] sm:$0xff]
    %v777 = vld [vmem:[%s6 + $0xd8] sm:$0xff]
    %v778 = vld [vmem:[%s6 + $0xe0] sm:$0xff]
    %v779 = vld [vmem:[%s6 + $0xe8] sm:$0xff]
    %v780 = vld [vmem:[%s6 + $0xf0] sm:$0xff]
    %v781 = vld [vmem:[%s6 + $0xf8] sm:$0xff]
    %v782 = vld [vmem:[%s7] sm:$0xff]
    %v783 = vld [vmem:[%s7 + $0x8] sm:$0xff]
    %v784 = vld [vmem:[%s7 + $0x10] sm:$0xff]
    %v785 = vld [vmem:[%s7 + $0x18] sm:$0xff]
    %v786 = vld [vmem:[%s7 + $0x20] sm:$0xff]
    %v787 = vld [vmem:[%s7 + $0x28] sm:$0xff]
    %v788 = vld [vmem:[%s7 + $0x30] sm:$0xff]
    %v789 = vld [vmem:[%s7 + $0x38] sm:$0xff]
    %v790 = vld [vmem:[%s7 + $0x40] sm:$0xff]
    %v791 = vld [vmem:[%s7 + $0x48] sm:$0xff]
    %v792 = vld [vmem:[%s7 + $0x50] sm:$0xff]
    %v793 = vld [vmem:[%s7 + $0x58] sm:$0xff]
    %v794 = vld [vmem:[%s7 + $0x60] sm:$0xff]
    %v795 = vld [vmem:[%s7 + $0x68] sm:$0xff]
    %v796 = vld [vmem:[%s7 + $0x70] sm:$0xff]
    %v797 = vld [vmem:[%s7 + $0x78] sm:$0xff]
    %v798 = vld [vmem:[%s7 + $0x80] sm:$0xff]
    %v799 = vld [vmem:[%s7 + $0x88] sm:$0xff]
    %v800 = vld [vmem:[%s7 + $0x90] sm:$0xff]
    %v801 = vld [vmem:[%s7 + $0x98] sm:$0xff]
    %v802 = vld [vmem:[%s7 + $0xa0] sm:$0xff]
    %v803 = vld [vmem:[%s7 + $0xa8] sm:$0xff]
    %v804 = vld [vmem:[%s7 + $0xb0] sm:$0xff]
    %v805 = vld [vmem:[%s7 + $0xb8] sm:$0xff]
    %v806 = vld [vmem:[%s7 + $0xc0] sm:$0xff]
    %v807 = vld [vmem:[%s7 + $0xc8] sm:$0xff]
    %v808 = vld [vmem:[%s7 + $0xd0] sm:$0xff]
    %v809 = vld [vmem:[%s7 + $0xd8] sm:$0xff]
    %v810 = vld [vmem:[%s7 + $0xe0] sm:$0xff]
    %v811 = vld [vmem:[%s7 + $0xe8] sm:$0xff]
    %v812 = vld [vmem:[%s7 + $0xf0] sm:$0xff]
    %v813 = vld [vmem:[%s7 + $0xf8] sm:$0xff]
    %v814 = vld [vmem:[%s7 + $0x100] sm:$0xff]
    %v815 = vld [vmem:[%s7 + $0x108] sm:$0xff]
    %v816 = vld [vmem:[%s7 + $0x110] sm:$0xff]
    %v817 = vld [vmem:[%s7 + $0x118] sm:$0xff]
    %v818 = vld [vmem:[%s7 + $0x120] sm:$0xff]
    %v819 = vld [vmem:[%s7 + $0x128] sm:$0xff]
    %v820 = vld [vmem:[%s7 + $0x130] sm:$0xff]
    %v821 = vld [vmem:[%s7 + $0x138] sm:$0xff]
    %v822 = vld [vmem:[%s7 + $0x140] sm:$0xff]
    %v823 = vld [vmem:[%s7 + $0x148] sm:$0xff]
    %v824 = vld [vmem:[%s7 + $0x150] sm:$0xff]
    %v825 = vld [vmem:[%s7 + $0x158] sm:$0xff]
    %v826 = vld [vmem:[%s7 + $0x160] sm:$0xff]
    %v827 = vld [vmem:[%s7 + $0x168] sm:$0xff]
    %v828 = vld [vmem:[%s7 + $0x170] sm:$0xff]
    %v829 = vld [vmem:[%s7 + $0x178] sm:$0xff]
    %v830 = vld [vmem:[%s7 + $0x180] sm:$0xff]
    %v831 = vld [vmem:[%s7 + $0x188] sm:$0xff]
    %v832 = vld [vmem:[%s7 + $0x190] sm:$0xff]
    %v833 = vld [vmem:[%s7 + $0x198] sm:$0xff]
    %v834 = vld [vmem:[%s7 + $0x1a0] sm:$0xff]
    %v835 = vld [vmem:[%s7 + $0x1a8] sm:$0xff]
    %v836 = vld [vmem:[%s7 + $0x1b0] sm:$0xff]
    %v837 = vld [vmem:[%s7 + $0x1b8] sm:$0xff]
    %v838 = vld [vmem:[%s7 + $0x1c0] sm:$0xff]
    %v839 = vld [vmem:[%s7 + $0x1c8] sm:$0xff]
    %v840 = vld [vmem:[%s7 + $0x1d0] sm:$0xff]
    %v841 = vld [vmem:[%s7 + $0x1d8] sm:$0xff]
    %v842 = vld [vmem:[%s7 + $0x1e0] sm:$0xff]
    %v843 = vld [vmem:[%s7 + $0x1e8] sm:$0xff]
    %v844 = vld [vmem:[%s7 + $0x1f0] sm:$0xff]
    %v845 = vld [vmem:[%s7 + $0x1f8] sm:$0xff]
    %v846 = vld [vmem:[%s7 + $0x200] sm:$0xff]
    %v847 = vld [vmem:[%s7 + $0x208] sm:$0xff]
    %v848 = vld [vmem:[%s7 + $0x210] sm:$0xff]
    %v849 = vld [vmem:[%s7 + $0x218] sm:$0xff]
    %v850 = vld [vmem:[%s7 + $0x220] sm:$0xff]
    %v851 = vld [vmem:[%s7 + $0x228] sm:$0xff]
    %v852 = vld [vmem:[%s7 + $0x230] sm:$0xff]
    %v853 = vld [vmem:[%s7 + $0x238] sm:$0xff]
    %v854 = vld [vmem:[%s7 + $0x240] sm:$0xff]
    %v855 = vld [vmem:[%s7 + $0x248] sm:$0xff]
    %v856 = vld [vmem:[%s7 + $0x250] sm:$0xff]
    %v857 = vld [vmem:[%s7 + $0x258] sm:$0xff]
    %v858 = vld [vmem:[%s7 + $0x260] sm:$0xff]
    %v859 = vld [vmem:[%s7 + $0x268] sm:$0xff]
    %v860 = vld [vmem:[%s7 + $0x270] sm:$0xff]
    %v861 = vld [vmem:[%s7 + $0x278] sm:$0xff]
    %v862 = vld [vmem:[%s7 + $0x280] sm:$0xff]
    %v863 = vld [vmem:[%s7 + $0x288] sm:$0xff]
    %v864 = vld [vmem:[%s7 + $0x290] sm:$0xff]
    %v865 = vld [vmem:[%s7 + $0x298] sm:$0xff]
    %v866 = vld [vmem:[%s7 + $0x2a0] sm:$0xff]
    %v867 = vld [vmem:[%s7 + $0x2a8] sm:$0xff]
    %v868 = vld [vmem:[%s7 + $0x2b0] sm:$0xff]
    %v869 = vld [vmem:[%s7 + $0x2b8] sm:$0xff]
    %v870 = vld [vmem:[%s7 + $0x2c0] sm:$0xff]
    %v871 = vld [vmem:[%s7 + $0x2c8] sm:$0xff]
    %v872 = vld [vmem:[%s7 + $0x2d0] sm:$0xff]
    %v873 = vld [vmem:[%s7 + $0x2d8] sm:$0xff]
    %v874 = vld [vmem:[%s7 + $0x2e0] sm:$0xff]
    %v875 = vld [vmem:[%s7 + $0x2e8] sm:$0xff]
    %v876 = vld [vmem:[%s7 + $0x2f0] sm:$0xff]
    %v877 = vld [vmem:[%s7 + $0x2f8] sm:$0xff]
    %v878 = vld [vmem:[%s7 + $0x300] sm:$0xff]
    %v879 = vld [vmem:[%s7 + $0x308] sm:$0xff]
    %v880 = vld [vmem:[%s7 + $0x310] sm:$0xff]
    %v881 = vld [vmem:[%s7 + $0x318] sm:$0xff]
    %v882 = vld [vmem:[%s7 + $0x320] sm:$0xff]
    %v883 = vld [vmem:[%s7 + $0x328] sm:$0xff]
    %v884 = vld [vmem:[%s7 + $0x330] sm:$0xff]
    %v885 = vld [vmem:[%s7 + $0x338] sm:$0xff]
    %v886 = vld [vmem:[%s7 + $0x340] sm:$0xff]
    %v887 = vld [vmem:[%s7 + $0x348] sm:$0xff]
    %v888 = vld [vmem:[%s7 + $0x350] sm:$0xff]
    %v889 = vld [vmem:[%s7 + $0x358] sm:$0xff]
    %v890 = vld [vmem:[%s7 + $0x360] sm:$0xff]
    %v891 = vld [vmem:[%s7 + $0x368] sm:$0xff]
    %v892 = vld [vmem:[%s7 + $0x370] sm:$0xff]
    %v893 = vld [vmem:[%s7 + $0x378] sm:$0xff]
    %v894 = vld [vmem:[%s7 + $0x380] sm:$0xff]
    %v895 = vld [vmem:[%s7 + $0x388] sm:$0xff]
    %v896 = vld [vmem:[%s7 + $0x390] sm:$0xff]
    %v897 = vld [vmem:[%s7 + $0x398] sm:$0xff]
    %v898 = vld [vmem:[%s7 + $0x3a0] sm:$0xff]
    %v899 = vld [vmem:[%s7 + $0x3a8] sm:$0xff]
    %v900 = vld [vmem:[%s7 + $0x3b0] sm:$0xff]
    %v901 = vld [vmem:[%s7 + $0x3b8] sm:$0xff]
    %v902 = vld [vmem:[%s7 + $0x3c0] sm:$0xff]
    %v903 = vld [vmem:[%s7 + $0x3c8] sm:$0xff]
    %v904 = vld [vmem:[%s7 + $0x3d0] sm:$0xff]
    %v905 = vld [vmem:[%s7 + $0x3d8] sm:$0xff]
    %v906 = vld [vmem:[%s7 + $0x3e0] sm:$0xff]
    %v907 = vld [vmem:[%s7 + $0x3e8] sm:$0xff]
    %v908 = vld [vmem:[%s7 + $0x3f0] sm:$0xff]
    %v909 = vld [vmem:[%s7 + $0x3f8] sm:$0xff]
    %v910 = vld [vmem:[%s14] sm:$0xff]
    %v911 = vld [vmem:[%s14 + $0x8] sm:$0xff]
    %v912 = vld [vmem:[%s14 + $0x10] sm:$0xff]
    %v913 = vld [vmem:[%s14 + $0x18] sm:$0xff]
    %v914 = vld [vmem:[%s15] sm:$0x1]
    %v915 = vld [vmem:[%s16] sm:$0xff]
    %v916 = vld [vmem:[%s16 + $0x8] sm:$0xff]
    %v917 = vld [vmem:[%s16 + $0x10] sm:$0xff]
    %v918 = vld [vmem:[%s16 + $0x18] sm:$0xff]
    %v919 = vld [vmem:[%s17] sm:$0xff]
    %v920 = vld [vmem:[%s17 + $0x8] sm:$0xff]
    %v921 = vld [vmem:[%s17 + $0x10] sm:$0xff]
    %v922 = vld [vmem:[%s17 + $0x18] sm:$0xff]
    %v923 = vld [vmem:[%s18] sm:$0x1]
    %v924 = vld [vmem:[%s19] sm:$0x1]
    %v925 = vld [vmem:[%s0] sm:$0xff]
    %v926 = vld [vmem:[%s0 + $0x8] sm:$0xff]
    %v927 = vld [vmem:[%s0 + $0x10] sm:$0xff]
    %v928 = vld [vmem:[%s12] sm:$0xff]
    %v929 = vld [vmem:[%s12 + $0x8] sm:$0xff]
    %v930 = vld [vmem:[%s13] sm:$0x1]
    %v932 = vlaneseq
    %v933 = vshrl.u32 %v932, 7
    %v934 = vsub.s32 0, %v933
    %v935 = vrot.slane %v930, %v934
    %vm937 = vcmask 130048
    %v939 = vsel %vm937, %v925, 0
    %v942 = vsel %vm937, %v926, 0
    %v945 = vsel %vm937, %v927, 0
    %947 = vmatprep.subr.mxu0 0.0
    %948 = vmatpush1.msra.mxu0 %v928
    %949 = vmatprep.subr.mxu0 0.0
    %950 = vmatpush1.msra.mxu0 %v929
    %951 = vmatprep.subr.mxu0 0.0
    %952 = vmatpush1.msra.mxu0 0.0
    %953 = vmatprep.subr.mxu0 0.0
    %954 = vmatpush1.msra.mxu0 0.0
    %955 = vmatprep.subr.mxu0 0.0
    %956 = vmatpush1.msra.mxu0 0.0
    %957 = vmatprep.subr.mxu0 0.0
    %958 = vmatpush1.msra.mxu0 0.0
    %959 = vmatprep.subr.mxu0 0.0
    %960 = vmatpush1.msra.mxu0 0.0
    %961 = vmatprep.subr.mxu0 0.0
    %962 = vmatpush1.msra.mxu0 0.0
    %963 = vmatprep.subr.mxu0 0.0
    %964 = vmatpush1.msra.mxu0 0.0
    %965 = vmatprep.subr.mxu0 0.0
    %966 = vmatpush1.msra.mxu0 0.0
    %967 = vmatprep.subr.mxu0 0.0
    %968 = vmatpush1.msra.mxu0 0.0
    %969 = vmatprep.subr.mxu0 0.0
    %970 = vmatpush1.msra.mxu0 0.0
    %971 = vmatprep.subr.mxu0 0.0
    %972 = vmatpush1.msra.mxu0 0.0
    %973 = vmatprep.subr.mxu0 0.0
    %974 = vmatpush1.msra.mxu0 0.0
    %975 = vmatprep.subr.mxu0 0.0
    %976 = vmatpush1.msra.mxu0 0.0
    %977 = vmatprep.subr.mxu0 0.0
    %978 = vmatpush1.msra.mxu0 0.0
    %979 = vmatprep.subr.mxu0 0.0
    %980 = vmatpush1.msra.mxu0 0.0
    %981 = vmatprep.subr.mxu0 0.0
    %982 = vmatpush1.msra.mxu0 0.0
    %983 = vmatprep.subr.mxu0 0.0
    %984 = vmatpush1.msra.mxu0 0.0
    %985 = vmatprep.subr.mxu0 0.0
    %986 = vmatpush1.msra.mxu0 0.0
    %987 = vmatprep.subr.mxu0 0.0
    %988 = vmatpush1.msra.mxu0 0.0
    %989 = vmatprep.subr.mxu0 0.0
    %990 = vmatpush1.msra.mxu0 0.0
    %991 = vmatprep.subr.mxu0 0.0
    %992 = vmatpush1.msra.mxu0 0.0
    %993 = vmatprep.subr.mxu0 0.0
    %994 = vmatpush1.msra.mxu0 0.0
    %995 = vmatprep.subr.mxu0 0.0
    %996 = vmatpush1.msra.mxu0 0.0
    %997 = vmatprep.subr.mxu0 0.0
    %998 = vmatpush1.msra.mxu0 0.0
    %999 = vmatprep.subr.mxu0 0.0
    %1000 = vmatpush1.msra.mxu0 0.0
    %1001 = vmatprep.subr.mxu0 0.0
    %1002 = vmatpush1.msra.mxu0 0.0
    %1003 = vmatprep.subr.mxu0 0.0
    %1004 = vmatpush1.msra.mxu0 0.0
    %1005 = vmatprep.subr.mxu0 0.0
    %1006 = vmatpush1.msra.mxu0 0.0
    %1007 = vmatprep.subr.mxu0 0.0
    %1008 = vmatpush1.msra.mxu0 0.0
    %1009 = vmatprep.subr.mxu0 0.0
    %1010 = vmatpush1.msra.mxu0 0.0
    %1011 = vmatprep.mubr.f32.mxu0 0.0
    %1012 = vmatmul.mubr.f32.gmra.mrb[0].mxu0 %v939
    %v1013 = vpop.f32.mrb[0].mxu0
    %v1014 = vadd.f32 %v935, %v1013
    %v1015 = vpop.f32.mrb[0].mxu0
    %1016 = vmatprep.mubr.f32.mxu0 0.0
    %1017 = vmatmul.mubr.f32.gmra.mrb[0].mxu0 %v942
    %v1018 = vpop.f32.mrb[0].mxu0
    %v1019 = vadd.f32 %v935, %v1018
    %v1020 = vpop.f32.mrb[0].mxu0
    %1021 = vmatprep.mubr.f32.mxu0 0.0
    %1022 = vmatmul.mubr.f32.gmra.mrb[0].mxu0 %v945
    %v1023 = vpop.f32.mrb[0].mxu0
    %v1024 = vadd.f32 %v935, %v1023
    %v1025 = vpop.f32.mrb[0].mxu0
    %1026 = vdwg.mxu0
    %v1027 = vmax.f32 %v1014, 0.0
    %v1028 = vmax.f32 %v1019, 0.0
    %v1029 = vmax.f32 %v1024, 0.0
    %vm1030 = vcmask 195584
    %v1032 = vsel %vm1030, %v741, 0
    %v1035 = vsel %vm1030, %v742, 0
    %v1038 = vsel %vm1030, %v743, 0
    %v1041 = vsel %vm1030, %v744, 0
    %v1044 = vsel %vm1030, %v745, 0
    %v1047 = vsel %vm1030, %v746, 0
    %1049 = vmatprep.subr.mxu0 0.0
    %1050 = vmatpush1.msra.mxu0 %v1027
    %1051 = vmatprep.subr.mxu0 0.0
    %1052 = vmatpush1.msra.mxu0 %v1028
    %1053 = vmatprep.subr.mxu0 0.0
    %1054 = vmatpush1.msra.mxu0 %v1029
    %1055 = vmatprep.subr.mxu0 0.0
    %1056 = vmatpush1.msra.mxu0 0.0
    %1057 = vmatprep.subr.mxu0 0.0
    %1058 = vmatpush1.msra.mxu0 0.0
    %1059 = vmatprep.subr.mxu0 0.0
    %1060 = vmatpush1.msra.mxu0 0.0
    %1061 = vmatprep.subr.mxu0 0.0
    %1062 = vmatpush1.msra.mxu0 0.0
    %1063 = vmatprep.subr.mxu0 0.0
    %1064 = vmatpush1.msra.mxu0 0.0
    %1065 = vmatprep.subr.mxu0 0.0
    %1066 = vmatpush1.msra.mxu0 0.0
    %1067 = vmatprep.subr.mxu0 0.0
    %1068 = vmatpush1.msra.mxu0 0.0
    %1069 = vmatprep.subr.mxu0 0.0
    %1070 = vmatpush1.msra.mxu0 0.0
    %1071 = vmatprep.subr.mxu0 0.0
    %1072 = vmatpush1.msra.mxu0 0.0
    %1073 = vmatprep.subr.mxu0 0.0
    %1074 = vmatpush1.msra.mxu0 0.0
    %1075 = vmatprep.subr.mxu0 0.0
    %1076 = vmatpush1.msra.mxu0 0.0
    %1077 = vmatprep.subr.mxu0 0.0
    %1078 = vmatpush1.msra.mxu0 0.0
    %1079 = vmatprep.subr.mxu0 0.0
    %1080 = vmatpush1.msra.mxu0 0.0
    %1081 = vmatprep.subr.mxu0 0.0
    %1082 = vmatpush1.msra.mxu0 0.0
    %1083 = vmatprep.subr.mxu0 0.0
    %1084 = vmatpush1.msra.mxu0 0.0
    %1085 = vmatprep.subr.mxu0 0.0
    %1086 = vmatpush1.msra.mxu0 0.0
    %1087 = vmatprep.subr.mxu0 0.0
    %1088 = vmatpush1.msra.mxu0 0.0
    %1089 = vmatprep.subr.mxu0 0.0
    %1090 = vmatpush1.msra.mxu0 0.0
    %1091 = vmatprep.subr.mxu0 0.0
    %1092 = vmatpush1.msra.mxu0 0.0
    %1093 = vmatprep.subr.mxu0 0.0
    %1094 = vmatpush1.msra.mxu0 0.0
    %1095 = vmatprep.subr.mxu0 0.0
    %1096 = vmatpush1.msra.mxu0 0.0
    %1097 = vmatprep.subr.mxu0 0.0
    %1098 = vmatpush1.msra.mxu0 0.0
    %1099 = vmatprep.subr.mxu0 0.0
    %1100 = vmatpush1.msra.mxu0 0.0
    %1101 = vmatprep.subr.mxu0 0.0
    %1102 = vmatpush1.msra.mxu0 0.0
    %1103 = vmatprep.subr.mxu0 0.0
    %1104 = vmatpush1.msra.mxu0 0.0
    %1105 = vmatprep.subr.mxu0 0.0
    %1106 = vmatpush1.msra.mxu0 0.0
    %1107 = vmatprep.subr.mxu0 0.0
    %1108 = vmatpush1.msra.mxu0 0.0
    %1109 = vmatprep.subr.mxu0 0.0
    %1110 = vmatpush1.msra.mxu0 0.0
    %1111 = vmatprep.subr.mxu0 0.0
    %1112 = vmatpush1.msra.mxu0 0.0
    %1113 = vmatprep.mubr.f32.mxu0 0.0
    %1114 = vmatmul.mubr.f32.gmra.mrb[0].mxu0 %v1032
    %v1115 = vpop.f32.mrb[0].mxu0
    %v1116 = vadd.f32 0.0, %v1115
    %v1117 = vpop.f32.mrb[0].mxu0
    %1118 = vmatprep.mubr.f32.mxu0 0.0
    %1119 = vmatmul.mubr.f32.gmra.mrb[0].mxu0 %v1035
    %v1120 = vpop.f32.mrb[0].mxu0
    %v1121 = vadd.f32 0.0, %v1120
    %v1122 = vpop.f32.mrb[0].mxu0
    %1123 = vmatprep.mubr.f32.mxu0 0.0
    %1124 = vmatmul.mubr.f32.gmra.mrb[0].mxu0 %v1038
    %v1125 = vpop.f32.mrb[0].mxu0
    %v1126 = vadd.f32 0.0, %v1125
    %v1127 = vpop.f32.mrb[0].mxu0
    %1128 = vmatprep.mubr.f32.mxu0 0.0
    %1129 = vmatmul.mubr.f32.gmra.mrb[0].mxu0 %v1041
    %v1130 = vpop.f32.mrb[0].mxu0
    %v1131 = vadd.f32 0.0, %v1130
    %v1132 = vpop.f32.mrb[0].mxu0
    %1133 = vmatprep.mubr.f32.mxu0 0.0
    %1134 = vmatmul.mubr.f32.gmra.mrb[0].mxu0 %v1044
    %v1135 = vpop.f32.mrb[0].mxu0
    %v1136 = vadd.f32 0.0, %v1135
    %v1137 = vpop.f32.mrb[0].mxu0
    %1138 = vmatprep.mubr.f32.mxu0 0.0
    %1139 = vmatmul.mubr.f32.gmra.mrb[0].mxu0 %v1047
    %v1140 = vpop.f32.mrb[0].mxu0
    %v1141 = vadd.f32 0.0, %v1140
    %v1142 = vpop.f32.mrb[0].mxu0
    %1143 = vdwg.mxu0
    %vm1144 = vcmask 261120
    %v1146 = vsel %vm1144, %v1116, 0
    %v1149 = vsel %vm1144, %v1121, 0
    %v1152 = vsel %vm1144, %v1126, 0
    %v1155 = vsel %vm1144, %v1131, 0
    %v1158 = vsel %vm1144, %v1136, 0
    %v1161 = vsel %vm1144, %v1141, 0
    %1163 = vmatprep.subr.mxu0 %v751
    %1164 = vmatpush1.msra.mxu0 %v750
    %1165 = vmatprep.subr.mxu0 %v759
    %1166 = vmatpush1.msra.mxu0 %v758
    %1167 = vmatprep.subr.mxu0 %v767
    %1168 = vmatpush1.msra.mxu0 %v766
    %1169 = vmatprep.subr.mxu0 %v775
    %1170 = vmatpush1.msra.mxu0 %v774
    %1171 = vmatprep.subr.mxu0 0.0
    %1172 = vmatpush1.msra.mxu0 0.0
    %1173 = vmatprep.subr.mxu0 0.0
    %1174 = vmatpush1.msra.mxu0 0.0
    %1175 = vmatprep.subr.mxu0 0.0
    %1176 = vmatpush1.msra.mxu0 0.0
    %1177 = vmatprep.subr.mxu0 0.0
    %1178 = vmatpush1.msra.mxu0 0.0
    %1179 = vmatprep.subr.mxu0 0.0
    %1180 = vmatpush1.msra.mxu0 0.0
    %1181 = vmatprep.subr.mxu0 0.0
    %1182 = vmatpush1.msra.mxu0 0.0
    %1183 = vmatprep.subr.mxu0 0.0
    %1184 = vmatpush1.msra.mxu0 0.0
    %1185 = vmatprep.subr.mxu0 0.0
    %1186 = vmatpush1.msra.mxu0 0.0
    %1187 = vmatprep.subr.mxu0 0.0
    %1188 = vmatpush1.msra.mxu0 0.0
    %1189 = vmatprep.subr.mxu0 0.0
    %1190 = vmatpush1.msra.mxu0 0.0
    %1191 = vmatprep.subr.mxu0 0.0
    %1192 = vmatpush1.msra.mxu0 0.0
    %1193 = vmatprep.subr.mxu0 0.0
    %1194 = vmatpush1.msra.mxu0 0.0
    %1195 = vmatprep.subr.mxu0 0.0
    %1196 = vmatpush1.msra.mxu0 0.0
    %1197 = vmatprep.subr.mxu0 0.0
    %1198 = vmatpush1.msra.mxu0 0.0
    %1199 = vmatprep.subr.mxu0 0.0
    %1200 = vmatpush1.msra.mxu0 0.0
    %1201 = vmatprep.subr.mxu0 0.0
    %1202 = vmatpush1.msra.mxu0 0.0
    %1203 = vmatprep.subr.mxu0 0.0
    %1204 = vmatpush1.msra.mxu0 0.0
    %1205 = vmatprep.subr.mxu0 0.0
    %1206 = vmatpush1.msra.mxu0 0.0
    %1207 = vmatprep.subr.mxu0 0.0
    %1208 = vmatpush1.msra.mxu0 0.0
    %1209 = vmatprep.subr.mxu0 0.0
    %1210 = vmatpush1.msra.mxu0 0.0
    %1211 = vmatprep.subr.mxu0 0.0
    %1212 = vmatpush1.msra.mxu0 0.0
    %1213 = vmatprep.subr.mxu0 0.0
    %1214 = vmatpush1.msra.mxu0 0.0
    %1215 = vmatprep.subr.mxu0 0.0
    %1216 = vmatpush1.msra.mxu0 0.0
    %1217 = vmatprep.subr.mxu0 0.0
    %1218 = vmatpush1.msra.mxu0 0.0
    %1219 = vmatprep.subr.mxu0 0.0
    %1220 = vmatpush1.msra.mxu0 0.0
    %1221 = vmatprep.subr.mxu0 0.0
    %1222 = vmatpush1.msra.mxu0 0.0
    %1223 = vmatprep.subr.mxu0 0.0
    %1224 = vmatpush1.msra.mxu0 0.0
    %1225 = vmatprep.subr.mxu0 0.0
    %1226 = vmatpush1.msra.mxu0 0.0
    %1227 = vmatprep.mubr.f32.mxu0 0.0
    %1228 = vmatmul.mubr.f32.gmra.mrb[0].mxu0 %v1146
    %v1229 = vpop.f32.mrb[0].mxu0
    %v1230 = vadd.f32 0.0, %v1229
    %v1231 = vpop.f32.mrb[0].mxu0
    %v1232 = vadd.f32 0.0, %v1231
    %1233 = vmatprep.mubr.f32.mxu0 0.0
    %1234 = vmatmul.mubr.f32.gmra.mrb[0].mxu0 %v1149
    %v1235 = vpop.f32.mrb[0].mxu0
    %v1236 = vadd.f32 0.0, %v1235
    %v1237 = vpop.f32.mrb[0].mxu0
    %v1238 = vadd.f32 0.0, %v1237
    %1239 = vmatprep.mubr.f32.mxu0 0.0
    %1240 = vmatmul.mubr.f32.gmra.mrb[0].mxu0 %v1152
    %v1241 = vpop.f32.mrb[0].mxu0
    %v1242 = vadd.f32 0.0, %v1241
    %v1243 = vpop.f32.mrb[0].mxu0
    %v1244 = vadd.f32 0.0, %v1243
    %1245 = vmatprep.mubr.f32.mxu0 0.0
    %1246 = vmatmul.mubr.f32.gmra.mrb[0].mxu0 %v1155
    %v1247 = vpop.f32.mrb[0].mxu0
    %v1248 = vadd.f32 0.0, %v1247
    %v1249 = vpop.f32.mrb[0].mxu0
    %v1250 = vadd.f32 0.0, %v1249
    %1251 = vmatprep.mubr.f32.mxu0 0.0
    %1252 = vmatmul.mubr.f32.gmra.mrb[0].mxu0 %v1158
    %v1253 = vpop.f32.mrb[0].mxu0
    %v1254 = vadd.f32 0.0, %v1253
    %v1255 = vpop.f32.mrb[0].mxu0
    %v1256 = vadd.f32 0.0, %v1255
    %1257 = vmatprep.mubr.f32.mxu0 0.0
    %1258 = vmatmul.mubr.f32.gmra.mrb[0].mxu0 %v1161
    %v1259 = vpop.f32.mrb[0].mxu0
    %v1260 = vadd.f32 0.0, %v1259
    %v1261 = vpop.f32.mrb[0].mxu0
    %v1262 = vadd.f32 0.0, %v1261
    %1263 = vdwg.mxu0
    %1264 = vmatprep.subr.mxu0 %v753
    %1265 = vmatpush1.msra.mxu0 %v752
    %1266 = vmatprep.subr.mxu0 %v761
    %1267 = vmatpush1.msra.mxu0 %v760
    %1268 = vmatprep.subr.mxu0 %v769
    %1269 = vmatpush1.msra.mxu0 %v768
    %1270 = vmatprep.subr.mxu0 %v777
    %1271 = vmatpush1.msra.mxu0 %v776
    %1272 = vmatprep.subr.mxu0 0.0
    %1273 = vmatpush1.msra.mxu0 0.0
    %1274 = vmatprep.subr.mxu0 0.0
    %1275 = vmatpush1.msra.mxu0 0.0
    %1276 = vmatprep.subr.mxu0 0.0
    %1277 = vmatpush1.msra.mxu0 0.0
    %1278 = vmatprep.subr.mxu0 0.0
    %1279 = vmatpush1.msra.mxu0 0.0
    %1280 = vmatprep.subr.mxu0 0.0
    %1281 = vmatpush1.msra.mxu0 0.0
    %1282 = vmatprep.subr.mxu0 0.0
    %1283 = vmatpush1.msra.mxu0 0.0
    %1284 = vmatprep.subr.mxu0 0.0
    %1285 = vmatpush1.msra.mxu0 0.0
    %1286 = vmatprep.subr.mxu0 0.0
    %1287 = vmatpush1.msra.mxu0 0.0
    %1288 = vmatprep.subr.mxu0 0.0
    %1289 = vmatpush1.msra.mxu0 0.0
    %1290 = vmatprep.subr.mxu0 0.0
    %1291 = vmatpush1.msra.mxu0 0.0
    %1292 = vmatprep.subr.mxu0 0.0
    %1293 = vmatpush1.msra.mxu0 0.0
    %1294 = vmatprep.subr.mxu0 0.0
    %1295 = vmatpush1.msra.mxu0 0.0
    %1296 = vmatprep.subr.mxu0 0.0
    %1297 = vmatpush1.msra.mxu0 0.0
    %1298 = vmatprep.subr.mxu0 0.0
    %1299 = vmatpush1.msra.mxu0 0.0
    %1300 = vmatprep.subr.mxu0 0.0
    %1301 = vmatpush1.msra.mxu0 0.0
    %1302 = vmatprep.subr.mxu0 0.0
    %1303 = vmatpush1.msra.mxu0 0.0
    %1304 = vmatprep.subr.mxu0 0.0
    %1305 = vmatpush1.msra.mxu0 0.0
    %1306 = vmatprep.subr.mxu0 0.0
    %1307 = vmatpush1.msra.mxu0 0.0
    %1308 = vmatprep.subr.mxu0 0.0
    %1309 = vmatpush1.msra.mxu0 0.0
    %1310 = vmatprep.subr.mxu0 0.0
    %1311 = vmatpush1.msra.mxu0 0.0
    %1312 = vmatprep.subr.mxu0 0.0
    %1313 = vmatpush1.msra.mxu0 0.0
    %1314 = vmatprep.subr.mxu0 0.0
    %1315 = vmatpush1.msra.mxu0 0.0
    %1316 = vmatprep.subr.mxu0 0.0
    %1317 = vmatpush1.msra.mxu0 0.0
    %1318 = vmatprep.subr.mxu0 0.0
    %1319 = vmatpush1.msra.mxu0 0.0
    %1320 = vmatprep.subr.mxu0 0.0
    %1321 = vmatpush1.msra.mxu0 0.0
    %1322 = vmatprep.subr.mxu0 0.0
    %1323 = vmatpush1.msra.mxu0 0.0
    %1324 = vmatprep.subr.mxu0 0.0
    %1325 = vmatpush1.msra.mxu0 0.0
    %1326 = vmatprep.subr.mxu0 0.0
    %1327 = vmatpush1.msra.mxu0 0.0
    %1328 = vmatprep.mubr.f32.mxu0 0.0
    %1329 = vmatmul.mubr.f32.gmra.mrb[0].mxu0 %v1146
    %v1330 = vpop.f32.mrb[0].mxu0
    %v1331 = vadd.f32 0.0, %v1330
    %v1332 = vpop.f32.mrb[0].mxu0
    %v1333 = vadd.f32 0.0, %v1332
    %1334 = vmatprep.mubr.f32.mxu0 0.0
    %1335 = vmatmul.mubr.f32.gmra.mrb[0].mxu0 %v1149
    %v1336 = vpop.f32.mrb[0].mxu0
    %v1337 = vadd.f32 0.0, %v1336
    %v1338 = vpop.f32.mrb[0].mxu0
    %v1339 = vadd.f32 0.0, %v1338
    %1340 = vmatprep.mubr.f32.mxu0 0.0
    %1341 = vmatmul.mubr.f32.gmra.mrb[0].mxu0 %v1152
    %v1342 = vpop.f32.mrb[0].mxu0
    %v1343 = vadd.f32 0.0, %v1342
    %v1344 = vpop.f32.mrb[0].mxu0
    %v1345 = vadd.f32 0.0, %v1344
    %1346 = vmatprep.mubr.f32.mxu0 0.0
    %1347 = vmatmul.mubr.f32.gmra.mrb[0].mxu0 %v1155
    %v1348 = vpop.f32.mrb[0].mxu0
    %v1349 = vadd.f32 0.0, %v1348
    %v1350 = vpop.f32.mrb[0].mxu0
    %v1351 = vadd.f32 0.0, %v1350
    %1352 = vmatprep.mubr.f32.mxu0 0.0
    %1353 = vmatmul.mubr.f32.gmra.mrb[0].mxu0 %v1158
    %v1354 = vpop.f32.mrb[0].mxu0
    %v1355 = vadd.f32 0.0, %v1354
    %v1356 = vpop.f32.mrb[0].mxu0
    %v1357 = vadd.f32 0.0, %v1356
    %1358 = vmatprep.mubr.f32.mxu0 0.0
    %1359 = vmatmul.mubr.f32.gmra.mrb[0].mxu0 %v1161
    %v1360 = vpop.f32.mrb[0].mxu0
    %v1361 = vadd.f32 0.0, %v1360
    %v1362 = vpop.f32.mrb[0].mxu0
    %v1363 = vadd.f32 0.0, %v1362
    %1364 = vdwg.mxu0
    %1365 = vmatprep.subr.mxu0 %v755
    %1366 = vmatpush1.msra.mxu0 %v754
    %1367 = vmatprep.subr.mxu0 %v763
    %1368 = vmatpush1.msra.mxu0 %v762
    %1369 = vmatprep.subr.mxu0 %v771
    %1370 = vmatpush1.msra.mxu0 %v770
    %1371 = vmatprep.subr.mxu0 %v779
    %1372 = vmatpush1.msra.mxu0 %v778
    %1373 = vmatprep.subr.mxu0 0.0
    %1374 = vmatpush1.msra.mxu0 0.0
    %1375 = vmatprep.subr.mxu0 0.0
    %1376 = vmatpush1.msra.mxu0 0.0
    %1377 = vmatprep.subr.mxu0 0.0
    %1378 = vmatpush1.msra.mxu0 0.0
    %1379 = vmatprep.subr.mxu0 0.0
    %1380 = vmatpush1.msra.mxu0 0.0
    %1381 = vmatprep.subr.mxu0 0.0
    %1382 = vmatpush1.msra.mxu0 0.0
    %1383 = vmatprep.subr.mxu0 0.0
    %1384 = vmatpush1.msra.mxu0 0.0
    %1385 = vmatprep.subr.mxu0 0.0
    %1386 = vmatpush1.msra.mxu0 0.0
    %1387 = vmatprep.subr.mxu0 0.0
    %1388 = vmatpush1.msra.mxu0 0.0
    %1389 = vmatprep.subr.mxu0 0.0
    %1390 = vmatpush1.msra.mxu0 0.0
    %1391 = vmatprep.subr.mxu0 0.0
    %1392 = vmatpush1.msra.mxu0 0.0
    %1393 = vmatprep.subr.mxu0 0.0
    %1394 = vmatpush1.msra.mxu0 0.0
    %1395 = vmatprep.subr.mxu0 0.0
    %1396 = vmatpush1.msra.mxu0 0.0
    %1397 = vmatprep.subr.mxu0 0.0
    %1398 = vmatpush1.msra.mxu0 0.0
    %1399 = vmatprep.subr.mxu0 0.0
    %1400 = vmatpush1.msra.mxu0 0.0
    %1401 = vmatprep.subr.mxu0 0.0
    %1402 = vmatpush1.msra.mxu0 0.0
    %1403 = vmatprep.subr.mxu0 0.0
    %1404 = vmatpush1.msra.mxu0 0.0
    %1405 = vmatprep.subr.mxu0 0.0
    %1406 = vmatpush1.msra.mxu0 0.0
    %1407 = vmatprep.subr.mxu0 0.0
    %1408 = vmatpush1.msra.mxu0 0.0
    %1409 = vmatprep.subr.mxu0 0.0
    %1410 = vmatpush1.msra.mxu0 0.0
    %1411 = vmatprep.subr.mxu0 0.0
    %1412 = vmatpush1.msra.mxu0 0.0
    %1413 = vmatprep.subr.mxu0 0.0
    %1414 = vmatpush1.msra.mxu0 0.0
    %1415 = vmatprep.subr.mxu0 0.0
    %1416 = vmatpush1.msra.mxu0 0.0
    %1417 = vmatprep.subr.mxu0 0.0
    %1418 = vmatpush1.msra.mxu0 0.0
    %1419 = vmatprep.subr.mxu0 0.0
    %1420 = vmatpush1.msra.mxu0 0.0
    %1421 = vmatprep.subr.mxu0 0.0
    %1422 = vmatpush1.msra.mxu0 0.0
    %1423 = vmatprep.subr.mxu0 0.0
    %1424 = vmatpush1.msra.mxu0 0.0
    %1425 = vmatprep.subr.mxu0 0.0
    %1426 = vmatpush1.msra.mxu0 0.0
    %1427 = vmatprep.subr.mxu0 0.0
    %1428 = vmatpush1.msra.mxu0 0.0
    %1429 = vmatprep.mubr.f32.mxu0 0.0
    %1430 = vmatmul.mubr.f32.gmra.mrb[0].mxu0 %v1146
    %v1431 = vpop.f32.mrb[0].mxu0
    %v1432 = vadd.f32 0.0, %v1431
    %v1433 = vpop.f32.mrb[0].mxu0
    %v1434 = vadd.f32 0.0, %v1433
    %1435 = vmatprep.mubr.f32.mxu0 0.0
    %1436 = vmatmul.mubr.f32.gmra.mrb[0].mxu0 %v1149
    %v1437 = vpop.f32.mrb[0].mxu0
    %v1438 = vadd.f32 0.0, %v1437
    %v1439 = vpop.f32.mrb[0].mxu0
    %v1440 = vadd.f32 0.0, %v1439
    %1441 = vmatprep.mubr.f32.mxu0 0.0
    %1442 = vmatmul.mubr.f32.gmra.mrb[0].mxu0 %v1152
    %v1443 = vpop.f32.mrb[0].mxu0
    %v1444 = vadd.f32 0.0, %v1443
    %v1445 = vpop.f32.mrb[0].mxu0
    %v1446 = vadd.f32 0.0, %v1445
    %1447 = vmatprep.mubr.f32.mxu0 0.0
    %1448 = vmatmul.mubr.f32.gmra.mrb[0].mxu0 %v1155
    %v1449 = vpop.f32.mrb[0].mxu0
    %v1450 = vadd.f32 0.0, %v1449
    %v1451 = vpop.f32.mrb[0].mxu0
    %v1452 = vadd.f32 0.0, %v1451
    %1453 = vmatprep.mubr.f32.mxu0 0.0
    %1454 = vmatmul.mubr.f32.gmra.mrb[0].mxu0 %v1158
    %v1455 = vpop.f32.mrb[0].mxu0
    %v1456 = vadd.f32 0.0, %v1455
    %v1457 = vpop.f32.mrb[0].mxu0
    %v1458 = vadd.f32 0.0, %v1457
    %1459 = vmatprep.mubr.f32.mxu0 0.0
    %1460 = vmatmul.mubr.f32.gmra.mrb[0].mxu0 %v1161
    %v1461 = vpop.f32.mrb[0].mxu0
    %v1462 = vadd.f32 0.0, %v1461
    %v1463 = vpop.f32.mrb[0].mxu0
    %v1464 = vadd.f32 0.0, %v1463
    %1465 = vdwg.mxu0
    %1466 = vmatprep.subr.mxu0 %v757
    %1467 = vmatpush1.msra.mxu0 %v756
    %1468 = vmatprep.subr.mxu0 %v765
    %1469 = vmatpush1.msra.mxu0 %v764
    %1470 = vmatprep.subr.mxu0 %v773
    %1471 = vmatpush1.msra.mxu0 %v772
    %1472 = vmatprep.subr.mxu0 %v781
    %1473 = vmatpush1.msra.mxu0 %v780
    %1474 = vmatprep.subr.mxu0 0.0
    %1475 = vmatpush1.msra.mxu0 0.0
    %1476 = vmatprep.subr.mxu0 0.0
    %1477 = vmatpush1.msra.mxu0 0.0
    %1478 = vmatprep.subr.mxu0 0.0
    %1479 = vmatpush1.msra.mxu0 0.0
    %1480 = vmatprep.subr.mxu0 0.0
    %1481 = vmatpush1.msra.mxu0 0.0
    %1482 = vmatprep.subr.mxu0 0.0
    %1483 = vmatpush1.msra.mxu0 0.0
    %1484 = vmatprep.subr.mxu0 0.0
    %1485 = vmatpush1.msra.mxu0 0.0
    %1486 = vmatprep.subr.mxu0 0.0
    %1487 = vmatpush1.msra.mxu0 0.0
    %1488 = vmatprep.subr.mxu0 0.0
    %1489 = vmatpush1.msra.mxu0 0.0
    %1490 = vmatprep.subr.mxu0 0.0
    %1491 = vmatpush1.msra.mxu0 0.0
    %1492 = vmatprep.subr.mxu0 0.0
    %1493 = vmatpush1.msra.mxu0 0.0
    %1494 = vmatprep.subr.mxu0 0.0
    %1495 = vmatpush1.msra.mxu0 0.0
    %1496 = vmatprep.subr.mxu0 0.0
    %1497 = vmatpush1.msra.mxu0 0.0
    %1498 = vmatprep.subr.mxu0 0.0
    %1499 = vmatpush1.msra.mxu0 0.0
    %1500 = vmatprep.subr.mxu0 0.0
    %1501 = vmatpush1.msra.mxu0 0.0
    %1502 = vmatprep.subr.mxu0 0.0
    %1503 = vmatpush1.msra.mxu0 0.0
    %1504 = vmatprep.subr.mxu0 0.0
    %1505 = vmatpush1.msra.mxu0 0.0
    %1506 = vmatprep.subr.mxu0 0.0
    %1507 = vmatpush1.msra.mxu0 0.0
    %1508 = vmatprep.subr.mxu0 0.0
    %1509 = vmatpush1.msra.mxu0 0.0
    %1510 = vmatprep.subr.mxu0 0.0
    %1511 = vmatpush1.msra.mxu0 0.0
    %1512 = vmatprep.subr.mxu0 0.0
    %1513 = vmatpush1.msra.mxu0 0.0
    %1514 = vmatprep.subr.mxu0 0.0
    %1515 = vmatpush1.msra.mxu0 0.0
    %1516 = vmatprep.subr.mxu0 0.0
    %1517 = vmatpush1.msra.mxu0 0.0
    %1518 = vmatprep.subr.mxu0 0.0
    %1519 = vmatpush1.msra.mxu0 0.0
    %1520 = vmatprep.subr.mxu0 0.0
    %1521 = vmatpush1.msra.mxu0 0.0
    %1522 = vmatprep.subr.mxu0 0.0
    %1523 = vmatpush1.msra.mxu0 0.0
    %1524 = vmatprep.subr.mxu0 0.0
    %1525 = vmatpush1.msra.mxu0 0.0
    %1526 = vmatprep.subr.mxu0 0.0
    %1527 = vmatpush1.msra.mxu0 0.0
    %1528 = vmatprep.subr.mxu0 0.0
    %1529 = vmatpush1.msra.mxu0 0.0
    %1530 = vmatprep.mubr.f32.mxu0 0.0
    %1531 = vmatmul.mubr.f32.gmra.mrb[0].mxu0 %v1146
    %v1532 = vpop.f32.mrb[0].mxu0
    %v1533 = vadd.f32 0.0, %v1532
    %v1534 = vpop.f32.mrb[0].mxu0
    %v1535 = vadd.f32 0.0, %v1534
    %1536 = vmatprep.mubr.f32.mxu0 0.0
    %1537 = vmatmul.mubr.f32.gmra.mrb[0].mxu0 %v1149
    %v1538 = vpop.f32.mrb[0].mxu0
    %v1539 = vadd.f32 0.0, %v1538
    %v1540 = vpop.f32.mrb[0].mxu0
    %v1541 = vadd.f32 0.0, %v1540
    %1542 = vmatprep.mubr.f32.mxu0 0.0
    %1543 = vmatmul.mubr.f32.gmra.mrb[0].mxu0 %v1152
    %v1544 = vpop.f32.mrb[0].mxu0
    %v1545 = vadd.f32 0.0, %v1544
    %v1546 = vpop.f32.mrb[0].mxu0
    %v1547 = vadd.f32 0.0, %v1546
    %1548 = vmatprep.mubr.f32.mxu0 0.0
    %1549 = vmatmul.mubr.f32.gmra.mrb[0].mxu0 %v1155
    %v1550 = vpop.f32.mrb[0].mxu0
    %v1551 = vadd.f32 0.0, %v1550
    %v1552 = vpop.f32.mrb[0].mxu0
    %v1553 = vadd.f32 0.0, %v1552
    %1554 = vmatprep.mubr.f32.mxu0 0.0
    %1555 = vmatmul.mubr.f32.gmra.mrb[0].mxu0 %v1158
    %v1556 = vpop.f32.mrb[0].mxu0
    %v1557 = vadd.f32 0.0, %v1556
    %v1558 = vpop.f32.mrb[0].mxu0
    %v1559 = vadd.f32 0.0, %v1558
    %1560 = vmatprep.mubr.f32.mxu0 0.0
    %1561 = vmatmul.mubr.f32.gmra.mrb[0].mxu0 %v1161
    %v1562 = vpop.f32.mrb[0].mxu0
    %v1563 = vadd.f32 0.0, %v1562
    %v1564 = vpop.f32.mrb[0].mxu0
    %v1565 = vadd.f32 0.0, %v1564
    %1566 = vdwg.mxu0
    %v1567 = vmul.f32 %v1230, %v404
    %v1568 = vmul.f32 %v1232, %v406
    %v1569 = vmul.f32 %v1331, %v505
    %v1570 = vmul.f32 %v1333, %v507
    %v1571 = vmul.f32 %v1432, %v606
    %v1572 = vmul.f32 %v1434, %v608
    %v1573 = vmul.f32 %v1533, %v707
    %v1574 = vmul.f32 %v1535, %v709
    %v1575 = vmul.f32 %v1236, %v410
    %v1576 = vmul.f32 %v1238, %v412
    %v1577 = vmul.f32 %v1337, %v511
    %v1578 = vmul.f32 %v1339, %v513
    %v1579 = vmul.f32 %v1438, %v612
    %v1580 = vmul.f32 %v1440, %v614
    %v1581 = vmul.f32 %v1539, %v713
    %v1582 = vmul.f32 %v1541, %v715
    %v1583 = vmul.f32 %v1242, %v416
    %v1584 = vmul.f32 %v1244, %v418
    %v1585 = vmul.f32 %v1343, %v517
    %v1586 = vmul.f32 %v1345, %v519
    %v1587 = vmul.f32 %v1444, %v618
    %v1588 = vmul.f32 %v1446, %v620
    %v1589 = vmul.f32 %v1545, %v719
    %v1590 = vmul.f32 %v1547, %v721
    %v1591 = vmul.f32 %v1248, %v422
    %v1592 = vmul.f32 %v1250, %v424
    %v1593 = vmul.f32 %v1349, %v523
    %v1594 = vmul.f32 %v1351, %v525
    %v1595 = vmul.f32 %v1450, %v624
    %v1596 = vmul.f32 %v1452, %v626
    %v1597 = vmul.f32 %v1551, %v725
    %v1598 = vmul.f32 %v1553, %v727
    %v1599 = vmul.f32 %v1254, %v428
    %v1600 = vmul.f32 %v1256, %v430
    %v1601 = vmul.f32 %v1355, %v529
    %v1602 = vmul.f32 %v1357, %v531
    %v1603 = vmul.f32 %v1456, %v630
    %v1604 = vmul.f32 %v1458, %v632
    %v1605 = vmul.f32 %v1557, %v731
    %v1606 = vmul.f32 %v1559, %v733
    %v1607 = vmul.f32 %v1260, %v434
    %v1608 = vmul.f32 %v1262, %v436
    %v1609 = vmul.f32 %v1361, %v535
    %v1610 = vmul.f32 %v1363, %v537
    %v1611 = vmul.f32 %v1462, %v636
    %v1612 = vmul.f32 %v1464, %v638
    %v1613 = vmul.f32 %v1563, %v737
    %v1614 = vmul.f32 %v1565, %v739
    %1615 = vmatprep.subr.mxu0 0.0
    %1616 = vmatpush1.msra.mxu0 %v782
    %1617 = vmatprep.subr.mxu0 0.0
    %1618 = vmatpush1.msra.mxu0 %v783
    %1619 = vmatprep.subr.mxu0 0.0
    %1620 = vmatpush1.msra.mxu0 %v784
    %1621 = vmatprep.subr.mxu0 0.0
    %1622 = vmatpush1.msra.mxu0 %v785
    %1623 = vmatprep.subr.mxu0 0.0
    %1624 = vmatpush1.msra.mxu0 %v786
    %1625 = vmatprep.subr.mxu0 0.0
    %1626 = vmatpush1.msra.mxu0 %v787
    %1627 = vmatprep.subr.mxu0 0.0
    %1628 = vmatpush1.msra.mxu0 %v788
    %1629 = vmatprep.subr.mxu0 0.0
    %1630 = vmatpush1.msra.mxu0 %v789
    %1631 = vmatprep.subr.mxu0 0.0
    %1632 = vmatpush1.msra.mxu0 %v790
    %1633 = vmatprep.subr.mxu0 0.0
    %1634 = vmatpush1.msra.mxu0 %v791
    %1635 = vmatprep.subr.mxu0 0.0
    %1636 = vmatpush1.msra.mxu0 %v792
    %1637 = vmatprep.subr.mxu0 0.0
    %1638 = vmatpush1.msra.mxu0 %v793
    %1639 = vmatprep.subr.mxu0 0.0
    %1640 = vmatpush1.msra.mxu0 %v794
    %1641 = vmatprep.subr.mxu0 0.0
    %1642 = vmatpush1.msra.mxu0 %v795
    %1643 = vmatprep.subr.mxu0 0.0
    %1644 = vmatpush1.msra.mxu0 %v796
    %1645 = vmatprep.subr.mxu0 0.0
    %1646 = vmatpush1.msra.mxu0 %v797
    %1647 = vmatprep.subr.mxu0 0.0
    %1648 = vmatpush1.msra.mxu0 %v798
    %1649 = vmatprep.subr.mxu0 0.0
    %1650 = vmatpush1.msra.mxu0 %v799
    %1651 = vmatprep.subr.mxu0 0.0
    %1652 = vmatpush1.msra.mxu0 %v800
    %1653 = vmatprep.subr.mxu0 0.0
    %1654 = vmatpush1.msra.mxu0 %v801
    %1655 = vmatprep.subr.mxu0 0.0
    %1656 = vmatpush1.msra.mxu0 %v802
    %1657 = vmatprep.subr.mxu0 0.0
    %1658 = vmatpush1.msra.mxu0 %v803
    %1659 = vmatprep.subr.mxu0 0.0
    %1660 = vmatpush1.msra.mxu0 %v804
    %1661 = vmatprep.subr.mxu0 0.0
    %1662 = vmatpush1.msra.mxu0 %v805
    %1663 = vmatprep.subr.mxu0 0.0
    %1664 = vmatpush1.msra.mxu0 %v806
    %1665 = vmatprep.subr.mxu0 0.0
    %1666 = vmatpush1.msra.mxu0 %v807
    %1667 = vmatprep.subr.mxu0 0.0
    %1668 = vmatpush1.msra.mxu0 %v808
    %1669 = vmatprep.subr.mxu0 0.0
    %1670 = vmatpush1.msra.mxu0 %v809
    %1671 = vmatprep.subr.mxu0 0.0
    %1672 = vmatpush1.msra.mxu0 %v810
    %1673 = vmatprep.subr.mxu0 0.0
    %1674 = vmatpush1.msra.mxu0 %v811
    %1675 = vmatprep.subr.mxu0 0.0
    %1676 = vmatpush1.msra.mxu0 %v812
    %1677 = vmatprep.subr.mxu0 0.0
    %1678 = vmatpush1.msra.mxu0 %v813
    %1679 = vmatprep.mubr.f32.mxu0 %v1568
    %1680 = vmatmul.mubr.f32.gmra.mrb[0].mxu0 %v1567
    %v1681 = vpop.f32.mrb[0].mxu0
    %v1682 = vadd.f32 0.0, %v1681
    %v1683 = vpop.f32.mrb[0].mxu0
    %1684 = vmatprep.mubr.f32.mxu0 %v1576
    %1685 = vmatmul.mubr.f32.gmra.mrb[0].mxu0 %v1575
    %v1686 = vpop.f32.mrb[0].mxu0
    %v1687 = vadd.f32 0.0, %v1686
    %v1688 = vpop.f32.mrb[0].mxu0
    %1689 = vmatprep.mubr.f32.mxu0 %v1584
    %1690 = vmatmul.mubr.f32.gmra.mrb[0].mxu0 %v1583
    %v1691 = vpop.f32.mrb[0].mxu0
    %v1692 = vadd.f32 0.0, %v1691
    %v1693 = vpop.f32.mrb[0].mxu0
    %1694 = vmatprep.mubr.f32.mxu0 %v1592
    %1695 = vmatmul.mubr.f32.gmra.mrb[0].mxu0 %v1591
    %v1696 = vpop.f32.mrb[0].mxu0
    %v1697 = vadd.f32 0.0, %v1696
    %v1698 = vpop.f32.mrb[0].mxu0
    %1699 = vmatprep.mubr.f32.mxu0 %v1600
    %1700 = vmatmul.mubr.f32.gmra.mrb[0].mxu0 %v1599
    %v1701 = vpop.f32.mrb[0].mxu0
    %v1702 = vadd.f32 0.0, %v1701
    %v1703 = vpop.f32.mrb[0].mxu0
    %1704 = vmatprep.mubr.f32.mxu0 %v1608
    %1705 = vmatmul.mubr.f32.gmra.mrb[0].mxu0 %v1607
    %v1706 = vpop.f32.mrb[0].mxu0
    %v1707 = vadd.f32 0.0, %v1706
    %v1708 = vpop.f32.mrb[0].mxu0
    %1709 = vdwg.mxu0
    %1710 = vmatprep.subr.mxu0 0.0
    %1711 = vmatpush1.msra.mxu0 %v814
    %1712 = vmatprep.subr.mxu0 0.0
    %1713 = vmatpush1.msra.mxu0 %v815
    %1714 = vmatprep.subr.mxu0 0.0
    %1715 = vmatpush1.msra.mxu0 %v816
    %1716 = vmatprep.subr.mxu0 0.0
    %1717 = vmatpush1.msra.mxu0 %v817
    %1718 = vmatprep.subr.mxu0 0.0
    %1719 = vmatpush1.msra.mxu0 %v818
    %1720 = vmatprep.subr.mxu0 0.0
    %1721 = vmatpush1.msra.mxu0 %v819
    %1722 = vmatprep.subr.mxu0 0.0
    %1723 = vmatpush1.msra.mxu0 %v820
    %1724 = vmatprep.subr.mxu0 0.0
    %1725 = vmatpush1.msra.mxu0 %v821
    %1726 = vmatprep.subr.mxu0 0.0
    %1727 = vmatpush1.msra.mxu0 %v822
    %1728 = vmatprep.subr.mxu0 0.0
    %1729 = vmatpush1.msra.mxu0 %v823
    %1730 = vmatprep.subr.mxu0 0.0
    %1731 = vmatpush1.msra.mxu0 %v824
    %1732 = vmatprep.subr.mxu0 0.0
    %1733 = vmatpush1.msra.mxu0 %v825
    %1734 = vmatprep.subr.mxu0 0.0
    %1735 = vmatpush1.msra.mxu0 %v826
    %1736 = vmatprep.subr.mxu0 0.0
    %1737 = vmatpush1.msra.mxu0 %v827
    %1738 = vmatprep.subr.mxu0 0.0
    %1739 = vmatpush1.msra.mxu0 %v828
    %1740 = vmatprep.subr.mxu0 0.0
    %1741 = vmatpush1.msra.mxu0 %v829
    %1742 = vmatprep.subr.mxu0 0.0
    %1743 = vmatpush1.msra.mxu0 %v830
    %1744 = vmatprep.subr.mxu0 0.0
    %1745 = vmatpush1.msra.mxu0 %v831
    %1746 = vmatprep.subr.mxu0 0.0
    %1747 = vmatpush1.msra.mxu0 %v832
    %1748 = vmatprep.subr.mxu0 0.0
    %1749 = vmatpush1.msra.mxu0 %v833
    %1750 = vmatprep.subr.mxu0 0.0
    %1751 = vmatpush1.msra.mxu0 %v834
    %1752 = vmatprep.subr.mxu0 0.0
    %1753 = vmatpush1.msra.mxu0 %v835
    %1754 = vmatprep.subr.mxu0 0.0
    %1755 = vmatpush1.msra.mxu0 %v836
    %1756 = vmatprep.subr.mxu0 0.0
    %1757 = vmatpush1.msra.mxu0 %v837
    %1758 = vmatprep.subr.mxu0 0.0
    %1759 = vmatpush1.msra.mxu0 %v838
    %1760 = vmatprep.subr.mxu0 0.0
    %1761 = vmatpush1.msra.mxu0 %v839
    %1762 = vmatprep.subr.mxu0 0.0
    %1763 = vmatpush1.msra.mxu0 %v840
    %1764 = vmatprep.subr.mxu0 0.0
    %1765 = vmatpush1.msra.mxu0 %v841
    %1766 = vmatprep.subr.mxu0 0.0
    %1767 = vmatpush1.msra.mxu0 %v842
    %1768 = vmatprep.subr.mxu0 0.0
    %1769 = vmatpush1.msra.mxu0 %v843
    %1770 = vmatprep.subr.mxu0 0.0
    %1771 = vmatpush1.msra.mxu0 %v844
    %1772 = vmatprep.subr.mxu0 0.0
    %1773 = vmatpush1.msra.mxu0 %v845
    %1774 = vmatprep.mubr.f32.mxu0 %v1570
    %1775 = vmatmul.mubr.f32.gmra.mrb[0].mxu0 %v1569
    %v1776 = vpop.f32.mrb[0].mxu0
    %v1777 = vadd.f32 %v1682, %v1776
    %v1778 = vpop.f32.mrb[0].mxu0
    %1779 = vmatprep.mubr.f32.mxu0 %v1578
    %1780 = vmatmul.mubr.f32.gmra.mrb[0].mxu0 %v1577
    %v1781 = vpop.f32.mrb[0].mxu0
    %v1782 = vadd.f32 %v1687, %v1781
    %v1783 = vpop.f32.mrb[0].mxu0
    %1784 = vmatprep.mubr.f32.mxu0 %v1586
    %1785 = vmatmul.mubr.f32.gmra.mrb[0].mxu0 %v1585
    %v1786 = vpop.f32.mrb[0].mxu0
    %v1787 = vadd.f32 %v1692, %v1786
    %v1788 = vpop.f32.mrb[0].mxu0
    %1789 = vmatprep.mubr.f32.mxu0 %v1594
    %1790 = vmatmul.mubr.f32.gmra.mrb[0].mxu0 %v1593
    %v1791 = vpop.f32.mrb[0].mxu0
    %v1792 = vadd.f32 %v1697, %v1791
    %v1793 = vpop.f32.mrb[0].mxu0
    %1794 = vmatprep.mubr.f32.mxu0 %v1602
    %1795 = vmatmul.mubr.f32.gmra.mrb[0].mxu0 %v1601
    %v1796 = vpop.f32.mrb[0].mxu0
    %v1797 = vadd.f32 %v1702, %v1796
    %v1798 = vpop.f32.mrb[0].mxu0
    %1799 = vmatprep.mubr.f32.mxu0 %v1610
    %1800 = vmatmul.mubr.f32.gmra.mrb[0].mxu0 %v1609
    %v1801 = vpop.f32.mrb[0].mxu0
    %v1802 = vadd.f32 %v1707, %v1801
    %v1803 = vpop.f32.mrb[0].mxu0
    %1804 = vdwg.mxu0
    %1805 = vmatprep.subr.mxu0 0.0
    %1806 = vmatpush1.msra.mxu0 %v846
    %1807 = vmatprep.subr.mxu0 0.0
    %1808 = vmatpush1.msra.mxu0 %v847
    %1809 = vmatprep.subr.mxu0 0.0
    %1810 = vmatpush1.msra.mxu0 %v848
    %1811 = vmatprep.subr.mxu0 0.0
    %1812 = vmatpush1.msra.mxu0 %v849
    %1813 = vmatprep.subr.mxu0 0.0
    %1814 = vmatpush1.msra.mxu0 %v850
    %1815 = vmatprep.subr.mxu0 0.0
    %1816 = vmatpush1.msra.mxu0 %v851
    %1817 = vmatprep.subr.mxu0 0.0
    %1818 = vmatpush1.msra.mxu0 %v852
    %1819 = vmatprep.subr.mxu0 0.0
    %1820 = vmatpush1.msra.mxu0 %v853
    %1821 = vmatprep.subr.mxu0 0.0
    %1822 = vmatpush1.msra.mxu0 %v854
    %1823 = vmatprep.subr.mxu0 0.0
    %1824 = vmatpush1.msra.mxu0 %v855
    %1825 = vmatprep.subr.mxu0 0.0
    %1826 = vmatpush1.msra.mxu0 %v856
    %1827 = vmatprep.subr.mxu0 0.0
    %1828 = vmatpush1.msra.mxu0 %v857
    %1829 = vmatprep.subr.mxu0 0.0
    %1830 = vmatpush1.msra.mxu0 %v858
    %1831 = vmatprep.subr.mxu0 0.0
    %1832 = vmatpush1.msra.mxu0 %v859
    %1833 = vmatprep.subr.mxu0 0.0
    %1834 = vmatpush1.msra.mxu0 %v860
    %1835 = vmatprep.subr.mxu0 0.0
    %1836 = vmatpush1.msra.mxu0 %v861
    %1837 = vmatprep.subr.mxu0 0.0
    %1838 = vmatpush1.msra.mxu0 %v862
    %1839 = vmatprep.subr.mxu0 0.0
    %1840 = vmatpush1.msra.mxu0 %v863
    %1841 = vmatprep.subr.mxu0 0.0
    %1842 = vmatpush1.msra.mxu0 %v864
    %1843 = vmatprep.subr.mxu0 0.0
    %1844 = vmatpush1.msra.mxu0 %v865
    %1845 = vmatprep.subr.mxu0 0.0
    %1846 = vmatpush1.msra.mxu0 %v866
    %1847 = vmatprep.subr.mxu0 0.0
    %1848 = vmatpush1.msra.mxu0 %v867
    %1849 = vmatprep.subr.mxu0 0.0
    %1850 = vmatpush1.msra.mxu0 %v868
    %1851 = vmatprep.subr.mxu0 0.0
    %1852 = vmatpush1.msra.mxu0 %v869
    %1853 = vmatprep.subr.mxu0 0.0
    %1854 = vmatpush1.msra.mxu0 %v870
    %1855 = vmatprep.subr.mxu0 0.0
    %1856 = vmatpush1.msra.mxu0 %v871
    %1857 = vmatprep.subr.mxu0 0.0
    %1858 = vmatpush1.msra.mxu0 %v872
    %1859 = vmatprep.subr.mxu0 0.0
    %1860 = vmatpush1.msra.mxu0 %v873
    %1861 = vmatprep.subr.mxu0 0.0
    %1862 = vmatpush1.msra.mxu0 %v874
    %1863 = vmatprep.subr.mxu0 0.0
    %1864 = vmatpush1.msra.mxu0 %v875
    %1865 = vmatprep.subr.mxu0 0.0
    %1866 = vmatpush1.msra.mxu0 %v876
    %1867 = vmatprep.subr.mxu0 0.0
    %1868 = vmatpush1.msra.mxu0 %v877
    %1869 = vmatprep.mubr.f32.mxu0 %v1572
    %1870 = vmatmul.mubr.f32.gmra.mrb[0].mxu0 %v1571
    %v1871 = vpop.f32.mrb[0].mxu0
    %v1872 = vadd.f32 %v1777, %v1871
    %v1873 = vpop.f32.mrb[0].mxu0
    %1874 = vmatprep.mubr.f32.mxu0 %v1580
    %1875 = vmatmul.mubr.f32.gmra.mrb[0].mxu0 %v1579
    %v1876 = vpop.f32.mrb[0].mxu0
    %v1877 = vadd.f32 %v1782, %v1876
    %v1878 = vpop.f32.mrb[0].mxu0
    %1879 = vmatprep.mubr.f32.mxu0 %v1588
    %1880 = vmatmul.mubr.f32.gmra.mrb[0].mxu0 %v1587
    %v1881 = vpop.f32.mrb[0].mxu0
    %v1882 = vadd.f32 %v1787, %v1881
    %v1883 = vpop.f32.mrb[0].mxu0
    %1884 = vmatprep.mubr.f32.mxu0 %v1596
    %1885 = vmatmul.mubr.f32.gmra.mrb[0].mxu0 %v1595
    %v1886 = vpop.f32.mrb[0].mxu0
    %v1887 = vadd.f32 %v1792, %v1886
    %v1888 = vpop.f32.mrb[0].mxu0
    %1889 = vmatprep.mubr.f32.mxu0 %v1604
    %1890 = vmatmul.mubr.f32.gmra.mrb[0].mxu0 %v1603
    %v1891 = vpop.f32.mrb[0].mxu0
    %v1892 = vadd.f32 %v1797, %v1891
    %v1893 = vpop.f32.mrb[0].mxu0
    %1894 = vmatprep.mubr.f32.mxu0 %v1612
    %1895 = vmatmul.mubr.f32.gmra.mrb[0].mxu0 %v1611
    %v1896 = vpop.f32.mrb[0].mxu0
    %v1897 = vadd.f32 %v1802, %v1896
    %v1898 = vpop.f32.mrb[0].mxu0
    %1899 = vdwg.mxu0
    %1900 = vmatprep.subr.mxu0 0.0
    %1901 = vmatpush1.msra.mxu0 %v878
    %1902 = vmatprep.subr.mxu0 0.0
    %1903 = vmatpush1.msra.mxu0 %v879
    %1904 = vmatprep.subr.mxu0 0.0
    %1905 = vmatpush1.msra.mxu0 %v880
    %1906 = vmatprep.subr.mxu0 0.0
    %1907 = vmatpush1.msra.mxu0 %v881
    %1908 = vmatprep.subr.mxu0 0.0
    %1909 = vmatpush1.msra.mxu0 %v882
    %1910 = vmatprep.subr.mxu0 0.0
    %1911 = vmatpush1.msra.mxu0 %v883
    %1912 = vmatprep.subr.mxu0 0.0
    %1913 = vmatpush1.msra.mxu0 %v884
    %1914 = vmatprep.subr.mxu0 0.0
    %1915 = vmatpush1.msra.mxu0 %v885
    %1916 = vmatprep.subr.mxu0 0.0
    %1917 = vmatpush1.msra.mxu0 %v886
    %1918 = vmatprep.subr.mxu0 0.0
    %1919 = vmatpush1.msra.mxu0 %v887
    %1920 = vmatprep.subr.mxu0 0.0
    %1921 = vmatpush1.msra.mxu0 %v888
    %1922 = vmatprep.subr.mxu0 0.0
    %1923 = vmatpush1.msra.mxu0 %v889
    %1924 = vmatprep.subr.mxu0 0.0
    %1925 = vmatpush1.msra.mxu0 %v890
    %1926 = vmatprep.subr.mxu0 0.0
    %1927 = vmatpush1.msra.mxu0 %v891
    %1928 = vmatprep.subr.mxu0 0.0
    %1929 = vmatpush1.msra.mxu0 %v892
    %1930 = vmatprep.subr.mxu0 0.0
    %1931 = vmatpush1.msra.mxu0 %v893
    %1932 = vmatprep.subr.mxu0 0.0
    %1933 = vmatpush1.msra.mxu0 %v894
    %1934 = vmatprep.subr.mxu0 0.0
    %1935 = vmatpush1.msra.mxu0 %v895
    %1936 = vmatprep.subr.mxu0 0.0
    %1937 = vmatpush1.msra.mxu0 %v896
    %1938 = vmatprep.subr.mxu0 0.0
    %1939 = vmatpush1.msra.mxu0 %v897
    %1940 = vmatprep.subr.mxu0 0.0
    %1941 = vmatpush1.msra.mxu0 %v898
    %1942 = vmatprep.subr.mxu0 0.0
    %1943 = vmatpush1.msra.mxu0 %v899
    %1944 = vmatprep.subr.mxu0 0.0
    %1945 = vmatpush1.msra.mxu0 %v900
    %1946 = vmatprep.subr.mxu0 0.0
    %1947 = vmatpush1.msra.mxu0 %v901
    %1948 = vmatprep.subr.mxu0 0.0
    %1949 = vmatpush1.msra.mxu0 %v902
    %1950 = vmatprep.subr.mxu0 0.0
    %1951 = vmatpush1.msra.mxu0 %v903
    %1952 = vmatprep.subr.mxu0 0.0
    %1953 = vmatpush1.msra.mxu0 %v904
    %1954 = vmatprep.subr.mxu0 0.0
    %1955 = vmatpush1.msra.mxu0 %v905
    %1956 = vmatprep.subr.mxu0 0.0
    %1957 = vmatpush1.msra.mxu0 %v906
    %1958 = vmatprep.subr.mxu0 0.0
    %1959 = vmatpush1.msra.mxu0 %v907
    %1960 = vmatprep.subr.mxu0 0.0
    %1961 = vmatpush1.msra.mxu0 %v908
    %1962 = vmatprep.subr.mxu0 0.0
    %1963 = vmatpush1.msra.mxu0 %v909
    %1964 = vmatprep.mubr.f32.mxu0 %v1574
    %1965 = vmatmul.mubr.f32.gmra.mrb[0].mxu0 %v1573
    %v1966 = vpop.f32.mrb[0].mxu0
    %v1967 = vadd.f32 %v1872, %v1966
    %v1968 = vpop.f32.mrb[0].mxu0
    %1969 = vmatprep.mubr.f32.mxu0 %v1582
    %1970 = vmatmul.mubr.f32.gmra.mrb[0].mxu0 %v1581
    %v1971 = vpop.f32.mrb[0].mxu0
    %v1972 = vadd.f32 %v1877, %v1971
    %v1973 = vpop.f32.mrb[0].mxu0
    %1974 = vmatprep.mubr.f32.mxu0 %v1590
    %1975 = vmatmul.mubr.f32.gmra.mrb[0].mxu0 %v1589
    %v1976 = vpop.f32.mrb[0].mxu0
    %v1977 = vadd.f32 %v1882, %v1976
    %v1978 = vpop.f32.mrb[0].mxu0
    %1979 = vmatprep.mubr.f32.mxu0 %v1598
    %1980 = vmatmul.mubr.f32.gmra.mrb[0].mxu0 %v1597
    %v1981 = vpop.f32.mrb[0].mxu0
    %v1982 = vadd.f32 %v1887, %v1981
    %v1983 = vpop.f32.mrb[0].mxu0
    %1984 = vmatprep.mubr.f32.mxu0 %v1606
    %1985 = vmatmul.mubr.f32.gmra.mrb[0].mxu0 %v1605
    %v1986 = vpop.f32.mrb[0].mxu0
    %v1987 = vadd.f32 %v1892, %v1986
    %v1988 = vpop.f32.mrb[0].mxu0
    %1989 = vmatprep.mubr.f32.mxu0 %v1614
    %1990 = vmatmul.mubr.f32.gmra.mrb[0].mxu0 %v1613
    %v1991 = vpop.f32.mrb[0].mxu0
    %v1992 = vadd.f32 %v1897, %v1991
    %v1993 = vpop.f32.mrb[0].mxu0
    %1994 = vdwg.mxu0
    %v1996 = vsel %vm1144, %v1027, 0
    %v1999 = vsel %vm1144, %v1028, 0
    %v2002 = vsel %vm1144, %v1029, 0
    %2004 = vmatprep.subr.mxu0 0.0
    %2005 = vmatpush1.msra.mxu0 %v910
    %2006 = vmatprep.subr.mxu0 0.0
    %2007 = vmatpush1.msra.mxu0 %v911
    %2008 = vmatprep.subr.mxu0 0.0
    %2009 = vmatpush1.msra.mxu0 %v912
    %2010 = vmatprep.subr.mxu0 0.0
    %2011 = vmatpush1.msra.mxu0 %v913
    %2012 = vmatprep.subr.mxu0 0.0
    %2013 = vmatpush1.msra.mxu0 0.0
    %2014 = vmatprep.subr.mxu0 0.0
    %2015 = vmatpush1.msra.mxu0 0.0
    %2016 = vmatprep.subr.mxu0 0.0
    %2017 = vmatpush1.msra.mxu0 0.0
    %2018 = vmatprep.subr.mxu0 0.0
    %2019 = vmatpush1.msra.mxu0 0.0
    %2020 = vmatprep.subr.mxu0 0.0
    %2021 = vmatpush1.msra.mxu0 0.0
    %2022 = vmatprep.subr.mxu0 0.0
    %2023 = vmatpush1.msra.mxu0 0.0
    %2024 = vmatprep.subr.mxu0 0.0
    %2025 = vmatpush1.msra.mxu0 0.0
    %2026 = vmatprep.subr.mxu0 0.0
    %2027 = vmatpush1.msra.mxu0 0.0
    %2028 = vmatprep.subr.mxu0 0.0
    %2029 = vmatpush1.msra.mxu0 0.0
    %2030 = vmatprep.subr.mxu0 0.0
    %2031 = vmatpush1.msra.mxu0 0.0
    %2032 = vmatprep.subr.mxu0 0.0
    %2033 = vmatpush1.msra.mxu0 0.0
    %2034 = vmatprep.subr.mxu0 0.0
    %2035 = vmatpush1.msra.mxu0 0.0
    %2036 = vmatprep.subr.mxu0 0.0
    %2037 = vmatpush1.msra.mxu0 0.0
    %2038 = vmatprep.subr.mxu0 0.0
    %2039 = vmatpush1.msra.mxu0 0.0
    %2040 = vmatprep.subr.mxu0 0.0
    %2041 = vmatpush1.msra.mxu0 0.0
    %2042 = vmatprep.subr.mxu0 0.0
    %2043 = vmatpush1.msra.mxu0 0.0
    %2044 = vmatprep.subr.mxu0 0.0
    %2045 = vmatpush1.msra.mxu0 0.0
    %2046 = vmatprep.subr.mxu0 0.0
    %2047 = vmatpush1.msra.mxu0 0.0
    %2048 = vmatprep.subr.mxu0 0.0
    %2049 = vmatpush1.msra.mxu0 0.0
    %2050 = vmatprep.subr.mxu0 0.0
    %2051 = vmatpush1.msra.mxu0 0.0
    %2052 = vmatprep.subr.mxu0 0.0
    %2053 = vmatpush1.msra.mxu0 0.0
    %2054 = vmatprep.subr.mxu0 0.0
    %2055 = vmatpush1.msra.mxu0 0.0
    %2056 = vmatprep.subr.mxu0 0.0
    %2057 = vmatpush1.msra.mxu0 0.0
    %2058 = vmatprep.subr.mxu0 0.0
    %2059 = vmatpush1.msra.mxu0 0.0
    %2060 = vmatprep.subr.mxu0 0.0
    %2061 = vmatpush1.msra.mxu0 0.0
    %2062 = vmatprep.subr.mxu0 0.0
    %2063 = vmatpush1.msra.mxu0 0.0
    %2064 = vmatprep.subr.mxu0 0.0
    %2065 = vmatpush1.msra.mxu0 0.0
    %2066 = vmatprep.subr.mxu0 0.0
    %2067 = vmatpush1.msra.mxu0 0.0
    %2068 = vmatprep.mubr.f32.mxu0 0.0
    %2069 = vmatmul.mubr.f32.gmra.mrb[0].mxu0 %v1996
    %v2070 = vpop.f32.mrb[0].mxu0
    %v2071 = vadd.f32 0.0, %v2070
    %v2072 = vpop.f32.mrb[0].mxu0
    %2073 = vmatprep.mubr.f32.mxu0 0.0
    %2074 = vmatmul.mubr.f32.gmra.mrb[0].mxu0 %v1999
    %v2075 = vpop.f32.mrb[0].mxu0
    %v2076 = vadd.f32 0.0, %v2075
    %v2077 = vpop.f32.mrb[0].mxu0
    %2078 = vmatprep.mubr.f32.mxu0 0.0
    %2079 = vmatmul.mubr.f32.gmra.mrb[0].mxu0 %v2002
    %v2080 = vpop.f32.mrb[0].mxu0
    %v2081 = vadd.f32 0.0, %v2080
    %v2082 = vpop.f32.mrb[0].mxu0
    %2083 = vdwg.mxu0
    %vm2084 = vcmask 392192
    %v2086 = vsel %vm2084, %v747, 0
    %v2089 = vsel %vm2084, %v748, 0
    %v2092 = vsel %vm2084, %v749, 0
    %2094 = vmatprep.subr.mxu0 0.0
    %2095 = vmatpush1.msra.mxu0 %v1967
    %2096 = vmatprep.subr.mxu0 0.0
    %2097 = vmatpush1.msra.mxu0 %v1972
    %2098 = vmatprep.subr.mxu0 0.0
    %2099 = vmatpush1.msra.mxu0 %v1977
    %2100 = vmatprep.subr.mxu0 0.0
    %2101 = vmatpush1.msra.mxu0 %v1982
    %2102 = vmatprep.subr.mxu0 0.0
    %2103 = vmatpush1.msra.mxu0 %v1987
    %2104 = vmatprep.subr.mxu0 0.0
    %2105 = vmatpush1.msra.mxu0 %v1992
    %2106 = vmatprep.subr.mxu0 0.0
    %2107 = vmatpush1.msra.mxu0 0.0
    %2108 = vmatprep.subr.mxu0 0.0
    %2109 = vmatpush1.msra.mxu0 0.0
    %2110 = vmatprep.subr.mxu0 0.0
    %2111 = vmatpush1.msra.mxu0 0.0
    %2112 = vmatprep.subr.mxu0 0.0
    %2113 = vmatpush1.msra.mxu0 0.0
    %2114 = vmatprep.subr.mxu0 0.0
    %2115 = vmatpush1.msra.mxu0 0.0
    %2116 = vmatprep.subr.mxu0 0.0
    %2117 = vmatpush1.msra.mxu0 0.0
    %2118 = vmatprep.subr.mxu0 0.0
    %2119 = vmatpush1.msra.mxu0 0.0
    %2120 = vmatprep.subr.mxu0 0.0
    %2121 = vmatpush1.msra.mxu0 0.0
    %2122 = vmatprep.subr.mxu0 0.0
    %2123 = vmatpush1.msra.mxu0 0.0
    %2124 = vmatprep.subr.mxu0 0.0
    %2125 = vmatpush1.msra.mxu0 0.0
    %2126 = vmatprep.subr.mxu0 0.0
    %2127 = vmatpush1.msra.mxu0 0.0
    %2128 = vmatprep.subr.mxu0 0.0
    %2129 = vmatpush1.msra.mxu0 0.0
    %2130 = vmatprep.subr.mxu0 0.0
    %2131 = vmatpush1.msra.mxu0 0.0
    %2132 = vmatprep.subr.mxu0 0.0
    %2133 = vmatpush1.msra.mxu0 0.0
    %2134 = vmatprep.subr.mxu0 0.0
    %2135 = vmatpush1.msra.mxu0 0.0
    %2136 = vmatprep.subr.mxu0 0.0
    %2137 = vmatpush1.msra.mxu0 0.0
    %2138 = vmatprep.subr.mxu0 0.0
    %2139 = vmatpush1.msra.mxu0 0.0
    %2140 = vmatprep.subr.mxu0 0.0
    %2141 = vmatpush1.msra.mxu0 0.0
    %2142 = vmatprep.subr.mxu0 0.0
    %2143 = vmatpush1.msra.mxu0 0.0
    %2144 = vmatprep.subr.mxu0 0.0
    %2145 = vmatpush1.msra.mxu0 0.0
    %2146 = vmatprep.subr.mxu0 0.0
    %2147 = vmatpush1.msra.mxu0 0.0
    %2148 = vmatprep.subr.mxu0 0.0
    %2149 = vmatpush1.msra.mxu0 0.0
    %2150 = vmatprep.subr.mxu0 0.0
    %2151 = vmatpush1.msra.mxu0 0.0
    %2152 = vmatprep.subr.mxu0 0.0
    %2153 = vmatpush1.msra.mxu0 0.0
    %2154 = vmatprep.subr.mxu0 0.0
    %2155 = vmatpush1.msra.mxu0 0.0
    %2156 = vmatprep.subr.mxu0 0.0
    %2157 = vmatpush1.msra.mxu0 0.0
    %2158 = vmatprep.mubr.f32.mxu0 0.0
    %2159 = vmatmul.mubr.f32.gmra.mrb[0].mxu0 %v2086
    %v2160 = vpop.f32.mrb[0].mxu0
    %v2161 = vadd.f32 %v2071, %v2160
    %v2162 = vpop.f32.mrb[0].mxu0
    %2163 = vmatprep.mubr.f32.mxu0 0.0
    %2164 = vmatmul.mubr.f32.gmra.mrb[0].mxu0 %v2089
    %v2165 = vpop.f32.mrb[0].mxu0
    %v2166 = vadd.f32 %v2076, %v2165
    %v2167 = vpop.f32.mrb[0].mxu0
    %2168 = vmatprep.mubr.f32.mxu0 0.0
    %2169 = vmatmul.mubr.f32.gmra.mrb[0].mxu0 %v2092
    %v2170 = vpop.f32.mrb[0].mxu0
    %v2171 = vadd.f32 %v2081, %v2170
    %v2172 = vpop.f32.mrb[0].mxu0
    %2173 = vdwg.mxu0
    %v2175 = vlaneseq
    %v2176 = vshrl.u32 %v2175, 7
    %v2177 = vsub.s32 0, %v2176
    %v2178 = vrot.slane %v914, %v2177
    %v2180 = vadd.f32 %v2161, %v2178
    %v2181 = vadd.f32 %v2166, %v2178
    %v2182 = vadd.f32 %v2171, %v2178
    %v2183 = vmax.f32 %v2180, 0.0
    %v2184 = vmax.f32 %v2181, 0.0
    %v2185 = vmax.f32 %v2182, 0.0
    %v2187 = vlaneseq
    %v2188 = vshrl.u32 %v2187, 7
    %v2189 = vsub.s32 0, %v2188
    %v2190 = vrot.slane %v923, %v2189
    %v2193 = vsel %vm1144, %v2183, 0
    %v2196 = vsel %vm1144, %v2184, 0
    %v2199 = vsel %vm1144, %v2185, 0
    %2201 = vmatprep.subr.mxu0 0.0
    %2202 = vmatpush1.msra.mxu0 %v915
    %2203 = vmatprep.subr.mxu0 0.0
    %2204 = vmatpush1.msra.mxu0 %v916
    %2205 = vmatprep.subr.mxu0 0.0
    %2206 = vmatpush1.msra.mxu0 %v917
    %2207 = vmatprep.subr.mxu0 0.0
    %2208 = vmatpush1.msra.mxu0 %v918
    %2209 = vmatprep.subr.mxu0 0.0
    %2210 = vmatpush1.msra.mxu0 0.0
    %2211 = vmatprep.subr.mxu0 0.0
    %2212 = vmatpush1.msra.mxu0 0.0
    %2213 = vmatprep.subr.mxu0 0.0
    %2214 = vmatpush1.msra.mxu0 0.0
    %2215 = vmatprep.subr.mxu0 0.0
    %2216 = vmatpush1.msra.mxu0 0.0
    %2217 = vmatprep.subr.mxu0 0.0
    %2218 = vmatpush1.msra.mxu0 0.0
    %2219 = vmatprep.subr.mxu0 0.0
    %2220 = vmatpush1.msra.mxu0 0.0
    %2221 = vmatprep.subr.mxu0 0.0
    %2222 = vmatpush1.msra.mxu0 0.0
    %2223 = vmatprep.subr.mxu0 0.0
    %2224 = vmatpush1.msra.mxu0 0.0
    %2225 = vmatprep.subr.mxu0 0.0
    %2226 = vmatpush1.msra.mxu0 0.0
    %2227 = vmatprep.subr.mxu0 0.0
    %2228 = vmatpush1.msra.mxu0 0.0
    %2229 = vmatprep.subr.mxu0 0.0
    %2230 = vmatpush1.msra.mxu0 0.0
    %2231 = vmatprep.subr.mxu0 0.0
    %2232 = vmatpush1.msra.mxu0 0.0
    %2233 = vmatprep.subr.mxu0 0.0
    %2234 = vmatpush1.msra.mxu0 0.0
    %2235 = vmatprep.subr.mxu0 0.0
    %2236 = vmatpush1.msra.mxu0 0.0
    %2237 = vmatprep.subr.mxu0 0.0
    %2238 = vmatpush1.msra.mxu0 0.0
    %2239 = vmatprep.subr.mxu0 0.0
    %2240 = vmatpush1.msra.mxu0 0.0
    %2241 = vmatprep.subr.mxu0 0.0
    %2242 = vmatpush1.msra.mxu0 0.0
    %2243 = vmatprep.subr.mxu0 0.0
    %2244 = vmatpush1.msra.mxu0 0.0
    %2245 = vmatprep.subr.mxu0 0.0
    %2246 = vmatpush1.msra.mxu0 0.0
    %2247 = vmatprep.subr.mxu0 0.0
    %2248 = vmatpush1.msra.mxu0 0.0
    %2249 = vmatprep.subr.mxu0 0.0
    %2250 = vmatpush1.msra.mxu0 0.0
    %2251 = vmatprep.subr.mxu0 0.0
    %2252 = vmatpush1.msra.mxu0 0.0
    %2253 = vmatprep.subr.mxu0 0.0
    %2254 = vmatpush1.msra.mxu0 0.0
    %2255 = vmatprep.subr.mxu0 0.0
    %2256 = vmatpush1.msra.mxu0 0.0
    %2257 = vmatprep.subr.mxu0 0.0
    %2258 = vmatpush1.msra.mxu0 0.0
    %2259 = vmatprep.subr.mxu0 0.0
    %2260 = vmatpush1.msra.mxu0 0.0
    %2261 = vmatprep.subr.mxu0 0.0
    %2262 = vmatpush1.msra.mxu0 0.0
    %2263 = vmatprep.subr.mxu0 0.0
    %2264 = vmatpush1.msra.mxu0 0.0
    %2265 = vmatprep.mubr.f32.mxu0 0.0
    %2266 = vmatmul.mubr.f32.gmra.mrb[0].mxu0 %v2193
    %v2267 = vpop.f32.mrb[0].mxu0
    %v2268 = vadd.f32 %v2190, %v2267
    %v2269 = vpop.f32.mrb[0].mxu0
    %2270 = vmatprep.mubr.f32.mxu0 0.0
    %2271 = vmatmul.mubr.f32.gmra.mrb[0].mxu0 %v2196
    %v2272 = vpop.f32.mrb[0].mxu0
    %v2273 = vadd.f32 %v2190, %v2272
    %v2274 = vpop.f32.mrb[0].mxu0
    %2275 = vmatprep.mubr.f32.mxu0 0.0
    %2276 = vmatmul.mubr.f32.gmra.mrb[0].mxu0 %v2199
    %v2277 = vpop.f32.mrb[0].mxu0
    %v2278 = vadd.f32 %v2190, %v2277
    %v2279 = vpop.f32.mrb[0].mxu0
    %2280 = vdwg.mxu0
    %v2282 = vlaneseq
    %v2283 = vshrl.u32 %v2282, 7
    %v2284 = vsub.s32 0, %v2283
    %v2285 = vrot.slane %v924, %v2284
    %2287 = vmatprep.subr.mxu0 0.0
    %2288 = vmatpush1.msra.mxu0 %v919
    %2289 = vmatprep.subr.mxu0 0.0
    %2290 = vmatpush1.msra.mxu0 %v920
    %2291 = vmatprep.subr.mxu0 0.0
    %2292 = vmatpush1.msra.mxu0 %v921
    %2293 = vmatprep.subr.mxu0 0.0
    %2294 = vmatpush1.msra.mxu0 %v922
    %2295 = vmatprep.subr.mxu0 0.0
    %2296 = vmatpush1.msra.mxu0 0.0
    %2297 = vmatprep.subr.mxu0 0.0
    %2298 = vmatpush1.msra.mxu0 0.0
    %2299 = vmatprep.subr.mxu0 0.0
    %2300 = vmatpush1.msra.mxu0 0.0
    %2301 = vmatprep.subr.mxu0 0.0
    %2302 = vmatpush1.msra.mxu0 0.0
    %2303 = vmatprep.subr.mxu0 0.0
    %2304 = vmatpush1.msra.mxu0 0.0
    %2305 = vmatprep.subr.mxu0 0.0
    %2306 = vmatpush1.msra.mxu0 0.0
    %2307 = vmatprep.subr.mxu0 0.0
    %2308 = vmatpush1.msra.mxu0 0.0
    %2309 = vmatprep.subr.mxu0 0.0
    %2310 = vmatpush1.msra.mxu0 0.0
    %2311 = vmatprep.subr.mxu0 0.0
    %2312 = vmatpush1.msra.mxu0 0.0
    %2313 = vmatprep.subr.mxu0 0.0
    %2314 = vmatpush1.msra.mxu0 0.0
    %2315 = vmatprep.subr.mxu0 0.0
    %2316 = vmatpush1.msra.mxu0 0.0
    %2317 = vmatprep.subr.mxu0 0.0
    %2318 = vmatpush1.msra.mxu0 0.0
    %2319 = vmatprep.subr.mxu0 0.0
    %2320 = vmatpush1.msra.mxu0 0.0
    %2321 = vmatprep.subr.mxu0 0.0
    %2322 = vmatpush1.msra.mxu0 0.0
    %2323 = vmatprep.subr.mxu0 0.0
    %2324 = vmatpush1.msra.mxu0 0.0
    %2325 = vmatprep.subr.mxu0 0.0
    %2326 = vmatpush1.msra.mxu0 0.0
    %2327 = vmatprep.subr.mxu0 0.0
    %2328 = vmatpush1.msra.mxu0 0.0
    %2329 = vmatprep.subr.mxu0 0.0
    %2330 = vmatpush1.msra.mxu0 0.0
    %2331 = vmatprep.subr.mxu0 0.0
    %2332 = vmatpush1.msra.mxu0 0.0
    %2333 = vmatprep.subr.mxu0 0.0
    %2334 = vmatpush1.msra.mxu0 0.0
    %2335 = vmatprep.subr.mxu0 0.0
    %2336 = vmatpush1.msra.mxu0 0.0
    %2337 = vmatprep.subr.mxu0 0.0
    %2338 = vmatpush1.msra.mxu0 0.0
    %2339 = vmatprep.subr.mxu0 0.0
    %2340 = vmatpush1.msra.mxu0 0.0
    %2341 = vmatprep.subr.mxu0 0.0
    %2342 = vmatpush1.msra.mxu0 0.0
    %2343 = vmatprep.subr.mxu0 0.0
    %2344 = vmatpush1.msra.mxu0 0.0
    %2345 = vmatprep.subr.mxu0 0.0
    %2346 = vmatpush1.msra.mxu0 0.0
    %2347 = vmatprep.subr.mxu0 0.0
    %2348 = vmatpush1.msra.mxu0 0.0
    %2349 = vmatprep.subr.mxu0 0.0
    %2350 = vmatpush1.msra.mxu0 0.0
    %2351 = vmatprep.mubr.f32.mxu0 0.0
    %2352 = vmatmul.mubr.f32.gmra.mrb[0].mxu0 %v1996
    %v2353 = vpop.f32.mrb[0].mxu0
    %v2354 = vadd.f32 %v2285, %v2353
    %v2355 = vpop.f32.mrb[0].mxu0
    %2356 = vmatprep.mubr.f32.mxu0 0.0
    %2357 = vmatmul.mubr.f32.gmra.mrb[0].mxu0 %v1999
    %v2358 = vpop.f32.mrb[0].mxu0
    %v2359 = vadd.f32 %v2285, %v2358
    %v2360 = vpop.f32.mrb[0].mxu0
    %2361 = vmatprep.mubr.f32.mxu0 0.0
    %2362 = vmatmul.mubr.f32.gmra.mrb[0].mxu0 %v2002
    %v2363 = vpop.f32.mrb[0].mxu0
    %v2364 = vadd.f32 %v2285, %v2363
    %v2365 = vpop.f32.mrb[0].mxu0
    %2366 = vdwg.mxu0
    %v2367 = vadd.f32 %v2268, %v2354
    %v2368 = vadd.f32 %v2273, %v2359
    %v2369 = vadd.f32 %v2278, %v2364
    %v2370 = vxor.u32 %v2367, 2147483648
    %v2371 = vxor.u32 %v2368, 2147483648
    %v2372 = vxor.u32 %v2369, 2147483648
    %v2373 = vmul.f32 %v2370, 1.442695
    %v2374 = vpow.pop %v2373
    %v2375 = vmul.f32 %v2371, 1.442695
    %v2376 = vpow.pop %v2375
    %v2377 = vmul.f32 %v2372, 1.442695
    %v2378 = vpow.pop %v2377
    %v2379 = vadd.f32 %v2374, 1.0
    %v2380 = vadd.f32 %v2376, 1.0
    %v2381 = vadd.f32 %v2378, 1.0
    %v2382 = vrcp.pop %v2379
    %v2383 = vmul.f32 1.0, %v2382
    %v2384 = vrcp.pop %v2380
    %v2385 = vmul.f32 1.0, %v2384
    %v2386 = vrcp.pop %v2381
    %v2387 = vmul.f32 1.0, %v2386
    %2391 = vrot.lane.b32.xlu0 %v2354, 64
    %v2392 = vpop.permute.xlu0 %2391
    %2393 = vrot.lane.b32.xlu0 %v2359, 64
    %v2394 = vpop.permute.xlu0 %2393
    %2395 = vrot.lane.b32.xlu0 %v2364, 64
    %v2396 = vpop.permute.xlu0 %2395
    %v2400 = vmul.f32 %v2383, %v2392
    %v2401 = vmul.f32 %v2385, %v2394
    %v2402 = vmul.f32 %v2387, %v2396
    %2406 = vrot.lane.b32.xlu0 %v2400, 64
    %v2407 = vpop.permute.xlu0 %2406
    %2408 = vrot.lane.b32.xlu0 %v2401, 64
    %v2409 = vpop.permute.xlu0 %2408
    %2410 = vrot.lane.b32.xlu0 %v2402, 64
    %v2411 = vpop.permute.xlu0 %2410
    %v2415 = vadd.f32 %v2268, %v2407
    %v2416 = vadd.f32 %v2273, %v2409
    %v2417 = vadd.f32 %v2278, %v2411
    %v2418 = vtanh.pop %v2415
    %v2419 = vtanh.pop %v2416
    %v2420 = vtanh.pop %v2417
    %v2421 = vsub.f32 1.0, %v2383
    %v2422 = vsub.f32 1.0, %v2385
    %v2423 = vsub.f32 1.0, %v2387
    %2427 = vrot.lane.b32.xlu0 %v2418, 96
    %v2428 = vpop.permute.xlu0 %2427
    %2429 = vrot.lane.b32.xlu0 %v2419, 96
    %v2430 = vpop.permute.xlu0 %2429
    %2431 = vrot.lane.b32.xlu0 %v2420, 96
    %v2432 = vpop.permute.xlu0 %2431
    %v2436 = vmul.f32 %v2421, %v2428
    %v2437 = vmul.f32 %v2422, %v2430
    %v2438 = vmul.f32 %v2423, %v2432
    %2439 = vrot.lane.b32.xlu0 %v1027, 32
    %v2440 = vpop.permute.xlu0 %2439
    %2441 = vrot.lane.b32.xlu0 %v1028, 32
    %v2442 = vpop.permute.xlu0 %2441
    %2443 = vrot.lane.b32.xlu0 %v1029, 32
    %v2444 = vpop.permute.xlu0 %2443
    %v2448 = vmul.f32 %v2383, %v2440
    %v2449 = vmul.f32 %v2385, %v2442
    %v2450 = vmul.f32 %v2387, %v2444
    %v2451 = vadd.f32 %v2436, %v2448
    %v2452 = vadd.f32 %v2437, %v2449
    %v2453 = vadd.f32 %v2438, %v2450
    %2457 = vrot.lane.b32.xlu0 %v2451, 96
    %v2458 = vpop.permute.xlu0 %2457
    %2459 = vrot.lane.b32.xlu0 %v2452, 96
    %v2460 = vpop.permute.xlu0 %2459
    %2461 = vrot.lane.b32.xlu0 %v2453, 96
    %v2462 = vpop.permute.xlu0 %2461
    %2466 = vmatprep.subr.mxu0 0.0
    %2467 = vmatpush1.msra.mxu0 %v2458
    %2468 = vmatprep.subr.mxu0 0.0
    %2469 = vmatpush1.msra.mxu0 %v2460
    %2470 = vmatprep.subr.mxu0 0.0
    %2471 = vmatpush1.msra.mxu0 %v2462
    %2472 = vmatprep.subr.mxu0 0.0
    %2473 = vmatpush1.msra.mxu0 0.0
    %2474 = vmatprep.subr.mxu0 0.0
    %2475 = vmatpush1.msra.mxu0 0.0
    %2476 = vmatprep.subr.mxu0 0.0
    %2477 = vmatpush1.msra.mxu0 0.0
    %2478 = vmatprep.subr.mxu0 0.0
    %2479 = vmatpush1.msra.mxu0 0.0
    %2480 = vmatprep.subr.mxu0 0.0
    %2481 = vmatpush1.msra.mxu0 0.0
    %2482 = vmatprep.subr.mxu0 0.0
    %2483 = vmatpush1.msra.mxu0 0.0
    %2484 = vmatprep.subr.mxu0 0.0
    %2485 = vmatpush1.msra.mxu0 0.0
    %2486 = vmatprep.subr.mxu0 0.0
    %2487 = vmatpush1.msra.mxu0 0.0
    %2488 = vmatprep.subr.mxu0 0.0
    %2489 = vmatpush1.msra.mxu0 0.0
    %2490 = vmatprep.subr.mxu0 0.0
    %2491 = vmatpush1.msra.mxu0 0.0
    %2492 = vmatprep.subr.mxu0 0.0
    %2493 = vmatpush1.msra.mxu0 0.0
    %2494 = vmatprep.subr.mxu0 0.0
    %2495 = vmatpush1.msra.mxu0 0.0
    %2496 = vmatprep.subr.mxu0 0.0
    %2497 = vmatpush1.msra.mxu0 0.0
    %2498 = vmatprep.subr.mxu0 0.0
    %2499 = vmatpush1.msra.mxu0 0.0
    %2500 = vmatprep.subr.mxu0 0.0
    %2501 = vmatpush1.msra.mxu0 0.0
    %2502 = vmatprep.subr.mxu0 0.0
    %2503 = vmatpush1.msra.mxu0 0.0
    %2504 = vmatprep.subr.mxu0 0.0
    %2505 = vmatpush1.msra.mxu0 0.0
    %2506 = vmatprep.subr.mxu0 0.0
    %2507 = vmatpush1.msra.mxu0 0.0
    %2508 = vmatprep.subr.mxu0 0.0
    %2509 = vmatpush1.msra.mxu0 0.0
    %2510 = vmatprep.subr.mxu0 0.0
    %2511 = vmatpush1.msra.mxu0 0.0
    %2512 = vmatprep.subr.mxu0 0.0
    %2513 = vmatpush1.msra.mxu0 0.0
    %2514 = vmatprep.subr.mxu0 0.0
    %2515 = vmatpush1.msra.mxu0 0.0
    %2516 = vmatprep.subr.mxu0 0.0
    %2517 = vmatpush1.msra.mxu0 0.0
    %2518 = vmatprep.subr.mxu0 0.0
    %2519 = vmatpush1.msra.mxu0 0.0
    %2520 = vmatprep.subr.mxu0 0.0
    %2521 = vmatpush1.msra.mxu0 0.0
    %2522 = vmatprep.subr.mxu0 0.0
    %2523 = vmatpush1.msra.mxu0 0.0
    %2524 = vmatprep.subr.mxu0 0.0
    %2525 = vmatpush1.msra.mxu0 0.0
    %2526 = vmatprep.subr.mxu0 0.0
    %2527 = vmatpush1.msra.mxu0 0.0
    %2528 = vmatprep.subr.mxu0 0.0
    %2529 = vmatpush1.msra.mxu0 0.0
    %2530 = vmatprep.mubr.f32.mxu0 0.0
    %2531 = vmatmul.mubr.f32.gmra.mrb[0].mxu0 %v1032
    %v2532 = vpop.f32.mrb[0].mxu0
    %v2533 = vadd.f32 0.0, %v2532
    %v2534 = vpop.f32.mrb[0].mxu0
    %2535 = vmatprep.mubr.f32.mxu0 0.0
    %2536 = vmatmul.mubr.f32.gmra.mrb[0].mxu0 %v1035
    %v2537 = vpop.f32.mrb[0].mxu0
    %v2538 = vadd.f32 0.0, %v2537
    %v2539 = vpop.f32.mrb[0].mxu0
    %2540 = vmatprep.mubr.f32.mxu0 0.0
    %2541 = vmatmul.mubr.f32.gmra.mrb[0].mxu0 %v1038
    %v2542 = vpop.f32.mrb[0].mxu0
    %v2543 = vadd.f32 0.0, %v2542
    %v2544 = vpop.f32.mrb[0].mxu0
    %2545 = vmatprep.mubr.f32.mxu0 0.0
    %2546 = vmatmul.mubr.f32.gmra.mrb[0].mxu0 %v1041
    %v2547 = vpop.f32.mrb[0].mxu0
    %v2548 = vadd.f32 0.0, %v2547
    %v2549 = vpop.f32.mrb[0].mxu0
    %2550 = vmatprep.mubr.f32.mxu0 0.0
    %2551 = vmatmul.mubr.f32.gmra.mrb[0].mxu0 %v1044
    %v2552 = vpop.f32.mrb[0].mxu0
    %v2553 = vadd.f32 0.0, %v2552
    %v2554 = vpop.f32.mrb[0].mxu0
    %2555 = vmatprep.mubr.f32.mxu0 0.0
    %2556 = vmatmul.mubr.f32.gmra.mrb[0].mxu0 %v1047
    %v2557 = vpop.f32.mrb[0].mxu0
    %v2558 = vadd.f32 0.0, %v2557
    %v2559 = vpop.f32.mrb[0].mxu0
    %2560 = vdwg.mxu0
    %v2562 = vsel %vm1144, %v2533, 0
    %v2565 = vsel %vm1144, %v2538, 0
    %v2568 = vsel %vm1144, %v2543, 0
    %v2571 = vsel %vm1144, %v2548, 0
    %v2574 = vsel %vm1144, %v2553, 0
    %v2577 = vsel %vm1144, %v2558, 0
    %2579 = vmatprep.subr.mxu0 %v751
    %2580 = vmatpush1.msra.mxu0 %v750
    %2581 = vmatprep.subr.mxu0 %v759
    %2582 = vmatpush1.msra.mxu0 %v758
    %2583 = vmatprep.subr.mxu0 %v767
    %2584 = vmatpush1.msra.mxu0 %v766
    %2585 = vmatprep.subr.mxu0 %v775
    %2586 = vmatpush1.msra.mxu0 %v774
    %2587 = vmatprep.subr.mxu0 0.0
    %2588 = vmatpush1.msra.mxu0 0.0
    %2589 = vmatprep.subr.mxu0 0.0
    %2590 = vmatpush1.msra.mxu0 0.0
    %2591 = vmatprep.subr.mxu0 0.0
    %2592 = vmatpush1.msra.mxu0 0.0
    %2593 = vmatprep.subr.mxu0 0.0
    %2594 = vmatpush1.msra.mxu0 0.0
    %2595 = vmatprep.subr.mxu0 0.0
    %2596 = vmatpush1.msra.mxu0 0.0
    %2597 = vmatprep.subr.mxu0 0.0
    %2598 = vmatpush1.msra.mxu0 0.0
    %2599 = vmatprep.subr.mxu0 0.0
    %2600 = vmatpush1.msra.mxu0 0.0
    %2601 = vmatprep.subr.mxu0 0.0
    %2602 = vmatpush1.msra.mxu0 0.0
    %2603 = vmatprep.subr.mxu0 0.0
    %2604 = vmatpush1.msra.mxu0 0.0
    %2605 = vmatprep.subr.mxu0 0.0
    %2606 = vmatpush1.msra.mxu0 0.0
    %2607 = vmatprep.subr.mxu0 0.0
    %2608 = vmatpush1.msra.mxu0 0.0
    %2609 = vmatprep.subr.mxu0 0.0
    %2610 = vmatpush1.msra.mxu0 0.0
    %2611 = vmatprep.subr.mxu0 0.0
    %2612 = vmatpush1.msra.mxu0 0.0
    %2613 = vmatprep.subr.mxu0 0.0
    %2614 = vmatpush1.msra.mxu0 0.0
    %2615 = vmatprep.subr.mxu0 0.0
    %2616 = vmatpush1.msra.mxu0 0.0
    %2617 = vmatprep.subr.mxu0 0.0
    %2618 = vmatpush1.msra.mxu0 0.0
    %2619 = vmatprep.subr.mxu0 0.0
    %2620 = vmatpush1.msra.mxu0 0.0
    %2621 = vmatprep.subr.mxu0 0.0
    %2622 = vmatpush1.msra.mxu0 0.0
    %2623 = vmatprep.subr.mxu0 0.0
    %2624 = vmatpush1.msra.mxu0 0.0
    %2625 = vmatprep.subr.mxu0 0.0
    %2626 = vmatpush1.msra.mxu0 0.0
    %2627 = vmatprep.subr.mxu0 0.0
    %2628 = vmatpush1.msra.mxu0 0.0
    %2629 = vmatprep.subr.mxu0 0.0
    %2630 = vmatpush1.msra.mxu0 0.0
    %2631 = vmatprep.subr.mxu0 0.0
    %2632 = vmatpush1.msra.mxu0 0.0
    %2633 = vmatprep.subr.mxu0 0.0
    %2634 = vmatpush1.msra.mxu0 0.0
    %2635 = vmatprep.subr.mxu0 0.0
    %2636 = vmatpush1.msra.mxu0 0.0
    %2637 = vmatprep.subr.mxu0 0.0
    %2638 = vmatpush1.msra.mxu0 0.0
    %2639 = vmatprep.subr.mxu0 0.0
    %2640 = vmatpush1.msra.mxu0 0.0
    %2641 = vmatprep.subr.mxu0 0.0
    %2642 = vmatpush1.msra.mxu0 0.0
    %2643 = vmatprep.mubr.f32.mxu0 0.0
    %2644 = vmatmul.mubr.f32.gmra.mrb[0].mxu0 %v2562
    %v2645 = vpop.f32.mrb[0].mxu0
    %v2646 = vadd.f32 0.0, %v2645
    %v2647 = vpop.f32.mrb[0].mxu0
    %v2648 = vadd.f32 0.0, %v2647
    %2649 = vmatprep.mubr.f32.mxu0 0.0
    %2650 = vmatmul.mubr.f32.gmra.mrb[0].mxu0 %v2565
    %v2651 = vpop.f32.mrb[0].mxu0
    %v2652 = vadd.f32 0.0, %v2651
    %v2653 = vpop.f32.mrb[0].mxu0
    %v2654 = vadd.f32 0.0, %v2653
    %2655 = vmatprep.mubr.f32.mxu0 0.0
    %2656 = vmatmul.mubr.f32.gmra.mrb[0].mxu0 %v2568
    %v2657 = vpop.f32.mrb[0].mxu0
    %v2658 = vadd.f32 0.0, %v2657
    %v2659 = vpop.f32.mrb[0].mxu0
    %v2660 = vadd.f32 0.0, %v2659
    %2661 = vmatprep.mubr.f32.mxu0 0.0
    %2662 = vmatmul.mubr.f32.gmra.mrb[0].mxu0 %v2571
    %v2663 = vpop.f32.mrb[0].mxu0
    %v2664 = vadd.f32 0.0, %v2663
    %v2665 = vpop.f32.mrb[0].mxu0
    %v2666 = vadd.f32 0.0, %v2665
    %2667 = vmatprep.mubr.f32.mxu0 0.0
    %2668 = vmatmul.mubr.f32.gmra.mrb[0].mxu0 %v2574
    %v2669 = vpop.f32.mrb[0].mxu0
    %v2670 = vadd.f32 0.0, %v2669
    %v2671 = vpop.f32.mrb[0].mxu0
    %v2672 = vadd.f32 0.0, %v2671
    %2673 = vmatprep.mubr.f32.mxu0 0.0
    %2674 = vmatmul.mubr.f32.gmra.mrb[0].mxu0 %v2577
    %v2675 = vpop.f32.mrb[0].mxu0
    %v2676 = vadd.f32 0.0, %v2675
    %v2677 = vpop.f32.mrb[0].mxu0
    %v2678 = vadd.f32 0.0, %v2677
    %2679 = vdwg.mxu0
    %2680 = vmatprep.subr.mxu0 %v753
    %2681 = vmatpush1.msra.mxu0 %v752
    %2682 = vmatprep.subr.mxu0 %v761
    %2683 = vmatpush1.msra.mxu0 %v760
    %2684 = vmatprep.subr.mxu0 %v769
    %2685 = vmatpush1.msra.mxu0 %v768
    %2686 = vmatprep.subr.mxu0 %v777
    %2687 = vmatpush1.msra.mxu0 %v776
    %2688 = vmatprep.subr.mxu0 0.0
    %2689 = vmatpush1.msra.mxu0 0.0
    %2690 = vmatprep.subr.mxu0 0.0
    %2691 = vmatpush1.msra.mxu0 0.0
    %2692 = vmatprep.subr.mxu0 0.0
    %2693 = vmatpush1.msra.mxu0 0.0
    %2694 = vmatprep.subr.mxu0 0.0
    %2695 = vmatpush1.msra.mxu0 0.0
    %2696 = vmatprep.subr.mxu0 0.0
    %2697 = vmatpush1.msra.mxu0 0.0
    %2698 = vmatprep.subr.mxu0 0.0
    %2699 = vmatpush1.msra.mxu0 0.0
    %2700 = vmatprep.subr.mxu0 0.0
    %2701 = vmatpush1.msra.mxu0 0.0
    %2702 = vmatprep.subr.mxu0 0.0
    %2703 = vmatpush1.msra.mxu0 0.0
    %2704 = vmatprep.subr.mxu0 0.0
    %2705 = vmatpush1.msra.mxu0 0.0
    %2706 = vmatprep.subr.mxu0 0.0
    %2707 = vmatpush1.msra.mxu0 0.0
    %2708 = vmatprep.subr.mxu0 0.0
    %2709 = vmatpush1.msra.mxu0 0.0
    %2710 = vmatprep.subr.mxu0 0.0
    %2711 = vmatpush1.msra.mxu0 0.0
    %2712 = vmatprep.subr.mxu0 0.0
    %2713 = vmatpush1.msra.mxu0 0.0
    %2714 = vmatprep.subr.mxu0 0.0
    %2715 = vmatpush1.msra.mxu0 0.0
    %2716 = vmatprep.subr.mxu0 0.0
    %2717 = vmatpush1.msra.mxu0 0.0
    %2718 = vmatprep.subr.mxu0 0.0
    %2719 = vmatpush1.msra.mxu0 0.0
    %2720 = vmatprep.subr.mxu0 0.0
    %2721 = vmatpush1.msra.mxu0 0.0
    %2722 = vmatprep.subr.mxu0 0.0
    %2723 = vmatpush1.msra.mxu0 0.0
    %2724 = vmatprep.subr.mxu0 0.0
    %2725 = vmatpush1.msra.mxu0 0.0
    %2726 = vmatprep.subr.mxu0 0.0
    %2727 = vmatpush1.msra.mxu0 0.0
    %2728 = vmatprep.subr.mxu0 0.0
    %2729 = vmatpush1.msra.mxu0 0.0
    %2730 = vmatprep.subr.mxu0 0.0
    %2731 = vmatpush1.msra.mxu0 0.0
    %2732 = vmatprep.subr.mxu0 0.0
    %2733 = vmatpush1.msra.mxu0 0.0
    %2734 = vmatprep.subr.mxu0 0.0
    %2735 = vmatpush1.msra.mxu0 0.0
    %2736 = vmatprep.subr.mxu0 0.0
    %2737 = vmatpush1.msra.mxu0 0.0
    %2738 = vmatprep.subr.mxu0 0.0
    %2739 = vmatpush1.msra.mxu0 0.0
    %2740 = vmatprep.subr.mxu0 0.0
    %2741 = vmatpush1.msra.mxu0 0.0
    %2742 = vmatprep.subr.mxu0 0.0
    %2743 = vmatpush1.msra.mxu0 0.0
    %2744 = vmatprep.mubr.f32.mxu0 0.0
    %2745 = vmatmul.mubr.f32.gmra.mrb[0].mxu0 %v2562
    %v2746 = vpop.f32.mrb[0].mxu0
    %v2747 = vadd.f32 0.0, %v2746
    %v2748 = vpop.f32.mrb[0].mxu0
    %v2749 = vadd.f32 0.0, %v2748
    %2750 = vmatprep.mubr.f32.mxu0 0.0
    %2751 = vmatmul.mubr.f32.gmra.mrb[0].mxu0 %v2565
    %v2752 = vpop.f32.mrb[0].mxu0
    %v2753 = vadd.f32 0.0, %v2752
    %v2754 = vpop.f32.mrb[0].mxu0
    %v2755 = vadd.f32 0.0, %v2754
    %2756 = vmatprep.mubr.f32.mxu0 0.0
    %2757 = vmatmul.mubr.f32.gmra.mrb[0].mxu0 %v2568
    %v2758 = vpop.f32.mrb[0].mxu0
    %v2759 = vadd.f32 0.0, %v2758
    %v2760 = vpop.f32.mrb[0].mxu0
    %v2761 = vadd.f32 0.0, %v2760
    %2762 = vmatprep.mubr.f32.mxu0 0.0
    %2763 = vmatmul.mubr.f32.gmra.mrb[0].mxu0 %v2571
    %v2764 = vpop.f32.mrb[0].mxu0
    %v2765 = vadd.f32 0.0, %v2764
    %v2766 = vpop.f32.mrb[0].mxu0
    %v2767 = vadd.f32 0.0, %v2766
    %2768 = vmatprep.mubr.f32.mxu0 0.0
    %2769 = vmatmul.mubr.f32.gmra.mrb[0].mxu0 %v2574
    %v2770 = vpop.f32.mrb[0].mxu0
    %v2771 = vadd.f32 0.0, %v2770
    %v2772 = vpop.f32.mrb[0].mxu0
    %v2773 = vadd.f32 0.0, %v2772
    %2774 = vmatprep.mubr.f32.mxu0 0.0
    %2775 = vmatmul.mubr.f32.gmra.mrb[0].mxu0 %v2577
    %v2776 = vpop.f32.mrb[0].mxu0
    %v2777 = vadd.f32 0.0, %v2776
    %v2778 = vpop.f32.mrb[0].mxu0
    %v2779 = vadd.f32 0.0, %v2778
    %2780 = vdwg.mxu0
    %2781 = vmatprep.subr.mxu0 %v755
    %2782 = vmatpush1.msra.mxu0 %v754
    %2783 = vmatprep.subr.mxu0 %v763
    %2784 = vmatpush1.msra.mxu0 %v762
    %2785 = vmatprep.subr.mxu0 %v771
    %2786 = vmatpush1.msra.mxu0 %v770
    %2787 = vmatprep.subr.mxu0 %v779
    %2788 = vmatpush1.msra.mxu0 %v778
    %2789 = vmatprep.subr.mxu0 0.0
    %2790 = vmatpush1.msra.mxu0 0.0
    %2791 = vmatprep.subr.mxu0 0.0
    %2792 = vmatpush1.msra.mxu0 0.0
    %2793 = vmatprep.subr.mxu0 0.0
    %2794 = vmatpush1.msra.mxu0 0.0
    %2795 = vmatprep.subr.mxu0 0.0
    %2796 = vmatpush1.msra.mxu0 0.0
    %2797 = vmatprep.subr.mxu0 0.0
    %2798 = vmatpush1.msra.mxu0 0.0
    %2799 = vmatprep.subr.mxu0 0.0
    %2800 = vmatpush1.msra.mxu0 0.0
    %2801 = vmatprep.subr.mxu0 0.0
    %2802 = vmatpush1.msra.mxu0 0.0
    %2803 = vmatprep.subr.mxu0 0.0
    %2804 = vmatpush1.msra.mxu0 0.0
    %2805 = vmatprep.subr.mxu0 0.0
    %2806 = vmatpush1.msra.mxu0 0.0
    %2807 = vmatprep.subr.mxu0 0.0
    %2808 = vmatpush1.msra.mxu0 0.0
    %2809 = vmatprep.subr.mxu0 0.0
    %2810 = vmatpush1.msra.mxu0 0.0
    %2811 = vmatprep.subr.mxu0 0.0
    %2812 = vmatpush1.msra.mxu0 0.0
    %2813 = vmatprep.subr.mxu0 0.0
    %2814 = vmatpush1.msra.mxu0 0.0
    %2815 = vmatprep.subr.mxu0 0.0
    %2816 = vmatpush1.msra.mxu0 0.0
    %2817 = vmatprep.subr.mxu0 0.0
    %2818 = vmatpush1.msra.mxu0 0.0
    %2819 = vmatprep.subr.mxu0 0.0
    %2820 = vmatpush1.msra.mxu0 0.0
    %2821 = vmatprep.subr.mxu0 0.0
    %2822 = vmatpush1.msra.mxu0 0.0
    %2823 = vmatprep.subr.mxu0 0.0
    %2824 = vmatpush1.msra.mxu0 0.0
    %2825 = vmatprep.subr.mxu0 0.0
    %2826 = vmatpush1.msra.mxu0 0.0
    %2827 = vmatprep.subr.mxu0 0.0
    %2828 = vmatpush1.msra.mxu0 0.0
    %2829 = vmatprep.subr.mxu0 0.0
    %2830 = vmatpush1.msra.mxu0 0.0
    %2831 = vmatprep.subr.mxu0 0.0
    %2832 = vmatpush1.msra.mxu0 0.0
    %2833 = vmatprep.subr.mxu0 0.0
    %2834 = vmatpush1.msra.mxu0 0.0
    %2835 = vmatprep.subr.mxu0 0.0
    %2836 = vmatpush1.msra.mxu0 0.0
    %2837 = vmatprep.subr.mxu0 0.0
    %2838 = vmatpush1.msra.mxu0 0.0
    %2839 = vmatprep.subr.mxu0 0.0
    %2840 = vmatpush1.msra.mxu0 0.0
    %2841 = vmatprep.subr.mxu0 0.0
    %2842 = vmatpush1.msra.mxu0 0.0
    %2843 = vmatprep.subr.mxu0 0.0
    %2844 = vmatpush1.msra.mxu0 0.0
    %2845 = vmatprep.mubr.f32.mxu0 0.0
    %2846 = vmatmul.mubr.f32.gmra.mrb[0].mxu0 %v2562
    %v2847 = vpop.f32.mrb[0].mxu0
    %v2848 = vadd.f32 0.0, %v2847
    %v2849 = vpop.f32.mrb[0].mxu0
    %v2850 = vadd.f32 0.0, %v2849
    %2851 = vmatprep.mubr.f32.mxu0 0.0
    %2852 = vmatmul.mubr.f32.gmra.mrb[0].mxu0 %v2565
    %v2853 = vpop.f32.mrb[0].mxu0
    %v2854 = vadd.f32 0.0, %v2853
    %v2855 = vpop.f32.mrb[0].mxu0
    %v2856 = vadd.f32 0.0, %v2855
    %2857 = vmatprep.mubr.f32.mxu0 0.0
    %2858 = vmatmul.mubr.f32.gmra.mrb[0].mxu0 %v2568
    %v2859 = vpop.f32.mrb[0].mxu0
    %v2860 = vadd.f32 0.0, %v2859
    %v2861 = vpop.f32.mrb[0].mxu0
    %v2862 = vadd.f32 0.0, %v2861
    %2863 = vmatprep.mubr.f32.mxu0 0.0
    %2864 = vmatmul.mubr.f32.gmra.mrb[0].mxu0 %v2571
    %v2865 = vpop.f32.mrb[0].mxu0
    %v2866 = vadd.f32 0.0, %v2865
    %v2867 = vpop.f32.mrb[0].mxu0
    %v2868 = vadd.f32 0.0, %v2867
    %2869 = vmatprep.mubr.f32.mxu0 0.0
    %2870 = vmatmul.mubr.f32.gmra.mrb[0].mxu0 %v2574
    %v2871 = vpop.f32.mrb[0].mxu0
    %v2872 = vadd.f32 0.0, %v2871
    %v2873 = vpop.f32.mrb[0].mxu0
    %v2874 = vadd.f32 0.0, %v2873
    %2875 = vmatprep.mubr.f32.mxu0 0.0
    %2876 = vmatmul.mubr.f32.gmra.mrb[0].mxu0 %v2577
    %v2877 = vpop.f32.mrb[0].mxu0
    %v2878 = vadd.f32 0.0, %v2877
    %v2879 = vpop.f32.mrb[0].mxu0
    %v2880 = vadd.f32 0.0, %v2879
    %2881 = vdwg.mxu0
    %2882 = vmatprep.subr.mxu0 %v757
    %2883 = vmatpush1.msra.mxu0 %v756
    %2884 = vmatprep.subr.mxu0 %v765
    %2885 = vmatpush1.msra.mxu0 %v764
    %2886 = vmatprep.subr.mxu0 %v773
    %2887 = vmatpush1.msra.mxu0 %v772
    %2888 = vmatprep.subr.mxu0 %v781
    %2889 = vmatpush1.msra.mxu0 %v780
    %2890 = vmatprep.subr.mxu0 0.0
    %2891 = vmatpush1.msra.mxu0 0.0
    %2892 = vmatprep.subr.mxu0 0.0
    %2893 = vmatpush1.msra.mxu0 0.0
    %2894 = vmatprep.subr.mxu0 0.0
    %2895 = vmatpush1.msra.mxu0 0.0
    %2896 = vmatprep.subr.mxu0 0.0
    %2897 = vmatpush1.msra.mxu0 0.0
    %2898 = vmatprep.subr.mxu0 0.0
    %2899 = vmatpush1.msra.mxu0 0.0
    %2900 = vmatprep.subr.mxu0 0.0
    %2901 = vmatpush1.msra.mxu0 0.0
    %2902 = vmatprep.subr.mxu0 0.0
    %2903 = vmatpush1.msra.mxu0 0.0
    %2904 = vmatprep.subr.mxu0 0.0
    %2905 = vmatpush1.msra.mxu0 0.0
    %2906 = vmatprep.subr.mxu0 0.0
    %2907 = vmatpush1.msra.mxu0 0.0
    %2908 = vmatprep.subr.mxu0 0.0
    %2909 = vmatpush1.msra.mxu0 0.0
    %2910 = vmatprep.subr.mxu0 0.0
    %2911 = vmatpush1.msra.mxu0 0.0
    %2912 = vmatprep.subr.mxu0 0.0
    %2913 = vmatpush1.msra.mxu0 0.0
    %2914 = vmatprep.subr.mxu0 0.0
    %2915 = vmatpush1.msra.mxu0 0.0
    %2916 = vmatprep.subr.mxu0 0.0
    %2917 = vmatpush1.msra.mxu0 0.0
    %2918 = vmatprep.subr.mxu0 0.0
    %2919 = vmatpush1.msra.mxu0 0.0
    %2920 = vmatprep.subr.mxu0 0.0
    %2921 = vmatpush1.msra.mxu0 0.0
    %2922 = vmatprep.subr.mxu0 0.0
    %2923 = vmatpush1.msra.mxu0 0.0
    %2924 = vmatprep.subr.mxu0 0.0
    %2925 = vmatpush1.msra.mxu0 0.0
    %2926 = vmatprep.subr.mxu0 0.0
    %2927 = vmatpush1.msra.mxu0 0.0
    %2928 = vmatprep.subr.mxu0 0.0
    %2929 = vmatpush1.msra.mxu0 0.0
    %2930 = vmatprep.subr.mxu0 0.0
    %2931 = vmatpush1.msra.mxu0 0.0
    %2932 = vmatprep.subr.mxu0 0.0
    %2933 = vmatpush1.msra.mxu0 0.0
    %2934 = vmatprep.subr.mxu0 0.0
    %2935 = vmatpush1.msra.mxu0 0.0
    %2936 = vmatprep.subr.mxu0 0.0
    %2937 = vmatpush1.msra.mxu0 0.0
    %2938 = vmatprep.subr.mxu0 0.0
    %2939 = vmatpush1.msra.mxu0 0.0
    %2940 = vmatprep.subr.mxu0 0.0
    %2941 = vmatpush1.msra.mxu0 0.0
    %2942 = vmatprep.subr.mxu0 0.0
    %2943 = vmatpush1.msra.mxu0 0.0
    %2944 = vmatprep.subr.mxu0 0.0
    %2945 = vmatpush1.msra.mxu0 0.0
    %2946 = vmatprep.mubr.f32.mxu0 0.0
    %2947 = vmatmul.mubr.f32.gmra.mrb[0].mxu0 %v2562
    %v2948 = vpop.f32.mrb[0].mxu0
    %v2949 = vadd.f32 0.0, %v2948
    %v2950 = vpop.f32.mrb[0].mxu0
    %v2951 = vadd.f32 0.0, %v2950
    %2952 = vmatprep.mubr.f32.mxu0 0.0
    %2953 = vmatmul.mubr.f32.gmra.mrb[0].mxu0 %v2565
    %v2954 = vpop.f32.mrb[0].mxu0
    %v2955 = vadd.f32 0.0, %v2954
    %v2956 = vpop.f32.mrb[0].mxu0
    %v2957 = vadd.f32 0.0, %v2956
    %2958 = vmatprep.mubr.f32.mxu0 0.0
    %2959 = vmatmul.mubr.f32.gmra.mrb[0].mxu0 %v2568
    %v2960 = vpop.f32.mrb[0].mxu0
    %v2961 = vadd.f32 0.0, %v2960
    %v2962 = vpop.f32.mrb[0].mxu0
    %v2963 = vadd.f32 0.0, %v2962
    %2964 = vmatprep.mubr.f32.mxu0 0.0
    %2965 = vmatmul.mubr.f32.gmra.mrb[0].mxu0 %v2571
    %v2966 = vpop.f32.mrb[0].mxu0
    %v2967 = vadd.f32 0.0, %v2966
    %v2968 = vpop.f32.mrb[0].mxu0
    %v2969 = vadd.f32 0.0, %v2968
    %2970 = vmatprep.mubr.f32.mxu0 0.0
    %2971 = vmatmul.mubr.f32.gmra.mrb[0].mxu0 %v2574
    %v2972 = vpop.f32.mrb[0].mxu0
    %v2973 = vadd.f32 0.0, %v2972
    %v2974 = vpop.f32.mrb[0].mxu0
    %v2975 = vadd.f32 0.0, %v2974
    %2976 = vmatprep.mubr.f32.mxu0 0.0
    %2977 = vmatmul.mubr.f32.gmra.mrb[0].mxu0 %v2577
    %v2978 = vpop.f32.mrb[0].mxu0
    %v2979 = vadd.f32 0.0, %v2978
    %v2980 = vpop.f32.mrb[0].mxu0
    %v2981 = vadd.f32 0.0, %v2980
    %2982 = vdwg.mxu0
    %v2983 = vmul.f32 %v2646, %v404
    %v2984 = vmul.f32 %v2648, %v406
    %v2985 = vmul.f32 %v2747, %v505
    %v2986 = vmul.f32 %v2749, %v507
    %v2987 = vmul.f32 %v2848, %v606
    %v2988 = vmul.f32 %v2850, %v608
    %v2989 = vmul.f32 %v2949, %v707
    %v2990 = vmul.f32 %v2951, %v709
    %v2991 = vmul.f32 %v2652, %v410
    %v2992 = vmul.f32 %v2654, %v412
    %v2993 = vmul.f32 %v2753, %v511
    %v2994 = vmul.f32 %v2755, %v513
    %v2995 = vmul.f32 %v2854, %v612
    %v2996 = vmul.f32 %v2856, %v614
    %v2997 = vmul.f32 %v2955, %v713
    %v2998 = vmul.f32 %v2957, %v715
    %v2999 = vmul.f32 %v2658, %v416
    %v3000 = vmul.f32 %v2660, %v418
    %v3001 = vmul.f32 %v2759, %v517
    %v3002 = vmul.f32 %v2761, %v519
    %v3003 = vmul.f32 %v2860, %v618
    %v3004 = vmul.f32 %v2862, %v620
    %v3005 = vmul.f32 %v2961, %v719
    %v3006 = vmul.f32 %v2963, %v721
    %v3007 = vmul.f32 %v2664, %v422
    %v3008 = vmul.f32 %v2666, %v424
    %v3009 = vmul.f32 %v2765, %v523
    %v3010 = vmul.f32 %v2767, %v525
    %v3011 = vmul.f32 %v2866, %v624
    %v3012 = vmul.f32 %v2868, %v626
    %v3013 = vmul.f32 %v2967, %v725
    %v3014 = vmul.f32 %v2969, %v727
    %v3015 = vmul.f32 %v2670, %v428
    %v3016 = vmul.f32 %v2672, %v430
    %v3017 = vmul.f32 %v2771, %v529
    %v3018 = vmul.f32 %v2773, %v531
    %v3019 = vmul.f32 %v2872, %v630
    %v3020 = vmul.f32 %v2874, %v632
    %v3021 = vmul.f32 %v2973, %v731
    %v3022 = vmul.f32 %v2975, %v733
    %v3023 = vmul.f32 %v2676, %v434
    %v3024 = vmul.f32 %v2678, %v436
    %v3025 = vmul.f32 %v2777, %v535
    %v3026 = vmul.f32 %v2779, %v537
    %v3027 = vmul.f32 %v2878, %v636
    %v3028 = vmul.f32 %v2880, %v638
    %v3029 = vmul.f32 %v2979, %v737
    %v3030 = vmul.f32 %v2981, %v739
    %3031 = vmatprep.subr.mxu0 0.0
    %3032 = vmatpush1.msra.mxu0 %v782
    %3033 = vmatprep.subr.mxu0 0.0
    %3034 = vmatpush1.msra.mxu0 %v783
    %3035 = vmatprep.subr.mxu0 0.0
    %3036 = vmatpush1.msra.mxu0 %v784
    %3037 = vmatprep.subr.mxu0 0.0
    %3038 = vmatpush1.msra.mxu0 %v785
    %3039 = vmatprep.subr.mxu0 0.0
    %3040 = vmatpush1.msra.mxu0 %v786
    %3041 = vmatprep.subr.mxu0 0.0
    %3042 = vmatpush1.msra.mxu0 %v787
    %3043 = vmatprep.subr.mxu0 0.0
    %3044 = vmatpush1.msra.mxu0 %v788
    %3045 = vmatprep.subr.mxu0 0.0
    %3046 = vmatpush1.msra.mxu0 %v789
    %3047 = vmatprep.subr.mxu0 0.0
    %3048 = vmatpush1.msra.mxu0 %v790
    %3049 = vmatprep.subr.mxu0 0.0
    %3050 = vmatpush1.msra.mxu0 %v791
    %3051 = vmatprep.subr.mxu0 0.0
    %3052 = vmatpush1.msra.mxu0 %v792
    %3053 = vmatprep.subr.mxu0 0.0
    %3054 = vmatpush1.msra.mxu0 %v793
    %3055 = vmatprep.subr.mxu0 0.0
    %3056 = vmatpush1.msra.mxu0 %v794
    %3057 = vmatprep.subr.mxu0 0.0
    %3058 = vmatpush1.msra.mxu0 %v795
    %3059 = vmatprep.subr.mxu0 0.0
    %3060 = vmatpush1.msra.mxu0 %v796
    %3061 = vmatprep.subr.mxu0 0.0
    %3062 = vmatpush1.msra.mxu0 %v797
    %3063 = vmatprep.subr.mxu0 0.0
    %3064 = vmatpush1.msra.mxu0 %v798
    %3065 = vmatprep.subr.mxu0 0.0
    %3066 = vmatpush1.msra.mxu0 %v799
    %3067 = vmatprep.subr.mxu0 0.0
    %3068 = vmatpush1.msra.mxu0 %v800
    %3069 = vmatprep.subr.mxu0 0.0
    %3070 = vmatpush1.msra.mxu0 %v801
    %3071 = vmatprep.subr.mxu0 0.0
    %3072 = vmatpush1.msra.mxu0 %v802
    %3073 = vmatprep.subr.mxu0 0.0
    %3074 = vmatpush1.msra.mxu0 %v803
    %3075 = vmatprep.subr.mxu0 0.0
    %3076 = vmatpush1.msra.mxu0 %v804
    %3077 = vmatprep.subr.mxu0 0.0
    %3078 = vmatpush1.msra.mxu0 %v805
    %3079 = vmatprep.subr.mxu0 0.0
    %3080 = vmatpush1.msra.mxu0 %v806
    %3081 = vmatprep.subr.mxu0 0.0
    %3082 = vmatpush1.msra.mxu0 %v807
    %3083 = vmatprep.subr.mxu0 0.0
    %3084 = vmatpush1.msra.mxu0 %v808
    %3085 = vmatprep.subr.mxu0 0.0
    %3086 = vmatpush1.msra.mxu0 %v809
    %3087 = vmatprep.subr.mxu0 0.0
    %3088 = vmatpush1.msra.mxu0 %v810
    %3089 = vmatprep.subr.mxu0 0.0
    %3090 = vmatpush1.msra.mxu0 %v811
    %3091 = vmatprep.subr.mxu0 0.0
    %3092 = vmatpush1.msra.mxu0 %v812
    %3093 = vmatprep.subr.mxu0 0.0
    %3094 = vmatpush1.msra.mxu0 %v813
    %3095 = vmatprep.mubr.f32.mxu0 %v2984
    %3096 = vmatmul.mubr.f32.gmra.mrb[0].mxu0 %v2983
    %v3097 = vpop.f32.mrb[0].mxu0
    %v3098 = vadd.f32 0.0, %v3097
    %v3099 = vpop.f32.mrb[0].mxu0
    %3100 = vmatprep.mubr.f32.mxu0 %v2992
    %3101 = vmatmul.mubr.f32.gmra.mrb[0].mxu0 %v2991
    %v3102 = vpop.f32.mrb[0].mxu0
    %v3103 = vadd.f32 0.0, %v3102
    %v3104 = vpop.f32.mrb[0].mxu0
    %3105 = vmatprep.mubr.f32.mxu0 %v3000
    %3106 = vmatmul.mubr.f32.gmra.mrb[0].mxu0 %v2999
    %v3107 = vpop.f32.mrb[0].mxu0
    %v3108 = vadd.f32 0.0, %v3107
    %v3109 = vpop.f32.mrb[0].mxu0
    %3110 = vmatprep.mubr.f32.mxu0 %v3008
    %3111 = vmatmul.mubr.f32.gmra.mrb[0].mxu0 %v3007
    %v3112 = vpop.f32.mrb[0].mxu0
    %v3113 = vadd.f32 0.0, %v3112
    %v3114 = vpop.f32.mrb[0].mxu0
    %3115 = vmatprep.mubr.f32.mxu0 %v3016
    %3116 = vmatmul.mubr.f32.gmra.mrb[0].mxu0 %v3015
    %v3117 = vpop.f32.mrb[0].mxu0
    %v3118 = vadd.f32 0.0, %v3117
    %v3119 = vpop.f32.mrb[0].mxu0
    %3120 = vmatprep.mubr.f32.mxu0 %v3024
    %3121 = vmatmul.mubr.f32.gmra.mrb[0].mxu0 %v3023
    %v3122 = vpop.f32.mrb[0].mxu0
    %v3123 = vadd.f32 0.0, %v3122
    %v3124 = vpop.f32.mrb[0].mxu0
    %3125 = vdwg.mxu0
    %3126 = vmatprep.subr.mxu0 0.0
    %3127 = vmatpush1.msra.mxu0 %v814
    %3128 = vmatprep.subr.mxu0 0.0
    %3129 = vmatpush1.msra.mxu0 %v815
    %3130 = vmatprep.subr.mxu0 0.0
    %3131 = vmatpush1.msra.mxu0 %v816
    %3132 = vmatprep.subr.mxu0 0.0
    %3133 = vmatpush1.msra.mxu0 %v817
    %3134 = vmatprep.subr.mxu0 0.0
    %3135 = vmatpush1.msra.mxu0 %v818
    %3136 = vmatprep.subr.mxu0 0.0
    %3137 = vmatpush1.msra.mxu0 %v819
    %3138 = vmatprep.subr.mxu0 0.0
    %3139 = vmatpush1.msra.mxu0 %v820
    %3140 = vmatprep.subr.mxu0 0.0
    %3141 = vmatpush1.msra.mxu0 %v821
    %3142 = vmatprep.subr.mxu0 0.0
    %3143 = vmatpush1.msra.mxu0 %v822
    %3144 = vmatprep.subr.mxu0 0.0
    %3145 = vmatpush1.msra.mxu0 %v823
    %3146 = vmatprep.subr.mxu0 0.0
    %3147 = vmatpush1.msra.mxu0 %v824
    %3148 = vmatprep.subr.mxu0 0.0
    %3149 = vmatpush1.msra.mxu0 %v825
    %3150 = vmatprep.subr.mxu0 0.0
    %3151 = vmatpush1.msra.mxu0 %v826
    %3152 = vmatprep.subr.mxu0 0.0
    %3153 = vmatpush1.msra.mxu0 %v827
    %3154 = vmatprep.subr.mxu0 0.0
    %3155 = vmatpush1.msra.mxu0 %v828
    %3156 = vmatprep.subr.mxu0 0.0
    %3157 = vmatpush1.msra.mxu0 %v829
    %3158 = vmatprep.subr.mxu0 0.0
    %3159 = vmatpush1.msra.mxu0 %v830
    %3160 = vmatprep.subr.mxu0 0.0
    %3161 = vmatpush1.msra.mxu0 %v831
    %3162 = vmatprep.subr.mxu0 0.0
    %3163 = vmatpush1.msra.mxu0 %v832
    %3164 = vmatprep.subr.mxu0 0.0
    %3165 = vmatpush1.msra.mxu0 %v833
    %3166 = vmatprep.subr.mxu0 0.0
    %3167 = vmatpush1.msra.mxu0 %v834
    %3168 = vmatprep.subr.mxu0 0.0
    %3169 = vmatpush1.msra.mxu0 %v835
    %3170 = vmatprep.subr.mxu0 0.0
    %3171 = vmatpush1.msra.mxu0 %v836
    %3172 = vmatprep.subr.mxu0 0.0
    %3173 = vmatpush1.msra.mxu0 %v837
    %3174 = vmatprep.subr.mxu0 0.0
    %3175 = vmatpush1.msra.mxu0 %v838
    %3176 = vmatprep.subr.mxu0 0.0
    %3177 = vmatpush1.msra.mxu0 %v839
    %3178 = vmatprep.subr.mxu0 0.0
    %3179 = vmatpush1.msra.mxu0 %v840
    %3180 = vmatprep.subr.mxu0 0.0
    %3181 = vmatpush1.msra.mxu0 %v841
    %3182 = vmatprep.subr.mxu0 0.0
    %3183 = vmatpush1.msra.mxu0 %v842
    %3184 = vmatprep.subr.mxu0 0.0
    %3185 = vmatpush1.msra.mxu0 %v843
    %3186 = vmatprep.subr.mxu0 0.0
    %3187 = vmatpush1.msra.mxu0 %v844
    %3188 = vmatprep.subr.mxu0 0.0
    %3189 = vmatpush1.msra.mxu0 %v845
    %3190 = vmatprep.mubr.f32.mxu0 %v2986
    %3191 = vmatmul.mubr.f32.gmra.mrb[0].mxu0 %v2985
    %v3192 = vpop.f32.mrb[0].mxu0
    %v3193 = vadd.f32 %v3098, %v3192
    %v3194 = vpop.f32.mrb[0].mxu0
    %3195 = vmatprep.mubr.f32.mxu0 %v2994
    %3196 = vmatmul.mubr.f32.gmra.mrb[0].mxu0 %v2993
    %v3197 = vpop.f32.mrb[0].mxu0
    %v3198 = vadd.f32 %v3103, %v3197
    %v3199 = vpop.f32.mrb[0].mxu0
    %3200 = vmatprep.mubr.f32.mxu0 %v3002
    %3201 = vmatmul.mubr.f32.gmra.mrb[0].mxu0 %v3001
    %v3202 = vpop.f32.mrb[0].mxu0
    %v3203 = vadd.f32 %v3108, %v3202
    %v3204 = vpop.f32.mrb[0].mxu0
    %3205 = vmatprep.mubr.f32.mxu0 %v3010
    %3206 = vmatmul.mubr.f32.gmra.mrb[0].mxu0 %v3009
    %v3207 = vpop.f32.mrb[0].mxu0
    %v3208 = vadd.f32 %v3113, %v3207
    %v3209 = vpop.f32.mrb[0].mxu0
    %3210 = vmatprep.mubr.f32.mxu0 %v3018
    %3211 = vmatmul.mubr.f32.gmra.mrb[0].mxu0 %v3017
    %v3212 = vpop.f32.mrb[0].mxu0
    %v3213 = vadd.f32 %v3118, %v3212
    %v3214 = vpop.f32.mrb[0].mxu0
    %3215 = vmatprep.mubr.f32.mxu0 %v3026
    %3216 = vmatmul.mubr.f32.gmra.mrb[0].mxu0 %v3025
    %v3217 = vpop.f32.mrb[0].mxu0
    %v3218 = vadd.f32 %v3123, %v3217
    %v3219 = vpop.f32.mrb[0].mxu0
    %3220 = vdwg.mxu0
    %3221 = vmatprep.subr.mxu0 0.0
    %3222 = vmatpush1.msra.mxu0 %v846
    %3223 = vmatprep.subr.mxu0 0.0
    %3224 = vmatpush1.msra.mxu0 %v847
    %3225 = vmatprep.subr.mxu0 0.0
    %3226 = vmatpush1.msra.mxu0 %v848
    %3227 = vmatprep.subr.mxu0 0.0
    %3228 = vmatpush1.msra.mxu0 %v849
    %3229 = vmatprep.subr.mxu0 0.0
    %3230 = vmatpush1.msra.mxu0 %v850
    %3231 = vmatprep.subr.mxu0 0.0
    %3232 = vmatpush1.msra.mxu0 %v851
    %3233 = vmatprep.subr.mxu0 0.0
    %3234 = vmatpush1.msra.mxu0 %v852
    %3235 = vmatprep.subr.mxu0 0.0
    %3236 = vmatpush1.msra.mxu0 %v853
    %3237 = vmatprep.subr.mxu0 0.0
    %3238 = vmatpush1.msra.mxu0 %v854
    %3239 = vmatprep.subr.mxu0 0.0
    %3240 = vmatpush1.msra.mxu0 %v855
    %3241 = vmatprep.subr.mxu0 0.0
    %3242 = vmatpush1.msra.mxu0 %v856
    %3243 = vmatprep.subr.mxu0 0.0
    %3244 = vmatpush1.msra.mxu0 %v857
    %3245 = vmatprep.subr.mxu0 0.0
    %3246 = vmatpush1.msra.mxu0 %v858
    %3247 = vmatprep.subr.mxu0 0.0
    %3248 = vmatpush1.msra.mxu0 %v859
    %3249 = vmatprep.subr.mxu0 0.0
    %3250 = vmatpush1.msra.mxu0 %v860
    %3251 = vmatprep.subr.mxu0 0.0
    %3252 = vmatpush1.msra.mxu0 %v861
    %3253 = vmatprep.subr.mxu0 0.0
    %3254 = vmatpush1.msra.mxu0 %v862
    %3255 = vmatprep.subr.mxu0 0.0
    %3256 = vmatpush1.msra.mxu0 %v863
    %3257 = vmatprep.subr.mxu0 0.0
    %3258 = vmatpush1.msra.mxu0 %v864
    %3259 = vmatprep.subr.mxu0 0.0
    %3260 = vmatpush1.msra.mxu0 %v865
    %3261 = vmatprep.subr.mxu0 0.0
    %3262 = vmatpush1.msra.mxu0 %v866
    %3263 = vmatprep.subr.mxu0 0.0
    %3264 = vmatpush1.msra.mxu0 %v867
    %3265 = vmatprep.subr.mxu0 0.0
    %3266 = vmatpush1.msra.mxu0 %v868
    %3267 = vmatprep.subr.mxu0 0.0
    %3268 = vmatpush1.msra.mxu0 %v869
    %3269 = vmatprep.subr.mxu0 0.0
    %3270 = vmatpush1.msra.mxu0 %v870
    %3271 = vmatprep.subr.mxu0 0.0
    %3272 = vmatpush1.msra.mxu0 %v871
    %3273 = vmatprep.subr.mxu0 0.0
    %3274 = vmatpush1.msra.mxu0 %v872
    %3275 = vmatprep.subr.mxu0 0.0
    %3276 = vmatpush1.msra.mxu0 %v873
    %3277 = vmatprep.subr.mxu0 0.0
    %3278 = vmatpush1.msra.mxu0 %v874
    %3279 = vmatprep.subr.mxu0 0.0
    %3280 = vmatpush1.msra.mxu0 %v875
    %3281 = vmatprep.subr.mxu0 0.0
    %3282 = vmatpush1.msra.mxu0 %v876
    %3283 = vmatprep.subr.mxu0 0.0
    %3284 = vmatpush1.msra.mxu0 %v877
    %3285 = vmatprep.mubr.f32.mxu0 %v2988
    %3286 = vmatmul.mubr.f32.gmra.mrb[0].mxu0 %v2987
    %v3287 = vpop.f32.mrb[0].mxu0
    %v3288 = vadd.f32 %v3193, %v3287
    %v3289 = vpop.f32.mrb[0].mxu0
    %3290 = vmatprep.mubr.f32.mxu0 %v2996
    %3291 = vmatmul.mubr.f32.gmra.mrb[0].mxu0 %v2995
    %v3292 = vpop.f32.mrb[0].mxu0
    %v3293 = vadd.f32 %v3198, %v3292
    %v3294 = vpop.f32.mrb[0].mxu0
    %3295 = vmatprep.mubr.f32.mxu0 %v3004
    %3296 = vmatmul.mubr.f32.gmra.mrb[0].mxu0 %v3003
    %v3297 = vpop.f32.mrb[0].mxu0
    %v3298 = vadd.f32 %v3203, %v3297
    %v3299 = vpop.f32.mrb[0].mxu0
    %3300 = vmatprep.mubr.f32.mxu0 %v3012
    %3301 = vmatmul.mubr.f32.gmra.mrb[0].mxu0 %v3011
    %v3302 = vpop.f32.mrb[0].mxu0
    %v3303 = vadd.f32 %v3208, %v3302
    %v3304 = vpop.f32.mrb[0].mxu0
    %3305 = vmatprep.mubr.f32.mxu0 %v3020
    %3306 = vmatmul.mubr.f32.gmra.mrb[0].mxu0 %v3019
    %v3307 = vpop.f32.mrb[0].mxu0
    %v3308 = vadd.f32 %v3213, %v3307
    %v3309 = vpop.f32.mrb[0].mxu0
    %3310 = vmatprep.mubr.f32.mxu0 %v3028
    %3311 = vmatmul.mubr.f32.gmra.mrb[0].mxu0 %v3027
    %v3312 = vpop.f32.mrb[0].mxu0
    %v3313 = vadd.f32 %v3218, %v3312
    %v3314 = vpop.f32.mrb[0].mxu0
    %3315 = vdwg.mxu0
    %3316 = vmatprep.subr.mxu0 0.0
    %3317 = vmatpush1.msra.mxu0 %v878
    %3318 = vmatprep.subr.mxu0 0.0
    %3319 = vmatpush1.msra.mxu0 %v879
    %3320 = vmatprep.subr.mxu0 0.0
    %3321 = vmatpush1.msra.mxu0 %v880
    %3322 = vmatprep.subr.mxu0 0.0
    %3323 = vmatpush1.msra.mxu0 %v881
    %3324 = vmatprep.subr.mxu0 0.0
    %3325 = vmatpush1.msra.mxu0 %v882
    %3326 = vmatprep.subr.mxu0 0.0
    %3327 = vmatpush1.msra.mxu0 %v883
    %3328 = vmatprep.subr.mxu0 0.0
    %3329 = vmatpush1.msra.mxu0 %v884
    %3330 = vmatprep.subr.mxu0 0.0
    %3331 = vmatpush1.msra.mxu0 %v885
    %3332 = vmatprep.subr.mxu0 0.0
    %3333 = vmatpush1.msra.mxu0 %v886
    %3334 = vmatprep.subr.mxu0 0.0
    %3335 = vmatpush1.msra.mxu0 %v887
    %3336 = vmatprep.subr.mxu0 0.0
    %3337 = vmatpush1.msra.mxu0 %v888
    %3338 = vmatprep.subr.mxu0 0.0
    %3339 = vmatpush1.msra.mxu0 %v889
    %3340 = vmatprep.subr.mxu0 0.0
    %3341 = vmatpush1.msra.mxu0 %v890
    %3342 = vmatprep.subr.mxu0 0.0
    %3343 = vmatpush1.msra.mxu0 %v891
    %3344 = vmatprep.subr.mxu0 0.0
    %3345 = vmatpush1.msra.mxu0 %v892
    %3346 = vmatprep.subr.mxu0 0.0
    %3347 = vmatpush1.msra.mxu0 %v893
    %3348 = vmatprep.subr.mxu0 0.0
    %3349 = vmatpush1.msra.mxu0 %v894
    %3350 = vmatprep.subr.mxu0 0.0
    %3351 = vmatpush1.msra.mxu0 %v895
    %3352 = vmatprep.subr.mxu0 0.0
    %3353 = vmatpush1.msra.mxu0 %v896
    %3354 = vmatprep.subr.mxu0 0.0
    %3355 = vmatpush1.msra.mxu0 %v897
    %3356 = vmatprep.subr.mxu0 0.0
    %3357 = vmatpush1.msra.mxu0 %v898
    %3358 = vmatprep.subr.mxu0 0.0
    %3359 = vmatpush1.msra.mxu0 %v899
    %3360 = vmatprep.subr.mxu0 0.0
    %3361 = vmatpush1.msra.mxu0 %v900
    %3362 = vmatprep.subr.mxu0 0.0
    %3363 = vmatpush1.msra.mxu0 %v901
    %3364 = vmatprep.subr.mxu0 0.0
    %3365 = vmatpush1.msra.mxu0 %v902
    %3366 = vmatprep.subr.mxu0 0.0
    %3367 = vmatpush1.msra.mxu0 %v903
    %3368 = vmatprep.subr.mxu0 0.0
    %3369 = vmatpush1.msra.mxu0 %v904
    %3370 = vmatprep.subr.mxu0 0.0
    %3371 = vmatpush1.msra.mxu0 %v905
    %3372 = vmatprep.subr.mxu0 0.0
    %3373 = vmatpush1.msra.mxu0 %v906
    %3374 = vmatprep.subr.mxu0 0.0
    %3375 = vmatpush1.msra.mxu0 %v907
    %3376 = vmatprep.subr.mxu0 0.0
    %3377 = vmatpush1.msra.mxu0 %v908
    %3378 = vmatprep.subr.mxu0 0.0
    %3379 = vmatpush1.msra.mxu0 %v909
    %3380 = vmatprep.mubr.f32.mxu0 %v2990
    %3381 = vmatmul.mubr.f32.gmra.mrb[0].mxu0 %v2989
    %v3382 = vpop.f32.mrb[0].mxu0
    %v3383 = vadd.f32 %v3288, %v3382
    %v3384 = vpop.f32.mrb[0].mxu0
    %3385 = vmatprep.mubr.f32.mxu0 %v2998
    %3386 = vmatmul.mubr.f32.gmra.mrb[0].mxu0 %v2997
    %v3387 = vpop.f32.mrb[0].mxu0
    %v3388 = vadd.f32 %v3293, %v3387
    %v3389 = vpop.f32.mrb[0].mxu0
    %3390 = vmatprep.mubr.f32.mxu0 %v3006
    %3391 = vmatmul.mubr.f32.gmra.mrb[0].mxu0 %v3005
    %v3392 = vpop.f32.mrb[0].mxu0
    %v3393 = vadd.f32 %v3298, %v3392
    %v3394 = vpop.f32.mrb[0].mxu0
    %3395 = vmatprep.mubr.f32.mxu0 %v3014
    %3396 = vmatmul.mubr.f32.gmra.mrb[0].mxu0 %v3013
    %v3397 = vpop.f32.mrb[0].mxu0
    %v3398 = vadd.f32 %v3303, %v3397
    %v3399 = vpop.f32.mrb[0].mxu0
    %3400 = vmatprep.mubr.f32.mxu0 %v3022
    %3401 = vmatmul.mubr.f32.gmra.mrb[0].mxu0 %v3021
    %v3402 = vpop.f32.mrb[0].mxu0
    %v3403 = vadd.f32 %v3308, %v3402
    %v3404 = vpop.f32.mrb[0].mxu0
    %3405 = vmatprep.mubr.f32.mxu0 %v3030
    %3406 = vmatmul.mubr.f32.gmra.mrb[0].mxu0 %v3029
    %v3407 = vpop.f32.mrb[0].mxu0
    %v3408 = vadd.f32 %v3313, %v3407
    %v3409 = vpop.f32.mrb[0].mxu0
    %3410 = vdwg.mxu0
    %v3411 = vsel %vm1144, %v2458, 0
    %v3413 = vsel %vm1144, %v2460, 0
    %v3415 = vsel %vm1144, %v2462, 0
    %3417 = vmatprep.subr.mxu0 0.0
    %3418 = vmatpush1.msra.mxu0 %v910
    %3419 = vmatprep.subr.mxu0 0.0
    %3420 = vmatpush1.msra.mxu0 %v911
    %3421 = vmatprep.subr.mxu0 0.0
    %3422 = vmatpush1.msra.mxu0 %v912
    %3423 = vmatprep.subr.mxu0 0.0
    %3424 = vmatpush1.msra.mxu0 %v913
    %3425 = vmatprep.subr.mxu0 0.0
    %3426 = vmatpush1.msra.mxu0 0.0
    %3427 = vmatprep.subr.mxu0 0.0
    %3428 = vmatpush1.msra.mxu0 0.0
    %3429 = vmatprep.subr.mxu0 0.0
    %3430 = vmatpush1.msra.mxu0 0.0
    %3431 = vmatprep.subr.mxu0 0.0
    %3432 = vmatpush1.msra.mxu0 0.0
    %3433 = vmatprep.subr.mxu0 0.0
    %3434 = vmatpush1.msra.mxu0 0.0
    %3435 = vmatprep.subr.mxu0 0.0
    %3436 = vmatpush1.msra.mxu0 0.0
    %3437 = vmatprep.subr.mxu0 0.0
    %3438 = vmatpush1.msra.mxu0 0.0
    %3439 = vmatprep.subr.mxu0 0.0
    %3440 = vmatpush1.msra.mxu0 0.0
    %3441 = vmatprep.subr.mxu0 0.0
    %3442 = vmatpush1.msra.mxu0 0.0
    %3443 = vmatprep.subr.mxu0 0.0
    %3444 = vmatpush1.msra.mxu0 0.0
    %3445 = vmatprep.subr.mxu0 0.0
    %3446 = vmatpush1.msra.mxu0 0.0
    %3447 = vmatprep.subr.mxu0 0.0
    %3448 = vmatpush1.msra.mxu0 0.0
    %3449 = vmatprep.subr.mxu0 0.0
    %3450 = vmatpush1.msra.mxu0 0.0
    %3451 = vmatprep.subr.mxu0 0.0
    %3452 = vmatpush1.msra.mxu0 0.0
    %3453 = vmatprep.subr.mxu0 0.0
    %3454 = vmatpush1.msra.mxu0 0.0
    %3455 = vmatprep.subr.mxu0 0.0
    %3456 = vmatpush1.msra.mxu0 0.0
    %3457 = vmatprep.subr.mxu0 0.0
    %3458 = vmatpush1.msra.mxu0 0.0
    %3459 = vmatprep.subr.mxu0 0.0
    %3460 = vmatpush1.msra.mxu0 0.0
    %3461 = vmatprep.subr.mxu0 0.0
    %3462 = vmatpush1.msra.mxu0 0.0
    %3463 = vmatprep.subr.mxu0 0.0
    %3464 = vmatpush1.msra.mxu0 0.0
    %3465 = vmatprep.subr.mxu0 0.0
    %3466 = vmatpush1.msra.mxu0 0.0
    %3467 = vmatprep.subr.mxu0 0.0
    %3468 = vmatpush1.msra.mxu0 0.0
    %3469 = vmatprep.subr.mxu0 0.0
    %3470 = vmatpush1.msra.mxu0 0.0
    %3471 = vmatprep.subr.mxu0 0.0
    %3472 = vmatpush1.msra.mxu0 0.0
    %3473 = vmatprep.subr.mxu0 0.0
    %3474 = vmatpush1.msra.mxu0 0.0
    %3475 = vmatprep.subr.mxu0 0.0
    %3476 = vmatpush1.msra.mxu0 0.0
    %3477 = vmatprep.subr.mxu0 0.0
    %3478 = vmatpush1.msra.mxu0 0.0
    %3479 = vmatprep.subr.mxu0 0.0
    %3480 = vmatpush1.msra.mxu0 0.0
    %3481 = vmatprep.mubr.f32.mxu0 0.0
    %3482 = vmatmul.mubr.f32.gmra.mrb[0].mxu0 %v3411
    %v3483 = vpop.f32.mrb[0].mxu0
    %v3484 = vadd.f32 0.0, %v3483
    %v3485 = vpop.f32.mrb[0].mxu0
    %3486 = vmatprep.mubr.f32.mxu0 0.0
    %3487 = vmatmul.mubr.f32.gmra.mrb[0].mxu0 %v3413
    %v3488 = vpop.f32.mrb[0].mxu0
    %v3489 = vadd.f32 0.0, %v3488
    %v3490 = vpop.f32.mrb[0].mxu0
    %3491 = vmatprep.mubr.f32.mxu0 0.0
    %3492 = vmatmul.mubr.f32.gmra.mrb[0].mxu0 %v3415
    %v3493 = vpop.f32.mrb[0].mxu0
    %v3494 = vadd.f32 0.0, %v3493
    %v3495 = vpop.f32.mrb[0].mxu0
    %3496 = vdwg.mxu0
    %3497 = vmatprep.subr.mxu0 0.0
    %3498 = vmatpush1.msra.mxu0 %v3383
    %3499 = vmatprep.subr.mxu0 0.0
    %3500 = vmatpush1.msra.mxu0 %v3388
    %3501 = vmatprep.subr.mxu0 0.0
    %3502 = vmatpush1.msra.mxu0 %v3393
    %3503 = vmatprep.subr.mxu0 0.0
    %3504 = vmatpush1.msra.mxu0 %v3398
    %3505 = vmatprep.subr.mxu0 0.0
    %3506 = vmatpush1.msra.mxu0 %v3403
    %3507 = vmatprep.subr.mxu0 0.0
    %3508 = vmatpush1.msra.mxu0 %v3408
    %3509 = vmatprep.subr.mxu0 0.0
    %3510 = vmatpush1.msra.mxu0 0.0
    %3511 = vmatprep.subr.mxu0 0.0
    %3512 = vmatpush1.msra.mxu0 0.0
    %3513 = vmatprep.subr.mxu0 0.0
    %3514 = vmatpush1.msra.mxu0 0.0
    %3515 = vmatprep.subr.mxu0 0.0
    %3516 = vmatpush1.msra.mxu0 0.0
    %3517 = vmatprep.subr.mxu0 0.0
    %3518 = vmatpush1.msra.mxu0 0.0
    %3519 = vmatprep.subr.mxu0 0.0
    %3520 = vmatpush1.msra.mxu0 0.0
    %3521 = vmatprep.subr.mxu0 0.0
    %3522 = vmatpush1.msra.mxu0 0.0
    %3523 = vmatprep.subr.mxu0 0.0
    %3524 = vmatpush1.msra.mxu0 0.0
    %3525 = vmatprep.subr.mxu0 0.0
    %3526 = vmatpush1.msra.mxu0 0.0
    %3527 = vmatprep.subr.mxu0 0.0
    %3528 = vmatpush1.msra.mxu0 0.0
    %3529 = vmatprep.subr.mxu0 0.0
    %3530 = vmatpush1.msra.mxu0 0.0
    %3531 = vmatprep.subr.mxu0 0.0
    %3532 = vmatpush1.msra.mxu0 0.0
    %3533 = vmatprep.subr.mxu0 0.0
    %3534 = vmatpush1.msra.mxu0 0.0
    %3535 = vmatprep.subr.mxu0 0.0
    %3536 = vmatpush1.msra.mxu0 0.0
    %3537 = vmatprep.subr.mxu0 0.0
    %3538 = vmatpush1.msra.mxu0 0.0
    %3539 = vmatprep.subr.mxu0 0.0
    %3540 = vmatpush1.msra.mxu0 0.0
    %3541 = vmatprep.subr.mxu0 0.0
    %3542 = vmatpush1.msra.mxu0 0.0
    %3543 = vmatprep.subr.mxu0 0.0
    %3544 = vmatpush1.msra.mxu0 0.0
    %3545 = vmatprep.subr.mxu0 0.0
    %3546 = vmatpush1.msra.mxu0 0.0
    %3547 = vmatprep.subr.mxu0 0.0
    %3548 = vmatpush1.msra.mxu0 0.0
    %3549 = vmatprep.subr.mxu0 0.0
    %3550 = vmatpush1.msra.mxu0 0.0
    %3551 = vmatprep.subr.mxu0 0.0
    %3552 = vmatpush1.msra.mxu0 0.0
    %3553 = vmatprep.subr.mxu0 0.0
    %3554 = vmatpush1.msra.mxu0 0.0
    %3555 = vmatprep.subr.mxu0 0.0
    %3556 = vmatpush1.msra.mxu0 0.0
    %3557 = vmatprep.subr.mxu0 0.0
    %3558 = vmatpush1.msra.mxu0 0.0
    %3559 = vmatprep.subr.mxu0 0.0
    %3560 = vmatpush1.msra.mxu0 0.0
    %3561 = vmatprep.mubr.f32.mxu0 0.0
    %3562 = vmatmul.mubr.f32.gmra.mrb[0].mxu0 %v2086
    %v3563 = vpop.f32.mrb[0].mxu0
    %v3564 = vadd.f32 %v3484, %v3563
    %v3565 = vpop.f32.mrb[0].mxu0
    %3566 = vmatprep.mubr.f32.mxu0 0.0
    %3567 = vmatmul.mubr.f32.gmra.mrb[0].mxu0 %v2089
    %v3568 = vpop.f32.mrb[0].mxu0
    %v3569 = vadd.f32 %v3489, %v3568
    %v3570 = vpop.f32.mrb[0].mxu0
    %3571 = vmatprep.mubr.f32.mxu0 0.0
    %3572 = vmatmul.mubr.f32.gmra.mrb[0].mxu0 %v2092
    %v3573 = vpop.f32.mrb[0].mxu0
    %v3574 = vadd.f32 %v3494, %v3573
    %v3575 = vpop.f32.mrb[0].mxu0
    %3576 = vdwg.mxu0
    %v3577 = vadd.f32 %v3564, %v2178
    %v3578 = vadd.f32 %v3569, %v2178
    %v3579 = vadd.f32 %v3574, %v2178
    %v3580 = vmax.f32 %v3577, 0.0
    %v3581 = vmax.f32 %v3578, 0.0
    %v3582 = vmax.f32 %v3579, 0.0
    %v3584 = vsel %vm1144, %v3580, 0
    %v3587 = vsel %vm1144, %v3581, 0
    %v3590 = vsel %vm1144, %v3582, 0
    %3592 = vmatprep.subr.mxu0 0.0
    %3593 = vmatpush1.msra.mxu0 %v915
    %3594 = vmatprep.subr.mxu0 0.0
    %3595 = vmatpush1.msra.mxu0 %v916
    %3596 = vmatprep.subr.mxu0 0.0
    %3597 = vmatpush1.msra.mxu0 %v917
    %3598 = vmatprep.subr.mxu0 0.0
    %3599 = vmatpush1.msra.mxu0 %v918
    %3600 = vmatprep.subr.mxu0 0.0
    %3601 = vmatpush1.msra.mxu0 0.0
    %3602 = vmatprep.subr.mxu0 0.0
    %3603 = vmatpush1.msra.mxu0 0.0
    %3604 = vmatprep.subr.mxu0 0.0
    %3605 = vmatpush1.msra.mxu0 0.0
    %3606 = vmatprep.subr.mxu0 0.0
    %3607 = vmatpush1.msra.mxu0 0.0
    %3608 = vmatprep.subr.mxu0 0.0
    %3609 = vmatpush1.msra.mxu0 0.0
    %3610 = vmatprep.subr.mxu0 0.0
    %3611 = vmatpush1.msra.mxu0 0.0
    %3612 = vmatprep.subr.mxu0 0.0
    %3613 = vmatpush1.msra.mxu0 0.0
    %3614 = vmatprep.subr.mxu0 0.0
    %3615 = vmatpush1.msra.mxu0 0.0
    %3616 = vmatprep.subr.mxu0 0.0
    %3617 = vmatpush1.msra.mxu0 0.0
    %3618 = vmatprep.subr.mxu0 0.0
    %3619 = vmatpush1.msra.mxu0 0.0
    %3620 = vmatprep.subr.mxu0 0.0
    %3621 = vmatpush1.msra.mxu0 0.0
    %3622 = vmatprep.subr.mxu0 0.0
    %3623 = vmatpush1.msra.mxu0 0.0
    %3624 = vmatprep.subr.mxu0 0.0
    %3625 = vmatpush1.msra.mxu0 0.0
    %3626 = vmatprep.subr.mxu0 0.0
    %3627 = vmatpush1.msra.mxu0 0.0
    %3628 = vmatprep.subr.mxu0 0.0
    %3629 = vmatpush1.msra.mxu0 0.0
    %3630 = vmatprep.subr.mxu0 0.0
    %3631 = vmatpush1.msra.mxu0 0.0
    %3632 = vmatprep.subr.mxu0 0.0
    %3633 = vmatpush1.msra.mxu0 0.0
    %3634 = vmatprep.subr.mxu0 0.0
    %3635 = vmatpush1.msra.mxu0 0.0
    %3636 = vmatprep.subr.mxu0 0.0
    %3637 = vmatpush1.msra.mxu0 0.0
    %3638 = vmatprep.subr.mxu0 0.0
    %3639 = vmatpush1.msra.mxu0 0.0
    %3640 = vmatprep.subr.mxu0 0.0
    %3641 = vmatpush1.msra.mxu0 0.0
    %3642 = vmatprep.subr.mxu0 0.0
    %3643 = vmatpush1.msra.mxu0 0.0
    %3644 = vmatprep.subr.mxu0 0.0
    %3645 = vmatpush1.msra.mxu0 0.0
    %3646 = vmatprep.subr.mxu0 0.0
    %3647 = vmatpush1.msra.mxu0 0.0
    %3648 = vmatprep.subr.mxu0 0.0
    %3649 = vmatpush1.msra.mxu0 0.0
    %3650 = vmatprep.subr.mxu0 0.0
    %3651 = vmatpush1.msra.mxu0 0.0
    %3652 = vmatprep.subr.mxu0 0.0
    %3653 = vmatpush1.msra.mxu0 0.0
    %3654 = vmatprep.subr.mxu0 0.0
    %3655 = vmatpush1.msra.mxu0 0.0
    %3656 = vmatprep.mubr.f32.mxu0 0.0
    %3657 = vmatmul.mubr.f32.gmra.mrb[0].mxu0 %v3584
    %v3658 = vpop.f32.mrb[0].mxu0
    %v3659 = vadd.f32 %v2190, %v3658
    %v3660 = vpop.f32.mrb[0].mxu0
    %3661 = vmatprep.mubr.f32.mxu0 0.0
    %3662 = vmatmul.mubr.f32.gmra.mrb[0].mxu0 %v3587
    %v3663 = vpop.f32.mrb[0].mxu0
    %v3664 = vadd.f32 %v2190, %v3663
    %v3665 = vpop.f32.mrb[0].mxu0
    %3666 = vmatprep.mubr.f32.mxu0 0.0
    %3667 = vmatmul.mubr.f32.gmra.mrb[0].mxu0 %v3590
    %v3668 = vpop.f32.mrb[0].mxu0
    %v3669 = vadd.f32 %v2190, %v3668
    %v3670 = vpop.f32.mrb[0].mxu0
    %3671 = vdwg.mxu0
    %3672 = vmatprep.subr.mxu0 0.0
    %3673 = vmatpush1.msra.mxu0 %v919
    %3674 = vmatprep.subr.mxu0 0.0
    %3675 = vmatpush1.msra.mxu0 %v920
    %3676 = vmatprep.subr.mxu0 0.0
    %3677 = vmatpush1.msra.mxu0 %v921
    %3678 = vmatprep.subr.mxu0 0.0
    %3679 = vmatpush1.msra.mxu0 %v922
    %3680 = vmatprep.subr.mxu0 0.0
    %3681 = vmatpush1.msra.mxu0 0.0
    %3682 = vmatprep.subr.mxu0 0.0
    %3683 = vmatpush1.msra.mxu0 0.0
    %3684 = vmatprep.subr.mxu0 0.0
    %3685 = vmatpush1.msra.mxu0 0.0
    %3686 = vmatprep.subr.mxu0 0.0
    %3687 = vmatpush1.msra.mxu0 0.0
    %3688 = vmatprep.subr.mxu0 0.0
    %3689 = vmatpush1.msra.mxu0 0.0
    %3690 = vmatprep.subr.mxu0 0.0
    %3691 = vmatpush1.msra.mxu0 0.0
    %3692 = vmatprep.subr.mxu0 0.0
    %3693 = vmatpush1.msra.mxu0 0.0
    %3694 = vmatprep.subr.mxu0 0.0
    %3695 = vmatpush1.msra.mxu0 0.0
    %3696 = vmatprep.subr.mxu0 0.0
    %3697 = vmatpush1.msra.mxu0 0.0
    %3698 = vmatprep.subr.mxu0 0.0
    %3699 = vmatpush1.msra.mxu0 0.0
    %3700 = vmatprep.subr.mxu0 0.0
    %3701 = vmatpush1.msra.mxu0 0.0
    %3702 = vmatprep.subr.mxu0 0.0
    %3703 = vmatpush1.msra.mxu0 0.0
    %3704 = vmatprep.subr.mxu0 0.0
    %3705 = vmatpush1.msra.mxu0 0.0
    %3706 = vmatprep.subr.mxu0 0.0
    %3707 = vmatpush1.msra.mxu0 0.0
    %3708 = vmatprep.subr.mxu0 0.0
    %3709 = vmatpush1.msra.mxu0 0.0
    %3710 = vmatprep.subr.mxu0 0.0
    %3711 = vmatpush1.msra.mxu0 0.0
    %3712 = vmatprep.subr.mxu0 0.0
    %3713 = vmatpush1.msra.mxu0 0.0
    %3714 = vmatprep.subr.mxu0 0.0
    %3715 = vmatpush1.msra.mxu0 0.0
    %3716 = vmatprep.subr.mxu0 0.0
    %3717 = vmatpush1.msra.mxu0 0.0
    %3718 = vmatprep.subr.mxu0 0.0
    %3719 = vmatpush1.msra.mxu0 0.0
    %3720 = vmatprep.subr.mxu0 0.0
    %3721 = vmatpush1.msra.mxu0 0.0
    %3722 = vmatprep.subr.mxu0 0.0
    %3723 = vmatpush1.msra.mxu0 0.0
    %3724 = vmatprep.subr.mxu0 0.0
    %3725 = vmatpush1.msra.mxu0 0.0
    %3726 = vmatprep.subr.mxu0 0.0
    %3727 = vmatpush1.msra.mxu0 0.0
    %3728 = vmatprep.subr.mxu0 0.0
    %3729 = vmatpush1.msra.mxu0 0.0
    %3730 = vmatprep.subr.mxu0 0.0
    %3731 = vmatpush1.msra.mxu0 0.0
    %3732 = vmatprep.subr.mxu0 0.0
    %3733 = vmatpush1.msra.mxu0 0.0
    %3734 = vmatprep.subr.mxu0 0.0
    %3735 = vmatpush1.msra.mxu0 0.0
    %3736 = vmatprep.mubr.f32.mxu0 0.0
    %3737 = vmatmul.mubr.f32.gmra.mrb[0].mxu0 %v3411
    %v3738 = vpop.f32.mrb[0].mxu0
    %v3739 = vadd.f32 %v2285, %v3738
    %v3740 = vpop.f32.mrb[0].mxu0
    %3741 = vmatprep.mubr.f32.mxu0 0.0
    %3742 = vmatmul.mubr.f32.gmra.mrb[0].mxu0 %v3413
    %v3743 = vpop.f32.mrb[0].mxu0
    %v3744 = vadd.f32 %v2285, %v3743
    %v3745 = vpop.f32.mrb[0].mxu0
    %3746 = vmatprep.mubr.f32.mxu0 0.0
    %3747 = vmatmul.mubr.f32.gmra.mrb[0].mxu0 %v3415
    %v3748 = vpop.f32.mrb[0].mxu0
    %v3749 = vadd.f32 %v2285, %v3748
    %v3750 = vpop.f32.mrb[0].mxu0
    %3751 = vdwg.mxu0
    %v3752 = vadd.f32 %v3659, %v3739
    %v3753 = vadd.f32 %v3664, %v3744
    %v3754 = vadd.f32 %v3669, %v3749
    %v3755 = vxor.u32 %v3752, 2147483648
    %v3756 = vxor.u32 %v3753, 2147483648
    %v3757 = vxor.u32 %v3754, 2147483648
    %v3758 = vmul.f32 %v3755, 1.442695
    %v3759 = vpow.pop %v3758
    %v3760 = vmul.f32 %v3756, 1.442695
    %v3761 = vpow.pop %v3760
    %v3762 = vmul.f32 %v3757, 1.442695
    %v3763 = vpow.pop %v3762
    %v3764 = vadd.f32 %v3759, 1.0
    %v3765 = vadd.f32 %v3761, 1.0
    %v3766 = vadd.f32 %v3763, 1.0
    %v3767 = vrcp.pop %v3764
    %v3768 = vmul.f32 1.0, %v3767
    %v3769 = vrcp.pop %v3765
    %v3770 = vmul.f32 1.0, %v3769
    %v3771 = vrcp.pop %v3766
    %v3772 = vmul.f32 1.0, %v3771
    %3776 = vrot.lane.b32.xlu0 %v3739, 64
    %v3777 = vpop.permute.xlu0 %3776
    %3778 = vrot.lane.b32.xlu0 %v3744, 64
    %v3779 = vpop.permute.xlu0 %3778
    %3780 = vrot.lane.b32.xlu0 %v3749, 64
    %v3781 = vpop.permute.xlu0 %3780
    %v3785 = vmul.f32 %v3768, %v3777
    %v3786 = vmul.f32 %v3770, %v3779
    %v3787 = vmul.f32 %v3772, %v3781
    %3791 = vrot.lane.b32.xlu0 %v3785, 64
    %v3792 = vpop.permute.xlu0 %3791
    %3793 = vrot.lane.b32.xlu0 %v3786, 64
    %v3794 = vpop.permute.xlu0 %3793
    %3795 = vrot.lane.b32.xlu0 %v3787, 64
    %v3796 = vpop.permute.xlu0 %3795
    %v3800 = vadd.f32 %v3659, %v3792
    %v3801 = vadd.f32 %v3664, %v3794
    %v3802 = vadd.f32 %v3669, %v3796
    %v3803 = vtanh.pop %v3800
    %v3804 = vtanh.pop %v3801
    %v3805 = vtanh.pop %v3802
    %v3806 = vsub.f32 1.0, %v3768
    %v3807 = vsub.f32 1.0, %v3770
    %v3808 = vsub.f32 1.0, %v3772
    %3812 = vrot.lane.b32.xlu0 %v3803, 96
    %v3813 = vpop.permute.xlu0 %3812
    %3814 = vrot.lane.b32.xlu0 %v3804, 96
    %v3815 = vpop.permute.xlu0 %3814
    %3816 = vrot.lane.b32.xlu0 %v3805, 96
    %v3817 = vpop.permute.xlu0 %3816
    %v3821 = vmul.f32 %v3806, %v3813
    %v3822 = vmul.f32 %v3807, %v3815
    %v3823 = vmul.f32 %v3808, %v3817
    %v3824 = vmul.f32 %v3768, %v2451
    %v3825 = vmul.f32 %v3770, %v2452
    %v3826 = vmul.f32 %v3772, %v2453
    %v3827 = vadd.f32 %v3821, %v3824
    %v3828 = vadd.f32 %v3822, %v3825
    %v3829 = vadd.f32 %v3823, %v3826
    %3833 = vrot.lane.b32.xlu0 %v3827, 96
    %v3834 = vpop.permute.xlu0 %3833
    %3835 = vrot.lane.b32.xlu0 %v3828, 96
    %v3836 = vpop.permute.xlu0 %3835
    %3837 = vrot.lane.b32.xlu0 %v3829, 96
    %v3838 = vpop.permute.xlu0 %3837
    %3842 = vmatprep.subr.mxu0 0.0
    %3843 = vmatpush1.msra.mxu0 %v3834
    %3844 = vmatprep.subr.mxu0 0.0
    %3845 = vmatpush1.msra.mxu0 %v3836
    %3846 = vmatprep.subr.mxu0 0.0
    %3847 = vmatpush1.msra.mxu0 %v3838
    %3848 = vmatprep.subr.mxu0 0.0
    %3849 = vmatpush1.msra.mxu0 0.0
    %3850 = vmatprep.subr.mxu0 0.0
    %3851 = vmatpush1.msra.mxu0 0.0
    %3852 = vmatprep.subr.mxu0 0.0
    %3853 = vmatpush1.msra.mxu0 0.0
    %3854 = vmatprep.subr.mxu0 0.0
    %3855 = vmatpush1.msra.mxu0 0.0
    %3856 = vmatprep.subr.mxu0 0.0
    %3857 = vmatpush1.msra.mxu0 0.0
    %3858 = vmatprep.subr.mxu0 0.0
    %3859 = vmatpush1.msra.mxu0 0.0
    %3860 = vmatprep.subr.mxu0 0.0
    %3861 = vmatpush1.msra.mxu0 0.0
    %3862 = vmatprep.subr.mxu0 0.0
    %3863 = vmatpush1.msra.mxu0 0.0
    %3864 = vmatprep.subr.mxu0 0.0
    %3865 = vmatpush1.msra.mxu0 0.0
    %3866 = vmatprep.subr.mxu0 0.0
    %3867 = vmatpush1.msra.mxu0 0.0
    %3868 = vmatprep.subr.mxu0 0.0
    %3869 = vmatpush1.msra.mxu0 0.0
    %3870 = vmatprep.subr.mxu0 0.0
    %3871 = vmatpush1.msra.mxu0 0.0
    %3872 = vmatprep.subr.mxu0 0.0
    %3873 = vmatpush1.msra.mxu0 0.0
    %3874 = vmatprep.subr.mxu0 0.0
    %3875 = vmatpush1.msra.mxu0 0.0
    %3876 = vmatprep.subr.mxu0 0.0
    %3877 = vmatpush1.msra.mxu0 0.0
    %3878 = vmatprep.subr.mxu0 0.0
    %3879 = vmatpush1.msra.mxu0 0.0
    %3880 = vmatprep.subr.mxu0 0.0
    %3881 = vmatpush1.msra.mxu0 0.0
    %3882 = vmatprep.subr.mxu0 0.0
    %3883 = vmatpush1.msra.mxu0 0.0
    %3884 = vmatprep.subr.mxu0 0.0
    %3885 = vmatpush1.msra.mxu0 0.0
    %3886 = vmatprep.subr.mxu0 0.0
    %3887 = vmatpush1.msra.mxu0 0.0
    %3888 = vmatprep.subr.mxu0 0.0
    %3889 = vmatpush1.msra.mxu0 0.0
    %3890 = vmatprep.subr.mxu0 0.0
    %3891 = vmatpush1.msra.mxu0 0.0
    %3892 = vmatprep.subr.mxu0 0.0
    %3893 = vmatpush1.msra.mxu0 0.0
    %3894 = vmatprep.subr.mxu0 0.0
    %3895 = vmatpush1.msra.mxu0 0.0
    %3896 = vmatprep.subr.mxu0 0.0
    %3897 = vmatpush1.msra.mxu0 0.0
    %3898 = vmatprep.subr.mxu0 0.0
    %3899 = vmatpush1.msra.mxu0 0.0
    %3900 = vmatprep.subr.mxu0 0.0
    %3901 = vmatpush1.msra.mxu0 0.0
    %3902 = vmatprep.subr.mxu0 0.0
    %3903 = vmatpush1.msra.mxu0 0.0
    %3904 = vmatprep.subr.mxu0 0.0
    %3905 = vmatpush1.msra.mxu0 0.0
    %3906 = vmatprep.mubr.f32.mxu0 0.0
    %3907 = vmatmul.mubr.f32.gmra.mrb[0].mxu0 %v1032
    %v3908 = vpop.f32.mrb[0].mxu0
    %v3909 = vadd.f32 0.0, %v3908
    %v3910 = vpop.f32.mrb[0].mxu0
    %3911 = vmatprep.mubr.f32.mxu0 0.0
    %3912 = vmatmul.mubr.f32.gmra.mrb[0].mxu0 %v1035
    %v3913 = vpop.f32.mrb[0].mxu0
    %v3914 = vadd.f32 0.0, %v3913
    %v3915 = vpop.f32.mrb[0].mxu0
    %3916 = vmatprep.mubr.f32.mxu0 0.0
    %3917 = vmatmul.mubr.f32.gmra.mrb[0].mxu0 %v1038
    %v3918 = vpop.f32.mrb[0].mxu0
    %v3919 = vadd.f32 0.0, %v3918
    %v3920 = vpop.f32.mrb[0].mxu0
    %3921 = vmatprep.mubr.f32.mxu0 0.0
    %3922 = vmatmul.mubr.f32.gmra.mrb[0].mxu0 %v1041
    %v3923 = vpop.f32.mrb[0].mxu0
    %v3924 = vadd.f32 0.0, %v3923
    %v3925 = vpop.f32.mrb[0].mxu0
    %3926 = vmatprep.mubr.f32.mxu0 0.0
    %3927 = vmatmul.mubr.f32.gmra.mrb[0].mxu0 %v1044
    %v3928 = vpop.f32.mrb[0].mxu0
    %v3929 = vadd.f32 0.0, %v3928
    %v3930 = vpop.f32.mrb[0].mxu0
    %3931 = vmatprep.mubr.f32.mxu0 0.0
    %3932 = vmatmul.mubr.f32.gmra.mrb[0].mxu0 %v1047
    %v3933 = vpop.f32.mrb[0].mxu0
    %v3934 = vadd.f32 0.0, %v3933
    %v3935 = vpop.f32.mrb[0].mxu0
    %3936 = vdwg.mxu0
    %v3938 = vsel %vm1144, %v3909, 0
    %v3941 = vsel %vm1144, %v3914, 0
    %v3944 = vsel %vm1144, %v3919, 0
    %v3947 = vsel %vm1144, %v3924, 0
    %v3950 = vsel %vm1144, %v3929, 0
    %v3953 = vsel %vm1144, %v3934, 0
    %3955 = vmatprep.subr.mxu0 %v751
    %3956 = vmatpush1.msra.mxu0 %v750
    %3957 = vmatprep.subr.mxu0 %v759
    %3958 = vmatpush1.msra.mxu0 %v758
    %3959 = vmatprep.subr.mxu0 %v767
    %3960 = vmatpush1.msra.mxu0 %v766
    %3961 = vmatprep.subr.mxu0 %v775
    %3962 = vmatpush1.msra.mxu0 %v774
    %3963 = vmatprep.subr.mxu0 0.0
    %3964 = vmatpush1.msra.mxu0 0.0
    %3965 = vmatprep.subr.mxu0 0.0
    %3966 = vmatpush1.msra.mxu0 0.0
    %3967 = vmatprep.subr.mxu0 0.0
    %3968 = vmatpush1.msra.mxu0 0.0
    %3969 = vmatprep.subr.mxu0 0.0
    %3970 = vmatpush1.msra.mxu0 0.0
    %3971 = vmatprep.subr.mxu0 0.0
    %3972 = vmatpush1.msra.mxu0 0.0
    %3973 = vmatprep.subr.mxu0 0.0
    %3974 = vmatpush1.msra.mxu0 0.0
    %3975 = vmatprep.subr.mxu0 0.0
    %3976 = vmatpush1.msra.mxu0 0.0
    %3977 = vmatprep.subr.mxu0 0.0
    %3978 = vmatpush1.msra.mxu0 0.0
    %3979 = vmatprep.subr.mxu0 0.0
    %3980 = vmatpush1.msra.mxu0 0.0
    %3981 = vmatprep.subr.mxu0 0.0
    %3982 = vmatpush1.msra.mxu0 0.0
    %3983 = vmatprep.subr.mxu0 0.0
    %3984 = vmatpush1.msra.mxu0 0.0
    %3985 = vmatprep.subr.mxu0 0.0
    %3986 = vmatpush1.msra.mxu0 0.0
    %3987 = vmatprep.subr.mxu0 0.0
    %3988 = vmatpush1.msra.mxu0 0.0
    %3989 = vmatprep.subr.mxu0 0.0
    %3990 = vmatpush1.msra.mxu0 0.0
    %3991 = vmatprep.subr.mxu0 0.0
    %3992 = vmatpush1.msra.mxu0 0.0
    %3993 = vmatprep.subr.mxu0 0.0
    %3994 = vmatpush1.msra.mxu0 0.0
    %3995 = vmatprep.subr.mxu0 0.0
    %3996 = vmatpush1.msra.mxu0 0.0
    %3997 = vmatprep.subr.mxu0 0.0
    %3998 = vmatpush1.msra.mxu0 0.0
    %3999 = vmatprep.subr.mxu0 0.0
    %4000 = vmatpush1.msra.mxu0 0.0
    %4001 = vmatprep.subr.mxu0 0.0
    %4002 = vmatpush1.msra.mxu0 0.0
    %4003 = vmatprep.subr.mxu0 0.0
    %4004 = vmatpush1.msra.mxu0 0.0
    %4005 = vmatprep.subr.mxu0 0.0
    %4006 = vmatpush1.msra.mxu0 0.0
    %4007 = vmatprep.subr.mxu0 0.0
    %4008 = vmatpush1.msra.mxu0 0.0
    %4009 = vmatprep.subr.mxu0 0.0
    %4010 = vmatpush1.msra.mxu0 0.0
    %4011 = vmatprep.subr.mxu0 0.0
    %4012 = vmatpush1.msra.mxu0 0.0
    %4013 = vmatprep.subr.mxu0 0.0
    %4014 = vmatpush1.msra.mxu0 0.0
    %4015 = vmatprep.subr.mxu0 0.0
    %4016 = vmatpush1.msra.mxu0 0.0
    %4017 = vmatprep.subr.mxu0 0.0
    %4018 = vmatpush1.msra.mxu0 0.0
    %4019 = vmatprep.mubr.f32.mxu0 0.0
    %4020 = vmatmul.mubr.f32.gmra.mrb[0].mxu0 %v3938
    %v4021 = vpop.f32.mrb[0].mxu0
    %v4022 = vadd.f32 0.0, %v4021
    %v4023 = vpop.f32.mrb[0].mxu0
    %v4024 = vadd.f32 0.0, %v4023
    %4025 = vmatprep.mubr.f32.mxu0 0.0
    %4026 = vmatmul.mubr.f32.gmra.mrb[0].mxu0 %v3941
    %v4027 = vpop.f32.mrb[0].mxu0
    %v4028 = vadd.f32 0.0, %v4027
    %v4029 = vpop.f32.mrb[0].mxu0
    %v4030 = vadd.f32 0.0, %v4029
    %4031 = vmatprep.mubr.f32.mxu0 0.0
    %4032 = vmatmul.mubr.f32.gmra.mrb[0].mxu0 %v3944
    %v4033 = vpop.f32.mrb[0].mxu0
    %v4034 = vadd.f32 0.0, %v4033
    %v4035 = vpop.f32.mrb[0].mxu0
    %v4036 = vadd.f32 0.0, %v4035
    %4037 = vmatprep.mubr.f32.mxu0 0.0
    %4038 = vmatmul.mubr.f32.gmra.mrb[0].mxu0 %v3947
    %v4039 = vpop.f32.mrb[0].mxu0
    %v4040 = vadd.f32 0.0, %v4039
    %v4041 = vpop.f32.mrb[0].mxu0
    %v4042 = vadd.f32 0.0, %v4041
    %4043 = vmatprep.mubr.f32.mxu0 0.0
    %4044 = vmatmul.mubr.f32.gmra.mrb[0].mxu0 %v3950
    %v4045 = vpop.f32.mrb[0].mxu0
    %v4046 = vadd.f32 0.0, %v4045
    %v4047 = vpop.f32.mrb[0].mxu0
    %v4048 = vadd.f32 0.0, %v4047
    %4049 = vmatprep.mubr.f32.mxu0 0.0
    %4050 = vmatmul.mubr.f32.gmra.mrb[0].mxu0 %v3953
    %v4051 = vpop.f32.mrb[0].mxu0
    %v4052 = vadd.f32 0.0, %v4051
    %v4053 = vpop.f32.mrb[0].mxu0
    %v4054 = vadd.f32 0.0, %v4053
    %4055 = vdwg.mxu0
    %4056 = vmatprep.subr.mxu0 %v753
    %4057 = vmatpush1.msra.mxu0 %v752
    %4058 = vmatprep.subr.mxu0 %v761
    %4059 = vmatpush1.msra.mxu0 %v760
    %4060 = vmatprep.subr.mxu0 %v769
    %4061 = vmatpush1.msra.mxu0 %v768
    %4062 = vmatprep.subr.mxu0 %v777
    %4063 = vmatpush1.msra.mxu0 %v776
    %4064 = vmatprep.subr.mxu0 0.0
    %4065 = vmatpush1.msra.mxu0 0.0
    %4066 = vmatprep.subr.mxu0 0.0
    %4067 = vmatpush1.msra.mxu0 0.0
    %4068 = vmatprep.subr.mxu0 0.0
    %4069 = vmatpush1.msra.mxu0 0.0
    %4070 = vmatprep.subr.mxu0 0.0
    %4071 = vmatpush1.msra.mxu0 0.0
    %4072 = vmatprep.subr.mxu0 0.0
    %4073 = vmatpush1.msra.mxu0 0.0
    %4074 = vmatprep.subr.mxu0 0.0
    %4075 = vmatpush1.msra.mxu0 0.0
    %4076 = vmatprep.subr.mxu0 0.0
    %4077 = vmatpush1.msra.mxu0 0.0
    %4078 = vmatprep.subr.mxu0 0.0
    %4079 = vmatpush1.msra.mxu0 0.0
    %4080 = vmatprep.subr.mxu0 0.0
    %4081 = vmatpush1.msra.mxu0 0.0
    %4082 = vmatprep.subr.mxu0 0.0
    %4083 = vmatpush1.msra.mxu0 0.0
    %4084 = vmatprep.subr.mxu0 0.0
    %4085 = vmatpush1.msra.mxu0 0.0
    %4086 = vmatprep.subr.mxu0 0.0
    %4087 = vmatpush1.msra.mxu0 0.0
    %4088 = vmatprep.subr.mxu0 0.0
    %4089 = vmatpush1.msra.mxu0 0.0
    %4090 = vmatprep.subr.mxu0 0.0
    %4091 = vmatpush1.msra.mxu0 0.0
    %4092 = vmatprep.subr.mxu0 0.0
    %4093 = vmatpush1.msra.mxu0 0.0
    %4094 = vmatprep.subr.mxu0 0.0
    %4095 = vmatpush1.msra.mxu0 0.0
    %4096 = vmatprep.subr.mxu0 0.0
    %4097 = vmatpush1.msra.mxu0 0.0
    %4098 = vmatprep.subr.mxu0 0.0
    %4099 = vmatpush1.msra.mxu0 0.0
    %4100 = vmatprep.subr.mxu0 0.0
    %4101 = vmatpush1.msra.mxu0 0.0
    %4102 = vmatprep.subr.mxu0 0.0
    %4103 = vmatpush1.msra.mxu0 0.0
    %4104 = vmatprep.subr.mxu0 0.0
    %4105 = vmatpush1.msra.mxu0 0.0
    %4106 = vmatprep.subr.mxu0 0.0
    %4107 = vmatpush1.msra.mxu0 0.0
    %4108 = vmatprep.subr.mxu0 0.0
    %4109 = vmatpush1.msra.mxu0 0.0
    %4110 = vmatprep.subr.mxu0 0.0
    %4111 = vmatpush1.msra.mxu0 0.0
    %4112 = vmatprep.subr.mxu0 0.0
    %4113 = vmatpush1.msra.mxu0 0.0
    %4114 = vmatprep.subr.mxu0 0.0
    %4115 = vmatpush1.msra.mxu0 0.0
    %4116 = vmatprep.subr.mxu0 0.0
    %4117 = vmatpush1.msra.mxu0 0.0
    %4118 = vmatprep.subr.mxu0 0.0
    %4119 = vmatpush1.msra.mxu0 0.0
    %4120 = vmatprep.mubr.f32.mxu0 0.0
    %4121 = vmatmul.mubr.f32.gmra.mrb[0].mxu0 %v3938
    %v4122 = vpop.f32.mrb[0].mxu0
    %v4123 = vadd.f32 0.0, %v4122
    %v4124 = vpop.f32.mrb[0].mxu0
    %v4125 = vadd.f32 0.0, %v4124
    %4126 = vmatprep.mubr.f32.mxu0 0.0
    %4127 = vmatmul.mubr.f32.gmra.mrb[0].mxu0 %v3941
    %v4128 = vpop.f32.mrb[0].mxu0
    %v4129 = vadd.f32 0.0, %v4128
    %v4130 = vpop.f32.mrb[0].mxu0
    %v4131 = vadd.f32 0.0, %v4130
    %4132 = vmatprep.mubr.f32.mxu0 0.0
    %4133 = vmatmul.mubr.f32.gmra.mrb[0].mxu0 %v3944
    %v4134 = vpop.f32.mrb[0].mxu0
    %v4135 = vadd.f32 0.0, %v4134
    %v4136 = vpop.f32.mrb[0].mxu0
    %v4137 = vadd.f32 0.0, %v4136
    %4138 = vmatprep.mubr.f32.mxu0 0.0
    %4139 = vmatmul.mubr.f32.gmra.mrb[0].mxu0 %v3947
    %v4140 = vpop.f32.mrb[0].mxu0
    %v4141 = vadd.f32 0.0, %v4140
    %v4142 = vpop.f32.mrb[0].mxu0
    %v4143 = vadd.f32 0.0, %v4142
    %4144 = vmatprep.mubr.f32.mxu0 0.0
    %4145 = vmatmul.mubr.f32.gmra.mrb[0].mxu0 %v3950
    %v4146 = vpop.f32.mrb[0].mxu0
    %v4147 = vadd.f32 0.0, %v4146
    %v4148 = vpop.f32.mrb[0].mxu0
    %v4149 = vadd.f32 0.0, %v4148
    %4150 = vmatprep.mubr.f32.mxu0 0.0
    %4151 = vmatmul.mubr.f32.gmra.mrb[0].mxu0 %v3953
    %v4152 = vpop.f32.mrb[0].mxu0
    %v4153 = vadd.f32 0.0, %v4152
    %v4154 = vpop.f32.mrb[0].mxu0
    %v4155 = vadd.f32 0.0, %v4154
    %4156 = vdwg.mxu0
    %4157 = vmatprep.subr.mxu0 %v755
    %4158 = vmatpush1.msra.mxu0 %v754
    %4159 = vmatprep.subr.mxu0 %v763
    %4160 = vmatpush1.msra.mxu0 %v762
    %4161 = vmatprep.subr.mxu0 %v771
    %4162 = vmatpush1.msra.mxu0 %v770
    %4163 = vmatprep.subr.mxu0 %v779
    %4164 = vmatpush1.msra.mxu0 %v778
    %4165 = vmatprep.subr.mxu0 0.0
    %4166 = vmatpush1.msra.mxu0 0.0
    %4167 = vmatprep.subr.mxu0 0.0
    %4168 = vmatpush1.msra.mxu0 0.0
    %4169 = vmatprep.subr.mxu0 0.0
    %4170 = vmatpush1.msra.mxu0 0.0
    %4171 = vmatprep.subr.mxu0 0.0
    %4172 = vmatpush1.msra.mxu0 0.0
    %4173 = vmatprep.subr.mxu0 0.0
    %4174 = vmatpush1.msra.mxu0 0.0
    %4175 = vmatprep.subr.mxu0 0.0
    %4176 = vmatpush1.msra.mxu0 0.0
    %4177 = vmatprep.subr.mxu0 0.0
    %4178 = vmatpush1.msra.mxu0 0.0
    %4179 = vmatprep.subr.mxu0 0.0
    %4180 = vmatpush1.msra.mxu0 0.0
    %4181 = vmatprep.subr.mxu0 0.0
    %4182 = vmatpush1.msra.mxu0 0.0
    %4183 = vmatprep.subr.mxu0 0.0
    %4184 = vmatpush1.msra.mxu0 0.0
    %4185 = vmatprep.subr.mxu0 0.0
    %4186 = vmatpush1.msra.mxu0 0.0
    %4187 = vmatprep.subr.mxu0 0.0
    %4188 = vmatpush1.msra.mxu0 0.0
    %4189 = vmatprep.subr.mxu0 0.0
    %4190 = vmatpush1.msra.mxu0 0.0
    %4191 = vmatprep.subr.mxu0 0.0
    %4192 = vmatpush1.msra.mxu0 0.0
    %4193 = vmatprep.subr.mxu0 0.0
    %4194 = vmatpush1.msra.mxu0 0.0
    %4195 = vmatprep.subr.mxu0 0.0
    %4196 = vmatpush1.msra.mxu0 0.0
    %4197 = vmatprep.subr.mxu0 0.0
    %4198 = vmatpush1.msra.mxu0 0.0
    %4199 = vmatprep.subr.mxu0 0.0
    %4200 = vmatpush1.msra.mxu0 0.0
    %4201 = vmatprep.subr.mxu0 0.0
    %4202 = vmatpush1.msra.mxu0 0.0
    %4203 = vmatprep.subr.mxu0 0.0
    %4204 = vmatpush1.msra.mxu0 0.0
    %4205 = vmatprep.subr.mxu0 0.0
    %4206 = vmatpush1.msra.mxu0 0.0
    %4207 = vmatprep.subr.mxu0 0.0
    %4208 = vmatpush1.msra.mxu0 0.0
    %4209 = vmatprep.subr.mxu0 0.0
    %4210 = vmatpush1.msra.mxu0 0.0
    %4211 = vmatprep.subr.mxu0 0.0
    %4212 = vmatpush1.msra.mxu0 0.0
    %4213 = vmatprep.subr.mxu0 0.0
    %4214 = vmatpush1.msra.mxu0 0.0
    %4215 = vmatprep.subr.mxu0 0.0
    %4216 = vmatpush1.msra.mxu0 0.0
    %4217 = vmatprep.subr.mxu0 0.0
    %4218 = vmatpush1.msra.mxu0 0.0
    %4219 = vmatprep.subr.mxu0 0.0
    %4220 = vmatpush1.msra.mxu0 0.0
    %4221 = vmatprep.mubr.f32.mxu0 0.0
    %4222 = vmatmul.mubr.f32.gmra.mrb[0].mxu0 %v3938
    %v4223 = vpop.f32.mrb[0].mxu0
    %v4224 = vadd.f32 0.0, %v4223
    %v4225 = vpop.f32.mrb[0].mxu0
    %v4226 = vadd.f32 0.0, %v4225
    %4227 = vmatprep.mubr.f32.mxu0 0.0
    %4228 = vmatmul.mubr.f32.gmra.mrb[0].mxu0 %v3941
    %v4229 = vpop.f32.mrb[0].mxu0
    %v4230 = vadd.f32 0.0, %v4229
    %v4231 = vpop.f32.mrb[0].mxu0
    %v4232 = vadd.f32 0.0, %v4231
    %4233 = vmatprep.mubr.f32.mxu0 0.0
    %4234 = vmatmul.mubr.f32.gmra.mrb[0].mxu0 %v3944
    %v4235 = vpop.f32.mrb[0].mxu0
    %v4236 = vadd.f32 0.0, %v4235
    %v4237 = vpop.f32.mrb[0].mxu0
    %v4238 = vadd.f32 0.0, %v4237
    %4239 = vmatprep.mubr.f32.mxu0 0.0
    %4240 = vmatmul.mubr.f32.gmra.mrb[0].mxu0 %v3947
    %v4241 = vpop.f32.mrb[0].mxu0
    %v4242 = vadd.f32 0.0, %v4241
    %v4243 = vpop.f32.mrb[0].mxu0
    %v4244 = vadd.f32 0.0, %v4243
    %4245 = vmatprep.mubr.f32.mxu0 0.0
    %4246 = vmatmul.mubr.f32.gmra.mrb[0].mxu0 %v3950
    %v4247 = vpop.f32.mrb[0].mxu0
    %v4248 = vadd.f32 0.0, %v4247
    %v4249 = vpop.f32.mrb[0].mxu0
    %v4250 = vadd.f32 0.0, %v4249
    %4251 = vmatprep.mubr.f32.mxu0 0.0
    %4252 = vmatmul.mubr.f32.gmra.mrb[0].mxu0 %v3953
    %v4253 = vpop.f32.mrb[0].mxu0
    %v4254 = vadd.f32 0.0, %v4253
    %v4255 = vpop.f32.mrb[0].mxu0
    %v4256 = vadd.f32 0.0, %v4255
    %4257 = vdwg.mxu0
    %4258 = vmatprep.subr.mxu0 %v757
    %4259 = vmatpush1.msra.mxu0 %v756
    %4260 = vmatprep.subr.mxu0 %v765
    %4261 = vmatpush1.msra.mxu0 %v764
    %4262 = vmatprep.subr.mxu0 %v773
    %4263 = vmatpush1.msra.mxu0 %v772
    %4264 = vmatprep.subr.mxu0 %v781
    %4265 = vmatpush1.msra.mxu0 %v780
    %4266 = vmatprep.subr.mxu0 0.0
    %4267 = vmatpush1.msra.mxu0 0.0
    %4268 = vmatprep.subr.mxu0 0.0
    %4269 = vmatpush1.msra.mxu0 0.0
    %4270 = vmatprep.subr.mxu0 0.0
    %4271 = vmatpush1.msra.mxu0 0.0
    %4272 = vmatprep.subr.mxu0 0.0
    %4273 = vmatpush1.msra.mxu0 0.0
    %4274 = vmatprep.subr.mxu0 0.0
    %4275 = vmatpush1.msra.mxu0 0.0
    %4276 = vmatprep.subr.mxu0 0.0
    %4277 = vmatpush1.msra.mxu0 0.0
    %4278 = vmatprep.subr.mxu0 0.0
    %4279 = vmatpush1.msra.mxu0 0.0
    %4280 = vmatprep.subr.mxu0 0.0
    %4281 = vmatpush1.msra.mxu0 0.0
    %4282 = vmatprep.subr.mxu0 0.0
    %4283 = vmatpush1.msra.mxu0 0.0
    %4284 = vmatprep.subr.mxu0 0.0
    %4285 = vmatpush1.msra.mxu0 0.0
    %4286 = vmatprep.subr.mxu0 0.0
    %4287 = vmatpush1.msra.mxu0 0.0
    %4288 = vmatprep.subr.mxu0 0.0
    %4289 = vmatpush1.msra.mxu0 0.0
    %4290 = vmatprep.subr.mxu0 0.0
    %4291 = vmatpush1.msra.mxu0 0.0
    %4292 = vmatprep.subr.mxu0 0.0
    %4293 = vmatpush1.msra.mxu0 0.0
    %4294 = vmatprep.subr.mxu0 0.0
    %4295 = vmatpush1.msra.mxu0 0.0
    %4296 = vmatprep.subr.mxu0 0.0
    %4297 = vmatpush1.msra.mxu0 0.0
    %4298 = vmatprep.subr.mxu0 0.0
    %4299 = vmatpush1.msra.mxu0 0.0
    %4300 = vmatprep.subr.mxu0 0.0
    %4301 = vmatpush1.msra.mxu0 0.0
    %4302 = vmatprep.subr.mxu0 0.0
    %4303 = vmatpush1.msra.mxu0 0.0
    %4304 = vmatprep.subr.mxu0 0.0
    %4305 = vmatpush1.msra.mxu0 0.0
    %4306 = vmatprep.subr.mxu0 0.0
    %4307 = vmatpush1.msra.mxu0 0.0
    %4308 = vmatprep.subr.mxu0 0.0
    %4309 = vmatpush1.msra.mxu0 0.0
    %4310 = vmatprep.subr.mxu0 0.0
    %4311 = vmatpush1.msra.mxu0 0.0
    %4312 = vmatprep.subr.mxu0 0.0
    %4313 = vmatpush1.msra.mxu0 0.0
    %4314 = vmatprep.subr.mxu0 0.0
    %4315 = vmatpush1.msra.mxu0 0.0
    %4316 = vmatprep.subr.mxu0 0.0
    %4317 = vmatpush1.msra.mxu0 0.0
    %4318 = vmatprep.subr.mxu0 0.0
    %4319 = vmatpush1.msra.mxu0 0.0
    %4320 = vmatprep.subr.mxu0 0.0
    %4321 = vmatpush1.msra.mxu0 0.0
    %4322 = vmatprep.mubr.f32.mxu0 0.0
    %4323 = vmatmul.mubr.f32.gmra.mrb[0].mxu0 %v3938
    %v4324 = vpop.f32.mrb[0].mxu0
    %v4325 = vadd.f32 0.0, %v4324
    %v4326 = vpop.f32.mrb[0].mxu0
    %v4327 = vadd.f32 0.0, %v4326
    %4328 = vmatprep.mubr.f32.mxu0 0.0
    %4329 = vmatmul.mubr.f32.gmra.mrb[0].mxu0 %v3941
    %v4330 = vpop.f32.mrb[0].mxu0
    %v4331 = vadd.f32 0.0, %v4330
    %v4332 = vpop.f32.mrb[0].mxu0
    %v4333 = vadd.f32 0.0, %v4332
    %4334 = vmatprep.mubr.f32.mxu0 0.0
    %4335 = vmatmul.mubr.f32.gmra.mrb[0].mxu0 %v3944
    %v4336 = vpop.f32.mrb[0].mxu0
    %v4337 = vadd.f32 0.0, %v4336
    %v4338 = vpop.f32.mrb[0].mxu0
    %v4339 = vadd.f32 0.0, %v4338
    %4340 = vmatprep.mubr.f32.mxu0 0.0
    %4341 = vmatmul.mubr.f32.gmra.mrb[0].mxu0 %v3947
    %v4342 = vpop.f32.mrb[0].mxu0
    %v4343 = vadd.f32 0.0, %v4342
    %v4344 = vpop.f32.mrb[0].mxu0
    %v4345 = vadd.f32 0.0, %v4344
    %4346 = vmatprep.mubr.f32.mxu0 0.0
    %4347 = vmatmul.mubr.f32.gmra.mrb[0].mxu0 %v3950
    %v4348 = vpop.f32.mrb[0].mxu0
    %v4349 = vadd.f32 0.0, %v4348
    %v4350 = vpop.f32.mrb[0].mxu0
    %v4351 = vadd.f32 0.0, %v4350
    %4352 = vmatprep.mubr.f32.mxu0 0.0
    %4353 = vmatmul.mubr.f32.gmra.mrb[0].mxu0 %v3953
    %v4354 = vpop.f32.mrb[0].mxu0
    %v4355 = vadd.f32 0.0, %v4354
    %v4356 = vpop.f32.mrb[0].mxu0
    %v4357 = vadd.f32 0.0, %v4356
    %4358 = vdwg.mxu0
    %v4359 = vmul.f32 %v4022, %v404
    %v4360 = vmul.f32 %v4024, %v406
    %v4361 = vmul.f32 %v4123, %v505
    %v4362 = vmul.f32 %v4125, %v507
    %v4363 = vmul.f32 %v4224, %v606
    %v4364 = vmul.f32 %v4226, %v608
    %v4365 = vmul.f32 %v4325, %v707
    %v4366 = vmul.f32 %v4327, %v709
    %v4367 = vmul.f32 %v4028, %v410
    %v4368 = vmul.f32 %v4030, %v412
    %v4369 = vmul.f32 %v4129, %v511
    %v4370 = vmul.f32 %v4131, %v513
    %v4371 = vmul.f32 %v4230, %v612
    %v4372 = vmul.f32 %v4232, %v614
    %v4373 = vmul.f32 %v4331, %v713
    %v4374 = vmul.f32 %v4333, %v715
    %v4375 = vmul.f32 %v4034, %v416
    %v4376 = vmul.f32 %v4036, %v418
    %v4377 = vmul.f32 %v4135, %v517
    %v4378 = vmul.f32 %v4137, %v519
    %v4379 = vmul.f32 %v4236, %v618
    %v4380 = vmul.f32 %v4238, %v620
    %v4381 = vmul.f32 %v4337, %v719
    %v4382 = vmul.f32 %v4339, %v721
    %v4383 = vmul.f32 %v4040, %v422
    %v4384 = vmul.f32 %v4042, %v424
    %v4385 = vmul.f32 %v4141, %v523
    %v4386 = vmul.f32 %v4143, %v525
    %v4387 = vmul.f32 %v4242, %v624
    %v4388 = vmul.f32 %v4244, %v626
    %v4389 = vmul.f32 %v4343, %v725
    %v4390 = vmul.f32 %v4345, %v727
    %v4391 = vmul.f32 %v4046, %v428
    %v4392 = vmul.f32 %v4048, %v430
    %v4393 = vmul.f32 %v4147, %v529
    %v4394 = vmul.f32 %v4149, %v531
    %v4395 = vmul.f32 %v4248, %v630
    %v4396 = vmul.f32 %v4250, %v632
    %v4397 = vmul.f32 %v4349, %v731
    %v4398 = vmul.f32 %v4351, %v733
    %v4399 = vmul.f32 %v4052, %v434
    %v4400 = vmul.f32 %v4054, %v436
    %v4401 = vmul.f32 %v4153, %v535
    %v4402 = vmul.f32 %v4155, %v537
    %v4403 = vmul.f32 %v4254, %v636
    %v4404 = vmul.f32 %v4256, %v638
    %v4405 = vmul.f32 %v4355, %v737
    %v4406 = vmul.f32 %v4357, %v739
    %4407 = vmatprep.subr.mxu0 0.0
    %4408 = vmatpush1.msra.mxu0 %v782
    %4409 = vmatprep.subr.mxu0 0.0
    %4410 = vmatpush1.msra.mxu0 %v783
    %4411 = vmatprep.subr.mxu0 0.0
    %4412 = vmatpush1.msra.mxu0 %v784
    %4413 = vmatprep.subr.mxu0 0.0
    %4414 = vmatpush1.msra.mxu0 %v785
    %4415 = vmatprep.subr.mxu0 0.0
    %4416 = vmatpush1.msra.mxu0 %v786
    %4417 = vmatprep.subr.mxu0 0.0
    %4418 = vmatpush1.msra.mxu0 %v787
    %4419 = vmatprep.subr.mxu0 0.0
    %4420 = vmatpush1.msra.mxu0 %v788
    %4421 = vmatprep.subr.mxu0 0.0
    %4422 = vmatpush1.msra.mxu0 %v789
    %4423 = vmatprep.subr.mxu0 0.0
    %4424 = vmatpush1.msra.mxu0 %v790
    %4425 = vmatprep.subr.mxu0 0.0
    %4426 = vmatpush1.msra.mxu0 %v791
    %4427 = vmatprep.subr.mxu0 0.0
    %4428 = vmatpush1.msra.mxu0 %v792
    %4429 = vmatprep.subr.mxu0 0.0
    %4430 = vmatpush1.msra.mxu0 %v793
    %4431 = vmatprep.subr.mxu0 0.0
    %4432 = vmatpush1.msra.mxu0 %v794
    %4433 = vmatprep.subr.mxu0 0.0
    %4434 = vmatpush1.msra.mxu0 %v795
    %4435 = vmatprep.subr.mxu0 0.0
    %4436 = vmatpush1.msra.mxu0 %v796
    %4437 = vmatprep.subr.mxu0 0.0
    %4438 = vmatpush1.msra.mxu0 %v797
    %4439 = vmatprep.subr.mxu0 0.0
    %4440 = vmatpush1.msra.mxu0 %v798
    %4441 = vmatprep.subr.mxu0 0.0
    %4442 = vmatpush1.msra.mxu0 %v799
    %4443 = vmatprep.subr.mxu0 0.0
    %4444 = vmatpush1.msra.mxu0 %v800
    %4445 = vmatprep.subr.mxu0 0.0
    %4446 = vmatpush1.msra.mxu0 %v801
    %4447 = vmatprep.subr.mxu0 0.0
    %4448 = vmatpush1.msra.mxu0 %v802
    %4449 = vmatprep.subr.mxu0 0.0
    %4450 = vmatpush1.msra.mxu0 %v803
    %4451 = vmatprep.subr.mxu0 0.0
    %4452 = vmatpush1.msra.mxu0 %v804
    %4453 = vmatprep.subr.mxu0 0.0
    %4454 = vmatpush1.msra.mxu0 %v805
    %4455 = vmatprep.subr.mxu0 0.0
    %4456 = vmatpush1.msra.mxu0 %v806
    %4457 = vmatprep.subr.mxu0 0.0
    %4458 = vmatpush1.msra.mxu0 %v807
    %4459 = vmatprep.subr.mxu0 0.0
    %4460 = vmatpush1.msra.mxu0 %v808
    %4461 = vmatprep.subr.mxu0 0.0
    %4462 = vmatpush1.msra.mxu0 %v809
    %4463 = vmatprep.subr.mxu0 0.0
    %4464 = vmatpush1.msra.mxu0 %v810
    %4465 = vmatprep.subr.mxu0 0.0
    %4466 = vmatpush1.msra.mxu0 %v811
    %4467 = vmatprep.subr.mxu0 0.0
    %4468 = vmatpush1.msra.mxu0 %v812
    %4469 = vmatprep.subr.mxu0 0.0
    %4470 = vmatpush1.msra.mxu0 %v813
    %4471 = vmatprep.mubr.f32.mxu0 %v4360
    %4472 = vmatmul.mubr.f32.gmra.mrb[0].mxu0 %v4359
    %v4473 = vpop.f32.mrb[0].mxu0
    %v4474 = vadd.f32 0.0, %v4473
    %v4475 = vpop.f32.mrb[0].mxu0
    %4476 = vmatprep.mubr.f32.mxu0 %v4368
    %4477 = vmatmul.mubr.f32.gmra.mrb[0].mxu0 %v4367
    %v4478 = vpop.f32.mrb[0].mxu0
    %v4479 = vadd.f32 0.0, %v4478
    %v4480 = vpop.f32.mrb[0].mxu0
    %4481 = vmatprep.mubr.f32.mxu0 %v4376
    %4482 = vmatmul.mubr.f32.gmra.mrb[0].mxu0 %v4375
    %v4483 = vpop.f32.mrb[0].mxu0
    %v4484 = vadd.f32 0.0, %v4483
    %v4485 = vpop.f32.mrb[0].mxu0
    %4486 = vmatprep.mubr.f32.mxu0 %v4384
    %4487 = vmatmul.mubr.f32.gmra.mrb[0].mxu0 %v4383
    %v4488 = vpop.f32.mrb[0].mxu0
    %v4489 = vadd.f32 0.0, %v4488
    %v4490 = vpop.f32.mrb[0].mxu0
    %4491 = vmatprep.mubr.f32.mxu0 %v4392
    %4492 = vmatmul.mubr.f32.gmra.mrb[0].mxu0 %v4391
    %v4493 = vpop.f32.mrb[0].mxu0
    %v4494 = vadd.f32 0.0, %v4493
    %v4495 = vpop.f32.mrb[0].mxu0
    %4496 = vmatprep.mubr.f32.mxu0 %v4400
    %4497 = vmatmul.mubr.f32.gmra.mrb[0].mxu0 %v4399
    %v4498 = vpop.f32.mrb[0].mxu0
    %v4499 = vadd.f32 0.0, %v4498
    %v4500 = vpop.f32.mrb[0].mxu0
    %4501 = vdwg.mxu0
    %4502 = vmatprep.subr.mxu0 0.0
    %4503 = vmatpush1.msra.mxu0 %v814
    %4504 = vmatprep.subr.mxu0 0.0
    %4505 = vmatpush1.msra.mxu0 %v815
    %4506 = vmatprep.subr.mxu0 0.0
    %4507 = vmatpush1.msra.mxu0 %v816
    %4508 = vmatprep.subr.mxu0 0.0
    %4509 = vmatpush1.msra.mxu0 %v817
    %4510 = vmatprep.subr.mxu0 0.0
    %4511 = vmatpush1.msra.mxu0 %v818
    %4512 = vmatprep.subr.mxu0 0.0
    %4513 = vmatpush1.msra.mxu0 %v819
    %4514 = vmatprep.subr.mxu0 0.0
    %4515 = vmatpush1.msra.mxu0 %v820
    %4516 = vmatprep.subr.mxu0 0.0
    %4517 = vmatpush1.msra.mxu0 %v821
    %4518 = vmatprep.subr.mxu0 0.0
    %4519 = vmatpush1.msra.mxu0 %v822
    %4520 = vmatprep.subr.mxu0 0.0
    %4521 = vmatpush1.msra.mxu0 %v823
    %4522 = vmatprep.subr.mxu0 0.0
    %4523 = vmatpush1.msra.mxu0 %v824
    %4524 = vmatprep.subr.mxu0 0.0
    %4525 = vmatpush1.msra.mxu0 %v825
    %4526 = vmatprep.subr.mxu0 0.0
    %4527 = vmatpush1.msra.mxu0 %v826
    %4528 = vmatprep.subr.mxu0 0.0
    %4529 = vmatpush1.msra.mxu0 %v827
    %4530 = vmatprep.subr.mxu0 0.0
    %4531 = vmatpush1.msra.mxu0 %v828
    %4532 = vmatprep.subr.mxu0 0.0
    %4533 = vmatpush1.msra.mxu0 %v829
    %4534 = vmatprep.subr.mxu0 0.0
    %4535 = vmatpush1.msra.mxu0 %v830
    %4536 = vmatprep.subr.mxu0 0.0
    %4537 = vmatpush1.msra.mxu0 %v831
    %4538 = vmatprep.subr.mxu0 0.0
    %4539 = vmatpush1.msra.mxu0 %v832
    %4540 = vmatprep.subr.mxu0 0.0
    %4541 = vmatpush1.msra.mxu0 %v833
    %4542 = vmatprep.subr.mxu0 0.0
    %4543 = vmatpush1.msra.mxu0 %v834
    %4544 = vmatprep.subr.mxu0 0.0
    %4545 = vmatpush1.msra.mxu0 %v835
    %4546 = vmatprep.subr.mxu0 0.0
    %4547 = vmatpush1.msra.mxu0 %v836
    %4548 = vmatprep.subr.mxu0 0.0
    %4549 = vmatpush1.msra.mxu0 %v837
    %4550 = vmatprep.subr.mxu0 0.0
    %4551 = vmatpush1.msra.mxu0 %v838
    %4552 = vmatprep.subr.mxu0 0.0
    %4553 = vmatpush1.msra.mxu0 %v839
    %4554 = vmatprep.subr.mxu0 0.0
    %4555 = vmatpush1.msra.mxu0 %v840
    %4556 = vmatprep.subr.mxu0 0.0
    %4557 = vmatpush1.msra.mxu0 %v841
    %4558 = vmatprep.subr.mxu0 0.0
    %4559 = vmatpush1.msra.mxu0 %v842
    %4560 = vmatprep.subr.mxu0 0.0
    %4561 = vmatpush1.msra.mxu0 %v843
    %4562 = vmatprep.subr.mxu0 0.0
    %4563 = vmatpush1.msra.mxu0 %v844
    %4564 = vmatprep.subr.mxu0 0.0
    %4565 = vmatpush1.msra.mxu0 %v845
    %4566 = vmatprep.mubr.f32.mxu0 %v4362
    %4567 = vmatmul.mubr.f32.gmra.mrb[0].mxu0 %v4361
    %v4568 = vpop.f32.mrb[0].mxu0
    %v4569 = vadd.f32 %v4474, %v4568
    %v4570 = vpop.f32.mrb[0].mxu0
    %4571 = vmatprep.mubr.f32.mxu0 %v4370
    %4572 = vmatmul.mubr.f32.gmra.mrb[0].mxu0 %v4369
    %v4573 = vpop.f32.mrb[0].mxu0
    %v4574 = vadd.f32 %v4479, %v4573
    %v4575 = vpop.f32.mrb[0].mxu0
    %4576 = vmatprep.mubr.f32.mxu0 %v4378
    %4577 = vmatmul.mubr.f32.gmra.mrb[0].mxu0 %v4377
    %v4578 = vpop.f32.mrb[0].mxu0
    %v4579 = vadd.f32 %v4484, %v4578
    %v4580 = vpop.f32.mrb[0].mxu0
    %4581 = vmatprep.mubr.f32.mxu0 %v4386
    %4582 = vmatmul.mubr.f32.gmra.mrb[0].mxu0 %v4385
    %v4583 = vpop.f32.mrb[0].mxu0
    %v4584 = vadd.f32 %v4489, %v4583
    %v4585 = vpop.f32.mrb[0].mxu0
    %4586 = vmatprep.mubr.f32.mxu0 %v4394
    %4587 = vmatmul.mubr.f32.gmra.mrb[0].mxu0 %v4393
    %v4588 = vpop.f32.mrb[0].mxu0
    %v4589 = vadd.f32 %v4494, %v4588
    %v4590 = vpop.f32.mrb[0].mxu0
    %4591 = vmatprep.mubr.f32.mxu0 %v4402
    %4592 = vmatmul.mubr.f32.gmra.mrb[0].mxu0 %v4401
    %v4593 = vpop.f32.mrb[0].mxu0
    %v4594 = vadd.f32 %v4499, %v4593
    %v4595 = vpop.f32.mrb[0].mxu0
    %4596 = vdwg.mxu0
    %4597 = vmatprep.subr.mxu0 0.0
    %4598 = vmatpush1.msra.mxu0 %v846
    %4599 = vmatprep.subr.mxu0 0.0
    %4600 = vmatpush1.msra.mxu0 %v847
    %4601 = vmatprep.subr.mxu0 0.0
    %4602 = vmatpush1.msra.mxu0 %v848
    %4603 = vmatprep.subr.mxu0 0.0
    %4604 = vmatpush1.msra.mxu0 %v849
    %4605 = vmatprep.subr.mxu0 0.0
    %4606 = vmatpush1.msra.mxu0 %v850
    %4607 = vmatprep.subr.mxu0 0.0
    %4608 = vmatpush1.msra.mxu0 %v851
    %4609 = vmatprep.subr.mxu0 0.0
    %4610 = vmatpush1.msra.mxu0 %v852
    %4611 = vmatprep.subr.mxu0 0.0
    %4612 = vmatpush1.msra.mxu0 %v853
    %4613 = vmatprep.subr.mxu0 0.0
    %4614 = vmatpush1.msra.mxu0 %v854
    %4615 = vmatprep.subr.mxu0 0.0
    %4616 = vmatpush1.msra.mxu0 %v855
    %4617 = vmatprep.subr.mxu0 0.0
    %4618 = vmatpush1.msra.mxu0 %v856
    %4619 = vmatprep.subr.mxu0 0.0
    %4620 = vmatpush1.msra.mxu0 %v857
    %4621 = vmatprep.subr.mxu0 0.0
    %4622 = vmatpush1.msra.mxu0 %v858
    %4623 = vmatprep.subr.mxu0 0.0
    %4624 = vmatpush1.msra.mxu0 %v859
    %4625 = vmatprep.subr.mxu0 0.0
    %4626 = vmatpush1.msra.mxu0 %v860
    %4627 = vmatprep.subr.mxu0 0.0
    %4628 = vmatpush1.msra.mxu0 %v861
    %4629 = vmatprep.subr.mxu0 0.0
    %4630 = vmatpush1.msra.mxu0 %v862
    %4631 = vmatprep.subr.mxu0 0.0
    %4632 = vmatpush1.msra.mxu0 %v863
    %4633 = vmatprep.subr.mxu0 0.0
    %4634 = vmatpush1.msra.mxu0 %v864
    %4635 = vmatprep.subr.mxu0 0.0
    %4636 = vmatpush1.msra.mxu0 %v865
    %4637 = vmatprep.subr.mxu0 0.0
    %4638 = vmatpush1.msra.mxu0 %v866
    %4639 = vmatprep.subr.mxu0 0.0
    %4640 = vmatpush1.msra.mxu0 %v867
    %4641 = vmatprep.subr.mxu0 0.0
    %4642 = vmatpush1.msra.mxu0 %v868
    %4643 = vmatprep.subr.mxu0 0.0
    %4644 = vmatpush1.msra.mxu0 %v869
    %4645 = vmatprep.subr.mxu0 0.0
    %4646 = vmatpush1.msra.mxu0 %v870
    %4647 = vmatprep.subr.mxu0 0.0
    %4648 = vmatpush1.msra.mxu0 %v871
    %4649 = vmatprep.subr.mxu0 0.0
    %4650 = vmatpush1.msra.mxu0 %v872
    %4651 = vmatprep.subr.mxu0 0.0
    %4652 = vmatpush1.msra.mxu0 %v873
    %4653 = vmatprep.subr.mxu0 0.0
    %4654 = vmatpush1.msra.mxu0 %v874
    %4655 = vmatprep.subr.mxu0 0.0
    %4656 = vmatpush1.msra.mxu0 %v875
    %4657 = vmatprep.subr.mxu0 0.0
    %4658 = vmatpush1.msra.mxu0 %v876
    %4659 = vmatprep.subr.mxu0 0.0
    %4660 = vmatpush1.msra.mxu0 %v877
    %4661 = vmatprep.mubr.f32.mxu0 %v4364
    %4662 = vmatmul.mubr.f32.gmra.mrb[0].mxu0 %v4363
    %v4663 = vpop.f32.mrb[0].mxu0
    %v4664 = vadd.f32 %v4569, %v4663
    %v4665 = vpop.f32.mrb[0].mxu0
    %4666 = vmatprep.mubr.f32.mxu0 %v4372
    %4667 = vmatmul.mubr.f32.gmra.mrb[0].mxu0 %v4371
    %v4668 = vpop.f32.mrb[0].mxu0
    %v4669 = vadd.f32 %v4574, %v4668
    %v4670 = vpop.f32.mrb[0].mxu0
    %4671 = vmatprep.mubr.f32.mxu0 %v4380
    %4672 = vmatmul.mubr.f32.gmra.mrb[0].mxu0 %v4379
    %v4673 = vpop.f32.mrb[0].mxu0
    %v4674 = vadd.f32 %v4579, %v4673
    %v4675 = vpop.f32.mrb[0].mxu0
    %4676 = vmatprep.mubr.f32.mxu0 %v4388
    %4677 = vmatmul.mubr.f32.gmra.mrb[0].mxu0 %v4387
    %v4678 = vpop.f32.mrb[0].mxu0
    %v4679 = vadd.f32 %v4584, %v4678
    %v4680 = vpop.f32.mrb[0].mxu0
    %4681 = vmatprep.mubr.f32.mxu0 %v4396
    %4682 = vmatmul.mubr.f32.gmra.mrb[0].mxu0 %v4395
    %v4683 = vpop.f32.mrb[0].mxu0
    %v4684 = vadd.f32 %v4589, %v4683
    %v4685 = vpop.f32.mrb[0].mxu0
    %4686 = vmatprep.mubr.f32.mxu0 %v4404
    %4687 = vmatmul.mubr.f32.gmra.mrb[0].mxu0 %v4403
    %v4688 = vpop.f32.mrb[0].mxu0
    %v4689 = vadd.f32 %v4594, %v4688
    %v4690 = vpop.f32.mrb[0].mxu0
    %4691 = vdwg.mxu0
    %4692 = vmatprep.subr.mxu0 0.0
    %4693 = vmatpush1.msra.mxu0 %v878
    %4694 = vmatprep.subr.mxu0 0.0
    %4695 = vmatpush1.msra.mxu0 %v879
    %4696 = vmatprep.subr.mxu0 0.0
    %4697 = vmatpush1.msra.mxu0 %v880
    %4698 = vmatprep.subr.mxu0 0.0
    %4699 = vmatpush1.msra.mxu0 %v881
    %4700 = vmatprep.subr.mxu0 0.0
    %4701 = vmatpush1.msra.mxu0 %v882
    %4702 = vmatprep.subr.mxu0 0.0
    %4703 = vmatpush1.msra.mxu0 %v883
    %4704 = vmatprep.subr.mxu0 0.0
    %4705 = vmatpush1.msra.mxu0 %v884
    %4706 = vmatprep.subr.mxu0 0.0
    %4707 = vmatpush1.msra.mxu0 %v885
    %4708 = vmatprep.subr.mxu0 0.0
    %4709 = vmatpush1.msra.mxu0 %v886
    %4710 = vmatprep.subr.mxu0 0.0
    %4711 = vmatpush1.msra.mxu0 %v887
    %4712 = vmatprep.subr.mxu0 0.0
    %4713 = vmatpush1.msra.mxu0 %v888
    %4714 = vmatprep.subr.mxu0 0.0
    %4715 = vmatpush1.msra.mxu0 %v889
    %4716 = vmatprep.subr.mxu0 0.0
    %4717 = vmatpush1.msra.mxu0 %v890
    %4718 = vmatprep.subr.mxu0 0.0
    %4719 = vmatpush1.msra.mxu0 %v891
    %4720 = vmatprep.subr.mxu0 0.0
    %4721 = vmatpush1.msra.mxu0 %v892
    %4722 = vmatprep.subr.mxu0 0.0
    %4723 = vmatpush1.msra.mxu0 %v893
    %4724 = vmatprep.subr.mxu0 0.0
    %4725 = vmatpush1.msra.mxu0 %v894
    %4726 = vmatprep.subr.mxu0 0.0
    %4727 = vmatpush1.msra.mxu0 %v895
    %4728 = vmatprep.subr.mxu0 0.0
    %4729 = vmatpush1.msra.mxu0 %v896
    %4730 = vmatprep.subr.mxu0 0.0
    %4731 = vmatpush1.msra.mxu0 %v897
    %4732 = vmatprep.subr.mxu0 0.0
    %4733 = vmatpush1.msra.mxu0 %v898
    %4734 = vmatprep.subr.mxu0 0.0
    %4735 = vmatpush1.msra.mxu0 %v899
    %4736 = vmatprep.subr.mxu0 0.0
    %4737 = vmatpush1.msra.mxu0 %v900
    %4738 = vmatprep.subr.mxu0 0.0
    %4739 = vmatpush1.msra.mxu0 %v901
    %4740 = vmatprep.subr.mxu0 0.0
    %4741 = vmatpush1.msra.mxu0 %v902
    %4742 = vmatprep.subr.mxu0 0.0
    %4743 = vmatpush1.msra.mxu0 %v903
    %4744 = vmatprep.subr.mxu0 0.0
    %4745 = vmatpush1.msra.mxu0 %v904
    %4746 = vmatprep.subr.mxu0 0.0
    %4747 = vmatpush1.msra.mxu0 %v905
    %4748 = vmatprep.subr.mxu0 0.0
    %4749 = vmatpush1.msra.mxu0 %v906
    %4750 = vmatprep.subr.mxu0 0.0
    %4751 = vmatpush1.msra.mxu0 %v907
    %4752 = vmatprep.subr.mxu0 0.0
    %4753 = vmatpush1.msra.mxu0 %v908
    %4754 = vmatprep.subr.mxu0 0.0
    %4755 = vmatpush1.msra.mxu0 %v909
    %4756 = vmatprep.mubr.f32.mxu0 %v4366
    %4757 = vmatmul.mubr.f32.gmra.mrb[0].mxu0 %v4365
    %v4758 = vpop.f32.mrb[0].mxu0
    %v4759 = vadd.f32 %v4664, %v4758
    %v4760 = vpop.f32.mrb[0].mxu0
    %4761 = vmatprep.mubr.f32.mxu0 %v4374
    %4762 = vmatmul.mubr.f32.gmra.mrb[0].mxu0 %v4373
    %v4763 = vpop.f32.mrb[0].mxu0
    %v4764 = vadd.f32 %v4669, %v4763
    %v4765 = vpop.f32.mrb[0].mxu0
    %4766 = vmatprep.mubr.f32.mxu0 %v4382
    %4767 = vmatmul.mubr.f32.gmra.mrb[0].mxu0 %v4381
    %v4768 = vpop.f32.mrb[0].mxu0
    %v4769 = vadd.f32 %v4674, %v4768
    %v4770 = vpop.f32.mrb[0].mxu0
    %4771 = vmatprep.mubr.f32.mxu0 %v4390
    %4772 = vmatmul.mubr.f32.gmra.mrb[0].mxu0 %v4389
    %v4773 = vpop.f32.mrb[0].mxu0
    %v4774 = vadd.f32 %v4679, %v4773
    %v4775 = vpop.f32.mrb[0].mxu0
    %4776 = vmatprep.mubr.f32.mxu0 %v4398
    %4777 = vmatmul.mubr.f32.gmra.mrb[0].mxu0 %v4397
    %v4778 = vpop.f32.mrb[0].mxu0
    %v4779 = vadd.f32 %v4684, %v4778
    %v4780 = vpop.f32.mrb[0].mxu0
    %4781 = vmatprep.mubr.f32.mxu0 %v4406
    %4782 = vmatmul.mubr.f32.gmra.mrb[0].mxu0 %v4405
    %v4783 = vpop.f32.mrb[0].mxu0
    %v4784 = vadd.f32 %v4689, %v4783
    %v4785 = vpop.f32.mrb[0].mxu0
    %4786 = vdwg.mxu0
    %v4787 = vsel %vm1144, %v3834, 0
    %v4789 = vsel %vm1144, %v3836, 0
    %v4791 = vsel %vm1144, %v3838, 0
    %4793 = vmatprep.subr.mxu0 0.0
    %4794 = vmatpush1.msra.mxu0 %v910
    %4795 = vmatprep.subr.mxu0 0.0
    %4796 = vmatpush1.msra.mxu0 %v911
    %4797 = vmatprep.subr.mxu0 0.0
    %4798 = vmatpush1.msra.mxu0 %v912
    %4799 = vmatprep.subr.mxu0 0.0
    %4800 = vmatpush1.msra.mxu0 %v913
    %4801 = vmatprep.subr.mxu0 0.0
    %4802 = vmatpush1.msra.mxu0 0.0
    %4803 = vmatprep.subr.mxu0 0.0
    %4804 = vmatpush1.msra.mxu0 0.0
    %4805 = vmatprep.subr.mxu0 0.0
    %4806 = vmatpush1.msra.mxu0 0.0
    %4807 = vmatprep.subr.mxu0 0.0
    %4808 = vmatpush1.msra.mxu0 0.0
    %4809 = vmatprep.subr.mxu0 0.0
    %4810 = vmatpush1.msra.mxu0 0.0
    %4811 = vmatprep.subr.mxu0 0.0
    %4812 = vmatpush1.msra.mxu0 0.0
    %4813 = vmatprep.subr.mxu0 0.0
    %4814 = vmatpush1.msra.mxu0 0.0
    %4815 = vmatprep.subr.mxu0 0.0
    %4816 = vmatpush1.msra.mxu0 0.0
    %4817 = vmatprep.subr.mxu0 0.0
    %4818 = vmatpush1.msra.mxu0 0.0
    %4819 = vmatprep.subr.mxu0 0.0
    %4820 = vmatpush1.msra.mxu0 0.0
    %4821 = vmatprep.subr.mxu0 0.0
    %4822 = vmatpush1.msra.mxu0 0.0
    %4823 = vmatprep.subr.mxu0 0.0
    %4824 = vmatpush1.msra.mxu0 0.0
    %4825 = vmatprep.subr.mxu0 0.0
    %4826 = vmatpush1.msra.mxu0 0.0
    %4827 = vmatprep.subr.mxu0 0.0
    %4828 = vmatpush1.msra.mxu0 0.0
    %4829 = vmatprep.subr.mxu0 0.0
    %4830 = vmatpush1.msra.mxu0 0.0
    %4831 = vmatprep.subr.mxu0 0.0
    %4832 = vmatpush1.msra.mxu0 0.0
    %4833 = vmatprep.subr.mxu0 0.0
    %4834 = vmatpush1.msra.mxu0 0.0
    %4835 = vmatprep.subr.mxu0 0.0
    %4836 = vmatpush1.msra.mxu0 0.0
    %4837 = vmatprep.subr.mxu0 0.0
    %4838 = vmatpush1.msra.mxu0 0.0
    %4839 = vmatprep.subr.mxu0 0.0
    %4840 = vmatpush1.msra.mxu0 0.0
    %4841 = vmatprep.subr.mxu0 0.0
    %4842 = vmatpush1.msra.mxu0 0.0
    %4843 = vmatprep.subr.mxu0 0.0
    %4844 = vmatpush1.msra.mxu0 0.0
    %4845 = vmatprep.subr.mxu0 0.0
    %4846 = vmatpush1.msra.mxu0 0.0
    %4847 = vmatprep.subr.mxu0 0.0
    %4848 = vmatpush1.msra.mxu0 0.0
    %4849 = vmatprep.subr.mxu0 0.0
    %4850 = vmatpush1.msra.mxu0 0.0
    %4851 = vmatprep.subr.mxu0 0.0
    %4852 = vmatpush1.msra.mxu0 0.0
    %4853 = vmatprep.subr.mxu0 0.0
    %4854 = vmatpush1.msra.mxu0 0.0
    %4855 = vmatprep.subr.mxu0 0.0
    %4856 = vmatpush1.msra.mxu0 0.0
    %4857 = vmatprep.mubr.f32.mxu0 0.0
    %4858 = vmatmul.mubr.f32.gmra.mrb[0].mxu0 %v4787
    %v4859 = vpop.f32.mrb[0].mxu0
    %v4860 = vadd.f32 0.0, %v4859
    %v4861 = vpop.f32.mrb[0].mxu0
    %4862 = vmatprep.mubr.f32.mxu0 0.0
    %4863 = vmatmul.mubr.f32.gmra.mrb[0].mxu0 %v4789
    %v4864 = vpop.f32.mrb[0].mxu0
    %v4865 = vadd.f32 0.0, %v4864
    %v4866 = vpop.f32.mrb[0].mxu0
    %4867 = vmatprep.mubr.f32.mxu0 0.0
    %4868 = vmatmul.mubr.f32.gmra.mrb[0].mxu0 %v4791
    %v4869 = vpop.f32.mrb[0].mxu0
    %v4870 = vadd.f32 0.0, %v4869
    %v4871 = vpop.f32.mrb[0].mxu0
    %4872 = vdwg.mxu0
    %4873 = vmatprep.subr.mxu0 0.0
    %4874 = vmatpush1.msra.mxu0 %v4759
    %4875 = vmatprep.subr.mxu0 0.0
    %4876 = vmatpush1.msra.mxu0 %v4764
    %4877 = vmatprep.subr.mxu0 0.0
    %4878 = vmatpush1.msra.mxu0 %v4769
    %4879 = vmatprep.subr.mxu0 0.0
    %4880 = vmatpush1.msra.mxu0 %v4774
    %4881 = vmatprep.subr.mxu0 0.0
    %4882 = vmatpush1.msra.mxu0 %v4779
    %4883 = vmatprep.subr.mxu0 0.0
    %4884 = vmatpush1.msra.mxu0 %v4784
    %4885 = vmatprep.subr.mxu0 0.0
    %4886 = vmatpush1.msra.mxu0 0.0
    %4887 = vmatprep.subr.mxu0 0.0
    %4888 = vmatpush1.msra.mxu0 0.0
    %4889 = vmatprep.subr.mxu0 0.0
    %4890 = vmatpush1.msra.mxu0 0.0
    %4891 = vmatprep.subr.mxu0 0.0
    %4892 = vmatpush1.msra.mxu0 0.0
    %4893 = vmatprep.subr.mxu0 0.0
    %4894 = vmatpush1.msra.mxu0 0.0
    %4895 = vmatprep.subr.mxu0 0.0
    %4896 = vmatpush1.msra.mxu0 0.0
    %4897 = vmatprep.subr.mxu0 0.0
    %4898 = vmatpush1.msra.mxu0 0.0
    %4899 = vmatprep.subr.mxu0 0.0
    %4900 = vmatpush1.msra.mxu0 0.0
    %4901 = vmatprep.subr.mxu0 0.0
    %4902 = vmatpush1.msra.mxu0 0.0
    %4903 = vmatprep.subr.mxu0 0.0
    %4904 = vmatpush1.msra.mxu0 0.0
    %4905 = vmatprep.subr.mxu0 0.0
    %4906 = vmatpush1.msra.mxu0 0.0
    %4907 = vmatprep.subr.mxu0 0.0
    %4908 = vmatpush1.msra.mxu0 0.0
    %4909 = vmatprep.subr.mxu0 0.0
    %4910 = vmatpush1.msra.mxu0 0.0
    %4911 = vmatprep.subr.mxu0 0.0
    %4912 = vmatpush1.msra.mxu0 0.0
    %4913 = vmatprep.subr.mxu0 0.0
    %4914 = vmatpush1.msra.mxu0 0.0
    %4915 = vmatprep.subr.mxu0 0.0
    %4916 = vmatpush1.msra.mxu0 0.0
    %4917 = vmatprep.subr.mxu0 0.0
    %4918 = vmatpush1.msra.mxu0 0.0
    %4919 = vmatprep.subr.mxu0 0.0
    %4920 = vmatpush1.msra.mxu0 0.0
    %4921 = vmatprep.subr.mxu0 0.0
    %4922 = vmatpush1.msra.mxu0 0.0
    %4923 = vmatprep.subr.mxu0 0.0
    %4924 = vmatpush1.msra.mxu0 0.0
    %4925 = vmatprep.subr.mxu0 0.0
    %4926 = vmatpush1.msra.mxu0 0.0
    %4927 = vmatprep.subr.mxu0 0.0
    %4928 = vmatpush1.msra.mxu0 0.0
    %4929 = vmatprep.subr.mxu0 0.0
    %4930 = vmatpush1.msra.mxu0 0.0
    %4931 = vmatprep.subr.mxu0 0.0
    %4932 = vmatpush1.msra.mxu0 0.0
    %4933 = vmatprep.subr.mxu0 0.0
    %4934 = vmatpush1.msra.mxu0 0.0
    %4935 = vmatprep.subr.mxu0 0.0
    %4936 = vmatpush1.msra.mxu0 0.0
    %4937 = vmatprep.mubr.f32.mxu0 0.0
    %4938 = vmatmul.mubr.f32.gmra.mrb[0].mxu0 %v2086
    %v4939 = vpop.f32.mrb[0].mxu0
    %v4940 = vadd.f32 %v4860, %v4939
    %v4941 = vpop.f32.mrb[0].mxu0
    %4942 = vmatprep.mubr.f32.mxu0 0.0
    %4943 = vmatmul.mubr.f32.gmra.mrb[0].mxu0 %v2089
    %v4944 = vpop.f32.mrb[0].mxu0
    %v4945 = vadd.f32 %v4865, %v4944
    %v4946 = vpop.f32.mrb[0].mxu0
    %4947 = vmatprep.mubr.f32.mxu0 0.0
    %4948 = vmatmul.mubr.f32.gmra.mrb[0].mxu0 %v2092
    %v4949 = vpop.f32.mrb[0].mxu0
    %v4950 = vadd.f32 %v4870, %v4949
    %v4951 = vpop.f32.mrb[0].mxu0
    %4952 = vdwg.mxu0
    %v4953 = vadd.f32 %v4940, %v2178
    %v4954 = vadd.f32 %v4945, %v2178
    %v4955 = vadd.f32 %v4950, %v2178
    %v4956 = vmax.f32 %v4953, 0.0
    %v4957 = vmax.f32 %v4954, 0.0
    %v4958 = vmax.f32 %v4955, 0.0
    %v4960 = vsel %vm1144, %v4956, 0
    %v4963 = vsel %vm1144, %v4957, 0
    %v4966 = vsel %vm1144, %v4958, 0
    %4968 = vmatprep.subr.mxu0 0.0
    %4969 = vmatpush1.msra.mxu0 %v915
    %4970 = vmatprep.subr.mxu0 0.0
    %4971 = vmatpush1.msra.mxu0 %v916
    %4972 = vmatprep.subr.mxu0 0.0
    %4973 = vmatpush1.msra.mxu0 %v917
    %4974 = vmatprep.subr.mxu0 0.0
    %4975 = vmatpush1.msra.mxu0 %v918
    %4976 = vmatprep.subr.mxu0 0.0
    %4977 = vmatpush1.msra.mxu0 0.0
    %4978 = vmatprep.subr.mxu0 0.0
    %4979 = vmatpush1.msra.mxu0 0.0
    %4980 = vmatprep.subr.mxu0 0.0
    %4981 = vmatpush1.msra.mxu0 0.0
    %4982 = vmatprep.subr.mxu0 0.0
    %4983 = vmatpush1.msra.mxu0 0.0
    %4984 = vmatprep.subr.mxu0 0.0
    %4985 = vmatpush1.msra.mxu0 0.0
    %4986 = vmatprep.subr.mxu0 0.0
    %4987 = vmatpush1.msra.mxu0 0.0
    %4988 = vmatprep.subr.mxu0 0.0
    %4989 = vmatpush1.msra.mxu0 0.0
    %4990 = vmatprep.subr.mxu0 0.0
    %4991 = vmatpush1.msra.mxu0 0.0
    %4992 = vmatprep.subr.mxu0 0.0
    %4993 = vmatpush1.msra.mxu0 0.0
    %4994 = vmatprep.subr.mxu0 0.0
    %4995 = vmatpush1.msra.mxu0 0.0
    %4996 = vmatprep.subr.mxu0 0.0
    %4997 = vmatpush1.msra.mxu0 0.0
    %4998 = vmatprep.subr.mxu0 0.0
    %4999 = vmatpush1.msra.mxu0 0.0
    %5000 = vmatprep.subr.mxu0 0.0
    %5001 = vmatpush1.msra.mxu0 0.0
    %5002 = vmatprep.subr.mxu0 0.0
    %5003 = vmatpush1.msra.mxu0 0.0
    %5004 = vmatprep.subr.mxu0 0.0
    %5005 = vmatpush1.msra.mxu0 0.0
    %5006 = vmatprep.subr.mxu0 0.0
    %5007 = vmatpush1.msra.mxu0 0.0
    %5008 = vmatprep.subr.mxu0 0.0
    %5009 = vmatpush1.msra.mxu0 0.0
    %5010 = vmatprep.subr.mxu0 0.0
    %5011 = vmatpush1.msra.mxu0 0.0
    %5012 = vmatprep.subr.mxu0 0.0
    %5013 = vmatpush1.msra.mxu0 0.0
    %5014 = vmatprep.subr.mxu0 0.0
    %5015 = vmatpush1.msra.mxu0 0.0
    %5016 = vmatprep.subr.mxu0 0.0
    %5017 = vmatpush1.msra.mxu0 0.0
    %5018 = vmatprep.subr.mxu0 0.0
    %5019 = vmatpush1.msra.mxu0 0.0
    %5020 = vmatprep.subr.mxu0 0.0
    %5021 = vmatpush1.msra.mxu0 0.0
    %5022 = vmatprep.subr.mxu0 0.0
    %5023 = vmatpush1.msra.mxu0 0.0
    %5024 = vmatprep.subr.mxu0 0.0
    %5025 = vmatpush1.msra.mxu0 0.0
    %5026 = vmatprep.subr.mxu0 0.0
    %5027 = vmatpush1.msra.mxu0 0.0
    %5028 = vmatprep.subr.mxu0 0.0
    %5029 = vmatpush1.msra.mxu0 0.0
    %5030 = vmatprep.subr.mxu0 0.0
    %5031 = vmatpush1.msra.mxu0 0.0
    %5032 = vmatprep.mubr.f32.mxu0 0.0
    %5033 = vmatmul.mubr.f32.gmra.mrb[0].mxu0 %v4960
    %v5034 = vpop.f32.mrb[0].mxu0
    %v5035 = vadd.f32 %v2190, %v5034
    %v5036 = vpop.f32.mrb[0].mxu0
    %5037 = vmatprep.mubr.f32.mxu0 0.0
    %5038 = vmatmul.mubr.f32.gmra.mrb[0].mxu0 %v4963
    %v5039 = vpop.f32.mrb[0].mxu0
    %v5040 = vadd.f32 %v2190, %v5039
    %v5041 = vpop.f32.mrb[0].mxu0
    %5042 = vmatprep.mubr.f32.mxu0 0.0
    %5043 = vmatmul.mubr.f32.gmra.mrb[0].mxu0 %v4966
    %v5044 = vpop.f32.mrb[0].mxu0
    %v5045 = vadd.f32 %v2190, %v5044
    %v5046 = vpop.f32.mrb[0].mxu0
    %5047 = vdwg.mxu0
    %5048 = vmatprep.subr.mxu0 0.0
    %5049 = vmatpush1.msra.mxu0 %v919
    %5050 = vmatprep.subr.mxu0 0.0
    %5051 = vmatpush1.msra.mxu0 %v920
    %5052 = vmatprep.subr.mxu0 0.0
    %5053 = vmatpush1.msra.mxu0 %v921
    %5054 = vmatprep.subr.mxu0 0.0
    %5055 = vmatpush1.msra.mxu0 %v922
    %5056 = vmatprep.subr.mxu0 0.0
    %5057 = vmatpush1.msra.mxu0 0.0
    %5058 = vmatprep.subr.mxu0 0.0
    %5059 = vmatpush1.msra.mxu0 0.0
    %5060 = vmatprep.subr.mxu0 0.0
    %5061 = vmatpush1.msra.mxu0 0.0
    %5062 = vmatprep.subr.mxu0 0.0
    %5063 = vmatpush1.msra.mxu0 0.0
    %5064 = vmatprep.subr.mxu0 0.0
    %5065 = vmatpush1.msra.mxu0 0.0
    %5066 = vmatprep.subr.mxu0 0.0
    %5067 = vmatpush1.msra.mxu0 0.0
    %5068 = vmatprep.subr.mxu0 0.0
    %5069 = vmatpush1.msra.mxu0 0.0
    %5070 = vmatprep.subr.mxu0 0.0
    %5071 = vmatpush1.msra.mxu0 0.0
    %5072 = vmatprep.subr.mxu0 0.0
    %5073 = vmatpush1.msra.mxu0 0.0
    %5074 = vmatprep.subr.mxu0 0.0
    %5075 = vmatpush1.msra.mxu0 0.0
    %5076 = vmatprep.subr.mxu0 0.0
    %5077 = vmatpush1.msra.mxu0 0.0
    %5078 = vmatprep.subr.mxu0 0.0
    %5079 = vmatpush1.msra.mxu0 0.0
    %5080 = vmatprep.subr.mxu0 0.0
    %5081 = vmatpush1.msra.mxu0 0.0
    %5082 = vmatprep.subr.mxu0 0.0
    %5083 = vmatpush1.msra.mxu0 0.0
    %5084 = vmatprep.subr.mxu0 0.0
    %5085 = vmatpush1.msra.mxu0 0.0
    %5086 = vmatprep.subr.mxu0 0.0
    %5087 = vmatpush1.msra.mxu0 0.0
    %5088 = vmatprep.subr.mxu0 0.0
    %5089 = vmatpush1.msra.mxu0 0.0
    %5090 = vmatprep.subr.mxu0 0.0
    %5091 = vmatpush1.msra.mxu0 0.0
    %5092 = vmatprep.subr.mxu0 0.0
    %5093 = vmatpush1.msra.mxu0 0.0
    %5094 = vmatprep.subr.mxu0 0.0
    %5095 = vmatpush1.msra.mxu0 0.0
    %5096 = vmatprep.subr.mxu0 0.0
    %5097 = vmatpush1.msra.mxu0 0.0
    %5098 = vmatprep.subr.mxu0 0.0
    %5099 = vmatpush1.msra.mxu0 0.0
    %5100 = vmatprep.subr.mxu0 0.0
    %5101 = vmatpush1.msra.mxu0 0.0
    %5102 = vmatprep.subr.mxu0 0.0
    %5103 = vmatpush1.msra.mxu0 0.0
    %5104 = vmatprep.subr.mxu0 0.0
    %5105 = vmatpush1.msra.mxu0 0.0
    %5106 = vmatprep.subr.mxu0 0.0
    %5107 = vmatpush1.msra.mxu0 0.0
    %5108 = vmatprep.subr.mxu0 0.0
    %5109 = vmatpush1.msra.mxu0 0.0
    %5110 = vmatprep.subr.mxu0 0.0
    %5111 = vmatpush1.msra.mxu0 0.0
    %5112 = vmatprep.mubr.f32.mxu0 0.0
    %5113 = vmatmul.mubr.f32.gmra.mrb[0].mxu0 %v4787
    %v5114 = vpop.f32.mrb[0].mxu0
    %v5115 = vadd.f32 %v2285, %v5114
    %v5116 = vpop.f32.mrb[0].mxu0
    %5117 = vmatprep.mubr.f32.mxu0 0.0
    %5118 = vmatmul.mubr.f32.gmra.mrb[0].mxu0 %v4789
    %v5119 = vpop.f32.mrb[0].mxu0
    %v5120 = vadd.f32 %v2285, %v5119
    %v5121 = vpop.f32.mrb[0].mxu0
    %5122 = vmatprep.mubr.f32.mxu0 0.0
    %5123 = vmatmul.mubr.f32.gmra.mrb[0].mxu0 %v4791
    %v5124 = vpop.f32.mrb[0].mxu0
    %v5125 = vadd.f32 %v2285, %v5124
    %v5126 = vpop.f32.mrb[0].mxu0
    %5127 = vdwg.mxu0
    %v5128 = vadd.f32 %v5035, %v5115
    %v5129 = vadd.f32 %v5040, %v5120
    %v5130 = vadd.f32 %v5045, %v5125
    %v5131 = vxor.u32 %v5128, 2147483648
    %v5132 = vxor.u32 %v5129, 2147483648
    %v5133 = vxor.u32 %v5130, 2147483648
    %v5134 = vmul.f32 %v5131, 1.442695
    %v5135 = vpow.pop %v5134
    %v5136 = vmul.f32 %v5132, 1.442695
    %v5137 = vpow.pop %v5136
    %v5138 = vmul.f32 %v5133, 1.442695
    %v5139 = vpow.pop %v5138
    %v5140 = vadd.f32 %v5135, 1.0
    %v5141 = vadd.f32 %v5137, 1.0
    %v5142 = vadd.f32 %v5139, 1.0
    %v5143 = vrcp.pop %v5140
    %v5144 = vmul.f32 1.0, %v5143
    %v5145 = vrcp.pop %v5141
    %v5146 = vmul.f32 1.0, %v5145
    %v5147 = vrcp.pop %v5142
    %v5148 = vmul.f32 1.0, %v5147
    %5152 = vrot.lane.b32.xlu0 %v5115, 64
    %v5153 = vpop.permute.xlu0 %5152
    %5154 = vrot.lane.b32.xlu0 %v5120, 64
    %v5155 = vpop.permute.xlu0 %5154
    %5156 = vrot.lane.b32.xlu0 %v5125, 64
    %v5157 = vpop.permute.xlu0 %5156
    %v5161 = vmul.f32 %v5144, %v5153
    %v5162 = vmul.f32 %v5146, %v5155
    %v5163 = vmul.f32 %v5148, %v5157
    %5167 = vrot.lane.b32.xlu0 %v5161, 64
    %v5168 = vpop.permute.xlu0 %5167
    %5169 = vrot.lane.b32.xlu0 %v5162, 64
    %v5170 = vpop.permute.xlu0 %5169
    %5171 = vrot.lane.b32.xlu0 %v5163, 64
    %v5172 = vpop.permute.xlu0 %5171
    %v5176 = vadd.f32 %v5035, %v5168
    %v5177 = vadd.f32 %v5040, %v5170
    %v5178 = vadd.f32 %v5045, %v5172
    %v5179 = vtanh.pop %v5176
    %v5180 = vtanh.pop %v5177
    %v5181 = vtanh.pop %v5178
    %v5182 = vsub.f32 1.0, %v5144
    %v5183 = vsub.f32 1.0, %v5146
    %v5184 = vsub.f32 1.0, %v5148
    %5188 = vrot.lane.b32.xlu0 %v5179, 96
    %v5189 = vpop.permute.xlu0 %5188
    %5190 = vrot.lane.b32.xlu0 %v5180, 96
    %v5191 = vpop.permute.xlu0 %5190
    %5192 = vrot.lane.b32.xlu0 %v5181, 96
    %v5193 = vpop.permute.xlu0 %5192
    %v5197 = vmul.f32 %v5182, %v5189
    %v5198 = vmul.f32 %v5183, %v5191
    %v5199 = vmul.f32 %v5184, %v5193
    %v5200 = vmul.f32 %v5144, %v3827
    %v5201 = vmul.f32 %v5146, %v3828
    %v5202 = vmul.f32 %v5148, %v3829
    %v5203 = vadd.f32 %v5197, %v5200
    %v5204 = vadd.f32 %v5198, %v5201
    %v5205 = vadd.f32 %v5199, %v5202
    %v5206 = vld [vmem:[%s4] sm:$0xff]
    %v5207 = vld [vmem:[%s4 + $0x8] sm:$0xff]
    %v5208 = vld [vmem:[%s4 + $0x10] sm:$0xff]
    %v5209 = vld [vmem:[%s5] sm:$0x3]
    %v5210 = vld [vmem:[%s20] sm:$0xff]
    %v5211 = vld [vmem:[%s20 + $0x8] sm:$0xff]
    %v5212 = vld [vmem:[%s20 + $0x10] sm:$0xff]
    %v5213 = vld [vmem:[%s20 + $0x18] sm:$0xff]
    %v5214 = vld [vmem:[%s20 + $0x20] sm:$0xff]
    %v5215 = vld [vmem:[%s20 + $0x28] sm:$0xff]
    %v5216 = vld [vmem:[%s20 + $0x30] sm:$0xff]
    %v5217 = vld [vmem:[%s20 + $0x38] sm:$0xff]
    %v5218 = vld [vmem:[%s21] sm:$0xff]
    %v5219 = vld [vmem:[%s21 + $0x8] sm:$0xff]
    %v5220 = vld [vmem:[%s21 + $0x10] sm:$0xff]
    %v5221 = vld [vmem:[%s21 + $0x18] sm:$0xff]
    %v5222 = vld [vmem:[%s22] sm:$0x1]
    %v5223 = vld [vmem:[%s23] sm:$0x1]
    %v5225 = vlaneseq
    %v5226 = vshrl.u32 %v5225, 7
    %v5227 = vsub.s32 0, %v5226
    %v5228 = vrot.slane %v5222, %v5227
    %v5231 = vsel %vm318, 0.0, 0
    %5233 = vmatprep.subr.mxu0 0.0
    %5234 = vmatpush1.msra.mxu0 %v5210
    %5235 = vmatprep.subr.mxu0 0.0
    %5236 = vmatpush1.msra.mxu0 %v5211
    %5237 = vmatprep.subr.mxu0 0.0
    %5238 = vmatpush1.msra.mxu0 %v5212
    %5239 = vmatprep.subr.mxu0 0.0
    %5240 = vmatpush1.msra.mxu0 %v5213
    %5241 = vmatprep.subr.mxu0 0.0
    %5242 = vmatpush1.msra.mxu0 %v5214
    %5243 = vmatprep.subr.mxu0 0.0
    %5244 = vmatpush1.msra.mxu0 %v5215
    %5245 = vmatprep.subr.mxu0 0.0
    %5246 = vmatpush1.msra.mxu0 %v5216
    %5247 = vmatprep.subr.mxu0 0.0
    %5248 = vmatpush1.msra.mxu0 %v5217
    %5249 = vmatprep.subr.mxu0 0.0
    %5250 = vmatpush1.msra.mxu0 0.0
    %5251 = vmatprep.subr.mxu0 0.0
    %5252 = vmatpush1.msra.mxu0 0.0
    %5253 = vmatprep.subr.mxu0 0.0
    %5254 = vmatpush1.msra.mxu0 0.0
    %5255 = vmatprep.subr.mxu0 0.0
    %5256 = vmatpush1.msra.mxu0 0.0
    %5257 = vmatprep.subr.mxu0 0.0
    %5258 = vmatpush1.msra.mxu0 0.0
    %5259 = vmatprep.subr.mxu0 0.0
    %5260 = vmatpush1.msra.mxu0 0.0
    %5261 = vmatprep.subr.mxu0 0.0
    %5262 = vmatpush1.msra.mxu0 0.0
    %5263 = vmatprep.subr.mxu0 0.0
    %5264 = vmatpush1.msra.mxu0 0.0
    %5265 = vmatprep.subr.mxu0 0.0
    %5266 = vmatpush1.msra.mxu0 0.0
    %5267 = vmatprep.subr.mxu0 0.0
    %5268 = vmatpush1.msra.mxu0 0.0
    %5269 = vmatprep.subr.mxu0 0.0
    %5270 = vmatpush1.msra.mxu0 0.0
    %5271 = vmatprep.subr.mxu0 0.0
    %5272 = vmatpush1.msra.mxu0 0.0
    %5273 = vmatprep.subr.mxu0 0.0
    %5274 = vmatpush1.msra.mxu0 0.0
    %5275 = vmatprep.subr.mxu0 0.0
    %5276 = vmatpush1.msra.mxu0 0.0
    %5277 = vmatprep.subr.mxu0 0.0
    %5278 = vmatpush1.msra.mxu0 0.0
    %5279 = vmatprep.subr.mxu0 0.0
    %5280 = vmatpush1.msra.mxu0 0.0
    %5281 = vmatprep.subr.mxu0 0.0
    %5282 = vmatpush1.msra.mxu0 0.0
    %5283 = vmatprep.subr.mxu0 0.0
    %5284 = vmatpush1.msra.mxu0 0.0
    %5285 = vmatprep.subr.mxu0 0.0
    %5286 = vmatpush1.msra.mxu0 0.0
    %5287 = vmatprep.subr.mxu0 0.0
    %5288 = vmatpush1.msra.mxu0 0.0
    %5289 = vmatprep.subr.mxu0 0.0
    %5290 = vmatpush1.msra.mxu0 0.0
    %5291 = vmatprep.subr.mxu0 0.0
    %5292 = vmatpush1.msra.mxu0 0.0
    %5293 = vmatprep.subr.mxu0 0.0
    %5294 = vmatpush1.msra.mxu0 0.0
    %5295 = vmatprep.subr.mxu0 0.0
    %5296 = vmatpush1.msra.mxu0 0.0
    %5297 = vmatprep.mubr.f32.mxu0 0.0
    %5298 = vmatmul.mubr.f32.gmra.mrb[0].mxu0 %v5231
    %v5299 = vpop.f32.mrb[0].mxu0
    %v5300 = vadd.f32 %v5228, %v5299
    %v5301 = vpop.f32.mrb[0].mxu0
    %5302 = vdwg.mxu0
    %v5303 = vsel %vm1144, 0.0, 0
    %5305 = vmatprep.subr.mxu0 0.0
    %5306 = vmatpush1.msra.mxu0 %v5218
    %5307 = vmatprep.subr.mxu0 0.0
    %5308 = vmatpush1.msra.mxu0 %v5219
    %5309 = vmatprep.subr.mxu0 0.0
    %5310 = vmatpush1.msra.mxu0 %v5220
    %5311 = vmatprep.subr.mxu0 0.0
    %5312 = vmatpush1.msra.mxu0 %v5221
    %5313 = vmatprep.subr.mxu0 0.0
    %5314 = vmatpush1.msra.mxu0 0.0
    %5315 = vmatprep.subr.mxu0 0.0
    %5316 = vmatpush1.msra.mxu0 0.0
    %5317 = vmatprep.subr.mxu0 0.0
    %5318 = vmatpush1.msra.mxu0 0.0
    %5319 = vmatprep.subr.mxu0 0.0
    %5320 = vmatpush1.msra.mxu0 0.0
    %5321 = vmatprep.subr.mxu0 0.0
    %5322 = vmatpush1.msra.mxu0 0.0
    %5323 = vmatprep.subr.mxu0 0.0
    %5324 = vmatpush1.msra.mxu0 0.0
    %5325 = vmatprep.subr.mxu0 0.0
    %5326 = vmatpush1.msra.mxu0 0.0
    %5327 = vmatprep.subr.mxu0 0.0
    %5328 = vmatpush1.msra.mxu0 0.0
    %5329 = vmatprep.subr.mxu0 0.0
    %5330 = vmatpush1.msra.mxu0 0.0
    %5331 = vmatprep.subr.mxu0 0.0
    %5332 = vmatpush1.msra.mxu0 0.0
    %5333 = vmatprep.subr.mxu0 0.0
    %5334 = vmatpush1.msra.mxu0 0.0
    %5335 = vmatprep.subr.mxu0 0.0
    %5336 = vmatpush1.msra.mxu0 0.0
    %5337 = vmatprep.subr.mxu0 0.0
    %5338 = vmatpush1.msra.mxu0 0.0
    %5339 = vmatprep.subr.mxu0 0.0
    %5340 = vmatpush1.msra.mxu0 0.0
    %5341 = vmatprep.subr.mxu0 0.0
    %5342 = vmatpush1.msra.mxu0 0.0
    %5343 = vmatprep.subr.mxu0 0.0
    %5344 = vmatpush1.msra.mxu0 0.0
    %5345 = vmatprep.subr.mxu0 0.0
    %5346 = vmatpush1.msra.mxu0 0.0
    %5347 = vmatprep.subr.mxu0 0.0
    %5348 = vmatpush1.msra.mxu0 0.0
    %5349 = vmatprep.subr.mxu0 0.0
    %5350 = vmatpush1.msra.mxu0 0.0
    %5351 = vmatprep.subr.mxu0 0.0
    %5352 = vmatpush1.msra.mxu0 0.0
    %5353 = vmatprep.subr.mxu0 0.0
    %5354 = vmatpush1.msra.mxu0 0.0
    %5355 = vmatprep.subr.mxu0 0.0
    %5356 = vmatpush1.msra.mxu0 0.0
    %5357 = vmatprep.subr.mxu0 0.0
    %5358 = vmatpush1.msra.mxu0 0.0
    %5359 = vmatprep.subr.mxu0 0.0
    %5360 = vmatpush1.msra.mxu0 0.0
    %5361 = vmatprep.subr.mxu0 0.0
    %5362 = vmatpush1.msra.mxu0 0.0
    %5363 = vmatprep.subr.mxu0 0.0
    %5364 = vmatpush1.msra.mxu0 0.0
    %5365 = vmatprep.subr.mxu0 0.0
    %5366 = vmatpush1.msra.mxu0 0.0
    %5367 = vmatprep.subr.mxu0 0.0
    %5368 = vmatpush1.msra.mxu0 0.0
    %5369 = vmatprep.mubr.f32.mxu0 0.0
    %5370 = vmatmul.mubr.f32.gmra.mrb[0].mxu0 %v5303
    %v5371 = vpop.f32.mrb[0].mxu0
    %v5372 = vadd.f32 0.0, %v5371
    %v5373 = vpop.f32.mrb[0].mxu0
    %5374 = vdwg.mxu0
    %v5375 = vadd.f32 %v5300, %v5372
    %v5377 = vlaneseq
    %v5378 = vshrl.u32 %v5377, 7
    %v5379 = vsub.s32 0, %v5378
    %v5380 = vrot.slane %v5223, %v5379
    %v5382 = vadd.f32 %v5375, %v5380
    %v5383 = vxor.u32 %v5382, 2147483648
    %v5384 = vmul.f32 %v5383, 1.442695
    %v5385 = vpow.pop %v5384
    %v5386 = vadd.f32 %v5385, 1.0
    %v5387 = vrcp.pop %v5386
    %v5388 = vmul.f32 1.0, %v5387
    %v5389 = vtanh.pop %v5382
    %v5390 = vmul.f32 %v5388, 0.0
    %5392 = vrot.lane.b32.xlu0 %v5389, 64
    %v5393 = vpop.permute.xlu0 %5392
    %v5395 = vmul.f32 %v5388, %v5393
    %5397 = vrot.lane.b32.xlu0 %v5395, 32
    %v5398 = vpop.permute.xlu0 %5397
    %v5400 = vadd.f32 %v5390, %v5398
    %v5401 = vtanh.pop %v5400
    %5403 = vrot.lane.b32.xlu0 %v5401, 64
    %v5404 = vpop.permute.xlu0 %5403
    %v5406 = vmul.f32 %v5388, %v5404
    %5408 = vrot.lane.b32.xlu0 %v5406, 32
    %v5409 = vpop.permute.xlu0 %5408
    %vm5410 = vcmask 15360
    %v5412 = vsel %vm5410, %v5206, 0
    %v5415 = vsel %vm5410, %v5207, 0
    %v5418 = vsel %vm5410, %v5208, 0
    %vm5420 = vcmask 1041408
    %v5421 = vsel %vm5420, %v5409, 0
    %5423 = vmatprep.subr.mxu0 0.0
    %5424 = vmatpush1.msra.mxu0 %v5421
    %5425 = vmatprep.subr.mxu0 0.0
    %5426 = vmatpush1.msra.mxu0 0.0
    %5427 = vmatprep.subr.mxu0 0.0
    %5428 = vmatpush1.msra.mxu0 0.0
    %5429 = vmatprep.subr.mxu0 0.0
    %5430 = vmatpush1.msra.mxu0 0.0
    %5431 = vmatprep.subr.mxu0 0.0
    %5432 = vmatpush1.msra.mxu0 0.0
    %5433 = vmatprep.subr.mxu0 0.0
    %5434 = vmatpush1.msra.mxu0 0.0
    %5435 = vmatprep.subr.mxu0 0.0
    %5436 = vmatpush1.msra.mxu0 0.0
    %5437 = vmatprep.subr.mxu0 0.0
    %5438 = vmatpush1.msra.mxu0 0.0
    %5439 = vmatprep.subr.mxu0 0.0
    %5440 = vmatpush1.msra.mxu0 0.0
    %5441 = vmatprep.subr.mxu0 0.0
    %5442 = vmatpush1.msra.mxu0 0.0
    %5443 = vmatprep.subr.mxu0 0.0
    %5444 = vmatpush1.msra.mxu0 0.0
    %5445 = vmatprep.subr.mxu0 0.0
    %5446 = vmatpush1.msra.mxu0 0.0
    %5447 = vmatprep.subr.mxu0 0.0
    %5448 = vmatpush1.msra.mxu0 0.0
    %5449 = vmatprep.subr.mxu0 0.0
    %5450 = vmatpush1.msra.mxu0 0.0
    %5451 = vmatprep.subr.mxu0 0.0
    %5452 = vmatpush1.msra.mxu0 0.0
    %5453 = vmatprep.subr.mxu0 0.0
    %5454 = vmatpush1.msra.mxu0 0.0
    %5455 = vmatprep.subr.mxu0 0.0
    %5456 = vmatpush1.msra.mxu0 0.0
    %5457 = vmatprep.subr.mxu0 0.0
    %5458 = vmatpush1.msra.mxu0 0.0
    %5459 = vmatprep.subr.mxu0 0.0
    %5460 = vmatpush1.msra.mxu0 0.0
    %5461 = vmatprep.subr.mxu0 0.0
    %5462 = vmatpush1.msra.mxu0 0.0
    %5463 = vmatprep.subr.mxu0 0.0
    %5464 = vmatpush1.msra.mxu0 0.0
    %5465 = vmatprep.subr.mxu0 0.0
    %5466 = vmatpush1.msra.mxu0 0.0
    %5467 = vmatprep.subr.mxu0 0.0
    %5468 = vmatpush1.msra.mxu0 0.0
    %5469 = vmatprep.subr.mxu0 0.0
    %5470 = vmatpush1.msra.mxu0 0.0
    %5471 = vmatprep.subr.mxu0 0.0
    %5472 = vmatpush1.msra.mxu0 0.0
    %5473 = vmatprep.subr.mxu0 0.0
    %5474 = vmatpush1.msra.mxu0 0.0
    %5475 = vmatprep.subr.mxu0 0.0
    %5476 = vmatpush1.msra.mxu0 0.0
    %5477 = vmatprep.subr.mxu0 0.0
    %5478 = vmatpush1.msra.mxu0 0.0
    %5479 = vmatprep.subr.mxu0 0.0
    %5480 = vmatpush1.msra.mxu0 0.0
    %5481 = vmatprep.subr.mxu0 0.0
    %5482 = vmatpush1.msra.mxu0 0.0
    %5483 = vmatprep.subr.mxu0 0.0
    %5484 = vmatpush1.msra.mxu0 0.0
    %5485 = vmatprep.subr.mxu0 0.0
    %5486 = vmatpush1.msra.mxu0 0.0
    %5487 = vmatprep.mubr.f32.mxu0 0.0
    %5488 = vmatmul.mubr.f32.gmra.mrb[0].mxu0 %v5412
    %v5489 = vpop.f32.mrb[0].mxu0
    %v5490 = vadd.f32 0.0, %v5489
    %v5491 = vpop.f32.mrb[0].mxu0
    %5492 = vmatprep.mubr.f32.mxu0 0.0
    %5493 = vmatmul.mubr.f32.gmra.mrb[0].mxu0 %v5415
    %v5494 = vpop.f32.mrb[0].mxu0
    %v5495 = vadd.f32 0.0, %v5494
    %v5496 = vpop.f32.mrb[0].mxu0
    %5497 = vmatprep.mubr.f32.mxu0 0.0
    %5498 = vmatmul.mubr.f32.gmra.mrb[0].mxu0 %v5418
    %v5499 = vpop.f32.mrb[0].mxu0
    %v5500 = vadd.f32 0.0, %v5499
    %v5501 = vpop.f32.mrb[0].mxu0
    %5502 = vdwg.mxu0
    %5506 = vrot.lane.b32.xlu0 %v5490, 32
    %v5507 = vpop.permute.xlu0 %5506
    %5508 = vrot.lane.b32.xlu0 %v5495, 32
    %v5509 = vpop.permute.xlu0 %5508
    %5510 = vrot.lane.b32.xlu0 %v5500, 32
    %v5511 = vpop.permute.xlu0 %5510
    %v5515 = vmul.f32 %v5203, %v5507
    %v5516 = vmul.f32 %v5204, %v5509
    %v5517 = vmul.f32 %v5205, %v5511
    %5521 = vrot.lane.b32.xlu0 %v5515, 96
    %v5522 = vpop.permute.xlu0 %5521
    %5523 = vrot.lane.b32.xlu0 %v5516, 96
    %v5524 = vpop.permute.xlu0 %5523
    %5525 = vrot.lane.b32.xlu0 %v5517, 96
    %v5526 = vpop.permute.xlu0 %5525
    %v5530 = vsel %vm1144, %v5522, 0.0
    %5531 = vadd.xlane.f32.xlu0 %v5530
    %v5532 = vpop.xlane.xlu0 %5531
    %v5533 = vsel %vm1144, %v5524, 0.0
    %5534 = vadd.xlane.f32.xlu0 %v5533
    %v5535 = vpop.xlane.xlu0 %5534
    %v5536 = vsel %vm1144, %v5526, 0.0
    %5537 = vadd.xlane.f32.xlu0 %v5536
    %v5538 = vpop.xlane.xlu0 %5537
    %vm5539 = vcmp.gt.f32.partialorder %v5206, 0.5
    %vm5540 = vcmp.gt.f32.partialorder %v5207, 0.5
    %vm5541 = vcmp.gt.f32.partialorder %v5208, 0.5
    %v5542 = vsel %vm5539, %v5532, -1e+30
    %v5543 = vsel %vm5540, %v5535, -1e+30
    %v5544 = vsel %vm5541, %v5538, -1e+30
    %v5545 = vsel %vm5410, %v5542, -inf
    %v5546 = vsel %vm5410, %v5543, -inf
    %v5547 = vsel %vm5410, %v5544, -inf
    %v5548 = vmax.f32 %v5545, %v5546
    %v5549 = vmax.f32 %v5548, %v5547
    %v5550 = vrot.slane %v5549, 4
    %v5551 = vmax.f32 %v5549, %v5550
    %v5552 = vrot.slane %v5551, 2
    %v5553 = vmax.f32 %v5551, %v5552
    %v5554 = vrot.slane %v5553, 1
    %v5555 = vmax.f32 %v5553, %v5554
    %v5556 = vmul.f32 %v5206, %v5555
    %v5557 = vmul.f32 %v5207, %v5555
    %v5558 = vmul.f32 %v5208, %v5555
    %v5559 = vsel %vm5410, %v5556, 0.0
    %5560 = vadd.xlane.f32.xlu0 %v5559
    %v5561 = vpop.xlane.xlu0 %5560
    %v5562 = vsel %vm5410, %v5557, 0.0
    %5563 = vadd.xlane.f32.xlu0 %v5562
    %v5564 = vpop.xlane.xlu0 %5563
    %v5565 = vsel %vm5410, %v5558, 0.0
    %5566 = vadd.xlane.f32.xlu0 %v5565
    %v5567 = vpop.xlane.xlu0 %5566
    %v5568 = vsub.f32 %v5532, %v5561
    %v5569 = vsub.f32 %v5535, %v5564
    %v5570 = vsub.f32 %v5538, %v5567
    %v5571 = vmul.f32 %v5568, 1.442695
    %v5572 = vpow.pop %v5571
    %v5573 = vmul.f32 %v5569, 1.442695
    %v5574 = vpow.pop %v5573
    %v5575 = vmul.f32 %v5570, 1.442695
    %v5576 = vpow.pop %v5575
    %v5577 = vmul.f32 %v5206, %v5572
    %v5578 = vmul.f32 %v5207, %v5574
    %v5579 = vmul.f32 %v5208, %v5576
    %v5580 = vsel %vm5410, %v5577, 0.0
    %v5581 = vsel %vm5410, %v5578, 0.0
    %v5582 = vadd.f32 %v5580, %v5581
    %v5583 = vsel %vm5410, %v5579, 0.0
    %v5584 = vadd.f32 %v5582, %v5583
    %v5585 = vrot.slane %v5584, 4
    %v5586 = vadd.f32 %v5584, %v5585
    %v5587 = vrot.slane %v5586, 2
    %v5588 = vadd.f32 %v5586, %v5587
    %v5589 = vrot.slane %v5588, 1
    %v5590 = vadd.f32 %v5588, %v5589
    %v5591 = vmul.f32 %v5206, %v5590
    %v5592 = vmul.f32 %v5207, %v5590
    %v5593 = vmul.f32 %v5208, %v5590
    %v5594 = vsel %vm5410, %v5591, 0.0
    %5595 = vadd.xlane.f32.xlu0 %v5594
    %v5596 = vpop.xlane.xlu0 %5595
    %v5597 = vsel %vm5410, %v5592, 0.0
    %5598 = vadd.xlane.f32.xlu0 %v5597
    %v5599 = vpop.xlane.xlu0 %5598
    %v5600 = vsel %vm5410, %v5593, 0.0
    %5601 = vadd.xlane.f32.xlu0 %v5600
    %v5602 = vpop.xlane.xlu0 %5601
    %v5603 = vrcp.pop %v5596
    %v5604 = vmul.f32 %v5572, %v5603
    %v5605 = vrcp.pop %v5599
    %v5606 = vmul.f32 %v5574, %v5605
    %v5607 = vrcp.pop %v5602
    %v5608 = vmul.f32 %v5576, %v5607
    %v5609 = vmul.f32 %v5604, %v5203
    %v5610 = vmul.f32 %v5606, %v5204
    %v5611 = vmul.f32 %v5608, %v5205
    %5615 = vrot.lane.b32.xlu0 %v5609, 96
    %v5616 = vpop.permute.xlu0 %5615
    %5617 = vrot.lane.b32.xlu0 %v5610, 96
    %v5618 = vpop.permute.xlu0 %5617
    %5619 = vrot.lane.b32.xlu0 %v5611, 96
    %v5620 = vpop.permute.xlu0 %5619
    %v5625 = vsel %vm1030, %v5209, 0
    %5627 = vmatprep.subr.mxu0 0.0
    %5628 = vmatpush1.msra.mxu0 %v5616
    %5629 = vmatprep.subr.mxu0 0.0
    %5630 = vmatpush1.msra.mxu0 %v5618
    %5631 = vmatprep.subr.mxu0 0.0
    %5632 = vmatpush1.msra.mxu0 %v5620
    %5633 = vmatprep.subr.mxu0 0.0
    %5634 = vmatpush1.msra.mxu0 0.0
    %5635 = vmatprep.subr.mxu0 0.0
    %5636 = vmatpush1.msra.mxu0 0.0
    %5637 = vmatprep.subr.mxu0 0.0
    %5638 = vmatpush1.msra.mxu0 0.0
    %5639 = vmatprep.subr.mxu0 0.0
    %5640 = vmatpush1.msra.mxu0 0.0
    %5641 = vmatprep.subr.mxu0 0.0
    %5642 = vmatpush1.msra.mxu0 0.0
    %5643 = vmatprep.subr.mxu0 0.0
    %5644 = vmatpush1.msra.mxu0 0.0
    %5645 = vmatprep.subr.mxu0 0.0
    %5646 = vmatpush1.msra.mxu0 0.0
    %5647 = vmatprep.subr.mxu0 0.0
    %5648 = vmatpush1.msra.mxu0 0.0
    %5649 = vmatprep.subr.mxu0 0.0
    %5650 = vmatpush1.msra.mxu0 0.0
    %5651 = vmatprep.subr.mxu0 0.0
    %5652 = vmatpush1.msra.mxu0 0.0
    %5653 = vmatprep.subr.mxu0 0.0
    %5654 = vmatpush1.msra.mxu0 0.0
    %5655 = vmatprep.subr.mxu0 0.0
    %5656 = vmatpush1.msra.mxu0 0.0
    %5657 = vmatprep.subr.mxu0 0.0
    %5658 = vmatpush1.msra.mxu0 0.0
    %5659 = vmatprep.subr.mxu0 0.0
    %5660 = vmatpush1.msra.mxu0 0.0
    %5661 = vmatprep.subr.mxu0 0.0
    %5662 = vmatpush1.msra.mxu0 0.0
    %5663 = vmatprep.subr.mxu0 0.0
    %5664 = vmatpush1.msra.mxu0 0.0
    %5665 = vmatprep.subr.mxu0 0.0
    %5666 = vmatpush1.msra.mxu0 0.0
    %5667 = vmatprep.subr.mxu0 0.0
    %5668 = vmatpush1.msra.mxu0 0.0
    %5669 = vmatprep.subr.mxu0 0.0
    %5670 = vmatpush1.msra.mxu0 0.0
    %5671 = vmatprep.subr.mxu0 0.0
    %5672 = vmatpush1.msra.mxu0 0.0
    %5673 = vmatprep.subr.mxu0 0.0
    %5674 = vmatpush1.msra.mxu0 0.0
    %5675 = vmatprep.subr.mxu0 0.0
    %5676 = vmatpush1.msra.mxu0 0.0
    %5677 = vmatprep.subr.mxu0 0.0
    %5678 = vmatpush1.msra.mxu0 0.0
    %5679 = vmatprep.subr.mxu0 0.0
    %5680 = vmatpush1.msra.mxu0 0.0
    %5681 = vmatprep.subr.mxu0 0.0
    %5682 = vmatpush1.msra.mxu0 0.0
    %5683 = vmatprep.subr.mxu0 0.0
    %5684 = vmatpush1.msra.mxu0 0.0
    %5685 = vmatprep.subr.mxu0 0.0
    %5686 = vmatpush1.msra.mxu0 0.0
    %5687 = vmatprep.subr.mxu0 0.0
    %5688 = vmatpush1.msra.mxu0 0.0
    %5689 = vmatprep.subr.mxu0 0.0
    %5690 = vmatpush1.msra.mxu0 0.0
    %5691 = vmatprep.mubr.f32.mxu0 0.0
    %5692 = vmatmul.mubr.f32.gmra.mrb[0].mxu0 %v5625
    %v5693 = vpop.f32.mrb[0].mxu0
    %v5694 = vadd.f32 0.0, %v5693
    %v5695 = vpop.f32.mrb[0].mxu0
    %5696 = vdwg.mxu0
    %5699 = vrot.lane.b32.xlu0 %v5694, 32
    %v5700 = vpop.permute.xlu0 %5699
    %v5702 = vsel %vm1144, %v5409, %v5700
    %v5704 = vsel %vm318, %v5702, 0
    %5706 = vmatprep.subr.mxu0 0.0
    %5707 = vmatpush1.msra.mxu0 %v5210
    %5708 = vmatprep.subr.mxu0 0.0
    %5709 = vmatpush1.msra.mxu0 %v5211
    %5710 = vmatprep.subr.mxu0 0.0
    %5711 = vmatpush1.msra.mxu0 %v5212
    %5712 = vmatprep.subr.mxu0 0.0
    %5713 = vmatpush1.msra.mxu0 %v5213
    %5714 = vmatprep.subr.mxu0 0.0
    %5715 = vmatpush1.msra.mxu0 %v5214
    %5716 = vmatprep.subr.mxu0 0.0
    %5717 = vmatpush1.msra.mxu0 %v5215
    %5718 = vmatprep.subr.mxu0 0.0
    %5719 = vmatpush1.msra.mxu0 %v5216
    %5720 = vmatprep.subr.mxu0 0.0
    %5721 = vmatpush1.msra.mxu0 %v5217
    %5722 = vmatprep.subr.mxu0 0.0
    %5723 = vmatpush1.msra.mxu0 0.0
    %5724 = vmatprep.subr.mxu0 0.0
    %5725 = vmatpush1.msra.mxu0 0.0
    %5726 = vmatprep.subr.mxu0 0.0
    %5727 = vmatpush1.msra.mxu0 0.0
    %5728 = vmatprep.subr.mxu0 0.0
    %5729 = vmatpush1.msra.mxu0 0.0
    %5730 = vmatprep.subr.mxu0 0.0
    %5731 = vmatpush1.msra.mxu0 0.0
    %5732 = vmatprep.subr.mxu0 0.0
    %5733 = vmatpush1.msra.mxu0 0.0
    %5734 = vmatprep.subr.mxu0 0.0
    %5735 = vmatpush1.msra.mxu0 0.0
    %5736 = vmatprep.subr.mxu0 0.0
    %5737 = vmatpush1.msra.mxu0 0.0
    %5738 = vmatprep.subr.mxu0 0.0
    %5739 = vmatpush1.msra.mxu0 0.0
    %5740 = vmatprep.subr.mxu0 0.0
    %5741 = vmatpush1.msra.mxu0 0.0
    %5742 = vmatprep.subr.mxu0 0.0
    %5743 = vmatpush1.msra.mxu0 0.0
    %5744 = vmatprep.subr.mxu0 0.0
    %5745 = vmatpush1.msra.mxu0 0.0
    %5746 = vmatprep.subr.mxu0 0.0
    %5747 = vmatpush1.msra.mxu0 0.0
    %5748 = vmatprep.subr.mxu0 0.0
    %5749 = vmatpush1.msra.mxu0 0.0
    %5750 = vmatprep.subr.mxu0 0.0
    %5751 = vmatpush1.msra.mxu0 0.0
    %5752 = vmatprep.subr.mxu0 0.0
    %5753 = vmatpush1.msra.mxu0 0.0
    %5754 = vmatprep.subr.mxu0 0.0
    %5755 = vmatpush1.msra.mxu0 0.0
    %5756 = vmatprep.subr.mxu0 0.0
    %5757 = vmatpush1.msra.mxu0 0.0
    %5758 = vmatprep.subr.mxu0 0.0
    %5759 = vmatpush1.msra.mxu0 0.0
    %5760 = vmatprep.subr.mxu0 0.0
    %5761 = vmatpush1.msra.mxu0 0.0
    %5762 = vmatprep.subr.mxu0 0.0
    %5763 = vmatpush1.msra.mxu0 0.0
    %5764 = vmatprep.subr.mxu0 0.0
    %5765 = vmatpush1.msra.mxu0 0.0
    %5766 = vmatprep.subr.mxu0 0.0
    %5767 = vmatpush1.msra.mxu0 0.0
    %5768 = vmatprep.subr.mxu0 0.0
    %5769 = vmatpush1.msra.mxu0 0.0
    %5770 = vmatprep.mubr.f32.mxu0 0.0
    %5771 = vmatmul.mubr.f32.gmra.mrb[0].mxu0 %v5704
    %v5772 = vpop.f32.mrb[0].mxu0
    %v5773 = vadd.f32 %v5228, %v5772
    %v5774 = vpop.f32.mrb[0].mxu0
    %5775 = vdwg.mxu0
    %v5776 = vsel %vm1144, %v5409, 0
    %5778 = vmatprep.subr.mxu0 0.0
    %5779 = vmatpush1.msra.mxu0 %v5218
    %5780 = vmatprep.subr.mxu0 0.0
    %5781 = vmatpush1.msra.mxu0 %v5219
    %5782 = vmatprep.subr.mxu0 0.0
    %5783 = vmatpush1.msra.mxu0 %v5220
    %5784 = vmatprep.subr.mxu0 0.0
    %5785 = vmatpush1.msra.mxu0 %v5221
    %5786 = vmatprep.subr.mxu0 0.0
    %5787 = vmatpush1.msra.mxu0 0.0
    %5788 = vmatprep.subr.mxu0 0.0
    %5789 = vmatpush1.msra.mxu0 0.0
    %5790 = vmatprep.subr.mxu0 0.0
    %5791 = vmatpush1.msra.mxu0 0.0
    %5792 = vmatprep.subr.mxu0 0.0
    %5793 = vmatpush1.msra.mxu0 0.0
    %5794 = vmatprep.subr.mxu0 0.0
    %5795 = vmatpush1.msra.mxu0 0.0
    %5796 = vmatprep.subr.mxu0 0.0
    %5797 = vmatpush1.msra.mxu0 0.0
    %5798 = vmatprep.subr.mxu0 0.0
    %5799 = vmatpush1.msra.mxu0 0.0
    %5800 = vmatprep.subr.mxu0 0.0
    %5801 = vmatpush1.msra.mxu0 0.0
    %5802 = vmatprep.subr.mxu0 0.0
    %5803 = vmatpush1.msra.mxu0 0.0
    %5804 = vmatprep.subr.mxu0 0.0
    %5805 = vmatpush1.msra.mxu0 0.0
    %5806 = vmatprep.subr.mxu0 0.0
    %5807 = vmatpush1.msra.mxu0 0.0
    %5808 = vmatprep.subr.mxu0 0.0
    %5809 = vmatpush1.msra.mxu0 0.0
    %5810 = vmatprep.subr.mxu0 0.0
    %5811 = vmatpush1.msra.mxu0 0.0
    %5812 = vmatprep.subr.mxu0 0.0
    %5813 = vmatpush1.msra.mxu0 0.0
    %5814 = vmatprep.subr.mxu0 0.0
    %5815 = vmatpush1.msra.mxu0 0.0
    %5816 = vmatprep.subr.mxu0 0.0
    %5817 = vmatpush1.msra.mxu0 0.0
    %5818 = vmatprep.subr.mxu0 0.0
    %5819 = vmatpush1.msra.mxu0 0.0
    %5820 = vmatprep.subr.mxu0 0.0
    %5821 = vmatpush1.msra.mxu0 0.0
    %5822 = vmatprep.subr.mxu0 0.0
    %5823 = vmatpush1.msra.mxu0 0.0
    %5824 = vmatprep.subr.mxu0 0.0
    %5825 = vmatpush1.msra.mxu0 0.0
    %5826 = vmatprep.subr.mxu0 0.0
    %5827 = vmatpush1.msra.mxu0 0.0
    %5828 = vmatprep.subr.mxu0 0.0
    %5829 = vmatpush1.msra.mxu0 0.0
    %5830 = vmatprep.subr.mxu0 0.0
    %5831 = vmatpush1.msra.mxu0 0.0
    %5832 = vmatprep.subr.mxu0 0.0
    %5833 = vmatpush1.msra.mxu0 0.0
    %5834 = vmatprep.subr.mxu0 0.0
    %5835 = vmatpush1.msra.mxu0 0.0
    %5836 = vmatprep.subr.mxu0 0.0
    %5837 = vmatpush1.msra.mxu0 0.0
    %5838 = vmatprep.subr.mxu0 0.0
    %5839 = vmatpush1.msra.mxu0 0.0
    %5840 = vmatprep.subr.mxu0 0.0
    %5841 = vmatpush1.msra.mxu0 0.0
    %5842 = vmatprep.mubr.f32.mxu0 0.0
    %5843 = vmatmul.mubr.f32.gmra.mrb[0].mxu0 %v5776
    %v5844 = vpop.f32.mrb[0].mxu0
    %v5845 = vadd.f32 0.0, %v5844
    %v5846 = vpop.f32.mrb[0].mxu0
    %5847 = vdwg.mxu0
    %v5848 = vadd.f32 %v5773, %v5845
    %v5849 = vadd.f32 %v5848, %v5380
    %v5850 = vxor.u32 %v5849, 2147483648
    %v5851 = vmul.f32 %v5850, 1.442695
    %v5852 = vpow.pop %v5851
    %v5853 = vadd.f32 %v5852, 1.0
    %v5854 = vrcp.pop %v5853
    %v5855 = vmul.f32 1.0, %v5854
    %v5856 = vtanh.pop %v5849
    %v5857 = vmul.f32 %v5855, %v5400
    %5859 = vrot.lane.b32.xlu0 %v5856, 64
    %v5860 = vpop.permute.xlu0 %5859
    %v5862 = vmul.f32 %v5855, %v5860
    %5864 = vrot.lane.b32.xlu0 %v5862, 32
    %v5865 = vpop.permute.xlu0 %5864
    %v5867 = vadd.f32 %v5857, %v5865
    %v5868 = vtanh.pop %v5867
    %5870 = vrot.lane.b32.xlu0 %v5868, 64
    %v5871 = vpop.permute.xlu0 %5870
    %v5873 = vmul.f32 %v5855, %v5871
    %5875 = vrot.lane.b32.xlu0 %v5873, 32
    %v5876 = vpop.permute.xlu0 %5875
    %v5877 = vsel %vm5420, %v5876, 0
    %5879 = vmatprep.subr.mxu0 0.0
    %5880 = vmatpush1.msra.mxu0 %v5877
    %5881 = vmatprep.subr.mxu0 0.0
    %5882 = vmatpush1.msra.mxu0 0.0
    %5883 = vmatprep.subr.mxu0 0.0
    %5884 = vmatpush1.msra.mxu0 0.0
    %5885 = vmatprep.subr.mxu0 0.0
    %5886 = vmatpush1.msra.mxu0 0.0
    %5887 = vmatprep.subr.mxu0 0.0
    %5888 = vmatpush1.msra.mxu0 0.0
    %5889 = vmatprep.subr.mxu0 0.0
    %5890 = vmatpush1.msra.mxu0 0.0
    %5891 = vmatprep.subr.mxu0 0.0
    %5892 = vmatpush1.msra.mxu0 0.0
    %5893 = vmatprep.subr.mxu0 0.0
    %5894 = vmatpush1.msra.mxu0 0.0
    %5895 = vmatprep.subr.mxu0 0.0
    %5896 = vmatpush1.msra.mxu0 0.0
    %5897 = vmatprep.subr.mxu0 0.0
    %5898 = vmatpush1.msra.mxu0 0.0
    %5899 = vmatprep.subr.mxu0 0.0
    %5900 = vmatpush1.msra.mxu0 0.0
    %5901 = vmatprep.subr.mxu0 0.0
    %5902 = vmatpush1.msra.mxu0 0.0
    %5903 = vmatprep.subr.mxu0 0.0
    %5904 = vmatpush1.msra.mxu0 0.0
    %5905 = vmatprep.subr.mxu0 0.0
    %5906 = vmatpush1.msra.mxu0 0.0
    %5907 = vmatprep.subr.mxu0 0.0
    %5908 = vmatpush1.msra.mxu0 0.0
    %5909 = vmatprep.subr.mxu0 0.0
    %5910 = vmatpush1.msra.mxu0 0.0
    %5911 = vmatprep.subr.mxu0 0.0
    %5912 = vmatpush1.msra.mxu0 0.0
    %5913 = vmatprep.subr.mxu0 0.0
    %5914 = vmatpush1.msra.mxu0 0.0
    %5915 = vmatprep.subr.mxu0 0.0
    %5916 = vmatpush1.msra.mxu0 0.0
    %5917 = vmatprep.subr.mxu0 0.0
    %5918 = vmatpush1.msra.mxu0 0.0
    %5919 = vmatprep.subr.mxu0 0.0
    %5920 = vmatpush1.msra.mxu0 0.0
    %5921 = vmatprep.subr.mxu0 0.0
    %5922 = vmatpush1.msra.mxu0 0.0
    %5923 = vmatprep.subr.mxu0 0.0
    %5924 = vmatpush1.msra.mxu0 0.0
    %5925 = vmatprep.subr.mxu0 0.0
    %5926 = vmatpush1.msra.mxu0 0.0
    %5927 = vmatprep.subr.mxu0 0.0
    %5928 = vmatpush1.msra.mxu0 0.0
    %5929 = vmatprep.subr.mxu0 0.0
    %5930 = vmatpush1.msra.mxu0 0.0
    %5931 = vmatprep.subr.mxu0 0.0
    %5932 = vmatpush1.msra.mxu0 0.0
    %5933 = vmatprep.subr.mxu0 0.0
    %5934 = vmatpush1.msra.mxu0 0.0
    %5935 = vmatprep.subr.mxu0 0.0
    %5936 = vmatpush1.msra.mxu0 0.0
    %5937 = vmatprep.subr.mxu0 0.0
    %5938 = vmatpush1.msra.mxu0 0.0
    %5939 = vmatprep.subr.mxu0 0.0
    %5940 = vmatpush1.msra.mxu0 0.0
    %5941 = vmatprep.subr.mxu0 0.0
    %5942 = vmatpush1.msra.mxu0 0.0
    %5943 = vmatprep.mubr.f32.mxu0 0.0
    %5944 = vmatmul.mubr.f32.gmra.mrb[0].mxu0 %v5412
    %v5945 = vpop.f32.mrb[0].mxu0
    %v5946 = vadd.f32 0.0, %v5945
    %v5947 = vpop.f32.mrb[0].mxu0
    %5948 = vmatprep.mubr.f32.mxu0 0.0
    %5949 = vmatmul.mubr.f32.gmra.mrb[0].mxu0 %v5415
    %v5950 = vpop.f32.mrb[0].mxu0
    %v5951 = vadd.f32 0.0, %v5950
    %v5952 = vpop.f32.mrb[0].mxu0
    %5953 = vmatprep.mubr.f32.mxu0 0.0
    %5954 = vmatmul.mubr.f32.gmra.mrb[0].mxu0 %v5418
    %v5955 = vpop.f32.mrb[0].mxu0
    %v5956 = vadd.f32 0.0, %v5955
    %v5957 = vpop.f32.mrb[0].mxu0
    %5958 = vdwg.mxu0
    %5962 = vrot.lane.b32.xlu0 %v5946, 32
    %v5963 = vpop.permute.xlu0 %5962
    %5964 = vrot.lane.b32.xlu0 %v5951, 32
    %v5965 = vpop.permute.xlu0 %5964
    %5966 = vrot.lane.b32.xlu0 %v5956, 32
    %v5967 = vpop.permute.xlu0 %5966
    %v5971 = vmul.f32 %v5203, %v5963
    %v5972 = vmul.f32 %v5204, %v5965
    %v5973 = vmul.f32 %v5205, %v5967
    %5977 = vrot.lane.b32.xlu0 %v5971, 96
    %v5978 = vpop.permute.xlu0 %5977
    %5979 = vrot.lane.b32.xlu0 %v5972, 96
    %v5980 = vpop.permute.xlu0 %5979
    %5981 = vrot.lane.b32.xlu0 %v5973, 96
    %v5982 = vpop.permute.xlu0 %5981
    %v5986 = vsel %vm1144, %v5978, 0.0
    %5987 = vadd.xlane.f32.xlu0 %v5986
    %v5988 = vpop.xlane.xlu0 %5987
    %v5989 = vsel %vm1144, %v5980, 0.0
    %5990 = vadd.xlane.f32.xlu0 %v5989
    %v5991 = vpop.xlane.xlu0 %5990
    %v5992 = vsel %vm1144, %v5982, 0.0
    %5993 = vadd.xlane.f32.xlu0 %v5992
    %v5994 = vpop.xlane.xlu0 %5993
    %v5995 = vsel %vm5539, %v5988, -1e+30
    %v5996 = vsel %vm5540, %v5991, -1e+30
    %v5997 = vsel %vm5541, %v5994, -1e+30
    %v5998 = vsel %vm5410, %v5995, -inf
    %v5999 = vsel %vm5410, %v5996, -inf
    %v6000 = vsel %vm5410, %v5997, -inf
    %v6001 = vmax.f32 %v5998, %v5999
    %v6002 = vmax.f32 %v6001, %v6000
    %v6003 = vrot.slane %v6002, 4
    %v6004 = vmax.f32 %v6002, %v6003
    %v6005 = vrot.slane %v6004, 2
    %v6006 = vmax.f32 %v6004, %v6005
    %v6007 = vrot.slane %v6006, 1
    %v6008 = vmax.f32 %v6006, %v6007
    %v6009 = vmul.f32 %v5206, %v6008
    %v6010 = vmul.f32 %v5207, %v6008
    %v6011 = vmul.f32 %v5208, %v6008
    %v6012 = vsel %vm5410, %v6009, 0.0
    %6013 = vadd.xlane.f32.xlu0 %v6012
    %v6014 = vpop.xlane.xlu0 %6013
    %v6015 = vsel %vm5410, %v6010, 0.0
    %6016 = vadd.xlane.f32.xlu0 %v6015
    %v6017 = vpop.xlane.xlu0 %6016
    %v6018 = vsel %vm5410, %v6011, 0.0
    %6019 = vadd.xlane.f32.xlu0 %v6018
    %v6020 = vpop.xlane.xlu0 %6019
    %v6021 = vsub.f32 %v5988, %v6014
    %v6022 = vsub.f32 %v5991, %v6017
    %v6023 = vsub.f32 %v5994, %v6020
    %v6024 = vmul.f32 %v6021, 1.442695
    %v6025 = vpow.pop %v6024
    %v6026 = vmul.f32 %v6022, 1.442695
    %v6027 = vpow.pop %v6026
    %v6028 = vmul.f32 %v6023, 1.442695
    %v6029 = vpow.pop %v6028
    %v6030 = vmul.f32 %v5206, %v6025
    %v6031 = vmul.f32 %v5207, %v6027
    %v6032 = vmul.f32 %v5208, %v6029
    %v6033 = vsel %vm5410, %v6030, 0.0
    %v6034 = vsel %vm5410, %v6031, 0.0
    %v6035 = vadd.f32 %v6033, %v6034
    %v6036 = vsel %vm5410, %v6032, 0.0
    %v6037 = vadd.f32 %v6035, %v6036
    %v6038 = vrot.slane %v6037, 4
    %v6039 = vadd.f32 %v6037, %v6038
    %v6040 = vrot.slane %v6039, 2
    %v6041 = vadd.f32 %v6039, %v6040
    %v6042 = vrot.slane %v6041, 1
    %v6043 = vadd.f32 %v6041, %v6042
    %v6044 = vmul.f32 %v5206, %v6043
    %v6045 = vmul.f32 %v5207, %v6043
    %v6046 = vmul.f32 %v5208, %v6043
    %v6047 = vsel %vm5410, %v6044, 0.0
    %6048 = vadd.xlane.f32.xlu0 %v6047
    %v6049 = vpop.xlane.xlu0 %6048
    %v6050 = vsel %vm5410, %v6045, 0.0
    %6051 = vadd.xlane.f32.xlu0 %v6050
    %v6052 = vpop.xlane.xlu0 %6051
    %v6053 = vsel %vm5410, %v6046, 0.0
    %6054 = vadd.xlane.f32.xlu0 %v6053
    %v6055 = vpop.xlane.xlu0 %6054
    %v6056 = vrcp.pop %v6049
    %v6057 = vmul.f32 %v6025, %v6056
    %v6058 = vrcp.pop %v6052
    %v6059 = vmul.f32 %v6027, %v6058
    %v6060 = vrcp.pop %v6055
    %v6061 = vmul.f32 %v6029, %v6060
    %v6062 = vmul.f32 %v6057, %v5203
    %v6063 = vmul.f32 %v6059, %v5204
    %v6064 = vmul.f32 %v6061, %v5205
    %6068 = vrot.lane.b32.xlu0 %v6062, 96
    %v6069 = vpop.permute.xlu0 %6068
    %6070 = vrot.lane.b32.xlu0 %v6063, 96
    %v6071 = vpop.permute.xlu0 %6070
    %6072 = vrot.lane.b32.xlu0 %v6064, 96
    %v6073 = vpop.permute.xlu0 %6072
    %6077 = vmatprep.subr.mxu0 0.0
    %6078 = vmatpush1.msra.mxu0 %v6069
    %6079 = vmatprep.subr.mxu0 0.0
    %6080 = vmatpush1.msra.mxu0 %v6071
    %6081 = vmatprep.subr.mxu0 0.0
    %6082 = vmatpush1.msra.mxu0 %v6073
    %6083 = vmatprep.subr.mxu0 0.0
    %6084 = vmatpush1.msra.mxu0 0.0
    %6085 = vmatprep.subr.mxu0 0.0
    %6086 = vmatpush1.msra.mxu0 0.0
    %6087 = vmatprep.subr.mxu0 0.0
    %6088 = vmatpush1.msra.mxu0 0.0
    %6089 = vmatprep.subr.mxu0 0.0
    %6090 = vmatpush1.msra.mxu0 0.0
    %6091 = vmatprep.subr.mxu0 0.0
    %6092 = vmatpush1.msra.mxu0 0.0
    %6093 = vmatprep.subr.mxu0 0.0
    %6094 = vmatpush1.msra.mxu0 0.0
    %6095 = vmatprep.subr.mxu0 0.0
    %6096 = vmatpush1.msra.mxu0 0.0
    %6097 = vmatprep.subr.mxu0 0.0
    %6098 = vmatpush1.msra.mxu0 0.0
    %6099 = vmatprep.subr.mxu0 0.0
    %6100 = vmatpush1.msra.mxu0 0.0
    %6101 = vmatprep.subr.mxu0 0.0
    %6102 = vmatpush1.msra.mxu0 0.0
    %6103 = vmatprep.subr.mxu0 0.0
    %6104 = vmatpush1.msra.mxu0 0.0
    %6105 = vmatprep.subr.mxu0 0.0
    %6106 = vmatpush1.msra.mxu0 0.0
    %6107 = vmatprep.subr.mxu0 0.0
    %6108 = vmatpush1.msra.mxu0 0.0
    %6109 = vmatprep.subr.mxu0 0.0
    %6110 = vmatpush1.msra.mxu0 0.0
    %6111 = vmatprep.subr.mxu0 0.0
    %6112 = vmatpush1.msra.mxu0 0.0
    %6113 = vmatprep.subr.mxu0 0.0
    %6114 = vmatpush1.msra.mxu0 0.0
    %6115 = vmatprep.subr.mxu0 0.0
    %6116 = vmatpush1.msra.mxu0 0.0
    %6117 = vmatprep.subr.mxu0 0.0
    %6118 = vmatpush1.msra.mxu0 0.0
    %6119 = vmatprep.subr.mxu0 0.0
    %6120 = vmatpush1.msra.mxu0 0.0
    %6121 = vmatprep.subr.mxu0 0.0
    %6122 = vmatpush1.msra.mxu0 0.0
    %6123 = vmatprep.subr.mxu0 0.0
    %6124 = vmatpush1.msra.mxu0 0.0
    %6125 = vmatprep.subr.mxu0 0.0
    %6126 = vmatpush1.msra.mxu0 0.0
    %6127 = vmatprep.subr.mxu0 0.0
    %6128 = vmatpush1.msra.mxu0 0.0
    %6129 = vmatprep.subr.mxu0 0.0
    %6130 = vmatpush1.msra.mxu0 0.0
    %6131 = vmatprep.subr.mxu0 0.0
    %6132 = vmatpush1.msra.mxu0 0.0
    %6133 = vmatprep.subr.mxu0 0.0
    %6134 = vmatpush1.msra.mxu0 0.0
    %6135 = vmatprep.subr.mxu0 0.0
    %6136 = vmatpush1.msra.mxu0 0.0
    %6137 = vmatprep.subr.mxu0 0.0
    %6138 = vmatpush1.msra.mxu0 0.0
    %6139 = vmatprep.subr.mxu0 0.0
    %6140 = vmatpush1.msra.mxu0 0.0
    %6141 = vmatprep.mubr.f32.mxu0 0.0
    %6142 = vmatmul.mubr.f32.gmra.mrb[0].mxu0 %v5625
    %v6143 = vpop.f32.mrb[0].mxu0
    %v6144 = vadd.f32 0.0, %v6143
    %v6145 = vpop.f32.mrb[0].mxu0
    %6146 = vdwg.mxu0
    %6149 = vrot.lane.b32.xlu0 %v6144, 32
    %v6150 = vpop.permute.xlu0 %6149
    %v6152 = vsel %vm1144, %v5876, %v6150
    %v6154 = vsel %vm318, %v6152, 0
    %6156 = vmatprep.subr.mxu0 0.0
    %6157 = vmatpush1.msra.mxu0 %v5210
    %6158 = vmatprep.subr.mxu0 0.0
    %6159 = vmatpush1.msra.mxu0 %v5211
    %6160 = vmatprep.subr.mxu0 0.0
    %6161 = vmatpush1.msra.mxu0 %v5212
    %6162 = vmatprep.subr.mxu0 0.0
    %6163 = vmatpush1.msra.mxu0 %v5213
    %6164 = vmatprep.subr.mxu0 0.0
    %6165 = vmatpush1.msra.mxu0 %v5214
    %6166 = vmatprep.subr.mxu0 0.0
    %6167 = vmatpush1.msra.mxu0 %v5215
    %6168 = vmatprep.subr.mxu0 0.0
    %6169 = vmatpush1.msra.mxu0 %v5216
    %6170 = vmatprep.subr.mxu0 0.0
    %6171 = vmatpush1.msra.mxu0 %v5217
    %6172 = vmatprep.subr.mxu0 0.0
    %6173 = vmatpush1.msra.mxu0 0.0
    %6174 = vmatprep.subr.mxu0 0.0
    %6175 = vmatpush1.msra.mxu0 0.0
    %6176 = vmatprep.subr.mxu0 0.0
    %6177 = vmatpush1.msra.mxu0 0.0
    %6178 = vmatprep.subr.mxu0 0.0
    %6179 = vmatpush1.msra.mxu0 0.0
    %6180 = vmatprep.subr.mxu0 0.0
    %6181 = vmatpush1.msra.mxu0 0.0
    %6182 = vmatprep.subr.mxu0 0.0
    %6183 = vmatpush1.msra.mxu0 0.0
    %6184 = vmatprep.subr.mxu0 0.0
    %6185 = vmatpush1.msra.mxu0 0.0
    %6186 = vmatprep.subr.mxu0 0.0
    %6187 = vmatpush1.msra.mxu0 0.0
    %6188 = vmatprep.subr.mxu0 0.0
    %6189 = vmatpush1.msra.mxu0 0.0
    %6190 = vmatprep.subr.mxu0 0.0
    %6191 = vmatpush1.msra.mxu0 0.0
    %6192 = vmatprep.subr.mxu0 0.0
    %6193 = vmatpush1.msra.mxu0 0.0
    %6194 = vmatprep.subr.mxu0 0.0
    %6195 = vmatpush1.msra.mxu0 0.0
    %6196 = vmatprep.subr.mxu0 0.0
    %6197 = vmatpush1.msra.mxu0 0.0
    %6198 = vmatprep.subr.mxu0 0.0
    %6199 = vmatpush1.msra.mxu0 0.0
    %6200 = vmatprep.subr.mxu0 0.0
    %6201 = vmatpush1.msra.mxu0 0.0
    %6202 = vmatprep.subr.mxu0 0.0
    %6203 = vmatpush1.msra.mxu0 0.0
    %6204 = vmatprep.subr.mxu0 0.0
    %6205 = vmatpush1.msra.mxu0 0.0
    %6206 = vmatprep.subr.mxu0 0.0
    %6207 = vmatpush1.msra.mxu0 0.0
    %6208 = vmatprep.subr.mxu0 0.0
    %6209 = vmatpush1.msra.mxu0 0.0
    %6210 = vmatprep.subr.mxu0 0.0
    %6211 = vmatpush1.msra.mxu0 0.0
    %6212 = vmatprep.subr.mxu0 0.0
    %6213 = vmatpush1.msra.mxu0 0.0
    %6214 = vmatprep.subr.mxu0 0.0
    %6215 = vmatpush1.msra.mxu0 0.0
    %6216 = vmatprep.subr.mxu0 0.0
    %6217 = vmatpush1.msra.mxu0 0.0
    %6218 = vmatprep.subr.mxu0 0.0
    %6219 = vmatpush1.msra.mxu0 0.0
    %6220 = vmatprep.mubr.f32.mxu0 0.0
    %6221 = vmatmul.mubr.f32.gmra.mrb[0].mxu0 %v6154
    %v6222 = vpop.f32.mrb[0].mxu0
    %v6223 = vadd.f32 %v5228, %v6222
    %v6224 = vpop.f32.mrb[0].mxu0
    %6225 = vdwg.mxu0
    %v6226 = vsel %vm1144, %v5876, 0
    %6228 = vmatprep.subr.mxu0 0.0
    %6229 = vmatpush1.msra.mxu0 %v5218
    %6230 = vmatprep.subr.mxu0 0.0
    %6231 = vmatpush1.msra.mxu0 %v5219
    %6232 = vmatprep.subr.mxu0 0.0
    %6233 = vmatpush1.msra.mxu0 %v5220
    %6234 = vmatprep.subr.mxu0 0.0
    %6235 = vmatpush1.msra.mxu0 %v5221
    %6236 = vmatprep.subr.mxu0 0.0
    %6237 = vmatpush1.msra.mxu0 0.0
    %6238 = vmatprep.subr.mxu0 0.0
    %6239 = vmatpush1.msra.mxu0 0.0
    %6240 = vmatprep.subr.mxu0 0.0
    %6241 = vmatpush1.msra.mxu0 0.0
    %6242 = vmatprep.subr.mxu0 0.0
    %6243 = vmatpush1.msra.mxu0 0.0
    %6244 = vmatprep.subr.mxu0 0.0
    %6245 = vmatpush1.msra.mxu0 0.0
    %6246 = vmatprep.subr.mxu0 0.0
    %6247 = vmatpush1.msra.mxu0 0.0
    %6248 = vmatprep.subr.mxu0 0.0
    %6249 = vmatpush1.msra.mxu0 0.0
    %6250 = vmatprep.subr.mxu0 0.0
    %6251 = vmatpush1.msra.mxu0 0.0
    %6252 = vmatprep.subr.mxu0 0.0
    %6253 = vmatpush1.msra.mxu0 0.0
    %6254 = vmatprep.subr.mxu0 0.0
    %6255 = vmatpush1.msra.mxu0 0.0
    %6256 = vmatprep.subr.mxu0 0.0
    %6257 = vmatpush1.msra.mxu0 0.0
    %6258 = vmatprep.subr.mxu0 0.0
    %6259 = vmatpush1.msra.mxu0 0.0
    %6260 = vmatprep.subr.mxu0 0.0
    %6261 = vmatpush1.msra.mxu0 0.0
    %6262 = vmatprep.subr.mxu0 0.0
    %6263 = vmatpush1.msra.mxu0 0.0
    %6264 = vmatprep.subr.mxu0 0.0
    %6265 = vmatpush1.msra.mxu0 0.0
    %6266 = vmatprep.subr.mxu0 0.0
    %6267 = vmatpush1.msra.mxu0 0.0
    %6268 = vmatprep.subr.mxu0 0.0
    %6269 = vmatpush1.msra.mxu0 0.0
    %6270 = vmatprep.subr.mxu0 0.0
    %6271 = vmatpush1.msra.mxu0 0.0
    %6272 = vmatprep.subr.mxu0 0.0
    %6273 = vmatpush1.msra.mxu0 0.0
    %6274 = vmatprep.subr.mxu0 0.0
    %6275 = vmatpush1.msra.mxu0 0.0
    %6276 = vmatprep.subr.mxu0 0.0
    %6277 = vmatpush1.msra.mxu0 0.0
    %6278 = vmatprep.subr.mxu0 0.0
    %6279 = vmatpush1.msra.mxu0 0.0
    %6280 = vmatprep.subr.mxu0 0.0
    %6281 = vmatpush1.msra.mxu0 0.0
    %6282 = vmatprep.subr.mxu0 0.0
    %6283 = vmatpush1.msra.mxu0 0.0
    %6284 = vmatprep.subr.mxu0 0.0
    %6285 = vmatpush1.msra.mxu0 0.0
    %6286 = vmatprep.subr.mxu0 0.0
    %6287 = vmatpush1.msra.mxu0 0.0
    %6288 = vmatprep.subr.mxu0 0.0
    %6289 = vmatpush1.msra.mxu0 0.0
    %6290 = vmatprep.subr.mxu0 0.0
    %6291 = vmatpush1.msra.mxu0 0.0
    %6292 = vmatprep.mubr.f32.mxu0 0.0
    %6293 = vmatmul.mubr.f32.gmra.mrb[0].mxu0 %v6226
    %v6294 = vpop.f32.mrb[0].mxu0
    %v6295 = vadd.f32 0.0, %v6294
    %v6296 = vpop.f32.mrb[0].mxu0
    %6297 = vdwg.mxu0
    %v6298 = vadd.f32 %v6223, %v6295
    %v6299 = vadd.f32 %v6298, %v5380
    %v6300 = vxor.u32 %v6299, 2147483648
    %v6301 = vmul.f32 %v6300, 1.442695
    %v6302 = vpow.pop %v6301
    %v6303 = vadd.f32 %v6302, 1.0
    %v6304 = vrcp.pop %v6303
    %v6305 = vmul.f32 1.0, %v6304
    %v6306 = vtanh.pop %v6299
    %v6307 = vmul.f32 %v6305, %v5867
    %6309 = vrot.lane.b32.xlu0 %v6306, 64
    %v6310 = vpop.permute.xlu0 %6309
    %v6312 = vmul.f32 %v6305, %v6310
    %6314 = vrot.lane.b32.xlu0 %v6312, 32
    %v6315 = vpop.permute.xlu0 %6314
    %v6317 = vadd.f32 %v6307, %v6315
    %v6318 = vtanh.pop %v6317
    %6320 = vrot.lane.b32.xlu0 %v6318, 64
    %v6321 = vpop.permute.xlu0 %6320
    %v6323 = vmul.f32 %v6305, %v6321
    %6325 = vrot.lane.b32.xlu0 %v6323, 32
    %v6326 = vpop.permute.xlu0 %6325
    %v6327 = vsel %vm5420, %v6326, 0
    %6329 = vmatprep.subr.mxu0 0.0
    %6330 = vmatpush1.msra.mxu0 %v6327
    %6331 = vmatprep.subr.mxu0 0.0
    %6332 = vmatpush1.msra.mxu0 0.0
    %6333 = vmatprep.subr.mxu0 0.0
    %6334 = vmatpush1.msra.mxu0 0.0
    %6335 = vmatprep.subr.mxu0 0.0
    %6336 = vmatpush1.msra.mxu0 0.0
    %6337 = vmatprep.subr.mxu0 0.0
    %6338 = vmatpush1.msra.mxu0 0.0
    %6339 = vmatprep.subr.mxu0 0.0
    %6340 = vmatpush1.msra.mxu0 0.0
    %6341 = vmatprep.subr.mxu0 0.0
    %6342 = vmatpush1.msra.mxu0 0.0
    %6343 = vmatprep.subr.mxu0 0.0
    %6344 = vmatpush1.msra.mxu0 0.0
    %6345 = vmatprep.subr.mxu0 0.0
    %6346 = vmatpush1.msra.mxu0 0.0
    %6347 = vmatprep.subr.mxu0 0.0
    %6348 = vmatpush1.msra.mxu0 0.0
    %6349 = vmatprep.subr.mxu0 0.0
    %6350 = vmatpush1.msra.mxu0 0.0
    %6351 = vmatprep.subr.mxu0 0.0
    %6352 = vmatpush1.msra.mxu0 0.0
    %6353 = vmatprep.subr.mxu0 0.0
    %6354 = vmatpush1.msra.mxu0 0.0
    %6355 = vmatprep.subr.mxu0 0.0
    %6356 = vmatpush1.msra.mxu0 0.0
    %6357 = vmatprep.subr.mxu0 0.0
    %6358 = vmatpush1.msra.mxu0 0.0
    %6359 = vmatprep.subr.mxu0 0.0
    %6360 = vmatpush1.msra.mxu0 0.0
    %6361 = vmatprep.subr.mxu0 0.0
    %6362 = vmatpush1.msra.mxu0 0.0
    %6363 = vmatprep.subr.mxu0 0.0
    %6364 = vmatpush1.msra.mxu0 0.0
    %6365 = vmatprep.subr.mxu0 0.0
    %6366 = vmatpush1.msra.mxu0 0.0
    %6367 = vmatprep.subr.mxu0 0.0
    %6368 = vmatpush1.msra.mxu0 0.0
    %6369 = vmatprep.subr.mxu0 0.0
    %6370 = vmatpush1.msra.mxu0 0.0
    %6371 = vmatprep.subr.mxu0 0.0
    %6372 = vmatpush1.msra.mxu0 0.0
    %6373 = vmatprep.subr.mxu0 0.0
    %6374 = vmatpush1.msra.mxu0 0.0
    %6375 = vmatprep.subr.mxu0 0.0
    %6376 = vmatpush1.msra.mxu0 0.0
    %6377 = vmatprep.subr.mxu0 0.0
    %6378 = vmatpush1.msra.mxu0 0.0
    %6379 = vmatprep.subr.mxu0 0.0
    %6380 = vmatpush1.msra.mxu0 0.0
    %6381 = vmatprep.subr.mxu0 0.0
    %6382 = vmatpush1.msra.mxu0 0.0
    %6383 = vmatprep.subr.mxu0 0.0
    %6384 = vmatpush1.msra.mxu0 0.0
    %6385 = vmatprep.subr.mxu0 0.0
    %6386 = vmatpush1.msra.mxu0 0.0
    %6387 = vmatprep.subr.mxu0 0.0
    %6388 = vmatpush1.msra.mxu0 0.0
    %6389 = vmatprep.subr.mxu0 0.0
    %6390 = vmatpush1.msra.mxu0 0.0
    %6391 = vmatprep.subr.mxu0 0.0
    %6392 = vmatpush1.msra.mxu0 0.0
    %6393 = vmatprep.mubr.f32.mxu0 0.0
    %6394 = vmatmul.mubr.f32.gmra.mrb[0].mxu0 %v5412
    %v6395 = vpop.f32.mrb[0].mxu0
    %v6396 = vadd.f32 0.0, %v6395
    %v6397 = vpop.f32.mrb[0].mxu0
    %6398 = vmatprep.mubr.f32.mxu0 0.0
    %6399 = vmatmul.mubr.f32.gmra.mrb[0].mxu0 %v5415
    %v6400 = vpop.f32.mrb[0].mxu0
    %v6401 = vadd.f32 0.0, %v6400
    %v6402 = vpop.f32.mrb[0].mxu0
    %6403 = vmatprep.mubr.f32.mxu0 0.0
    %6404 = vmatmul.mubr.f32.gmra.mrb[0].mxu0 %v5418
    %v6405 = vpop.f32.mrb[0].mxu0
    %v6406 = vadd.f32 0.0, %v6405
    %v6407 = vpop.f32.mrb[0].mxu0
    %6408 = vdwg.mxu0
    %6412 = vrot.lane.b32.xlu0 %v6396, 32
    %v6413 = vpop.permute.xlu0 %6412
    %6414 = vrot.lane.b32.xlu0 %v6401, 32
    %v6415 = vpop.permute.xlu0 %6414
    %6416 = vrot.lane.b32.xlu0 %v6406, 32
    %v6417 = vpop.permute.xlu0 %6416
    %v6421 = vmul.f32 %v5203, %v6413
    %v6422 = vmul.f32 %v5204, %v6415
    %v6423 = vmul.f32 %v5205, %v6417
    %6427 = vrot.lane.b32.xlu0 %v6421, 96
    %v6428 = vpop.permute.xlu0 %6427
    %6429 = vrot.lane.b32.xlu0 %v6422, 96
    %v6430 = vpop.permute.xlu0 %6429
    %6431 = vrot.lane.b32.xlu0 %v6423, 96
    %v6432 = vpop.permute.xlu0 %6431
    %v6436 = vsel %vm1144, %v6428, 0.0
    %6437 = vadd.xlane.f32.xlu0 %v6436
    %v6438 = vpop.xlane.xlu0 %6437
    %v6439 = vsel %vm1144, %v6430, 0.0
    %6440 = vadd.xlane.f32.xlu0 %v6439
    %v6441 = vpop.xlane.xlu0 %6440
    %v6442 = vsel %vm1144, %v6432, 0.0
    %6443 = vadd.xlane.f32.xlu0 %v6442
    %v6444 = vpop.xlane.xlu0 %6443
    %v6445 = vsel %vm5539, %v6438, -1e+30
    %v6446 = vsel %vm5540, %v6441, -1e+30
    %v6447 = vsel %vm5541, %v6444, -1e+30
    %v6448 = vsel %vm5410, %v6445, -inf
    %v6449 = vsel %vm5410, %v6446, -inf
    %v6450 = vsel %vm5410, %v6447, -inf
    %v6451 = vmax.f32 %v6448, %v6449
    %v6452 = vmax.f32 %v6451, %v6450
    %v6453 = vrot.slane %v6452, 4
    %v6454 = vmax.f32 %v6452, %v6453
    %v6455 = vrot.slane %v6454, 2
    %v6456 = vmax.f32 %v6454, %v6455
    %v6457 = vrot.slane %v6456, 1
    %v6458 = vmax.f32 %v6456, %v6457
    %v6459 = vmul.f32 %v5206, %v6458
    %v6460 = vmul.f32 %v5207, %v6458
    %v6461 = vmul.f32 %v5208, %v6458
    %v6462 = vsel %vm5410, %v6459, 0.0
    %6463 = vadd.xlane.f32.xlu0 %v6462
    %v6464 = vpop.xlane.xlu0 %6463
    %v6465 = vsel %vm5410, %v6460, 0.0
    %6466 = vadd.xlane.f32.xlu0 %v6465
    %v6467 = vpop.xlane.xlu0 %6466
    %v6468 = vsel %vm5410, %v6461, 0.0
    %6469 = vadd.xlane.f32.xlu0 %v6468
    %v6470 = vpop.xlane.xlu0 %6469
    %v6471 = vsub.f32 %v6438, %v6464
    %v6472 = vsub.f32 %v6441, %v6467
    %v6473 = vsub.f32 %v6444, %v6470
    %v6474 = vmul.f32 %v6471, 1.442695
    %v6475 = vpow.pop %v6474
    %v6476 = vmul.f32 %v6472, 1.442695
    %v6477 = vpow.pop %v6476
    %v6478 = vmul.f32 %v6473, 1.442695
    %v6479 = vpow.pop %v6478
    %v6480 = vmul.f32 %v5206, %v6475
    %v6481 = vmul.f32 %v5207, %v6477
    %v6482 = vmul.f32 %v5208, %v6479
    %v6483 = vsel %vm5410, %v6480, 0.0
    %v6484 = vsel %vm5410, %v6481, 0.0
    %v6485 = vadd.f32 %v6483, %v6484
    %v6486 = vsel %vm5410, %v6482, 0.0
    %v6487 = vadd.f32 %v6485, %v6486
    %v6488 = vrot.slane %v6487, 4
    %v6489 = vadd.f32 %v6487, %v6488
    %v6490 = vrot.slane %v6489, 2
    %v6491 = vadd.f32 %v6489, %v6490
    %v6492 = vrot.slane %v6491, 1
    %v6493 = vadd.f32 %v6491, %v6492
    %v6494 = vmul.f32 %v5206, %v6493
    %v6495 = vmul.f32 %v5207, %v6493
    %v6496 = vmul.f32 %v5208, %v6493
    %v6497 = vsel %vm5410, %v6494, 0.0
    %6498 = vadd.xlane.f32.xlu0 %v6497
    %v6499 = vpop.xlane.xlu0 %6498
    %v6500 = vsel %vm5410, %v6495, 0.0
    %6501 = vadd.xlane.f32.xlu0 %v6500
    %v6502 = vpop.xlane.xlu0 %6501
    %v6503 = vsel %vm5410, %v6496, 0.0
    %6504 = vadd.xlane.f32.xlu0 %v6503
    %v6505 = vpop.xlane.xlu0 %6504
    %v6506 = vrcp.pop %v6499
    %v6507 = vmul.f32 %v6475, %v6506
    %v6508 = vrcp.pop %v6502
    %v6509 = vmul.f32 %v6477, %v6508
    %v6510 = vrcp.pop %v6505
    %v6511 = vmul.f32 %v6479, %v6510
    %v6512 = vmul.f32 %v6507, %v5203
    %v6513 = vmul.f32 %v6509, %v5204
    %v6514 = vmul.f32 %v6511, %v5205
    %6518 = vrot.lane.b32.xlu0 %v6512, 96
    %v6519 = vpop.permute.xlu0 %6518
    %6520 = vrot.lane.b32.xlu0 %v6513, 96
    %v6521 = vpop.permute.xlu0 %6520
    %6522 = vrot.lane.b32.xlu0 %v6514, 96
    %v6523 = vpop.permute.xlu0 %6522
    %6527 = vmatprep.subr.mxu0 0.0
    %6528 = vmatpush1.msra.mxu0 %v6519
    %6529 = vmatprep.subr.mxu0 0.0
    %6530 = vmatpush1.msra.mxu0 %v6521
    %6531 = vmatprep.subr.mxu0 0.0
    %6532 = vmatpush1.msra.mxu0 %v6523
    %6533 = vmatprep.subr.mxu0 0.0
    %6534 = vmatpush1.msra.mxu0 0.0
    %6535 = vmatprep.subr.mxu0 0.0
    %6536 = vmatpush1.msra.mxu0 0.0
    %6537 = vmatprep.subr.mxu0 0.0
    %6538 = vmatpush1.msra.mxu0 0.0
    %6539 = vmatprep.subr.mxu0 0.0
    %6540 = vmatpush1.msra.mxu0 0.0
    %6541 = vmatprep.subr.mxu0 0.0
    %6542 = vmatpush1.msra.mxu0 0.0
    %6543 = vmatprep.subr.mxu0 0.0
    %6544 = vmatpush1.msra.mxu0 0.0
    %6545 = vmatprep.subr.mxu0 0.0
    %6546 = vmatpush1.msra.mxu0 0.0
    %6547 = vmatprep.subr.mxu0 0.0
    %6548 = vmatpush1.msra.mxu0 0.0
    %6549 = vmatprep.subr.mxu0 0.0
    %6550 = vmatpush1.msra.mxu0 0.0
    %6551 = vmatprep.subr.mxu0 0.0
    %6552 = vmatpush1.msra.mxu0 0.0
    %6553 = vmatprep.subr.mxu0 0.0
    %6554 = vmatpush1.msra.mxu0 0.0
    %6555 = vmatprep.subr.mxu0 0.0
    %6556 = vmatpush1.msra.mxu0 0.0
    %6557 = vmatprep.subr.mxu0 0.0
    %6558 = vmatpush1.msra.mxu0 0.0
    %6559 = vmatprep.subr.mxu0 0.0
    %6560 = vmatpush1.msra.mxu0 0.0
    %6561 = vmatprep.subr.mxu0 0.0
    %6562 = vmatpush1.msra.mxu0 0.0
    %6563 = vmatprep.subr.mxu0 0.0
    %6564 = vmatpush1.msra.mxu0 0.0
    %6565 = vmatprep.subr.mxu0 0.0
    %6566 = vmatpush1.msra.mxu0 0.0
    %6567 = vmatprep.subr.mxu0 0.0
    %6568 = vmatpush1.msra.mxu0 0.0
    %6569 = vmatprep.subr.mxu0 0.0
    %6570 = vmatpush1.msra.mxu0 0.0
    %6571 = vmatprep.subr.mxu0 0.0
    %6572 = vmatpush1.msra.mxu0 0.0
    %6573 = vmatprep.subr.mxu0 0.0
    %6574 = vmatpush1.msra.mxu0 0.0
    %6575 = vmatprep.subr.mxu0 0.0
    %6576 = vmatpush1.msra.mxu0 0.0
    %6577 = vmatprep.subr.mxu0 0.0
    %6578 = vmatpush1.msra.mxu0 0.0
    %6579 = vmatprep.subr.mxu0 0.0
    %6580 = vmatpush1.msra.mxu0 0.0
    %6581 = vmatprep.subr.mxu0 0.0
    %6582 = vmatpush1.msra.mxu0 0.0
    %6583 = vmatprep.subr.mxu0 0.0
    %6584 = vmatpush1.msra.mxu0 0.0
    %6585 = vmatprep.subr.mxu0 0.0
    %6586 = vmatpush1.msra.mxu0 0.0
    %6587 = vmatprep.subr.mxu0 0.0
    %6588 = vmatpush1.msra.mxu0 0.0
    %6589 = vmatprep.subr.mxu0 0.0
    %6590 = vmatpush1.msra.mxu0 0.0
    %6591 = vmatprep.mubr.f32.mxu0 0.0
    %6592 = vmatmul.mubr.f32.gmra.mrb[0].mxu0 %v5625
    %v6593 = vpop.f32.mrb[0].mxu0
    %v6594 = vadd.f32 0.0, %v6593
    %v6595 = vpop.f32.mrb[0].mxu0
    %6596 = vdwg.mxu0
    %6599 = vrot.lane.b32.xlu0 %v6594, 32
    %v6600 = vpop.permute.xlu0 %6599
    %v6602 = vsel %vm1144, %v6326, %v6600
    %vm6603 = vcmask 517120
    %6604 = vst.msk [vmem:[#allocation2] sm:$0x3] %vm6603, %v6602
    // Predicated region
    $region98: #{ggnet_forward.1} parent=1 // pred_check
      _
    $region99: #{ggnet_forward.1} parent=1 // pred_check_branch
      %6606 = sbr.rel (0) target = $region101
    $region100: #{ggnet_forward.1} parent=1 // pred_region
      %s6608 = ssub.s32 32, 32
      %6609 = vsyncadd [#allocation3], %s6608
      %s6611 = sshll.u32 [#allocation2], 4
      %s6612 = int_to_ptr.vmem [resolvable:$true] %s6611
      %6614 = dma.vmem_to_hbm [thread:$0]  %s6612, 32, %s24, [#allocation3]
    $region101: #{ggnet_forward.1} parent=1 // pred_fallthru
      _
    // Predicated region
    $region102: #{ggnet_forward.1} parent=1 // pred_check
      _
    $region103: #{ggnet_forward.1} parent=1 // pred_check_branch
      %6616 = sbr.rel (0) target = $region105
    $region104: #{ggnet_forward.1} parent=1 // pred_region
      %6617 = dma.done [#allocation3], 32
    $region105: #{ggnet_forward.1} parent=1 // pred_fallthru
      _
    %6618 = vsyncpa [#allocation3], 1

</llo_original>
